<compile_context>
chip_gen: v7x
topology: tpu7x:2x2x1
jax: 0.10.0
libtpu: 0.0.40
codegen_flags: <defaults>
</compile_context>

<pallas_src>
import jax
import jax.numpy as jnp
from jax import lax
from jax.experimental import pallas as pl
from jax.experimental.pallas import tpu as pltpu

B = 2
DIM = 16          # channels (must be divisible by num_heads)
NUM_HEADS = 8     # -> channels per head = 2
H = 16
W = 16
LN_EPS = 1e-5
L2_EPS = 1e-12


# ----------------------------------------------------------------------------
# Parameter glue (wrapper side, plain XLA): depthwise 1-D convs -> banded mats,
# then fuse LN-affine + convs + 1x1 projection into dense matrices, plus the
# constant block-structure matrices used by the in-kernel attention.
# ----------------------------------------------------------------------------
def _band_matrix(w, n, pad, vertical):
    """w: (C, K).  horizontal: out[c,h,:] = x[c,h,:] @ M[c] (M[c,w,w'])
       vertical:   out[c,:,w] = M[c] @ x[c,:,w]           (M[c,h',h])
       Exact PyTorch cross-correlation with zero padding."""
    k = w.shape[-1]
    i = jnp.arange(n)[:, None]
    j = jnp.arange(n)[None, :]
    t = (j - i + pad) if vertical else (i - j + pad)
    valid = (t >= 0) & (t < k)
    tc = jnp.clip(t, 0, k - 1)
    return jnp.where(valid[None, :, :], w[:, tc], 0.0).astype(jnp.float32)


def build_fused(p, C=DIM, NH=NUM_HEADS, Hx=H, Wx=W):
    # TODO(synk): constant sharing (P / G / MASK / BS) below assumes Hx == Wx;
    # non-square maps need per-branch copies of those constants.
    assert Hx == Wx
    CH = C // NH

    Mh = (_band_matrix(p['w01'], Wx, 3, vertical=False)
          + _band_matrix(p['w11'], Wx, 5, vertical=False)
          + _band_matrix(p['w21'], Wx, 10, vertical=False))          # (C, w, w')
    Mv = (_band_matrix(p['w02'], Hx, 3, vertical=True)
          + _band_matrix(p['w12'], Hx, 5, vertical=True)
          + _band_matrix(p['w22'], Hx, 10, vertical=True))           # (C, h', h)
    bh = p['b01'] + p['b11'] + p['b21']
    bv = p['b02'] + p['b12'] + p['b22']
    wp, bp, lnw, lnb = p['wp'], p['bp'], p['ln_w'], p['ln_b']

    # po1[h, (d,w')] = sum_{c,w} F1[(c,w),(d,w')] * xhat[h,(c,w)] + b1[(d,w')]
    F1 = jnp.einsum('c,dc,cwv->cwdv', lnw, wp, Mh).reshape(C * Wx, C * Wx)
    Sh = jnp.sum(Mh, axis=1)                                          # (C, w')
    b1 = (wp @ (lnb[:, None] * Sh + bh[:, None]) + bp[:, None]).reshape(1, C * Wx)

    # po2[w, (d,h')] = sum_{c,h} F2[(c,h),(d,h')] * xhat[w,(c,h)] + b2[(d,h')]
    F2 = jnp.einsum('c,dc,cph->chdp', lnw, wp, Mv).reshape(C * Hx, C * Hx)
    Sv = jnp.sum(Mv, axis=2)                                          # (C, h')
    b2 = (wp @ (lnb[:, None] * Sv + bv[:, None]) + bp[:, None]).reshape(1, C * Hx)

    # Per-pixel-mean tiling matrix: (xh @ P)[h,(c,w)] = mean_c' xh[h,(c',w)]
    P = jnp.kron(jnp.ones((C, C), jnp.float32) / C,
                 jnp.eye(Wx, dtype=jnp.float32))

    # Block-structure constants for the 2-D (head-blocked) attention.
    head_of_col = jnp.arange(C * Wx) // (CH * Wx)                     # (C*W,)
    row_head = jnp.repeat(jnp.arange(NH), Hx)                         # (NH*H,)
    HONES = (head_of_col[:, None] == head_of_col[None, :]).astype(jnp.float32)
    MASK = (row_head[:, None] == head_of_col[None, :]).astype(jnp.float32)
    BS = (row_head[:, None] == row_head[None, :]).astype(jnp.float32)

    # project_out in token-major layout:  o @ G + bg,  G = wp^T (x) I_W
    G = jnp.kron(wp.T, jnp.eye(Wx, dtype=jnp.float32))
    bg = jnp.repeat(bp, Wx).reshape(1, C * Wx)

    return dict(F1=F1.astype(jnp.bfloat16), b1=b1,
                F2=F2.astype(jnp.bfloat16), b2=b2,
                P=P, HONES=HONES, MASK=MASK, BS=BS, G=G, bg=bg)


# ----------------------------------------------------------------------------
# Pallas kernel + wrapper
# ----------------------------------------------------------------------------
def msca_forward_pallas(x, fused, num_heads=NUM_HEADS):
    Bx, C, Hx, Wx = x.shape
    assert Hx == Wx
    CW = C * Wx
    NKV = num_heads * Hx        # rows of the expanded (per-head) key/value tensors

    def kernel(xh_ref, xw_ref, p_ref, f1_ref, b1_ref, f2_ref, b2_ref,
               hones_ref, mask_ref, bs_ref, g_ref, bg_ref, o3_ref, o4_ref):
        xh = xh_ref[0]                     # (H, C*W) cols (c, w)
        xw = xw_ref[0]                     # (W, C*H) cols (c, h)

        # ---- LayerNorm stats per pixel via MXU (no cross-lane reductions) ----
        z0 = jnp.concatenate([xh, xw], axis=0)                        # (2T, 256)
        mu = jnp.dot(z0, p_ref[...], preferred_element_type=jnp.float32)
        m2 = jnp.dot(z0 * z0, p_ref[...], preferred_element_type=jnp.float32)
        xn = (z0 - mu) * lax.rsqrt(jnp.maximum(m2 - mu * mu, 0.0) + LN_EPS)
        xnh = xn[0:Hx]
        xnw = xn[Hx:]

        # ---- fused LN-affine + multiscale depthwise convs + project_out ------
        po1 = jnp.dot(xnh.astype(jnp.bfloat16), f1_ref[...],
                      preferred_element_type=jnp.float32) + b1_ref[...]  # (H, C*W)
        po2 = jnp.dot(xnw.astype(jnp.bfloat16), f2_ref[...],
                      preferred_element_type=jnp.float32) + b2_ref[...]  # (W, C*H)

        # ---- cross-orientation flips (the only relayouts left in the kernel) -
        def flip(t, tin, tout):
            # (tin, C*tout) cols (c, tout)  ->  (tout, C*tin) cols (c, tin)
            t3 = t.reshape(tin, C, tout)
            t3 = jnp.transpose(t3, (1, 0, 2))         # (C, tin, tout)
            t3 = jnp.swapaxes(t3, -1, -2)             # (C, tout, tin)
            return jnp.transpose(t3, (1, 0, 2)).reshape(tout, C * tin)

        q1r = flip(po2, Wx, Hx)            # (H, C*W): q1 before normalization
        q2r = flip(po1, Hx, Wx)            # (W, C*H): q2 before normalization

        # ---- L2 normalization of q1,q2,k1,k2: one block-sum MXU matmul -------
        z1 = jnp.concatenate([q1r, q2r, po1, po2], axis=0)            # (4T, 256)
        ssq = jnp.dot(z1 * z1, hones_ref[...],
                      preferred_element_type=jnp.float32)
        zn = z1 * lax.rsqrt(jnp.maximum(ssq, L2_EPS * L2_EPS))
        qn1 = zn[0:Hx]
        qn2 = zn[Hx:2 * Hx]
        kn1 = zn[2 * Hx:3 * Hx]
        kn2 = zn[3 * Hx:]

        # ---- block-diagonal (per-head) attention, both paths merged ----------
        mask = mask_ref[...]                                          # (NKV, 256)

        def expand(t):                     # (T, 256) -> (NKV, 256) per-head masked
            return mask * jnp.concatenate([t] * num_heads, axis=0)

        kexp1, vexp1 = expand(kn1), expand(po1)
        kexp2, vexp2 = expand(kn2), expand(po2)

        dn = (((1,), (1,)), ((), ()))      # contract last dim with last dim (q @ k^T)
        s1 = lax.dot_general(qn1, kexp1, dn, preferred_element_type=jnp.float32)
        s2 = lax.dot_general(qn2, kexp2, dn, preferred_element_type=jnp.float32)

        # q/k are L2-normalized -> logits in [-1, 1]; no max-subtraction needed.
        e = jnp.exp(jnp.concatenate([s1, s2], axis=0))                # (2T, NKV)
        denom = jnp.dot(e, bs_ref[...], preferred_element_type=jnp.float32)
        # NOTE: approx reciprocal -> attention rows sum to 1 only to ~1e-3 rel.
        pattn = e * pl.reciprocal(denom, approx=True)

        o3 = jnp.dot(pattn[0:Hx], vexp1,
                     preferred_element_type=jnp.float32) + qn1        # (H, C*W)
        o4 = jnp.dot(pattn[Hx:], vexp2,
                     preferred_element_type=jnp.float32) + qn2        # (W, C*H)

        # ---- fused project_out in token-major layout, lane-dense stores ------
        res = jnp.dot(jnp.concatenate([o3, o4], axis=0), g_ref[...],
                      preferred_element_type=jnp.float32) + bg_ref[...]
        o3_ref[0] = res[0:Hx]              # (H, C*W) cols (c', w)
        o4_ref[0] = res[Hx:]               # (W, C*H) cols (c', h)

    # wrapper-side permutations (cheap XLA transposes, pipelined by BlockSpec)
    xh = jnp.transpose(x, (0, 2, 1, 3)).reshape(Bx, Hx, CW)   # (B, H, C*W)
    xw = jnp.transpose(x, (0, 3, 1, 2)).reshape(Bx, Wx, CW)   # (B, W, C*H)

    o3p, o4p = pl.pallas_call(
        kernel,
        out_shape=(jax.ShapeDtypeStruct((Bx, Hx, CW), jnp.float32),
                   jax.ShapeDtypeStruct((Bx, Wx, CW), jnp.float32)),
        grid_spec=pltpu.PrefetchScalarGridSpec(
            num_scalar_prefetch=0,
            grid=(Bx,),
            in_specs=[
                pl.BlockSpec((1, Hx, CW), lambda b: (b, 0, 0)),   # xh
                pl.BlockSpec((1, Wx, CW), lambda b: (b, 0, 0)),   # xw
                pl.BlockSpec((CW, CW), lambda b: (0, 0)),         # P
                pl.BlockSpec((CW, CW), lambda b: (0, 0)),         # F1 (bf16)
                pl.BlockSpec((1, CW), lambda b: (0, 0)),          # b1
                pl.BlockSpec((CW, CW), lambda b: (0, 0)),         # F2 (bf16)
                pl.BlockSpec((1, CW), lambda b: (0, 0)),          # b2
                pl.BlockSpec((CW, CW), lambda b: (0, 0)),         # HONES
                pl.BlockSpec((NKV, CW), lambda b: (0, 0)),        # MASK
                pl.BlockSpec((NKV, NKV), lambda b: (0, 0)),       # BS
                pl.BlockSpec((CW, CW), lambda b: (0, 0)),         # G
                pl.BlockSpec((1, CW), lambda b: (0, 0)),          # bg
            ],
            out_specs=[pl.BlockSpec((1, Hx, CW), lambda b: (b, 0, 0)),
                       pl.BlockSpec((1, Wx, CW), lambda b: (b, 0, 0))]),
        compiler_params=pltpu.CompilerParams(
            dimension_semantics=("parallel",)),                  # v7x: 2 TCs busy
    )(xh, xw, fused['P'], fused['F1'], fused['b1'], fused['F2'], fused['b2'],
      fused['HONES'], fused['MASK'], fused['BS'], fused['G'], fused['bg'])

    # single final permute + residual add in XLA (kernel stores stay lane-dense)
    y3 = jnp.transpose(o3p.reshape(Bx, Hx, C, Wx), (0, 2, 1, 3))
    y4 = jnp.transpose(o4p.reshape(Bx, Wx, C, Hx), (0, 2, 3, 1))
    return y3 + y4 + x


# ----------------------------------------------------------------------------
# Pure-JAX reference (mirrors the PyTorch forward exactly) for validation
# ----------------------------------------------------------------------------
def reference_forward(x, p):
    Bx, C, Hx, Wx = x.shape
    head, ch = NUM_HEADS, C // NUM_HEADS

    xt = jnp.transpose(x, (0, 2, 3, 1)).reshape(Bx, Hx * Wx, C)
    mu = jnp.mean(xt, -1, keepdims=True)
    var = jnp.mean((xt - mu) ** 2, -1, keepdims=True)
    xn = (xt - mu) / jnp.sqrt(var + LN_EPS) * p['ln_w'] + p['ln_b']
    x1 = jnp.transpose(xn.reshape(Bx, Hx, Wx, C), (0, 3, 1, 2))

    def dwconv(inp, w, b, pad):
        out = jax.lax.conv_general_dilated(
            inp, w, (1, 1), ((pad[0], pad[0]), (pad[1], pad[1])),
            dimension_numbers=('NCHW', 'OIHW', 'NCHW'),
            feature_group_count=C)
        return out + b[None, :, None, None]

    a00 = dwconv(x1, p['w01'].reshape(C, 1, 1, 7),  p['b01'], (0, 3))
    a10 = dwconv(x1, p['w11'].reshape(C, 1, 1, 11), p['b11'], (0, 5))
    a20 = dwconv(x1, p['w21'].reshape(C, 1, 1, 21), p['b21'], (0, 10))
    a01 = dwconv(x1, p['w02'].reshape(C, 1, 7, 1),  p['b02'], (3, 0))
    a11 = dwconv(x1, p['w12'].reshape(C, 1, 11, 1), p['b12'], (5, 0))
    a21 = dwconv(x1, p['w22'].reshape(C, 1, 21, 1), p['b22'], (10, 0))
    out1 = a00 + a10 + a20
    out2 = a01 + a11 + a21

    def proj(t):
        return jnp.einsum('dc,bchw->bdhw', p['wp'], t) + p['bp'][None, :, None, None]

    po1, po2 = proj(out1), proj(out2)

    def rearr_h(t):   # b (head c) h w -> b head h (w c)
        t = t.reshape(Bx, head, ch, Hx, Wx)
        return jnp.transpose(t, (0, 1, 3, 4, 2)).reshape(Bx, head, Hx, Wx * ch)

    def rearr_w(t):   # b (head c) h w -> b head w (h c)
        t = t.reshape(Bx, head, ch, Hx, Wx)
        return jnp.transpose(t, (0, 1, 4, 3, 2)).reshape(Bx, head, Wx, Hx * ch)

    k1 = rearr_h(po1); v1 = k1
    q1 = rearr_h(po2)
    k2 = rearr_w(po2); v2 = k2
    q2 = rearr_w(po1)

    def l2n(t):
        n = jnp.linalg.norm(t, axis=-1, keepdims=True)
        return t / jnp.maximum(n, L2_EPS)

    q1, q2, k1, k2 = l2n(q1), l2n(q2), l2n(k1), l2n(k2)

    attn1 = jax.nn.softmax(q1 @ jnp.swapaxes(k1, -1, -2), axis=-1)
    out3 = attn1 @ v1 + q1
    attn2 = jax.nn.softmax(q2 @ jnp.swapaxes(k2, -1, -2), axis=-1)
    out4 = attn2 @ v2 + q2

    out3 = jnp.transpose(out3.reshape(Bx, head, Hx, Wx, ch),
                         (0, 1, 4, 2, 3)).reshape(Bx, C, Hx, Wx)
    out4 = jnp.transpose(out4.reshape(Bx, head, Wx, Hx, ch),
                         (0, 1, 4, 3, 2)).reshape(Bx, C, Hx, Wx)
    return proj(out3) + proj(out4) + x


# ----------------------------------------------------------------------------
if __name__ == "__main__":
    key = jax.random.PRNGKey(0)
    ks = jax.random.split(key, 20)

    x = jax.random.normal(ks[0], (B, DIM, H, W), jnp.float32)

    p = {
        'ln_w': 1.0 + 0.1 * jax.random.normal(ks[1], (DIM,), jnp.float32),
        'ln_b': 0.1 * jax.random.normal(ks[2], (DIM,), jnp.float32),
        'w01': 0.2 * jax.random.normal(ks[3], (DIM, 7), jnp.float32),
        'b01': 0.1 * jax.random.normal(ks[4], (DIM,), jnp.float32),
        'w02': 0.2 * jax.random.normal(ks[5], (DIM, 7), jnp.float32),
        'b02': 0.1 * jax.random.normal(ks[6], (DIM,), jnp.float32),
        'w11': 0.2 * jax.random.normal(ks[7], (DIM, 11), jnp.float32),
        'b11': 0.1 * jax.random.normal(ks[8], (DIM,), jnp.float32),
        'w12': 0.2 * jax.random.normal(ks[9], (DIM, 11), jnp.float32),
        'b12': 0.1 * jax.random.normal(ks[10], (DIM,), jnp.float32),
        'w21': 0.2 * jax.random.normal(ks[11], (DIM, 21), jnp.float32),
        'b21': 0.1 * jax.random.normal(ks[12], (DIM,), jnp.float32),
        'w22': 0.2 * jax.random.normal(ks[13], (DIM, 21), jnp.float32),
        'b22': 0.1 * jax.random.normal(ks[14], (DIM,), jnp.float32),
        'wp': 0.1 * jax.random.normal(ks[15], (DIM, DIM), jnp.float32),
        'bp': 0.1 * jax.random.normal(ks[16], (DIM,), jnp.float32),
    }
    # NOTE: self.temperature exists in __init__ but is never used in forward().

    fused = build_fused(p)

    out = msca_forward_pallas(x, fused)
    out = jax.block_until_ready(out)

    ref = reference_forward(x, p)
    err = jnp.max(jnp.abs(out - ref))
    # Tolerance covers bf16 F1/F2 MXU operands + approx softmax reciprocal.
    assert jnp.allclose(out, ref, atol=5e-3, rtol=5e-3), f"max abs err = {err}"

    print("KERNEL_OK")
</pallas_src>

<mosaic_0001>
module attributes {stable_mosaic.version = 11 : i64} {
  func.func @kernel(%arg0: i32, %arg1: memref<1x16x256xf32, #tpu.memory_space<vmem>>, %arg2: memref<1x16x256xf32, #tpu.memory_space<vmem>>, %arg3: memref<256x256xf32, #tpu.memory_space<vmem>>, %arg4: memref<256x256xbf16, #tpu.memory_space<vmem>>, %arg5: memref<1x256xf32, #tpu.memory_space<vmem>>, %arg6: memref<256x256xbf16, #tpu.memory_space<vmem>>, %arg7: memref<1x256xf32, #tpu.memory_space<vmem>>, %arg8: memref<256x256xf32, #tpu.memory_space<vmem>>, %arg9: memref<128x256xf32, #tpu.memory_space<vmem>>, %arg10: memref<128x128xf32, #tpu.memory_space<vmem>>, %arg11: memref<256x256xf32, #tpu.memory_space<vmem>>, %arg12: memref<1x256xf32, #tpu.memory_space<vmem>>, %arg13: memref<1x16x256xf32, #tpu.memory_space<vmem>>, %arg14: memref<1x16x256xf32, #tpu.memory_space<vmem>>) attributes {dimension_semantics = [#tpu.dimension_semantics<parallel>], iteration_bounds = array<i64: 2>, scalar_prefetch = 0 : i64, scratch_operands = 0 : i64, tpu.core_type = #tpu.core_type<tc>, window_params = [{transform_indices = @transform_0, window_bounds = array<i64: 1, 16, 256>}, {transform_indices = @transform_1, window_bounds = array<i64: 1, 16, 256>}, {pipeline_mode = #tpu.pipeline_mode<synchronous>, transform_indices = @transform_2, window_bounds = array<i64: 256, 256>}, {pipeline_mode = #tpu.pipeline_mode<synchronous>, transform_indices = @transform_3, window_bounds = array<i64: 256, 256>}, {pipeline_mode = #tpu.pipeline_mode<synchronous>, transform_indices = @transform_4, window_bounds = array<i64: 1, 256>}, {pipeline_mode = #tpu.pipeline_mode<synchronous>, transform_indices = @transform_5, window_bounds = array<i64: 256, 256>}, {pipeline_mode = #tpu.pipeline_mode<synchronous>, transform_indices = @transform_6, window_bounds = array<i64: 1, 256>}, {pipeline_mode = #tpu.pipeline_mode<synchronous>, transform_indices = @transform_7, window_bounds = array<i64: 256, 256>}, {pipeline_mode = #tpu.pipeline_mode<synchronous>, transform_indices = @transform_8, window_bounds = array<i64: 128, 256>}, {pipeline_mode = #tpu.pipeline_mode<synchronous>, transform_indices = @transform_9, window_bounds = array<i64: 128, 128>}, {pipeline_mode = #tpu.pipeline_mode<synchronous>, transform_indices = @transform_10, window_bounds = array<i64: 256, 256>}, {pipeline_mode = #tpu.pipeline_mode<synchronous>, transform_indices = @transform_11, window_bounds = array<i64: 1, 256>}, {transform_indices = @transform_12, window_bounds = array<i64: 1, 16, 256>}, {transform_indices = @transform_13, window_bounds = array<i64: 1, 16, 256>}]} {
    %c0 = arith.constant 0 : index
    %c0_0 = arith.constant 0 : index
    %c0_1 = arith.constant 0 : index
    %0 = vector.load %arg1[%c0, %c0_0, %c0_1] : memref<1x16x256xf32, #tpu.memory_space<vmem>>, vector<1x16x256xf32>
    %1 = vector.shape_cast %0 : vector<1x16x256xf32> to vector<16x256xf32>
    %c0_2 = arith.constant 0 : index
    %c0_3 = arith.constant 0 : index
    %c0_4 = arith.constant 0 : index
    %2 = vector.load %arg2[%c0_2, %c0_3, %c0_4] : memref<1x16x256xf32, #tpu.memory_space<vmem>>, vector<1x16x256xf32>
    %3 = vector.shape_cast %2 : vector<1x16x256xf32> to vector<16x256xf32>
    %4 = tpu.concatenate %1, %3 in 0 : vector<16x256xf32>, vector<16x256xf32> -> vector<32x256xf32>
    %c0_5 = arith.constant 0 : index
    %c0_6 = arith.constant 0 : index
    %5 = vector.load %arg3[%c0_5, %c0_6] : memref<256x256xf32, #tpu.memory_space<vmem>>, vector<256x256xf32>
    %cst = arith.constant dense<0.000000e+00> : vector<32x256xf32>
    %6 = tpu.matmul %4, %5, %cst {dimension_numbers = #tpu.dot_dimension_numbers<[1], [0], [0], [1], [0, 0, 1, 1], [], []>} : vector<32x256xf32>, vector<256x256xf32>, vector<32x256xf32> -> vector<32x256xf32>
    %7 = arith.mulf %4, %4 : vector<32x256xf32>
    %c0_7 = arith.constant 0 : index
    %c0_8 = arith.constant 0 : index
    %8 = vector.load %arg3[%c0_7, %c0_8] : memref<256x256xf32, #tpu.memory_space<vmem>>, vector<256x256xf32>
    %cst_9 = arith.constant dense<0.000000e+00> : vector<32x256xf32>
    %9 = tpu.matmul %7, %8, %cst_9 {dimension_numbers = #tpu.dot_dimension_numbers<[1], [0], [0], [1], [0, 0, 1, 1], [], []>} : vector<32x256xf32>, vector<256x256xf32>, vector<32x256xf32> -> vector<32x256xf32>
    %10 = arith.subf %4, %6 : vector<32x256xf32>
    %11 = arith.mulf %6, %6 : vector<32x256xf32>
    %12 = arith.subf %9, %11 : vector<32x256xf32>
    %cst_10 = arith.constant 0.000000e+00 : f32
    %13 = vector.broadcast %cst_10 : f32 to vector<32x256xf32>
    %14 = arith.maximumf %12, %13 : vector<32x256xf32>
    %cst_11 = arith.constant 9.99999974E-6 : f32
    %15 = vector.broadcast %cst_11 : f32 to vector<32x256xf32>
    %16 = arith.addf %14, %15 : vector<32x256xf32>
    %17 = math.rsqrt %16 : vector<32x256xf32>
    %18 = arith.mulf %10, %17 : vector<32x256xf32>
    %19 = vector.extract_strided_slice %18 {offsets = [0, 0], sizes = [16, 256], strides = [1, 1]} : vector<32x256xf32> to vector<16x256xf32>
    %20 = vector.extract_strided_slice %18 {offsets = [16, 0], sizes = [16, 256], strides = [1, 1]} : vector<32x256xf32> to vector<16x256xf32>
    %21 = arith.truncf %19 : vector<16x256xf32> to vector<16x256xbf16>
    %c0_12 = arith.constant 0 : index
    %c0_13 = arith.constant 0 : index
    %22 = vector.load %arg4[%c0_12, %c0_13] : memref<256x256xbf16, #tpu.memory_space<vmem>>, vector<256x256xbf16>
    %cst_14 = arith.constant dense<0.000000e+00> : vector<16x256xf32>
    %23 = tpu.matmul %21, %22, %cst_14 {dimension_numbers = #tpu.dot_dimension_numbers<[1], [0], [0], [1], [0, 0, 1, 1], [], []>} : vector<16x256xbf16>, vector<256x256xbf16>, vector<16x256xf32> -> vector<16x256xf32>
    %c0_15 = arith.constant 0 : index
    %c0_16 = arith.constant 0 : index
    %24 = vector.load %arg5[%c0_15, %c0_16] : memref<1x256xf32, #tpu.memory_space<vmem>>, vector<1x256xf32>
    %25 = vector.broadcast %24 : vector<1x256xf32> to vector<16x256xf32>
    %26 = arith.addf %23, %25 : vector<16x256xf32>
    %27 = arith.truncf %20 : vector<16x256xf32> to vector<16x256xbf16>
    %c0_17 = arith.constant 0 : index
    %c0_18 = arith.constant 0 : index
    %28 = vector.load %arg6[%c0_17, %c0_18] : memref<256x256xbf16, #tpu.memory_space<vmem>>, vector<256x256xbf16>
    %cst_19 = arith.constant dense<0.000000e+00> : vector<16x256xf32>
    %29 = tpu.matmul %27, %28, %cst_19 {dimension_numbers = #tpu.dot_dimension_numbers<[1], [0], [0], [1], [0, 0, 1, 1], [], []>} : vector<16x256xbf16>, vector<256x256xbf16>, vector<16x256xf32> -> vector<16x256xf32>
    %c0_20 = arith.constant 0 : index
    %c0_21 = arith.constant 0 : index
    %30 = vector.load %arg7[%c0_20, %c0_21] : memref<1x256xf32, #tpu.memory_space<vmem>>, vector<1x256xf32>
    %31 = vector.broadcast %30 : vector<1x256xf32> to vector<16x256xf32>
    %32 = arith.addf %29, %31 : vector<16x256xf32>
    %33 = vector.shape_cast %32 : vector<16x256xf32> to vector<16x16x16xf32>
    %34 = tpu.transpose %33, [1, 0, 2] : vector<16x16x16xf32> -> vector<16x16x16xf32>
    %35 = tpu.transpose %34, [0, 2, 1] : vector<16x16x16xf32> -> vector<16x16x16xf32>
    %36 = tpu.transpose %35, [1, 0, 2] : vector<16x16x16xf32> -> vector<16x16x16xf32>
    %37 = vector.shape_cast %36 : vector<16x16x16xf32> to vector<16x256xf32>
    %38 = vector.shape_cast %26 : vector<16x256xf32> to vector<16x16x16xf32>
    %39 = tpu.transpose %38, [1, 0, 2] : vector<16x16x16xf32> -> vector<16x16x16xf32>
    %40 = tpu.transpose %39, [0, 2, 1] : vector<16x16x16xf32> -> vector<16x16x16xf32>
    %41 = tpu.transpose %40, [1, 0, 2] : vector<16x16x16xf32> -> vector<16x16x16xf32>
    %42 = vector.shape_cast %41 : vector<16x16x16xf32> to vector<16x256xf32>
    %43 = tpu.concatenate %37, %42, %26, %32 in 0 : vector<16x256xf32>, vector<16x256xf32>, vector<16x256xf32>, vector<16x256xf32> -> vector<64x256xf32>
    %44 = arith.mulf %43, %43 : vector<64x256xf32>
    %c0_22 = arith.constant 0 : index
    %c0_23 = arith.constant 0 : index
    %45 = vector.load %arg8[%c0_22, %c0_23] : memref<256x256xf32, #tpu.memory_space<vmem>>, vector<256x256xf32>
    %cst_24 = arith.constant dense<0.000000e+00> : vector<64x256xf32>
    %46 = tpu.matmul %44, %45, %cst_24 {dimension_numbers = #tpu.dot_dimension_numbers<[1], [0], [0], [1], [0, 0, 1, 1], [], []>} : vector<64x256xf32>, vector<256x256xf32>, vector<64x256xf32> -> vector<64x256xf32>
    %cst_25 = arith.constant 1.000000e-24 : f32
    %47 = vector.broadcast %cst_25 : f32 to vector<64x256xf32>
    %48 = arith.maximumf %46, %47 : vector<64x256xf32>
    %49 = math.rsqrt %48 : vector<64x256xf32>
    %50 = arith.mulf %43, %49 : vector<64x256xf32>
    %51 = vector.extract_strided_slice %50 {offsets = [0, 0], sizes = [16, 256], strides = [1, 1]} : vector<64x256xf32> to vector<16x256xf32>
    %52 = vector.extract_strided_slice %50 {offsets = [16, 0], sizes = [16, 256], strides = [1, 1]} : vector<64x256xf32> to vector<16x256xf32>
    %53 = vector.extract_strided_slice %50 {offsets = [32, 0], sizes = [16, 256], strides = [1, 1]} : vector<64x256xf32> to vector<16x256xf32>
    %54 = vector.extract_strided_slice %50 {offsets = [48, 0], sizes = [16, 256], strides = [1, 1]} : vector<64x256xf32> to vector<16x256xf32>
    %c0_26 = arith.constant 0 : index
    %c0_27 = arith.constant 0 : index
    %55 = vector.load %arg9[%c0_26, %c0_27] : memref<128x256xf32, #tpu.memory_space<vmem>>, vector<128x256xf32>
    %56 = tpu.concatenate %53, %53, %53, %53, %53, %53, %53, %53 in 0 : vector<16x256xf32>, vector<16x256xf32>, vector<16x256xf32>, vector<16x256xf32>, vector<16x256xf32>, vector<16x256xf32>, vector<16x256xf32>, vector<16x256xf32> -> vector<128x256xf32>
    %57 = arith.mulf %55, %56 : vector<128x256xf32>
    %58 = tpu.concatenate %26, %26, %26, %26, %26, %26, %26, %26 in 0 : vector<16x256xf32>, vector<16x256xf32>, vector<16x256xf32>, vector<16x256xf32>, vector<16x256xf32>, vector<16x256xf32>, vector<16x256xf32>, vector<16x256xf32> -> vector<128x256xf32>
    %59 = arith.mulf %55, %58 : vector<128x256xf32>
    %60 = tpu.concatenate %54, %54, %54, %54, %54, %54, %54, %54 in 0 : vector<16x256xf32>, vector<16x256xf32>, vector<16x256xf32>, vector<16x256xf32>, vector<16x256xf32>, vector<16x256xf32>, vector<16x256xf32>, vector<16x256xf32> -> vector<128x256xf32>
    %61 = arith.mulf %55, %60 : vector<128x256xf32>
    %62 = tpu.concatenate %32, %32, %32, %32, %32, %32, %32, %32 in 0 : vector<16x256xf32>, vector<16x256xf32>, vector<16x256xf32>, vector<16x256xf32>, vector<16x256xf32>, vector<16x256xf32>, vector<16x256xf32>, vector<16x256xf32> -> vector<128x256xf32>
    %63 = arith.mulf %55, %62 : vector<128x256xf32>
    %cst_28 = arith.constant dense<0.000000e+00> : vector<16x128xf32>
    %64 = tpu.matmul %51, %57, %cst_28 {dimension_numbers = #tpu.dot_dimension_numbers<[1], [1], [0], [0], [0, 0, 1, 0], [], []>} : vector<16x256xf32>, vector<128x256xf32>, vector<16x128xf32> -> vector<16x128xf32>
    %cst_29 = arith.constant dense<0.000000e+00> : vector<16x128xf32>
    %65 = tpu.matmul %52, %61, %cst_29 {dimension_numbers = #tpu.dot_dimension_numbers<[1], [1], [0], [0], [0, 0, 1, 0], [], []>} : vector<16x256xf32>, vector<128x256xf32>, vector<16x128xf32> -> vector<16x128xf32>
    %66 = tpu.concatenate %64, %65 in 0 : vector<16x128xf32>, vector<16x128xf32> -> vector<32x128xf32>
    %67 = math.exp %66 : vector<32x128xf32>
    %c0_30 = arith.constant 0 : index
    %c0_31 = arith.constant 0 : index
    %68 = vector.load %arg10[%c0_30, %c0_31] : memref<128x128xf32, #tpu.memory_space<vmem>>, vector<128x128xf32>
    %cst_32 = arith.constant dense<0.000000e+00> : vector<32x128xf32>
    %69 = tpu.matmul %67, %68, %cst_32 {dimension_numbers = #tpu.dot_dimension_numbers<[1], [0], [0], [1], [0, 0, 1, 1], [], []>} : vector<32x128xf32>, vector<128x128xf32>, vector<32x128xf32> -> vector<32x128xf32>
    %70 = tpu.reciprocal %69 {approx = true} : vector<32x128xf32> -> vector<32x128xf32>
    %71 = arith.mulf %67, %70 : vector<32x128xf32>
    %72 = vector.extract_strided_slice %71 {offsets = [0, 0], sizes = [16, 128], strides = [1, 1]} : vector<32x128xf32> to vector<16x128xf32>
    %cst_33 = arith.constant dense<0.000000e+00> : vector<16x256xf32>
    %73 = tpu.matmul %72, %59, %cst_33 {dimension_numbers = #tpu.dot_dimension_numbers<[1], [0], [0], [1], [0, 0, 1, 1], [], []>} : vector<16x128xf32>, vector<128x256xf32>, vector<16x256xf32> -> vector<16x256xf32>
    %74 = arith.addf %73, %51 : vector<16x256xf32>
    %75 = vector.extract_strided_slice %71 {offsets = [16, 0], sizes = [16, 128], strides = [1, 1]} : vector<32x128xf32> to vector<16x128xf32>
    %cst_34 = arith.constant dense<0.000000e+00> : vector<16x256xf32>
    %76 = tpu.matmul %75, %63, %cst_34 {dimension_numbers = #tpu.dot_dimension_numbers<[1], [0], [0], [1], [0, 0, 1, 1], [], []>} : vector<16x128xf32>, vector<128x256xf32>, vector<16x256xf32> -> vector<16x256xf32>
    %77 = arith.addf %76, %52 : vector<16x256xf32>
    %78 = tpu.concatenate %74, %77 in 0 : vector<16x256xf32>, vector<16x256xf32> -> vector<32x256xf32>
    %c0_35 = arith.constant 0 : index
    %c0_36 = arith.constant 0 : index
    %79 = vector.load %arg11[%c0_35, %c0_36] : memref<256x256xf32, #tpu.memory_space<vmem>>, vector<256x256xf32>
    %cst_37 = arith.constant dense<0.000000e+00> : vector<32x256xf32>
    %80 = tpu.matmul %78, %79, %cst_37 {dimension_numbers = #tpu.dot_dimension_numbers<[1], [0], [0], [1], [0, 0, 1, 1], [], []>} : vector<32x256xf32>, vector<256x256xf32>, vector<32x256xf32> -> vector<32x256xf32>
    %c0_38 = arith.constant 0 : index
    %c0_39 = arith.constant 0 : index
    %81 = vector.load %arg12[%c0_38, %c0_39] : memref<1x256xf32, #tpu.memory_space<vmem>>, vector<1x256xf32>
    %82 = vector.broadcast %81 : vector<1x256xf32> to vector<32x256xf32>
    %83 = arith.addf %80, %82 : vector<32x256xf32>
    %84 = vector.extract_strided_slice %83 {offsets = [0, 0], sizes = [16, 256], strides = [1, 1]} : vector<32x256xf32> to vector<16x256xf32>
    %c0_40 = arith.constant 0 : index
    %c0_41 = arith.constant 0 : index
    %c0_42 = arith.constant 0 : index
    %85 = vector.load %arg13[%c0_40, %c0_41, %c0_42] : memref<1x16x256xf32, #tpu.memory_space<vmem>>, vector<1x16x256xf32>
    %86 = vector.shape_cast %85 : vector<1x16x256xf32> to vector<16x256xf32>
    %87 = vector.shape_cast %84 : vector<16x256xf32> to vector<1x16x256xf32>
    tpu.vector_store %arg13[%c0_40, %c0_41, %c0_42], %87 {strides = array<i32>} : memref<1x16x256xf32, #tpu.memory_space<vmem>>, vector<1x16x256xf32>,
    %88 = vector.extract_strided_slice %83 {offsets = [16, 0], sizes = [16, 256], strides = [1, 1]} : vector<32x256xf32> to vector<16x256xf32>
    %c0_43 = arith.constant 0 : index
    %c0_44 = arith.constant 0 : index
    %c0_45 = arith.constant 0 : index
    %89 = vector.load %arg14[%c0_43, %c0_44, %c0_45] : memref<1x16x256xf32, #tpu.memory_space<vmem>>, vector<1x16x256xf32>
    %90 = vector.shape_cast %89 : vector<1x16x256xf32> to vector<16x256xf32>
    %91 = vector.shape_cast %88 : vector<16x256xf32> to vector<1x16x256xf32>
    tpu.vector_store %arg14[%c0_43, %c0_44, %c0_45], %91 {strides = array<i32>} : memref<1x16x256xf32, #tpu.memory_space<vmem>>, vector<1x16x256xf32>,
    return
  }
  func.func @transform_0(%arg0: i32) -> (i32, i32, i32) {
    %c0_i32 = arith.constant 0 : i32
    %c0_i32_0 = arith.constant 0 : i32
    %c0_i32_1 = arith.constant 0 : i32
    return %arg0, %c0_i32, %c0_i32_0 : i32, i32, i32
  }
  func.func @transform_1(%arg0: i32) -> (i32, i32, i32) {
    %c0_i32 = arith.constant 0 : i32
    %c0_i32_0 = arith.constant 0 : i32
    %c0_i32_1 = arith.constant 0 : i32
    return %arg0, %c0_i32, %c0_i32_0 : i32, i32, i32
  }
  func.func @transform_2(%arg0: i32) -> (i32, i32) {
    %c0_i32 = arith.constant 0 : i32
    %c0_i32_0 = arith.constant 0 : i32
    %c0_i32_1 = arith.constant 0 : i32
    return %c0_i32, %c0_i32_0 : i32, i32
  }
  func.func @transform_3(%arg0: i32) -> (i32, i32) {
    %c0_i32 = arith.constant 0 : i32
    %c0_i32_0 = arith.constant 0 : i32
    %c0_i32_1 = arith.constant 0 : i32
    return %c0_i32, %c0_i32_0 : i32, i32
  }
  func.func @transform_4(%arg0: i32) -> (i32, i32) {
    %c0_i32 = arith.constant 0 : i32
    %c0_i32_0 = arith.constant 0 : i32
    %c0_i32_1 = arith.constant 0 : i32
    return %c0_i32, %c0_i32_0 : i32, i32
  }
  func.func @transform_5(%arg0: i32) -> (i32, i32) {
    %c0_i32 = arith.constant 0 : i32
    %c0_i32_0 = arith.constant 0 : i32
    %c0_i32_1 = arith.constant 0 : i32
    return %c0_i32, %c0_i32_0 : i32, i32
  }
  func.func @transform_6(%arg0: i32) -> (i32, i32) {
    %c0_i32 = arith.constant 0 : i32
    %c0_i32_0 = arith.constant 0 : i32
    %c0_i32_1 = arith.constant 0 : i32
    return %c0_i32, %c0_i32_0 : i32, i32
  }
  func.func @transform_7(%arg0: i32) -> (i32, i32) {
    %c0_i32 = arith.constant 0 : i32
    %c0_i32_0 = arith.constant 0 : i32
    %c0_i32_1 = arith.constant 0 : i32
    return %c0_i32, %c0_i32_0 : i32, i32
  }
  func.func @transform_8(%arg0: i32) -> (i32, i32) {
    %c0_i32 = arith.constant 0 : i32
    %c0_i32_0 = arith.constant 0 : i32
    %c0_i32_1 = arith.constant 0 : i32
    return %c0_i32, %c0_i32_0 : i32, i32
  }
  func.func @transform_9(%arg0: i32) -> (i32, i32) {
    %c0_i32 = arith.constant 0 : i32
    %c0_i32_0 = arith.constant 0 : i32
    %c0_i32_1 = arith.constant 0 : i32
    return %c0_i32, %c0_i32_0 : i32, i32
  }
  func.func @transform_10(%arg0: i32) -> (i32, i32) {
    %c0_i32 = arith.constant 0 : i32
    %c0_i32_0 = arith.constant 0 : i32
    %c0_i32_1 = arith.constant 0 : i32
    return %c0_i32, %c0_i32_0 : i32, i32
  }
  func.func @transform_11(%arg0: i32) -> (i32, i32) {
    %c0_i32 = arith.constant 0 : i32
    %c0_i32_0 = arith.constant 0 : i32
    %c0_i32_1 = arith.constant 0 : i32
    return %c0_i32, %c0_i32_0 : i32, i32
  }
  func.func @transform_12(%arg0: i32) -> (i32, i32, i32) {
    %c0_i32 = arith.constant 0 : i32
    %c0_i32_0 = arith.constant 0 : i32
    %c0_i32_1 = arith.constant 0 : i32
    return %arg0, %c0_i32, %c0_i32_0 : i32, i32, i32
  }
  func.func @transform_13(%arg0: i32) -> (i32, i32, i32) {
    %c0_i32 = arith.constant 0 : i32
    %c0_i32_0 = arith.constant 0 : i32
    %c0_i32_1 = arith.constant 0 : i32
    return %arg0, %c0_i32, %c0_i32_0 : i32, i32, i32
  }
}

</mosaic_0001>

<llo_original>
// kernel: tpu_custom_call.1
$region0: #{tpu_custom_call.1}
  #allocation0 [shape = 'u32[]', space=smem, size = 0x4, offset = 0x4, fixed_abs, tag = 'smem constant byte address 0x4 - core index']
  #allocation1 [shape = 'u32[144,128]{1,0:T(1,128)}', space=vmem, size = 0x12000, scoped, tag = 'internal scratch']
  %s0 = inlined_call_operand.hbm [shape: f32[2,16,256], index: 0, kind: input, shape index: {}]
  %s1 = inlined_call_operand.hbm [shape: f32[2,16,256], index: 1, kind: input, shape index: {}]
  %s2 = inlined_call_operand.hbm [shape: f32[256,256], index: 2, kind: input, shape index: {}]
  %s3 = inlined_call_operand.hbm [shape: bf16[256,256], index: 3, kind: input, shape index: {}]
  %s4 = inlined_call_operand.vmem [shape: f32[1,256], index: 4, kind: input, shape index: {}]
  %s5 = inlined_call_operand.hbm [shape: bf16[256,256], index: 5, kind: input, shape index: {}]
  %s6 = inlined_call_operand.vmem [shape: f32[1,256], index: 6, kind: input, shape index: {}]
  %s7 = inlined_call_operand.hbm [shape: f32[256,256], index: 7, kind: input, shape index: {}]
  %s8 = inlined_call_operand.hbm [shape: f32[128,256], index: 8, kind: input, shape index: {}]
  %s9 = inlined_call_operand.hbm [shape: f32[128,128], index: 9, kind: input, shape index: {}]
  %s10 = inlined_call_operand.hbm [shape: f32[256,256], index: 10, kind: input, shape index: {}]
  %s11 = inlined_call_operand.vmem [shape: f32[1,256], index: 11, kind: input, shape index: {}]
  %s12 = inlined_call_operand.hbm [shape: f32[2,16,256], index: 12, kind: output, shape index: {0}]
  %s13 = inlined_call_operand.hbm [shape: f32[2,16,256], index: 13, kind: output, shape index: {1}]
  %14 = xla_tuple %s12, %s13
  %s15 = sld [smem:[#allocation0]]
  $region125: #{tpu_custom_call.1} parent=0
    _
  %s17 = ssub.s32 1, %s15
  %s18 = scalar_select 0, %s17, %s15
  $region1: #{tpu_custom_call.1} parent=0
    #allocation2 [shape = 'u8[32768]{0}', space=vmem, size = 0x8000, scoped, tag = 'input window, operand 0']
    #allocation3 [shape = 's32[2]{0}', space=sflag, size = 0x8, scoped, tag = 'scoped memory for tpu_custom_call.1']
    #allocation4 [shape = 's32[2]{0}', space=sflag, size = 0x8, scoped, tag = 'scoped memory for tpu_custom_call.1']
    #allocation5 [shape = 'u8[32768]{0}', space=vmem, size = 0x8000, scoped, tag = 'input window, operand 1']
    #allocation6 [shape = 's32[2]{0}', space=sflag, size = 0x8, scoped, tag = 'scoped memory for tpu_custom_call.1']
    #allocation7 [shape = 'u8[262144]{0}', space=vmem, size = 0x40000, scoped, tag = 'input window, operand 2, single buffered']
    #allocation8 [shape = 'u8[131072]{0}', space=vmem, size = 0x20000, scoped, tag = 'input window, operand 3, single buffered']
    #allocation9 [shape = 's32[1]{0}', space=sflag, size = 0x4, scoped, tag = 'scoped memory for tpu_custom_call.1']
    #allocation10 [shape = 'u8[131072]{0}', space=vmem, size = 0x20000, scoped, tag = 'input window, operand 5, single buffered']
    #allocation11 [shape = 'u8[262144]{0}', space=vmem, size = 0x40000, scoped, tag = 'input window, operand 7, single buffered']
    #allocation12 [shape = 's32[1]{0}', space=sflag, size = 0x4, scoped, tag = 'scoped memory for tpu_custom_call.1']
    #allocation13 [shape = 'u8[131072]{0}', space=vmem, size = 0x20000, scoped, tag = 'input window, operand 8, single buffered']
    #allocation14 [shape = 'u8[65536]{0}', space=vmem, size = 0x10000, scoped, tag = 'input window, operand 9, single buffered']
    #allocation15 [shape = 's32[1]{0}', space=sflag, size = 0x4, scoped, tag = 'scoped memory for tpu_custom_call.1']
    #allocation16 [shape = 'u8[262144]{0}', space=vmem, size = 0x40000, scoped, tag = 'input window, operand 10, single buffered']
    #allocation17 [shape = 'u8[32768]{0}', space=vmem, size = 0x8000, scoped, tag = 'output window, operand 0']
    #allocation18 [shape = 'u8[32768]{0}', space=vmem, size = 0x8000, scoped, tag = 'output window, operand 1']
    #allocation19 [shape = 's32[2]{0}', space=sflag, size = 0x8, scoped, tag = 'scoped memory for tpu_custom_call.1']
    %19 = vsyncpa [#allocation3], 0
    %s20 = scalar_lea.sflag [#allocation3], 1
    %21 = vsyncpa %s20, 0
    %22 = vsyncpa [#allocation6], 0
    %s23 = scalar_lea.sflag [#allocation6], 1
    %24 = vsyncpa %s23, 0
    %25 = vsyncpa [#allocation9], 0
    %26 = vsyncpa [#allocation12], 0
    %27 = vsyncpa [#allocation15], 0
    %28 = vsyncpa [#allocation4], 0
    %s29 = scalar_lea.sflag [#allocation4], 1
    %30 = vsyncpa %s29, 0
    %31 = vsyncpa [#allocation19], 0
    %s32 = scalar_lea.sflag [#allocation19], 1
    %33 = vsyncpa %s32, 0
    loop: start=0, step=1, limit=4
    $region2: #{tpu_custom_call.1} parent=1 // loop_pre_header
      _
    $region3: #{tpu_custom_call.1} parent=1 // loop_header
      %s35 = sphi 0, %s39
      %p36 = scmp.ge.s32.totalorder %s35, 4
      %s45 = sphi 0, %s47
      %s48 = sphi 0, %s45
      %s49 = sphi 0, %s48
      %s65 = sphi 0, %s49
      %s71 = sphi 0, %s73
      %s74 = sphi 0, %s71
      %s75 = sphi 0, %s74
      %s91 = sphi 0, %s75
      %s95 = sphi 0, %s95
      %s97 = sphi 0, %s95
      %s98 = sphi 0, %s97
      %s112 = sphi 0, %s98
      %s116 = sphi 0, %s116
      %s118 = sphi 0, %s116
      %s119 = sphi 0, %s118
      %s133 = sphi 0, %s119
      %s137 = sphi 0, %s137
      %s139 = sphi 0, %s137
      %s140 = sphi 0, %s139
      %s154 = sphi 0, %s140
      %s158 = sphi 0, %s158
      %s160 = sphi 0, %s158
      %s161 = sphi 0, %s160
      %s175 = sphi 0, %s161
      %s179 = sphi 0, %s179
      %s181 = sphi 0, %s179
      %s182 = sphi 0, %s181
      %s196 = sphi 0, %s182
      %s200 = sphi 0, %s200
      %s202 = sphi 0, %s200
      %s203 = sphi 0, %s202
      %s217 = sphi 0, %s203
      %s221 = sphi 0, %s221
      %s223 = sphi 0, %s221
      %s224 = sphi 0, %s223
      %s238 = sphi 0, %s224
      %s242 = sphi 0, %s242
      %s244 = sphi 0, %s242
      %s245 = sphi 0, %s244
      %s259 = sphi 0, %s245
      %s263 = sphi 0, %s263
      %s265 = sphi 0, %s263
      %s266 = sphi 0, %s265
      %s280 = sphi 0, %s266
      %s284 = sphi 0, %s284
      %s286 = sphi 0, %s284
      %s287 = sphi 0, %s286
      %s301 = sphi 0, %s287
      %s307 = sphi 0, %s309
      %s310 = sphi 0, %s307
      %s311 = sphi 0, %s310
      %s327 = sphi 0, %s311
      %s333 = sphi 0, %s335
      %s336 = sphi 0, %s333
      %s337 = sphi 0, %s336
      %s353 = sphi 0, %s337
    $region4: #{tpu_custom_call.1} parent=1 // loop_header_branch
      %38 = sbr.rel (%p36) target = $region8
    $region5: #{tpu_custom_call.1} parent=1 // loop_body
      %s40 = ssub.s32 %s35, 1
      %s41 = ssub.s32 %s35, 2
      %s42 = sadd.s32 %s35, 1
      %s43 = ssub.s32 %s35, %s42
      %p44 = scmp.eq.s32.totalorder %s43, 0
      %s46 = sadd.s32 %s45, 1
      %s47 = scalar_select %p44, %s45, %s46
      %p50 = pneg %p44
      %p51 = scmp.eq.s32.totalorder %s35, 1
      %p52 = por %p50, %p51
      %p53 = scmp.ne.s32.totalorder %s45, %s48
      %p54 = scmp.eq.s32.totalorder %s35, 0
      %p55 = por %p53, %p54
      %p56 = scmp.ne.s32.totalorder %s45, %s48
      %p57 = scmp.eq.s32.totalorder %s40, 1
      %p58 = por %p56, %p57
      %p59 = scmp.ne.s32.totalorder %s48, %s49
      %p60 = scmp.eq.s32.totalorder %s40, 0
      %p61 = por %p59, %p60
      %p62 = scmp.ne.s32.totalorder %s48, %s49
      %p63 = scmp.eq.s32.totalorder %s41, 1
      %p64 = por %p62, %p63
      %p66 = scmp.ne.s32.totalorder %s49, %s65
      %p67 = scmp.eq.s32.totalorder %s41, 0
      %p68 = por %p66, %p67
      %s69 = ssub.s32 %s35, %s42
      %p70 = scmp.eq.s32.totalorder %s69, 0
      %s72 = sadd.s32 %s71, 1
      %s73 = scalar_select %p70, %s71, %s72
      %p76 = pneg %p70
      %p77 = scmp.eq.s32.totalorder %s35, 1
      %p78 = por %p76, %p77
      %p79 = scmp.ne.s32.totalorder %s71, %s74
      %p80 = scmp.eq.s32.totalorder %s35, 0
      %p81 = por %p79, %p80
      %p82 = scmp.ne.s32.totalorder %s71, %s74
      %p83 = scmp.eq.s32.totalorder %s40, 1
      %p84 = por %p82, %p83
      %p85 = scmp.ne.s32.totalorder %s74, %s75
      %p86 = scmp.eq.s32.totalorder %s40, 0
      %p87 = por %p85, %p86
      %p88 = scmp.ne.s32.totalorder %s74, %s75
      %p89 = scmp.eq.s32.totalorder %s41, 1
      %p90 = por %p88, %p89
      %p92 = scmp.ne.s32.totalorder %s75, %s91
      %p93 = scmp.eq.s32.totalorder %s41, 0
      %p94 = por %p92, %p93
      %s96 = sadd.s32 %s95, 1
      %p99 = scmp.eq.s32.totalorder %s35, 1
      %p100 = scmp.ne.s32.totalorder %s95, %s97
      %p101 = scmp.eq.s32.totalorder %s35, 0
      %p102 = por %p100, %p101
      %p103 = scmp.ne.s32.totalorder %s95, %s97
      %p104 = scmp.eq.s32.totalorder %s40, 1
      %p105 = por %p103, %p104
      %p106 = scmp.ne.s32.totalorder %s97, %s98
      %p107 = scmp.eq.s32.totalorder %s40, 0
      %p108 = por %p106, %p107
      %p109 = scmp.ne.s32.totalorder %s97, %s98
      %p110 = scmp.eq.s32.totalorder %s41, 1
      %p111 = por %p109, %p110
      %p113 = scmp.ne.s32.totalorder %s98, %s112
      %p114 = scmp.eq.s32.totalorder %s41, 0
      %p115 = por %p113, %p114
      %s117 = sadd.s32 %s116, 1
      %p120 = scmp.eq.s32.totalorder %s35, 1
      %p121 = scmp.ne.s32.totalorder %s116, %s118
      %p122 = scmp.eq.s32.totalorder %s35, 0
      %p123 = por %p121, %p122
      %p124 = scmp.ne.s32.totalorder %s116, %s118
      %p125 = scmp.eq.s32.totalorder %s40, 1
      %p126 = por %p124, %p125
      %p127 = scmp.ne.s32.totalorder %s118, %s119
      %p128 = scmp.eq.s32.totalorder %s40, 0
      %p129 = por %p127, %p128
      %p130 = scmp.ne.s32.totalorder %s118, %s119
      %p131 = scmp.eq.s32.totalorder %s41, 1
      %p132 = por %p130, %p131
      %p134 = scmp.ne.s32.totalorder %s119, %s133
      %p135 = scmp.eq.s32.totalorder %s41, 0
      %p136 = por %p134, %p135
      %s138 = sadd.s32 %s137, 1
      %p141 = scmp.eq.s32.totalorder %s35, 1
      %p142 = scmp.ne.s32.totalorder %s137, %s139
      %p143 = scmp.eq.s32.totalorder %s35, 0
      %p144 = por %p142, %p143
      %p145 = scmp.ne.s32.totalorder %s137, %s139
      %p146 = scmp.eq.s32.totalorder %s40, 1
      %p147 = por %p145, %p146
      %p148 = scmp.ne.s32.totalorder %s139, %s140
      %p149 = scmp.eq.s32.totalorder %s40, 0
      %p150 = por %p148, %p149
      %p151 = scmp.ne.s32.totalorder %s139, %s140
      %p152 = scmp.eq.s32.totalorder %s41, 1
      %p153 = por %p151, %p152
      %p155 = scmp.ne.s32.totalorder %s140, %s154
      %p156 = scmp.eq.s32.totalorder %s41, 0
      %p157 = por %p155, %p156
      %s159 = sadd.s32 %s158, 1
      %p162 = scmp.eq.s32.totalorder %s35, 1
      %p163 = scmp.ne.s32.totalorder %s158, %s160
      %p164 = scmp.eq.s32.totalorder %s35, 0
      %p165 = por %p163, %p164
      %p166 = scmp.ne.s32.totalorder %s158, %s160
      %p167 = scmp.eq.s32.totalorder %s40, 1
      %p168 = por %p166, %p167
      %p169 = scmp.ne.s32.totalorder %s160, %s161
      %p170 = scmp.eq.s32.totalorder %s40, 0
      %p171 = por %p169, %p170
      %p172 = scmp.ne.s32.totalorder %s160, %s161
      %p173 = scmp.eq.s32.totalorder %s41, 1
      %p174 = por %p172, %p173
      %p176 = scmp.ne.s32.totalorder %s161, %s175
      %p177 = scmp.eq.s32.totalorder %s41, 0
      %p178 = por %p176, %p177
      %s180 = sadd.s32 %s179, 1
      %p183 = scmp.eq.s32.totalorder %s35, 1
      %p184 = scmp.ne.s32.totalorder %s179, %s181
      %p185 = scmp.eq.s32.totalorder %s35, 0
      %p186 = por %p184, %p185
      %p187 = scmp.ne.s32.totalorder %s179, %s181
      %p188 = scmp.eq.s32.totalorder %s40, 1
      %p189 = por %p187, %p188
      %p190 = scmp.ne.s32.totalorder %s181, %s182
      %p191 = scmp.eq.s32.totalorder %s40, 0
      %p192 = por %p190, %p191
      %p193 = scmp.ne.s32.totalorder %s181, %s182
      %p194 = scmp.eq.s32.totalorder %s41, 1
      %p195 = por %p193, %p194
      %p197 = scmp.ne.s32.totalorder %s182, %s196
      %p198 = scmp.eq.s32.totalorder %s41, 0
      %p199 = por %p197, %p198
      %s201 = sadd.s32 %s200, 1
      %p204 = scmp.eq.s32.totalorder %s35, 1
      %p205 = scmp.ne.s32.totalorder %s200, %s202
      %p206 = scmp.eq.s32.totalorder %s35, 0
      %p207 = por %p205, %p206
      %p208 = scmp.ne.s32.totalorder %s200, %s202
      %p209 = scmp.eq.s32.totalorder %s40, 1
      %p210 = por %p208, %p209
      %p211 = scmp.ne.s32.totalorder %s202, %s203
      %p212 = scmp.eq.s32.totalorder %s40, 0
      %p213 = por %p211, %p212
      %p214 = scmp.ne.s32.totalorder %s202, %s203
      %p215 = scmp.eq.s32.totalorder %s41, 1
      %p216 = por %p214, %p215
      %p218 = scmp.ne.s32.totalorder %s203, %s217
      %p219 = scmp.eq.s32.totalorder %s41, 0
      %p220 = por %p218, %p219
      %s222 = sadd.s32 %s221, 1
      %p225 = scmp.eq.s32.totalorder %s35, 1
      %p226 = scmp.ne.s32.totalorder %s221, %s223
      %p227 = scmp.eq.s32.totalorder %s35, 0
      %p228 = por %p226, %p227
      %p229 = scmp.ne.s32.totalorder %s221, %s223
      %p230 = scmp.eq.s32.totalorder %s40, 1
      %p231 = por %p229, %p230
      %p232 = scmp.ne.s32.totalorder %s223, %s224
      %p233 = scmp.eq.s32.totalorder %s40, 0
      %p234 = por %p232, %p233
      %p235 = scmp.ne.s32.totalorder %s223, %s224
      %p236 = scmp.eq.s32.totalorder %s41, 1
      %p237 = por %p235, %p236
      %p239 = scmp.ne.s32.totalorder %s224, %s238
      %p240 = scmp.eq.s32.totalorder %s41, 0
      %p241 = por %p239, %p240
      %s243 = sadd.s32 %s242, 1
      %p246 = scmp.eq.s32.totalorder %s35, 1
      %p247 = scmp.ne.s32.totalorder %s242, %s244
      %p248 = scmp.eq.s32.totalorder %s35, 0
      %p249 = por %p247, %p248
      %p250 = scmp.ne.s32.totalorder %s242, %s244
      %p251 = scmp.eq.s32.totalorder %s40, 1
      %p252 = por %p250, %p251
      %p253 = scmp.ne.s32.totalorder %s244, %s245
      %p254 = scmp.eq.s32.totalorder %s40, 0
      %p255 = por %p253, %p254
      %p256 = scmp.ne.s32.totalorder %s244, %s245
      %p257 = scmp.eq.s32.totalorder %s41, 1
      %p258 = por %p256, %p257
      %p260 = scmp.ne.s32.totalorder %s245, %s259
      %p261 = scmp.eq.s32.totalorder %s41, 0
      %p262 = por %p260, %p261
      %s264 = sadd.s32 %s263, 1
      %p267 = scmp.eq.s32.totalorder %s35, 1
      %p268 = scmp.ne.s32.totalorder %s263, %s265
      %p269 = scmp.eq.s32.totalorder %s35, 0
      %p270 = por %p268, %p269
      %p271 = scmp.ne.s32.totalorder %s263, %s265
      %p272 = scmp.eq.s32.totalorder %s40, 1
      %p273 = por %p271, %p272
      %p274 = scmp.ne.s32.totalorder %s265, %s266
      %p275 = scmp.eq.s32.totalorder %s40, 0
      %p276 = por %p274, %p275
      %p277 = scmp.ne.s32.totalorder %s265, %s266
      %p278 = scmp.eq.s32.totalorder %s41, 1
      %p279 = por %p277, %p278
      %p281 = scmp.ne.s32.totalorder %s266, %s280
      %p282 = scmp.eq.s32.totalorder %s41, 0
      %p283 = por %p281, %p282
      %s285 = sadd.s32 %s284, 1
      %p288 = scmp.eq.s32.totalorder %s35, 1
      %p289 = scmp.ne.s32.totalorder %s284, %s286
      %p290 = scmp.eq.s32.totalorder %s35, 0
      %p291 = por %p289, %p290
      %p292 = scmp.ne.s32.totalorder %s284, %s286
      %p293 = scmp.eq.s32.totalorder %s40, 1
      %p294 = por %p292, %p293
      %p295 = scmp.ne.s32.totalorder %s286, %s287
      %p296 = scmp.eq.s32.totalorder %s40, 0
      %p297 = por %p295, %p296
      %p298 = scmp.ne.s32.totalorder %s286, %s287
      %p299 = scmp.eq.s32.totalorder %s41, 1
      %p300 = por %p298, %p299
      %p302 = scmp.ne.s32.totalorder %s287, %s301
      %p303 = scmp.eq.s32.totalorder %s41, 0
      %p304 = por %p302, %p303
      %s305 = ssub.s32 %s35, %s42
      %p306 = scmp.eq.s32.totalorder %s305, 0
      %s308 = sadd.s32 %s307, 1
      %s309 = scalar_select %p306, %s307, %s308
      %p312 = pneg %p306
      %p313 = scmp.eq.s32.totalorder %s35, 1
      %p314 = por %p312, %p313
      %p315 = scmp.ne.s32.totalorder %s307, %s310
      %p316 = scmp.eq.s32.totalorder %s35, 0
      %p317 = por %p315, %p316
      %p318 = scmp.ne.s32.totalorder %s307, %s310
      %p319 = scmp.eq.s32.totalorder %s40, 1
      %p320 = por %p318, %p319
      %p321 = scmp.ne.s32.totalorder %s310, %s311
      %p322 = scmp.eq.s32.totalorder %s40, 0
      %p323 = por %p321, %p322
      %p324 = scmp.ne.s32.totalorder %s310, %s311
      %p325 = scmp.eq.s32.totalorder %s41, 1
      %p326 = por %p324, %p325
      %p328 = scmp.ne.s32.totalorder %s311, %s327
      %p329 = scmp.eq.s32.totalorder %s41, 0
      %p330 = por %p328, %p329
      %s331 = ssub.s32 %s35, %s42
      %p332 = scmp.eq.s32.totalorder %s331, 0
      %s334 = sadd.s32 %s333, 1
      %s335 = scalar_select %p332, %s333, %s334
      %p338 = pneg %p332
      %p339 = scmp.eq.s32.totalorder %s35, 1
      %p340 = por %p338, %p339
      %p341 = scmp.ne.s32.totalorder %s333, %s336
      %p342 = scmp.eq.s32.totalorder %s35, 0
      %p343 = por %p341, %p342
      %p344 = scmp.ne.s32.totalorder %s333, %s336
      %p345 = scmp.eq.s32.totalorder %s40, 1
      %p346 = por %p344, %p345
      %p347 = scmp.ne.s32.totalorder %s336, %s337
      %p348 = scmp.eq.s32.totalorder %s40, 0
      %p349 = por %p347, %p348
      %p350 = scmp.ne.s32.totalorder %s336, %s337
      %p351 = scmp.eq.s32.totalorder %s41, 1
      %p352 = por %p350, %p351
      %p354 = scmp.ne.s32.totalorder %s337, %s353
      %p355 = scmp.eq.s32.totalorder %s41, 0
      %p356 = por %p354, %p355
      %p357 = scmp.le.s32.totalorder 1, %s35
      %p358 = scmp.lt.s32.totalorder %s35, 3
      %p359 = pnand %p357, %p358
      %p360 = pneg %p359
      // Predicated region
      $region9: #{tpu_custom_call.1} parent=5 // pred_check
        _
      $region10: #{tpu_custom_call.1} parent=5 // pred_check_branch
        %362 = sbr.rel (%p359) target = $region12
      $region11: #{tpu_custom_call.1} parent=5 // pred_region
        %s363 = ssub.s32 %s35, 1
        // Predicated region
        $region13: #{tpu_custom_call.1} parent=11 // pred_check
          %p364 = pneg %p108
        $region14: #{tpu_custom_call.1} parent=11 // pred_check_branch
          %366 = sbr.rel (%p364) target = $region16
        $region15: #{tpu_custom_call.1} parent=11 // pred_region
          %s368 = ssub.s32 8192, 8192
          %369 = vsyncadd [#allocation6], %s368
          %s370 = sshll.u32 [#allocation7], 4
          %s371 = int_to_ptr.vmem [resolvable:$true] %s370
          %376 = dma.hbm_to_vmem [thread:$0]  %s2, 8192, %s371, [#allocation6], 256, 256, 16
        $region16: #{tpu_custom_call.1} parent=11 // pred_fallthru
          _
        // Predicated region
        $region17: #{tpu_custom_call.1} parent=11 // pred_check
          %p377 = pneg %p129
        $region18: #{tpu_custom_call.1} parent=11 // pred_check_branch
          %379 = sbr.rel (%p377) target = $region20
        $region19: #{tpu_custom_call.1} parent=11 // pred_region
          %s381 = ssub.s32 4096, 4096
          %382 = vsyncadd [#allocation9], %s381
          %s383 = sshll.u32 [#allocation8], 4
          %s384 = int_to_ptr.vmem [resolvable:$true] %s383
          %389 = dma.hbm_to_vmem [thread:$0]  %s3, 4096, %s384, [#allocation9], 128, 128, 8
        $region20: #{tpu_custom_call.1} parent=11 // pred_fallthru
          _
        // Predicated region
        $region21: #{tpu_custom_call.1} parent=11 // pred_check
          %p390 = pneg %p150
        $region22: #{tpu_custom_call.1} parent=11 // pred_check_branch
          %392 = sbr.rel (%p390) target = $region24
        $region23: #{tpu_custom_call.1} parent=11 // pred_region
          _
        $region24: #{tpu_custom_call.1} parent=11 // pred_fallthru
          _
        // Predicated region
        $region25: #{tpu_custom_call.1} parent=11 // pred_check
          %p393 = pneg %p171
        $region26: #{tpu_custom_call.1} parent=11 // pred_check_branch
          %395 = sbr.rel (%p393) target = $region28
        $region27: #{tpu_custom_call.1} parent=11 // pred_region
          %s397 = ssub.s32 4096, 4096
          %398 = vsyncadd [#allocation9], %s397
          %s399 = sshll.u32 [#allocation10], 4
          %s400 = int_to_ptr.vmem [resolvable:$true] %s399
          %405 = dma.hbm_to_vmem [thread:$0]  %s5, 4096, %s400, [#allocation9], 128, 128, 8
        $region28: #{tpu_custom_call.1} parent=11 // pred_fallthru
          _
        // Predicated region
        $region29: #{tpu_custom_call.1} parent=11 // pred_check
          %p406 = pneg %p192
        $region30: #{tpu_custom_call.1} parent=11 // pred_check_branch
          %408 = sbr.rel (%p406) target = $region32
        $region31: #{tpu_custom_call.1} parent=11 // pred_region
          _
        $region32: #{tpu_custom_call.1} parent=11 // pred_fallthru
          _
        // Predicated region
        $region33: #{tpu_custom_call.1} parent=11 // pred_check
          %p409 = pneg %p213
        $region34: #{tpu_custom_call.1} parent=11 // pred_check_branch
          %411 = sbr.rel (%p409) target = $region36
        $region35: #{tpu_custom_call.1} parent=11 // pred_region
          %s413 = ssub.s32 8192, 8192
          %414 = vsyncadd [#allocation12], %s413
          %s415 = sshll.u32 [#allocation11], 4
          %s416 = int_to_ptr.vmem [resolvable:$true] %s415
          %421 = dma.hbm_to_vmem [thread:$0]  %s7, 8192, %s416, [#allocation12], 256, 256, 16
        $region36: #{tpu_custom_call.1} parent=11 // pred_fallthru
          _
        // Predicated region
        $region37: #{tpu_custom_call.1} parent=11 // pred_check
          %p422 = pneg %p234
        $region38: #{tpu_custom_call.1} parent=11 // pred_check_branch
          %424 = sbr.rel (%p422) target = $region40
        $region39: #{tpu_custom_call.1} parent=11 // pred_region
          %s426 = ssub.s32 4096, 4096
          %427 = vsyncadd [#allocation12], %s426
          %s428 = sshll.u32 [#allocation13], 4
          %s429 = int_to_ptr.vmem [resolvable:$true] %s428
          %434 = dma.hbm_to_vmem [thread:$0]  %s8, 4096, %s429, [#allocation12], 256, 256, 16
        $region40: #{tpu_custom_call.1} parent=11 // pred_fallthru
          _
        // Predicated region
        $region41: #{tpu_custom_call.1} parent=11 // pred_check
          %p435 = pneg %p255
        $region42: #{tpu_custom_call.1} parent=11 // pred_check_branch
          %437 = sbr.rel (%p435) target = $region44
        $region43: #{tpu_custom_call.1} parent=11 // pred_region
          %s439 = ssub.s32 2048, 2048
          %440 = vsyncadd [#allocation15], %s439
          %s441 = sshll.u32 [#allocation14], 4
          %s442 = int_to_ptr.vmem [resolvable:$true] %s441
          %447 = dma.hbm_to_vmem [thread:$0]  %s9, 2048, %s442, [#allocation15], 128, 128, 8
        $region44: #{tpu_custom_call.1} parent=11 // pred_fallthru
          _
        // Predicated region
        $region45: #{tpu_custom_call.1} parent=11 // pred_check
          %p448 = pneg %p276
        $region46: #{tpu_custom_call.1} parent=11 // pred_check_branch
          %450 = sbr.rel (%p448) target = $region48
        $region47: #{tpu_custom_call.1} parent=11 // pred_region
          %s452 = ssub.s32 8192, 8192
          %453 = vsyncadd [#allocation15], %s452
          %s454 = sshll.u32 [#allocation16], 4
          %s455 = int_to_ptr.vmem [resolvable:$true] %s454
          %460 = dma.hbm_to_vmem [thread:$0]  %s10, 8192, %s455, [#allocation15], 256, 256, 16
        $region48: #{tpu_custom_call.1} parent=11 // pred_fallthru
          _
        // Predicated region
        $region49: #{tpu_custom_call.1} parent=11 // pred_check
          %p461 = pneg %p297
        $region50: #{tpu_custom_call.1} parent=11 // pred_check_branch
          %463 = sbr.rel (%p461) target = $region52
        $region51: #{tpu_custom_call.1} parent=11 // pred_region
          _
        $region52: #{tpu_custom_call.1} parent=11 // pred_fallthru
          _
      $region12: #{tpu_custom_call.1} parent=5 // pred_fallthru
        _
      %p464 = scmp.lt.s32.totalorder %s35, 2
      // Predicated region
      $region53: #{tpu_custom_call.1} parent=5 // pred_check
        %p465 = pneg %p464
      $region54: #{tpu_custom_call.1} parent=5 // pred_check_branch
        %467 = sbr.rel (%p465) target = $region56
      $region55: #{tpu_custom_call.1} parent=5 // pred_region
        // Predicated region
        $region57: #{tpu_custom_call.1} parent=55 // pred_check
          %p468 = pneg %p55
        $region58: #{tpu_custom_call.1} parent=55 // pred_check_branch
          %470 = sbr.rel (%p468) target = $region60
        $region59: #{tpu_custom_call.1} parent=55 // pred_region
          %s471 = sand.u32 %s45, 1
          %s472 = scalar_lea.sflag [#allocation3], %s471
          %s473 = sand.u32 %s45, 1
          %s474 = smul.addr %s473, 32
          %s475 = scalar_lea.vmem [#allocation2], %s474
          %s477 = ssub.s32 512, 512
          %478 = vsyncadd %s472, %s477
          %s479 = smul.addr %s35, 4
          %s480 = smul.addr %s479, 128
          %s481 = scalar_lea.hbm %s0, %s480
          %s482 = sshll.u32 %s475, 4
          %s483 = int_to_ptr.vmem [resolvable:$true] %s482
          %488 = dma.hbm_to_vmem [thread:$0]  %s481, 512, %s483, %s472, 256, 256, 16
        $region60: #{tpu_custom_call.1} parent=55 // pred_fallthru
          _
        // Predicated region
        $region61: #{tpu_custom_call.1} parent=55 // pred_check
          %p489 = pneg %p81
        $region62: #{tpu_custom_call.1} parent=55 // pred_check_branch
          %491 = sbr.rel (%p489) target = $region64
        $region63: #{tpu_custom_call.1} parent=55 // pred_region
          %s492 = sand.u32 %s35, 1
          %s493 = scalar_lea.sflag [#allocation6], %s492
          %s494 = sand.u32 %s71, 1
          %s495 = smul.addr %s494, 32
          %s496 = scalar_lea.vmem [#allocation5], %s495
          %s498 = ssub.s32 512, 512
          %499 = vsyncadd %s493, %s498
          %s500 = smul.addr %s35, 4
          %s501 = smul.addr %s500, 128
          %s502 = scalar_lea.hbm %s1, %s501
          %s503 = sshll.u32 %s496, 4
          %s504 = int_to_ptr.vmem [resolvable:$true] %s503
          %509 = dma.hbm_to_vmem [thread:$0]  %s502, 512, %s504, %s493, 256, 256, 16
        $region64: #{tpu_custom_call.1} parent=55 // pred_fallthru
          _
      $region56: #{tpu_custom_call.1} parent=5 // pred_fallthru
        _
      %p510 = scmp.le.s32.totalorder 1, %s35
      %p511 = scmp.lt.s32.totalorder %s35, 3
      %p512 = pnand %p510, %p511
      %p513 = pneg %p512
      // Predicated region
      $region65: #{tpu_custom_call.1} parent=5 // pred_check
        _
      $region66: #{tpu_custom_call.1} parent=5 // pred_check_branch
        %515 = sbr.rel (%p512) target = $region68
      $region67: #{tpu_custom_call.1} parent=5 // pred_region
        %s516 = ssub.s32 %s35, 1
        %s517 = sand.u32 %s48, 1
        %s518 = scalar_lea.sflag [#allocation3], %s517
        %s519 = sand.u32 %s48, 1
        %s520 = smul.addr %s519, 32
        %s521 = scalar_lea.vmem [#allocation2], %s520
        // Predicated region
        $region69: #{tpu_custom_call.1} parent=67 // pred_check
          %p522 = pneg %p61
        $region70: #{tpu_custom_call.1} parent=67 // pred_check_branch
          %524 = sbr.rel (%p522) target = $region72
        $region71: #{tpu_custom_call.1} parent=67 // pred_region
          %525 = dma.done %s518, 512
        $region72: #{tpu_custom_call.1} parent=67 // pred_fallthru
          _
        %s526 = sand.u32 %s40, 1
        %s527 = scalar_lea.sflag [#allocation6], %s526
        %s528 = sand.u32 %s74, 1
        %s529 = smul.addr %s528, 32
        %s530 = scalar_lea.vmem [#allocation5], %s529
        // Predicated region
        $region73: #{tpu_custom_call.1} parent=67 // pred_check
          %p531 = pneg %p87
        $region74: #{tpu_custom_call.1} parent=67 // pred_check_branch
          %533 = sbr.rel (%p531) target = $region76
        $region75: #{tpu_custom_call.1} parent=67 // pred_region
          %534 = dma.done %s527, 512
        $region76: #{tpu_custom_call.1} parent=67 // pred_fallthru
          _
        // Predicated region
        $region77: #{tpu_custom_call.1} parent=67 // pred_check
          %p535 = pneg %p108
        $region78: #{tpu_custom_call.1} parent=67 // pred_check_branch
          %537 = sbr.rel (%p535) target = $region80
        $region79: #{tpu_custom_call.1} parent=67 // pred_region
          %538 = dma.done [#allocation6], 8192
        $region80: #{tpu_custom_call.1} parent=67 // pred_fallthru
          _
        // Predicated region
        $region81: #{tpu_custom_call.1} parent=67 // pred_check
          %p539 = pneg %p129
        $region82: #{tpu_custom_call.1} parent=67 // pred_check_branch
          %541 = sbr.rel (%p539) target = $region84
        $region83: #{tpu_custom_call.1} parent=67 // pred_region
          %542 = dma.done [#allocation9], 4096
        $region84: #{tpu_custom_call.1} parent=67 // pred_fallthru
          _
        // Predicated region
        $region85: #{tpu_custom_call.1} parent=67 // pred_check
          %p543 = pneg %p171
        $region86: #{tpu_custom_call.1} parent=67 // pred_check_branch
          %545 = sbr.rel (%p543) target = $region88
        $region87: #{tpu_custom_call.1} parent=67 // pred_region
          %546 = dma.done [#allocation9], 4096
        $region88: #{tpu_custom_call.1} parent=67 // pred_fallthru
          _
        // Predicated region
        $region89: #{tpu_custom_call.1} parent=67 // pred_check
          %p547 = pneg %p213
        $region90: #{tpu_custom_call.1} parent=67 // pred_check_branch
          %549 = sbr.rel (%p547) target = $region92
        $region91: #{tpu_custom_call.1} parent=67 // pred_region
          %550 = dma.done [#allocation12], 8192
        $region92: #{tpu_custom_call.1} parent=67 // pred_fallthru
          _
        // Predicated region
        $region93: #{tpu_custom_call.1} parent=67 // pred_check
          %p551 = pneg %p234
        $region94: #{tpu_custom_call.1} parent=67 // pred_check_branch
          %553 = sbr.rel (%p551) target = $region96
        $region95: #{tpu_custom_call.1} parent=67 // pred_region
          %554 = dma.done [#allocation12], 4096
        $region96: #{tpu_custom_call.1} parent=67 // pred_fallthru
          _
        // Predicated region
        $region97: #{tpu_custom_call.1} parent=67 // pred_check
          %p555 = pneg %p255
        $region98: #{tpu_custom_call.1} parent=67 // pred_check_branch
          %557 = sbr.rel (%p555) target = $region100
        $region99: #{tpu_custom_call.1} parent=67 // pred_region
          %558 = dma.done [#allocation15], 2048
        $region100: #{tpu_custom_call.1} parent=67 // pred_fallthru
          _
        // Predicated region
        $region101: #{tpu_custom_call.1} parent=67 // pred_check
          %p559 = pneg %p276
        $region102: #{tpu_custom_call.1} parent=67 // pred_check_branch
          %561 = sbr.rel (%p559) target = $region104
        $region103: #{tpu_custom_call.1} parent=67 // pred_region
          %562 = dma.done [#allocation15], 8192
        $region104: #{tpu_custom_call.1} parent=67 // pred_fallthru
          _
        %s563 = sand.u32 %s48, 1
        %s564 = scalar_lea.sflag [#allocation3], %s563
        %s565 = sand.u32 %s48, 1
        %s566 = smul.addr %s565, 32
        %s567 = scalar_lea.vmem [#allocation2], %s566
        %p568 = pneg %p61
        %p569 = pneg %p58
        %s570 = sand.u32 %s40, 1
        %s571 = scalar_lea.sflag [#allocation6], %s570
        %s572 = sand.u32 %s74, 1
        %s573 = smul.addr %s572, 32
        %s574 = scalar_lea.vmem [#allocation5], %s573
        %p575 = pneg %p87
        %p576 = pneg %p84
        %p577 = pneg %p108
        %p578 = pneg %p105
        %p579 = pneg %p129
        %p580 = pneg %p126
        %p581 = pneg %p150
        %p582 = pneg %p147
        %p583 = pneg %p171
        %p584 = pneg %p168
        %p585 = pneg %p192
        %p586 = pneg %p189
        %p587 = pneg %p213
        %p588 = pneg %p210
        %p589 = pneg %p234
        %p590 = pneg %p231
        %p591 = pneg %p255
        %p592 = pneg %p252
        %p593 = pneg %p276
        %p594 = pneg %p273
        %p595 = pneg %p297
        %p596 = pneg %p294
        %p597 = pneg %p323
        %p598 = pneg %p320
        %s599 = sand.u32 %s310, 1
        %s600 = scalar_lea.sflag [#allocation4], %s599
        %s601 = sand.u32 %s310, 1
        %s602 = smul.addr %s601, 32
        %s603 = scalar_lea.vmem [#allocation17], %s602
        %p604 = pneg %p349
        %p605 = pneg %p346
        %s606 = sand.u32 %s336, 1
        %s607 = scalar_lea.sflag [#allocation19], %s606
        %s608 = sand.u32 %s336, 1
        %s609 = smul.addr %s608, 32
        %s610 = scalar_lea.vmem [#allocation18], %s609
        %v611 = vld [vmem:[%s521] sm:$0xff]
        %v612 = vld [vmem:[%s521 + $0x8] sm:$0xff]
        %v613 = vld [vmem:[%s521 + $0x10] sm:$0xff]
        %v614 = vld [vmem:[%s521 + $0x18] sm:$0xff]
        %v615 = vld [vmem:[%s530] sm:$0xff]
        %v616 = vld [vmem:[%s530 + $0x8] sm:$0xff]
        %v617 = vld [vmem:[%s530 + $0x10] sm:$0xff]
        %v618 = vld [vmem:[%s530 + $0x18] sm:$0xff]
        %v619 = vld [vmem:[#allocation7] sm:$0xff]
        %v620 = vld [vmem:[#allocation7 + $0x8] sm:$0xff]
        %v621 = vld [vmem:[#allocation7 + $0x10] sm:$0xff]
        %v622 = vld [vmem:[#allocation7 + $0x18] sm:$0xff]
        %v623 = vld [vmem:[#allocation7 + $0x20] sm:$0xff]
        %v624 = vld [vmem:[#allocation7 + $0x28] sm:$0xff]
        %v625 = vld [vmem:[#allocation7 + $0x30] sm:$0xff]
        %v626 = vld [vmem:[#allocation7 + $0x38] sm:$0xff]
        %v627 = vld [vmem:[#allocation7 + $0x40] sm:$0xff]
        %v628 = vld [vmem:[#allocation7 + $0x48] sm:$0xff]
        %v629 = vld [vmem:[#allocation7 + $0x50] sm:$0xff]
        %v630 = vld [vmem:[#allocation7 + $0x58] sm:$0xff]
        %v631 = vld [vmem:[#allocation7 + $0x60] sm:$0xff]
        %v632 = vld [vmem:[#allocation7 + $0x68] sm:$0xff]
        %v633 = vld [vmem:[#allocation7 + $0x70] sm:$0xff]
        %v634 = vld [vmem:[#allocation7 + $0x78] sm:$0xff]
        %v635 = vld [vmem:[#allocation7 + $0x80] sm:$0xff]
        %v636 = vld [vmem:[#allocation7 + $0x88] sm:$0xff]
        %v637 = vld [vmem:[#allocation7 + $0x90] sm:$0xff]
        %v638 = vld [vmem:[#allocation7 + $0x98] sm:$0xff]
        %v639 = vld [vmem:[#allocation7 + $0xa0] sm:$0xff]
        %v640 = vld [vmem:[#allocation7 + $0xa8] sm:$0xff]
        %v641 = vld [vmem:[#allocation7 + $0xb0] sm:$0xff]
        %v642 = vld [vmem:[#allocation7 + $0xb8] sm:$0xff]
        %v643 = vld [vmem:[#allocation7 + $0xc0] sm:$0xff]
        %v644 = vld [vmem:[#allocation7 + $0xc8] sm:$0xff]
        %v645 = vld [vmem:[#allocation7 + $0xd0] sm:$0xff]
        %v646 = vld [vmem:[#allocation7 + $0xd8] sm:$0xff]
        %v647 = vld [vmem:[#allocation7 + $0xe0] sm:$0xff]
        %v648 = vld [vmem:[#allocation7 + $0xe8] sm:$0xff]
        %v649 = vld [vmem:[#allocation7 + $0xf0] sm:$0xff]
        %v650 = vld [vmem:[#allocation7 + $0xf8] sm:$0xff]
        %v651 = vld [vmem:[#allocation7 + $0x100] sm:$0xff]
        %v652 = vld [vmem:[#allocation7 + $0x108] sm:$0xff]
        %v653 = vld [vmem:[#allocation7 + $0x110] sm:$0xff]
        %v654 = vld [vmem:[#allocation7 + $0x118] sm:$0xff]
        %v655 = vld [vmem:[#allocation7 + $0x120] sm:$0xff]
        %v656 = vld [vmem:[#allocation7 + $0x128] sm:$0xff]
        %v657 = vld [vmem:[#allocation7 + $0x130] sm:$0xff]
        %v658 = vld [vmem:[#allocation7 + $0x138] sm:$0xff]
        %v659 = vld [vmem:[#allocation7 + $0x140] sm:$0xff]
        %v660 = vld [vmem:[#allocation7 + $0x148] sm:$0xff]
        %v661 = vld [vmem:[#allocation7 + $0x150] sm:$0xff]
        %v662 = vld [vmem:[#allocation7 + $0x158] sm:$0xff]
        %v663 = vld [vmem:[#allocation7 + $0x160] sm:$0xff]
        %v664 = vld [vmem:[#allocation7 + $0x168] sm:$0xff]
        %v665 = vld [vmem:[#allocation7 + $0x170] sm:$0xff]
        %v666 = vld [vmem:[#allocation7 + $0x178] sm:$0xff]
        %v667 = vld [vmem:[#allocation7 + $0x180] sm:$0xff]
        %v668 = vld [vmem:[#allocation7 + $0x188] sm:$0xff]
        %v669 = vld [vmem:[#allocation7 + $0x190] sm:$0xff]
        %v670 = vld [vmem:[#allocation7 + $0x198] sm:$0xff]
        %v671 = vld [vmem:[#allocation7 + $0x1a0] sm:$0xff]
        %v672 = vld [vmem:[#allocation7 + $0x1a8] sm:$0xff]
        %v673 = vld [vmem:[#allocation7 + $0x1b0] sm:$0xff]
        %v674 = vld [vmem:[#allocation7 + $0x1b8] sm:$0xff]
        %v675 = vld [vmem:[#allocation7 + $0x1c0] sm:$0xff]
        %v676 = vld [vmem:[#allocation7 + $0x1c8] sm:$0xff]
        %v677 = vld [vmem:[#allocation7 + $0x1d0] sm:$0xff]
        %v678 = vld [vmem:[#allocation7 + $0x1d8] sm:$0xff]
        %v679 = vld [vmem:[#allocation7 + $0x1e0] sm:$0xff]
        %v680 = vld [vmem:[#allocation7 + $0x1e8] sm:$0xff]
        %v681 = vld [vmem:[#allocation7 + $0x1f0] sm:$0xff]
        %v682 = vld [vmem:[#allocation7 + $0x1f8] sm:$0xff]
        %683 = vmatprep.subr.mxu0 %v620
        %684 = vmatpush1.msra.mxu0 %v619
        %685 = vmatprep.subr.mxu0 %v622
        %686 = vmatpush1.msra.mxu0 %v621
        %687 = vmatprep.subr.mxu0 %v624
        %688 = vmatpush1.msra.mxu0 %v623
        %689 = vmatprep.subr.mxu0 %v626
        %690 = vmatpush1.msra.mxu0 %v625
        %691 = vmatprep.subr.mxu0 %v628
        %692 = vmatpush1.msra.mxu0 %v627
        %693 = vmatprep.subr.mxu0 %v630
        %694 = vmatpush1.msra.mxu0 %v629
        %695 = vmatprep.subr.mxu0 %v632
        %696 = vmatpush1.msra.mxu0 %v631
        %697 = vmatprep.subr.mxu0 %v634
        %698 = vmatpush1.msra.mxu0 %v633
        %699 = vmatprep.subr.mxu0 %v636
        %700 = vmatpush1.msra.mxu0 %v635
        %701 = vmatprep.subr.mxu0 %v638
        %702 = vmatpush1.msra.mxu0 %v637
        %703 = vmatprep.subr.mxu0 %v640
        %704 = vmatpush1.msra.mxu0 %v639
        %705 = vmatprep.subr.mxu0 %v642
        %706 = vmatpush1.msra.mxu0 %v641
        %707 = vmatprep.subr.mxu0 %v644
        %708 = vmatpush1.msra.mxu0 %v643
        %709 = vmatprep.subr.mxu0 %v646
        %710 = vmatpush1.msra.mxu0 %v645
        %711 = vmatprep.subr.mxu0 %v648
        %712 = vmatpush1.msra.mxu0 %v647
        %713 = vmatprep.subr.mxu0 %v650
        %714 = vmatpush1.msra.mxu0 %v649
        %715 = vmatprep.subr.mxu0 %v652
        %716 = vmatpush1.msra.mxu0 %v651
        %717 = vmatprep.subr.mxu0 %v654
        %718 = vmatpush1.msra.mxu0 %v653
        %719 = vmatprep.subr.mxu0 %v656
        %720 = vmatpush1.msra.mxu0 %v655
        %721 = vmatprep.subr.mxu0 %v658
        %722 = vmatpush1.msra.mxu0 %v657
        %723 = vmatprep.subr.mxu0 %v660
        %724 = vmatpush1.msra.mxu0 %v659
        %725 = vmatprep.subr.mxu0 %v662
        %726 = vmatpush1.msra.mxu0 %v661
        %727 = vmatprep.subr.mxu0 %v664
        %728 = vmatpush1.msra.mxu0 %v663
        %729 = vmatprep.subr.mxu0 %v666
        %730 = vmatpush1.msra.mxu0 %v665
        %731 = vmatprep.subr.mxu0 %v668
        %732 = vmatpush1.msra.mxu0 %v667
        %733 = vmatprep.subr.mxu0 %v670
        %734 = vmatpush1.msra.mxu0 %v669
        %735 = vmatprep.subr.mxu0 %v672
        %736 = vmatpush1.msra.mxu0 %v671
        %737 = vmatprep.subr.mxu0 %v674
        %738 = vmatpush1.msra.mxu0 %v673
        %739 = vmatprep.subr.mxu0 %v676
        %740 = vmatpush1.msra.mxu0 %v675
        %741 = vmatprep.subr.mxu0 %v678
        %742 = vmatpush1.msra.mxu0 %v677
        %743 = vmatprep.subr.mxu0 %v680
        %744 = vmatpush1.msra.mxu0 %v679
        %745 = vmatprep.subr.mxu0 %v682
        %746 = vmatpush1.msra.mxu0 %v681
        %747 = vmatprep.mubr.f32.mxu0 %v612
        %748 = vmatmul.mubr.f32.gmra.mrb[0].mxu0 %v611
        %v749 = vpop.f32.mrb[0].mxu0
        %v750 = vadd.f32 0.0, %v749
        %v751 = vpop.f32.mrb[0].mxu0
        %v752 = vadd.f32 0.0, %v751
        %753 = vmatprep.mubr.f32.mxu0 %v614
        %754 = vmatmul.mubr.f32.gmra.mrb[0].mxu0 %v613
        %v755 = vpop.f32.mrb[0].mxu0
        %v756 = vadd.f32 0.0, %v755
        %v757 = vpop.f32.mrb[0].mxu0
        %v758 = vadd.f32 0.0, %v757
        %759 = vmatprep.mubr.f32.mxu0 %v616
        %760 = vmatmul.mubr.f32.gmra.mrb[0].mxu0 %v615
        %v761 = vpop.f32.mrb[0].mxu0
        %v762 = vadd.f32 0.0, %v761
        %v763 = vpop.f32.mrb[0].mxu0
        %v764 = vadd.f32 0.0, %v763
        %765 = vmatprep.mubr.f32.mxu0 %v618
        %766 = vmatmul.mubr.f32.gmra.mrb[0].mxu0 %v617
        %v767 = vpop.f32.mrb[0].mxu0
        %v768 = vadd.f32 0.0, %v767
        %v769 = vpop.f32.mrb[0].mxu0
        %v770 = vadd.f32 0.0, %v769
        %771 = vdwg.mxu0
        %v772 = vmul.f32 %v611, %v611
        %v773 = vmul.f32 %v612, %v612
        %v774 = vmul.f32 %v613, %v613
        %v775 = vmul.f32 %v614, %v614
        %v776 = vmul.f32 %v615, %v615
        %v777 = vmul.f32 %v616, %v616
        %v778 = vmul.f32 %v617, %v617
        %v779 = vmul.f32 %v618, %v618
        %780 = vmatprep.subr.mxu0 %v620
        %781 = vmatpush1.msra.mxu0 %v619
        %782 = vmatprep.subr.mxu0 %v622
        %783 = vmatpush1.msra.mxu0 %v621
        %784 = vmatprep.subr.mxu0 %v624
        %785 = vmatpush1.msra.mxu0 %v623
        %786 = vmatprep.subr.mxu0 %v626
        %787 = vmatpush1.msra.mxu0 %v625
        %788 = vmatprep.subr.mxu0 %v628
        %789 = vmatpush1.msra.mxu0 %v627
        %790 = vmatprep.subr.mxu0 %v630
        %791 = vmatpush1.msra.mxu0 %v629
        %792 = vmatprep.subr.mxu0 %v632
        %793 = vmatpush1.msra.mxu0 %v631
        %794 = vmatprep.subr.mxu0 %v634
        %795 = vmatpush1.msra.mxu0 %v633
        %796 = vmatprep.subr.mxu0 %v636
        %797 = vmatpush1.msra.mxu0 %v635
        %798 = vmatprep.subr.mxu0 %v638
        %799 = vmatpush1.msra.mxu0 %v637
        %800 = vmatprep.subr.mxu0 %v640
        %801 = vmatpush1.msra.mxu0 %v639
        %802 = vmatprep.subr.mxu0 %v642
        %803 = vmatpush1.msra.mxu0 %v641
        %804 = vmatprep.subr.mxu0 %v644
        %805 = vmatpush1.msra.mxu0 %v643
        %806 = vmatprep.subr.mxu0 %v646
        %807 = vmatpush1.msra.mxu0 %v645
        %808 = vmatprep.subr.mxu0 %v648
        %809 = vmatpush1.msra.mxu0 %v647
        %810 = vmatprep.subr.mxu0 %v650
        %811 = vmatpush1.msra.mxu0 %v649
        %812 = vmatprep.subr.mxu0 %v652
        %813 = vmatpush1.msra.mxu0 %v651
        %814 = vmatprep.subr.mxu0 %v654
        %815 = vmatpush1.msra.mxu0 %v653
        %816 = vmatprep.subr.mxu0 %v656
        %817 = vmatpush1.msra.mxu0 %v655
        %818 = vmatprep.subr.mxu0 %v658
        %819 = vmatpush1.msra.mxu0 %v657
        %820 = vmatprep.subr.mxu0 %v660
        %821 = vmatpush1.msra.mxu0 %v659
        %822 = vmatprep.subr.mxu0 %v662
        %823 = vmatpush1.msra.mxu0 %v661
        %824 = vmatprep.subr.mxu0 %v664
        %825 = vmatpush1.msra.mxu0 %v663
        %826 = vmatprep.subr.mxu0 %v666
        %827 = vmatpush1.msra.mxu0 %v665
        %828 = vmatprep.subr.mxu0 %v668
        %829 = vmatpush1.msra.mxu0 %v667
        %830 = vmatprep.subr.mxu0 %v670
        %831 = vmatpush1.msra.mxu0 %v669
        %832 = vmatprep.subr.mxu0 %v672
        %833 = vmatpush1.msra.mxu0 %v671
        %834 = vmatprep.subr.mxu0 %v674
        %835 = vmatpush1.msra.mxu0 %v673
        %836 = vmatprep.subr.mxu0 %v676
        %837 = vmatpush1.msra.mxu0 %v675
        %838 = vmatprep.subr.mxu0 %v678
        %839 = vmatpush1.msra.mxu0 %v677
        %840 = vmatprep.subr.mxu0 %v680
        %841 = vmatpush1.msra.mxu0 %v679
        %842 = vmatprep.subr.mxu0 %v682
        %843 = vmatpush1.msra.mxu0 %v681
        %844 = vmatprep.mubr.f32.mxu0 %v773
        %845 = vmatmul.mubr.f32.gmra.mrb[0].mxu0 %v772
        %v846 = vpop.f32.mrb[0].mxu0
        %v847 = vadd.f32 0.0, %v846
        %v848 = vpop.f32.mrb[0].mxu0
        %v849 = vadd.f32 0.0, %v848
        %850 = vmatprep.mubr.f32.mxu0 %v775
        %851 = vmatmul.mubr.f32.gmra.mrb[0].mxu0 %v774
        %v852 = vpop.f32.mrb[0].mxu0
        %v853 = vadd.f32 0.0, %v852
        %v854 = vpop.f32.mrb[0].mxu0
        %v855 = vadd.f32 0.0, %v854
        %856 = vmatprep.mubr.f32.mxu0 %v777
        %857 = vmatmul.mubr.f32.gmra.mrb[0].mxu0 %v776
        %v858 = vpop.f32.mrb[0].mxu0
        %v859 = vadd.f32 0.0, %v858
        %v860 = vpop.f32.mrb[0].mxu0
        %v861 = vadd.f32 0.0, %v860
        %862 = vmatprep.mubr.f32.mxu0 %v779
        %863 = vmatmul.mubr.f32.gmra.mrb[0].mxu0 %v778
        %v864 = vpop.f32.mrb[0].mxu0
        %v865 = vadd.f32 0.0, %v864
        %v866 = vpop.f32.mrb[0].mxu0
        %v867 = vadd.f32 0.0, %v866
        %868 = vdwg.mxu0
        %v869 = vsub.f32 %v611, %v750
        %v870 = vsub.f32 %v612, %v752
        %v871 = vsub.f32 %v613, %v756
        %v872 = vsub.f32 %v614, %v758
        %v873 = vsub.f32 %v615, %v762
        %v874 = vsub.f32 %v616, %v764
        %v875 = vsub.f32 %v617, %v768
        %v876 = vsub.f32 %v618, %v770
        %v877 = vmul.f32 %v750, %v750
        %v878 = vmul.f32 %v752, %v752
        %v879 = vmul.f32 %v756, %v756
        %v880 = vmul.f32 %v758, %v758
        %v881 = vmul.f32 %v762, %v762
        %v882 = vmul.f32 %v764, %v764
        %v883 = vmul.f32 %v768, %v768
        %v884 = vmul.f32 %v770, %v770
        %v885 = vsub.f32 %v847, %v877
        %v886 = vsub.f32 %v849, %v878
        %v887 = vsub.f32 %v853, %v879
        %v888 = vsub.f32 %v855, %v880
        %v889 = vsub.f32 %v859, %v881
        %v890 = vsub.f32 %v861, %v882
        %v891 = vsub.f32 %v865, %v883
        %v892 = vsub.f32 %v867, %v884
        %v893 = vmax.f32 %v885, 0.0
        %v894 = vmax.f32 %v886, 0.0
        %v895 = vmax.f32 %v887, 0.0
        %v896 = vmax.f32 %v888, 0.0
        %v897 = vmax.f32 %v889, 0.0
        %v898 = vmax.f32 %v890, 0.0
        %v899 = vmax.f32 %v891, 0.0
        %v900 = vmax.f32 %v892, 0.0
        %v901 = vadd.f32 %v893, 1e-05
        %v902 = vadd.f32 %v894, 1e-05
        %v903 = vadd.f32 %v895, 1e-05
        %v904 = vadd.f32 %v896, 1e-05
        %v905 = vadd.f32 %v897, 1e-05
        %v906 = vadd.f32 %v898, 1e-05
        %v907 = vadd.f32 %v899, 1e-05
        %v908 = vadd.f32 %v900, 1e-05
        %v909 = vrsqrt.pop %v901
        %v910 = vrsqrt.pop %v902
        %v911 = vrsqrt.pop %v903
        %v912 = vrsqrt.pop %v904
        %v913 = vrsqrt.pop %v905
        %v914 = vrsqrt.pop %v906
        %v915 = vrsqrt.pop %v907
        %v916 = vrsqrt.pop %v908
        %v917 = vmul.f32 %v869, %v909
        %v918 = vmul.f32 %v870, %v910
        %v919 = vmul.f32 %v871, %v911
        %v920 = vmul.f32 %v872, %v912
        %v921 = vmul.f32 %v873, %v913
        %v922 = vmul.f32 %v874, %v914
        %v923 = vmul.f32 %v875, %v915
        %v924 = vmul.f32 %v876, %v916
        %v925 = vpack.c.bf16 %v919, %v917
        %v926 = vpack.c.bf16 %v920, %v918
        %v927 = vld [vmem:[#allocation8] sm:$0xff]
        %v928 = vld [vmem:[#allocation8 + $0x8] sm:$0xff]
        %v929 = vld [vmem:[#allocation8 + $0x10] sm:$0xff]
        %v930 = vld [vmem:[#allocation8 + $0x18] sm:$0xff]
        %v931 = vld [vmem:[#allocation8 + $0x20] sm:$0xff]
        %v932 = vld [vmem:[#allocation8 + $0x28] sm:$0xff]
        %v933 = vld [vmem:[#allocation8 + $0x30] sm:$0xff]
        %v934 = vld [vmem:[#allocation8 + $0x38] sm:$0xff]
        %v935 = vld [vmem:[#allocation8 + $0x40] sm:$0xff]
        %v936 = vld [vmem:[#allocation8 + $0x48] sm:$0xff]
        %v937 = vld [vmem:[#allocation8 + $0x50] sm:$0xff]
        %v938 = vld [vmem:[#allocation8 + $0x58] sm:$0xff]
        %v939 = vld [vmem:[#allocation8 + $0x60] sm:$0xff]
        %v940 = vld [vmem:[#allocation8 + $0x68] sm:$0xff]
        %v941 = vld [vmem:[#allocation8 + $0x70] sm:$0xff]
        %v942 = vld [vmem:[#allocation8 + $0x78] sm:$0xff]
        %v943 = vld [vmem:[#allocation8 + $0x80] sm:$0xff]
        %v944 = vld [vmem:[#allocation8 + $0x88] sm:$0xff]
        %v945 = vld [vmem:[#allocation8 + $0x90] sm:$0xff]
        %v946 = vld [vmem:[#allocation8 + $0x98] sm:$0xff]
        %v947 = vld [vmem:[#allocation8 + $0xa0] sm:$0xff]
        %v948 = vld [vmem:[#allocation8 + $0xa8] sm:$0xff]
        %v949 = vld [vmem:[#allocation8 + $0xb0] sm:$0xff]
        %v950 = vld [vmem:[#allocation8 + $0xb8] sm:$0xff]
        %v951 = vld [vmem:[#allocation8 + $0xc0] sm:$0xff]
        %v952 = vld [vmem:[#allocation8 + $0xc8] sm:$0xff]
        %v953 = vld [vmem:[#allocation8 + $0xd0] sm:$0xff]
        %v954 = vld [vmem:[#allocation8 + $0xd8] sm:$0xff]
        %v955 = vld [vmem:[#allocation8 + $0xe0] sm:$0xff]
        %v956 = vld [vmem:[#allocation8 + $0xe8] sm:$0xff]
        %v957 = vld [vmem:[#allocation8 + $0xf0] sm:$0xff]
        %v958 = vld [vmem:[#allocation8 + $0xf8] sm:$0xff]
        %v959 = vld [vmem:[%s4] sm:$0x3]
        %v961 = vlaneseq
        %v962 = vshrl.u32 %v961, 7
        %v963 = vsub.s32 0, %v962
        %v964 = vrot.slane %v959, %v963
        %v965 = vlaneseq
        %v966 = vshrl.u32 %v965, 7
        %v967 = vsub.s32 1, %v966
        %v968 = vrot.slane %v959, %v967
        %v1003 = vunpack.c.l.b16 %v927
        %v1004 = vunpack.c.h.b16 %v927
        %v1005 = vunpack.c.l.b16 %v928
        %v1006 = vunpack.c.h.b16 %v928
        %v1007 = vunpack.c.l.b16 %v929
        %v1008 = vunpack.c.h.b16 %v929
        %v1009 = vunpack.c.l.b16 %v930
        %v1010 = vunpack.c.h.b16 %v930
        %v1011 = vunpack.c.l.b16 %v931
        %v1012 = vunpack.c.h.b16 %v931
        %v1013 = vunpack.c.l.b16 %v932
        %v1014 = vunpack.c.h.b16 %v932
        %v1015 = vunpack.c.l.b16 %v933
        %v1016 = vunpack.c.h.b16 %v933
        %v1017 = vunpack.c.l.b16 %v934
        %v1018 = vunpack.c.h.b16 %v934
        %v1019 = vunpack.c.l.b16 %v935
        %v1020 = vunpack.c.h.b16 %v935
        %v1021 = vunpack.c.l.b16 %v936
        %v1022 = vunpack.c.h.b16 %v936
        %v1023 = vunpack.c.l.b16 %v937
        %v1024 = vunpack.c.h.b16 %v937
        %v1025 = vunpack.c.l.b16 %v938
        %v1026 = vunpack.c.h.b16 %v938
        %v1027 = vunpack.c.l.b16 %v939
        %v1028 = vunpack.c.h.b16 %v939
        %v1029 = vunpack.c.l.b16 %v940
        %v1030 = vunpack.c.h.b16 %v940
        %v1031 = vunpack.c.l.b16 %v941
        %v1032 = vunpack.c.h.b16 %v941
        %v1033 = vunpack.c.l.b16 %v942
        %v1034 = vunpack.c.h.b16 %v942
        %v1035 = vunpack.c.l.b16 %v943
        %v1036 = vunpack.c.h.b16 %v943
        %v1037 = vunpack.c.l.b16 %v944
        %v1038 = vunpack.c.h.b16 %v944
        %v1039 = vunpack.c.l.b16 %v945
        %v1040 = vunpack.c.h.b16 %v945
        %v1041 = vunpack.c.l.b16 %v946
        %v1042 = vunpack.c.h.b16 %v946
        %v1043 = vunpack.c.l.b16 %v947
        %v1044 = vunpack.c.h.b16 %v947
        %v1045 = vunpack.c.l.b16 %v948
        %v1046 = vunpack.c.h.b16 %v948
        %v1047 = vunpack.c.l.b16 %v949
        %v1048 = vunpack.c.h.b16 %v949
        %v1049 = vunpack.c.l.b16 %v950
        %v1050 = vunpack.c.h.b16 %v950
        %v1051 = vunpack.c.l.b16 %v951
        %v1052 = vunpack.c.h.b16 %v951
        %v1053 = vunpack.c.l.b16 %v952
        %v1054 = vunpack.c.h.b16 %v952
        %v1055 = vunpack.c.l.b16 %v953
        %v1056 = vunpack.c.h.b16 %v953
        %v1057 = vunpack.c.l.b16 %v954
        %v1058 = vunpack.c.h.b16 %v954
        %v1059 = vunpack.c.l.b16 %v955
        %v1060 = vunpack.c.h.b16 %v955
        %v1061 = vunpack.c.l.b16 %v956
        %v1062 = vunpack.c.h.b16 %v956
        %v1063 = vunpack.c.l.b16 %v957
        %v1064 = vunpack.c.h.b16 %v957
        %v1065 = vunpack.c.l.b16 %v958
        %v1066 = vunpack.c.h.b16 %v958
        %v1067 = vpack.c.b16 %v1005, %v1003
        %v1068 = vpack.c.b16 %v1006, %v1004
        %v1069 = vpack.c.b16 %v1009, %v1007
        %v1070 = vpack.c.b16 %v1010, %v1008
        %v1071 = vpack.c.b16 %v1013, %v1011
        %v1072 = vpack.c.b16 %v1014, %v1012
        %v1073 = vpack.c.b16 %v1017, %v1015
        %v1074 = vpack.c.b16 %v1018, %v1016
        %v1075 = vpack.c.b16 %v1021, %v1019
        %v1076 = vpack.c.b16 %v1022, %v1020
        %v1077 = vpack.c.b16 %v1025, %v1023
        %v1078 = vpack.c.b16 %v1026, %v1024
        %v1079 = vpack.c.b16 %v1029, %v1027
        %v1080 = vpack.c.b16 %v1030, %v1028
        %v1081 = vpack.c.b16 %v1033, %v1031
        %v1082 = vpack.c.b16 %v1034, %v1032
        %v1083 = vpack.c.b16 %v1037, %v1035
        %v1084 = vpack.c.b16 %v1038, %v1036
        %v1085 = vpack.c.b16 %v1041, %v1039
        %v1086 = vpack.c.b16 %v1042, %v1040
        %v1087 = vpack.c.b16 %v1045, %v1043
        %v1088 = vpack.c.b16 %v1046, %v1044
        %v1089 = vpack.c.b16 %v1049, %v1047
        %v1090 = vpack.c.b16 %v1050, %v1048
        %v1091 = vpack.c.b16 %v1053, %v1051
        %v1092 = vpack.c.b16 %v1054, %v1052
        %v1093 = vpack.c.b16 %v1057, %v1055
        %v1094 = vpack.c.b16 %v1058, %v1056
        %v1095 = vpack.c.b16 %v1061, %v1059
        %v1096 = vpack.c.b16 %v1062, %v1060
        %v1097 = vpack.c.b16 %v1065, %v1063
        %v1098 = vpack.c.b16 %v1066, %v1064
        %1131 = vmatprep.subr.bf16.mxu0 %v1068
        %1132 = vmatpush1.bf16.msra.mxu0 %v1067
        %1133 = vmatprep.subr.bf16.mxu0 %v1070
        %1134 = vmatpush1.bf16.msra.mxu0 %v1069
        %1135 = vmatprep.subr.bf16.mxu0 %v1072
        %1136 = vmatpush1.bf16.msra.mxu0 %v1071
        %1137 = vmatprep.subr.bf16.mxu0 %v1074
        %1138 = vmatpush1.bf16.msra.mxu0 %v1073
        %1139 = vmatprep.subr.bf16.mxu0 %v1076
        %1140 = vmatpush1.bf16.msra.mxu0 %v1075
        %1141 = vmatprep.subr.bf16.mxu0 %v1078
        %1142 = vmatpush1.bf16.msra.mxu0 %v1077
        %1143 = vmatprep.subr.bf16.mxu0 %v1080
        %1144 = vmatpush1.bf16.msra.mxu0 %v1079
        %1145 = vmatprep.subr.bf16.mxu0 %v1082
        %1146 = vmatpush1.bf16.msra.mxu0 %v1081
        %1147 = vmatprep.subr.bf16.mxu0 %v1084
        %1148 = vmatpush1.bf16.msra.mxu0 %v1083
        %1149 = vmatprep.subr.bf16.mxu0 %v1086
        %1150 = vmatpush1.bf16.msra.mxu0 %v1085
        %1151 = vmatprep.subr.bf16.mxu0 %v1088
        %1152 = vmatpush1.bf16.msra.mxu0 %v1087
        %1153 = vmatprep.subr.bf16.mxu0 %v1090
        %1154 = vmatpush1.bf16.msra.mxu0 %v1089
        %1155 = vmatprep.subr.bf16.mxu0 %v1092
        %1156 = vmatpush1.bf16.msra.mxu0 %v1091
        %1157 = vmatprep.subr.bf16.mxu0 %v1094
        %1158 = vmatpush1.bf16.msra.mxu0 %v1093
        %1159 = vmatprep.subr.bf16.mxu0 %v1096
        %1160 = vmatpush1.bf16.msra.mxu0 %v1095
        %1161 = vmatprep.subr.bf16.mxu0 %v1098
        %1162 = vmatpush1.bf16.msra.mxu0 %v1097
        %1163 = vmatprep.mubr.bf16.mxu0 %v926
        %1164 = vmatmul.mubr.bf16.gmra.mrb[0].mxu0 %v925
        %v1165 = vpop.f32.mrb[0].mxu0
        %v1166 = vadd.f32 %v964, %v1165
        %v1167 = vpop.f32.mrb[0].mxu0
        %v1168 = vadd.f32 %v968, %v1167
        %v1169 = vpop.f32.mrb[0].mxu0
        %v1170 = vadd.f32 %v964, %v1169
        %v1171 = vpop.f32.mrb[0].mxu0
        %v1172 = vadd.f32 %v968, %v1171
        %1173 = vdwg.mxu0
        %v1174 = vpack.c.bf16 %v923, %v921
        %v1175 = vpack.c.bf16 %v924, %v922
        %v1176 = vld [vmem:[#allocation10] sm:$0xff]
        %v1177 = vld [vmem:[#allocation10 + $0x8] sm:$0xff]
        %v1178 = vld [vmem:[#allocation10 + $0x10] sm:$0xff]
        %v1179 = vld [vmem:[#allocation10 + $0x18] sm:$0xff]
        %v1180 = vld [vmem:[#allocation10 + $0x20] sm:$0xff]
        %v1181 = vld [vmem:[#allocation10 + $0x28] sm:$0xff]
        %v1182 = vld [vmem:[#allocation10 + $0x30] sm:$0xff]
        %v1183 = vld [vmem:[#allocation10 + $0x38] sm:$0xff]
        %v1184 = vld [vmem:[#allocation10 + $0x40] sm:$0xff]
        %v1185 = vld [vmem:[#allocation10 + $0x48] sm:$0xff]
        %v1186 = vld [vmem:[#allocation10 + $0x50] sm:$0xff]
        %v1187 = vld [vmem:[#allocation10 + $0x58] sm:$0xff]
        %v1188 = vld [vmem:[#allocation10 + $0x60] sm:$0xff]
        %v1189 = vld [vmem:[#allocation10 + $0x68] sm:$0xff]
        %v1190 = vld [vmem:[#allocation10 + $0x70] sm:$0xff]
        %v1191 = vld [vmem:[#allocation10 + $0x78] sm:$0xff]
        %v1192 = vld [vmem:[#allocation10 + $0x80] sm:$0xff]
        %v1193 = vld [vmem:[#allocation10 + $0x88] sm:$0xff]
        %v1194 = vld [vmem:[#allocation10 + $0x90] sm:$0xff]
        %v1195 = vld [vmem:[#allocation10 + $0x98] sm:$0xff]
        %v1196 = vld [vmem:[#allocation10 + $0xa0] sm:$0xff]
        %v1197 = vld [vmem:[#allocation10 + $0xa8] sm:$0xff]
        %v1198 = vld [vmem:[#allocation10 + $0xb0] sm:$0xff]
        %v1199 = vld [vmem:[#allocation10 + $0xb8] sm:$0xff]
        %v1200 = vld [vmem:[#allocation10 + $0xc0] sm:$0xff]
        %v1201 = vld [vmem:[#allocation10 + $0xc8] sm:$0xff]
        %v1202 = vld [vmem:[#allocation10 + $0xd0] sm:$0xff]
        %v1203 = vld [vmem:[#allocation10 + $0xd8] sm:$0xff]
        %v1204 = vld [vmem:[#allocation10 + $0xe0] sm:$0xff]
        %v1205 = vld [vmem:[#allocation10 + $0xe8] sm:$0xff]
        %v1206 = vld [vmem:[#allocation10 + $0xf0] sm:$0xff]
        %v1207 = vld [vmem:[#allocation10 + $0xf8] sm:$0xff]
        %v1208 = vld [vmem:[%s6] sm:$0x3]
        %v1210 = vlaneseq
        %v1211 = vshrl.u32 %v1210, 7
        %v1212 = vsub.s32 0, %v1211
        %v1213 = vrot.slane %v1208, %v1212
        %v1214 = vlaneseq
        %v1215 = vshrl.u32 %v1214, 7
        %v1216 = vsub.s32 1, %v1215
        %v1217 = vrot.slane %v1208, %v1216
        %v1252 = vunpack.c.l.b16 %v1176
        %v1253 = vunpack.c.h.b16 %v1176
        %v1254 = vunpack.c.l.b16 %v1177
        %v1255 = vunpack.c.h.b16 %v1177
        %v1256 = vunpack.c.l.b16 %v1178
        %v1257 = vunpack.c.h.b16 %v1178
        %v1258 = vunpack.c.l.b16 %v1179
        %v1259 = vunpack.c.h.b16 %v1179
        %v1260 = vunpack.c.l.b16 %v1180
        %v1261 = vunpack.c.h.b16 %v1180
        %v1262 = vunpack.c.l.b16 %v1181
        %v1263 = vunpack.c.h.b16 %v1181
        %v1264 = vunpack.c.l.b16 %v1182
        %v1265 = vunpack.c.h.b16 %v1182
        %v1266 = vunpack.c.l.b16 %v1183
        %v1267 = vunpack.c.h.b16 %v1183
        %v1268 = vunpack.c.l.b16 %v1184
        %v1269 = vunpack.c.h.b16 %v1184
        %v1270 = vunpack.c.l.b16 %v1185
        %v1271 = vunpack.c.h.b16 %v1185
        %v1272 = vunpack.c.l.b16 %v1186
        %v1273 = vunpack.c.h.b16 %v1186
        %v1274 = vunpack.c.l.b16 %v1187
        %v1275 = vunpack.c.h.b16 %v1187
        %v1276 = vunpack.c.l.b16 %v1188
        %v1277 = vunpack.c.h.b16 %v1188
        %v1278 = vunpack.c.l.b16 %v1189
        %v1279 = vunpack.c.h.b16 %v1189
        %v1280 = vunpack.c.l.b16 %v1190
        %v1281 = vunpack.c.h.b16 %v1190
        %v1282 = vunpack.c.l.b16 %v1191
        %v1283 = vunpack.c.h.b16 %v1191
        %v1284 = vunpack.c.l.b16 %v1192
        %v1285 = vunpack.c.h.b16 %v1192
        %v1286 = vunpack.c.l.b16 %v1193
        %v1287 = vunpack.c.h.b16 %v1193
        %v1288 = vunpack.c.l.b16 %v1194
        %v1289 = vunpack.c.h.b16 %v1194
        %v1290 = vunpack.c.l.b16 %v1195
        %v1291 = vunpack.c.h.b16 %v1195
        %v1292 = vunpack.c.l.b16 %v1196
        %v1293 = vunpack.c.h.b16 %v1196
        %v1294 = vunpack.c.l.b16 %v1197
        %v1295 = vunpack.c.h.b16 %v1197
        %v1296 = vunpack.c.l.b16 %v1198
        %v1297 = vunpack.c.h.b16 %v1198
        %v1298 = vunpack.c.l.b16 %v1199
        %v1299 = vunpack.c.h.b16 %v1199
        %v1300 = vunpack.c.l.b16 %v1200
        %v1301 = vunpack.c.h.b16 %v1200
        %v1302 = vunpack.c.l.b16 %v1201
        %v1303 = vunpack.c.h.b16 %v1201
        %v1304 = vunpack.c.l.b16 %v1202
        %v1305 = vunpack.c.h.b16 %v1202
        %v1306 = vunpack.c.l.b16 %v1203
        %v1307 = vunpack.c.h.b16 %v1203
        %v1308 = vunpack.c.l.b16 %v1204
        %v1309 = vunpack.c.h.b16 %v1204
        %v1310 = vunpack.c.l.b16 %v1205
        %v1311 = vunpack.c.h.b16 %v1205
        %v1312 = vunpack.c.l.b16 %v1206
        %v1313 = vunpack.c.h.b16 %v1206
        %v1314 = vunpack.c.l.b16 %v1207
        %v1315 = vunpack.c.h.b16 %v1207
        %v1316 = vpack.c.b16 %v1254, %v1252
        %v1317 = vpack.c.b16 %v1255, %v1253
        %v1318 = vpack.c.b16 %v1258, %v1256
        %v1319 = vpack.c.b16 %v1259, %v1257
        %v1320 = vpack.c.b16 %v1262, %v1260
        %v1321 = vpack.c.b16 %v1263, %v1261
        %v1322 = vpack.c.b16 %v1266, %v1264
        %v1323 = vpack.c.b16 %v1267, %v1265
        %v1324 = vpack.c.b16 %v1270, %v1268
        %v1325 = vpack.c.b16 %v1271, %v1269
        %v1326 = vpack.c.b16 %v1274, %v1272
        %v1327 = vpack.c.b16 %v1275, %v1273
        %v1328 = vpack.c.b16 %v1278, %v1276
        %v1329 = vpack.c.b16 %v1279, %v1277
        %v1330 = vpack.c.b16 %v1282, %v1280
        %v1331 = vpack.c.b16 %v1283, %v1281
        %v1332 = vpack.c.b16 %v1286, %v1284
        %v1333 = vpack.c.b16 %v1287, %v1285
        %v1334 = vpack.c.b16 %v1290, %v1288
        %v1335 = vpack.c.b16 %v1291, %v1289
        %v1336 = vpack.c.b16 %v1294, %v1292
        %v1337 = vpack.c.b16 %v1295, %v1293
        %v1338 = vpack.c.b16 %v1298, %v1296
        %v1339 = vpack.c.b16 %v1299, %v1297
        %v1340 = vpack.c.b16 %v1302, %v1300
        %v1341 = vpack.c.b16 %v1303, %v1301
        %v1342 = vpack.c.b16 %v1306, %v1304
        %v1343 = vpack.c.b16 %v1307, %v1305
        %v1344 = vpack.c.b16 %v1310, %v1308
        %v1345 = vpack.c.b16 %v1311, %v1309
        %v1346 = vpack.c.b16 %v1314, %v1312
        %v1347 = vpack.c.b16 %v1315, %v1313
        %1380 = vmatprep.subr.bf16.mxu0 %v1317
        %1381 = vmatpush1.bf16.msra.mxu0 %v1316
        %1382 = vmatprep.subr.bf16.mxu0 %v1319
        %1383 = vmatpush1.bf16.msra.mxu0 %v1318
        %1384 = vmatprep.subr.bf16.mxu0 %v1321
        %1385 = vmatpush1.bf16.msra.mxu0 %v1320
        %1386 = vmatprep.subr.bf16.mxu0 %v1323
        %1387 = vmatpush1.bf16.msra.mxu0 %v1322
        %1388 = vmatprep.subr.bf16.mxu0 %v1325
        %1389 = vmatpush1.bf16.msra.mxu0 %v1324
        %1390 = vmatprep.subr.bf16.mxu0 %v1327
        %1391 = vmatpush1.bf16.msra.mxu0 %v1326
        %1392 = vmatprep.subr.bf16.mxu0 %v1329
        %1393 = vmatpush1.bf16.msra.mxu0 %v1328
        %1394 = vmatprep.subr.bf16.mxu0 %v1331
        %1395 = vmatpush1.bf16.msra.mxu0 %v1330
        %1396 = vmatprep.subr.bf16.mxu0 %v1333
        %1397 = vmatpush1.bf16.msra.mxu0 %v1332
        %1398 = vmatprep.subr.bf16.mxu0 %v1335
        %1399 = vmatpush1.bf16.msra.mxu0 %v1334
        %1400 = vmatprep.subr.bf16.mxu0 %v1337
        %1401 = vmatpush1.bf16.msra.mxu0 %v1336
        %1402 = vmatprep.subr.bf16.mxu0 %v1339
        %1403 = vmatpush1.bf16.msra.mxu0 %v1338
        %1404 = vmatprep.subr.bf16.mxu0 %v1341
        %1405 = vmatpush1.bf16.msra.mxu0 %v1340
        %1406 = vmatprep.subr.bf16.mxu0 %v1343
        %1407 = vmatpush1.bf16.msra.mxu0 %v1342
        %1408 = vmatprep.subr.bf16.mxu0 %v1345
        %1409 = vmatpush1.bf16.msra.mxu0 %v1344
        %1410 = vmatprep.subr.bf16.mxu0 %v1347
        %1411 = vmatpush1.bf16.msra.mxu0 %v1346
        %1412 = vmatprep.mubr.bf16.mxu0 %v1175
        %1413 = vmatmul.mubr.bf16.gmra.mrb[0].mxu0 %v1174
        %v1414 = vpop.f32.mrb[0].mxu0
        %v1415 = vadd.f32 %v1213, %v1414
        %v1416 = vpop.f32.mrb[0].mxu0
        %v1417 = vadd.f32 %v1217, %v1416
        %v1418 = vpop.f32.mrb[0].mxu0
        %v1419 = vadd.f32 %v1213, %v1418
        %v1420 = vpop.f32.mrb[0].mxu0
        %v1421 = vadd.f32 %v1217, %v1420
        %1422 = vdwg.mxu0
        %1425 = vrot.lane.b32.xlu0 %v1415, 112
        %v1426 = vpop.permute.xlu0 %1425
        %1427 = vrot.lane.b32.xlu0 %v1419, 112
        %v1428 = vpop.permute.xlu0 %1427
        %1431 = vrot.lane.b32.xlu0 %v1415, 96
        %v1432 = vpop.permute.xlu0 %1431
        %1433 = vrot.lane.b32.xlu0 %v1419, 96
        %v1434 = vpop.permute.xlu0 %1433
        %1437 = vrot.lane.b32.xlu0 %v1415, 80
        %v1438 = vpop.permute.xlu0 %1437
        %1439 = vrot.lane.b32.xlu0 %v1419, 80
        %v1440 = vpop.permute.xlu0 %1439
        %1443 = vrot.lane.b32.xlu0 %v1415, 64
        %v1444 = vpop.permute.xlu0 %1443
        %1445 = vrot.lane.b32.xlu0 %v1419, 64
        %v1446 = vpop.permute.xlu0 %1445
        %1449 = vrot.lane.b32.xlu0 %v1415, 48
        %v1450 = vpop.permute.xlu0 %1449
        %1451 = vrot.lane.b32.xlu0 %v1419, 48
        %v1452 = vpop.permute.xlu0 %1451
        %1455 = vrot.lane.b32.xlu0 %v1415, 32
        %v1456 = vpop.permute.xlu0 %1455
        %1457 = vrot.lane.b32.xlu0 %v1419, 32
        %v1458 = vpop.permute.xlu0 %1457
        %1461 = vrot.lane.b32.xlu0 %v1415, 16
        %v1462 = vpop.permute.xlu0 %1461
        %1463 = vrot.lane.b32.xlu0 %v1419, 16
        %v1464 = vpop.permute.xlu0 %1463
        %1469 = vrot.lane.b32.xlu0 %v1417, 112
        %v1470 = vpop.permute.xlu0 %1469
        %1471 = vrot.lane.b32.xlu0 %v1421, 112
        %v1472 = vpop.permute.xlu0 %1471
        %1475 = vrot.lane.b32.xlu0 %v1417, 96
        %v1476 = vpop.permute.xlu0 %1475
        %1477 = vrot.lane.b32.xlu0 %v1421, 96
        %v1478 = vpop.permute.xlu0 %1477
        %1481 = vrot.lane.b32.xlu0 %v1417, 80
        %v1482 = vpop.permute.xlu0 %1481
        %1483 = vrot.lane.b32.xlu0 %v1421, 80
        %v1484 = vpop.permute.xlu0 %1483
        %1487 = vrot.lane.b32.xlu0 %v1417, 64
        %v1488 = vpop.permute.xlu0 %1487
        %1489 = vrot.lane.b32.xlu0 %v1421, 64
        %v1490 = vpop.permute.xlu0 %1489
        %1493 = vrot.lane.b32.xlu0 %v1417, 48
        %v1494 = vpop.permute.xlu0 %1493
        %1495 = vrot.lane.b32.xlu0 %v1421, 48
        %v1496 = vpop.permute.xlu0 %1495
        %1499 = vrot.lane.b32.xlu0 %v1417, 32
        %v1500 = vpop.permute.xlu0 %1499
        %1501 = vrot.lane.b32.xlu0 %v1421, 32
        %v1502 = vpop.permute.xlu0 %1501
        %1505 = vrot.lane.b32.xlu0 %v1417, 16
        %v1506 = vpop.permute.xlu0 %1505
        %1507 = vrot.lane.b32.xlu0 %v1421, 16
        %v1508 = vpop.permute.xlu0 %1507
        %v1511 = vcombine.low %v1415, %v1432
        %v1512 = vcombine.high %v1415, %v1432
        %v1514 = vunpack.c.l.s4 1983009808
        %v1515 = vunpack.c.0.s8 %v1514
        %v1516 = vlaneseq
        %v1517 = vshrl.u32 %v1516, 7
        %v1518 = vsub.s32 %v1515, %v1517
        %v1519 = vrot.slane %v1511, %v1518
        %v1521 = vunpack.c.l.s4 1983009808
        %v1522 = vunpack.c.0.s8 %v1521
        %v1523 = vlaneseq
        %v1524 = vshrl.u32 %v1523, 7
        %v1525 = vsub.s32 %v1522, %v1524
        %v1526 = vrot.slane %v1512, %v1525
        %v1527 = vcombine.low %v1426, %v1438
        %v1528 = vcombine.high %v1426, %v1438
        %v1530 = vunpack.c.l.s4 1983009808
        %v1531 = vunpack.c.0.s8 %v1530
        %v1532 = vlaneseq
        %v1533 = vshrl.u32 %v1532, 7
        %v1534 = vsub.s32 %v1531, %v1533
        %v1535 = vrot.slane %v1527, %v1534
        %v1537 = vunpack.c.l.s4 1983009808
        %v1538 = vunpack.c.0.s8 %v1537
        %v1539 = vlaneseq
        %v1540 = vshrl.u32 %v1539, 7
        %v1541 = vsub.s32 %v1538, %v1540
        %v1542 = vrot.slane %v1528, %v1541
        %v1543 = vcombine.low %v1444, %v1456
        %v1544 = vcombine.high %v1444, %v1456
        %v1546 = vunpack.c.l.s4 1983009808
        %v1547 = vunpack.c.0.s8 %v1546
        %v1548 = vlaneseq
        %v1549 = vshrl.u32 %v1548, 7
        %v1550 = vsub.s32 %v1547, %v1549
        %v1551 = vrot.slane %v1543, %v1550
        %v1553 = vunpack.c.l.s4 1983009808
        %v1554 = vunpack.c.0.s8 %v1553
        %v1555 = vlaneseq
        %v1556 = vshrl.u32 %v1555, 7
        %v1557 = vsub.s32 %v1554, %v1556
        %v1558 = vrot.slane %v1544, %v1557
        %v1559 = vcombine.low %v1450, %v1462
        %v1560 = vcombine.high %v1450, %v1462
        %v1562 = vunpack.c.l.s4 1983009808
        %v1563 = vunpack.c.0.s8 %v1562
        %v1564 = vlaneseq
        %v1565 = vshrl.u32 %v1564, 7
        %v1566 = vsub.s32 %v1563, %v1565
        %v1567 = vrot.slane %v1559, %v1566
        %v1569 = vunpack.c.l.s4 1983009808
        %v1570 = vunpack.c.0.s8 %v1569
        %v1571 = vlaneseq
        %v1572 = vshrl.u32 %v1571, 7
        %v1573 = vsub.s32 %v1570, %v1572
        %v1574 = vrot.slane %v1560, %v1573
        %v1575 = vcombine.low %v1519, %v1535
        %v1576 = vcombine.high %v1519, %v1535
        %v1578 = vunpack.c.l.s4 1934713408
        %v1579 = vunpack.c.0.s8 %v1578
        %v1580 = vlaneseq
        %v1581 = vshrl.u32 %v1580, 7
        %v1582 = vsub.s32 %v1579, %v1581
        %v1583 = vrot.slane %v1575, %v1582
        %v1585 = vunpack.c.l.s4 1934713408
        %v1586 = vunpack.c.0.s8 %v1585
        %v1587 = vlaneseq
        %v1588 = vshrl.u32 %v1587, 7
        %v1589 = vsub.s32 %v1586, %v1588
        %v1590 = vrot.slane %v1576, %v1589
        %v1591 = vcombine.low %v1526, %v1542
        %v1592 = vcombine.high %v1526, %v1542
        %v1594 = vunpack.c.l.s4 1934713408
        %v1595 = vunpack.c.0.s8 %v1594
        %v1596 = vlaneseq
        %v1597 = vshrl.u32 %v1596, 7
        %v1598 = vsub.s32 %v1595, %v1597
        %v1599 = vrot.slane %v1591, %v1598
        %v1601 = vunpack.c.l.s4 1934713408
        %v1602 = vunpack.c.0.s8 %v1601
        %v1603 = vlaneseq
        %v1604 = vshrl.u32 %v1603, 7
        %v1605 = vsub.s32 %v1602, %v1604
        %v1606 = vrot.slane %v1592, %v1605
        %v1607 = vcombine.low %v1551, %v1567
        %v1608 = vcombine.high %v1551, %v1567
        %v1610 = vunpack.c.l.s4 1934713408
        %v1611 = vunpack.c.0.s8 %v1610
        %v1612 = vlaneseq
        %v1613 = vshrl.u32 %v1612, 7
        %v1614 = vsub.s32 %v1611, %v1613
        %v1615 = vrot.slane %v1607, %v1614
        %v1617 = vunpack.c.l.s4 1934713408
        %v1618 = vunpack.c.0.s8 %v1617
        %v1619 = vlaneseq
        %v1620 = vshrl.u32 %v1619, 7
        %v1621 = vsub.s32 %v1618, %v1620
        %v1622 = vrot.slane %v1608, %v1621
        %v1623 = vcombine.low %v1558, %v1574
        %v1624 = vcombine.high %v1558, %v1574
        %v1626 = vunpack.c.l.s4 1934713408
        %v1627 = vunpack.c.0.s8 %v1626
        %v1628 = vlaneseq
        %v1629 = vshrl.u32 %v1628, 7
        %v1630 = vsub.s32 %v1627, %v1629
        %v1631 = vrot.slane %v1623, %v1630
        %v1633 = vunpack.c.l.s4 1934713408
        %v1634 = vunpack.c.0.s8 %v1633
        %v1635 = vlaneseq
        %v1636 = vshrl.u32 %v1635, 7
        %v1637 = vsub.s32 %v1634, %v1636
        %v1638 = vrot.slane %v1624, %v1637
        %v1639 = vcombine.low %v1583, %v1615
        %v1640 = vcombine.high %v1583, %v1615
        %v1641 = vcombine.low %v1590, %v1622
        %v1642 = vcombine.high %v1590, %v1622
        %v1643 = vcombine.low %v1599, %v1631
        %v1644 = vcombine.high %v1599, %v1631
        %v1645 = vcombine.low %v1606, %v1638
        %v1646 = vcombine.high %v1606, %v1638
        %v1647 = vcombine.low %v1417, %v1476
        %v1648 = vcombine.high %v1417, %v1476
        %v1650 = vunpack.c.l.s4 1983009808
        %v1651 = vunpack.c.0.s8 %v1650
        %v1652 = vlaneseq
        %v1653 = vshrl.u32 %v1652, 7
        %v1654 = vsub.s32 %v1651, %v1653
        %v1655 = vrot.slane %v1647, %v1654
        %v1657 = vunpack.c.l.s4 1983009808
        %v1658 = vunpack.c.0.s8 %v1657
        %v1659 = vlaneseq
        %v1660 = vshrl.u32 %v1659, 7
        %v1661 = vsub.s32 %v1658, %v1660
        %v1662 = vrot.slane %v1648, %v1661
        %v1663 = vcombine.low %v1470, %v1482
        %v1664 = vcombine.high %v1470, %v1482
        %v1666 = vunpack.c.l.s4 1983009808
        %v1667 = vunpack.c.0.s8 %v1666
        %v1668 = vlaneseq
        %v1669 = vshrl.u32 %v1668, 7
        %v1670 = vsub.s32 %v1667, %v1669
        %v1671 = vrot.slane %v1663, %v1670
        %v1673 = vunpack.c.l.s4 1983009808
        %v1674 = vunpack.c.0.s8 %v1673
        %v1675 = vlaneseq
        %v1676 = vshrl.u32 %v1675, 7
        %v1677 = vsub.s32 %v1674, %v1676
        %v1678 = vrot.slane %v1664, %v1677
        %v1679 = vcombine.low %v1488, %v1500
        %v1680 = vcombine.high %v1488, %v1500
        %v1682 = vunpack.c.l.s4 1983009808
        %v1683 = vunpack.c.0.s8 %v1682
        %v1684 = vlaneseq
        %v1685 = vshrl.u32 %v1684, 7
        %v1686 = vsub.s32 %v1683, %v1685
        %v1687 = vrot.slane %v1679, %v1686
        %v1689 = vunpack.c.l.s4 1983009808
        %v1690 = vunpack.c.0.s8 %v1689
        %v1691 = vlaneseq
        %v1692 = vshrl.u32 %v1691, 7
        %v1693 = vsub.s32 %v1690, %v1692
        %v1694 = vrot.slane %v1680, %v1693
        %v1695 = vcombine.low %v1494, %v1506
        %v1696 = vcombine.high %v1494, %v1506
        %v1698 = vunpack.c.l.s4 1983009808
        %v1699 = vunpack.c.0.s8 %v1698
        %v1700 = vlaneseq
        %v1701 = vshrl.u32 %v1700, 7
        %v1702 = vsub.s32 %v1699, %v1701
        %v1703 = vrot.slane %v1695, %v1702
        %v1705 = vunpack.c.l.s4 1983009808
        %v1706 = vunpack.c.0.s8 %v1705
        %v1707 = vlaneseq
        %v1708 = vshrl.u32 %v1707, 7
        %v1709 = vsub.s32 %v1706, %v1708
        %v1710 = vrot.slane %v1696, %v1709
        %v1711 = vcombine.low %v1655, %v1671
        %v1712 = vcombine.high %v1655, %v1671
        %v1714 = vunpack.c.l.s4 1934713408
        %v1715 = vunpack.c.0.s8 %v1714
        %v1716 = vlaneseq
        %v1717 = vshrl.u32 %v1716, 7
        %v1718 = vsub.s32 %v1715, %v1717
        %v1719 = vrot.slane %v1711, %v1718
        %v1721 = vunpack.c.l.s4 1934713408
        %v1722 = vunpack.c.0.s8 %v1721
        %v1723 = vlaneseq
        %v1724 = vshrl.u32 %v1723, 7
        %v1725 = vsub.s32 %v1722, %v1724
        %v1726 = vrot.slane %v1712, %v1725
        %v1727 = vcombine.low %v1662, %v1678
        %v1728 = vcombine.high %v1662, %v1678
        %v1730 = vunpack.c.l.s4 1934713408
        %v1731 = vunpack.c.0.s8 %v1730
        %v1732 = vlaneseq
        %v1733 = vshrl.u32 %v1732, 7
        %v1734 = vsub.s32 %v1731, %v1733
        %v1735 = vrot.slane %v1727, %v1734
        %v1737 = vunpack.c.l.s4 1934713408
        %v1738 = vunpack.c.0.s8 %v1737
        %v1739 = vlaneseq
        %v1740 = vshrl.u32 %v1739, 7
        %v1741 = vsub.s32 %v1738, %v1740
        %v1742 = vrot.slane %v1728, %v1741
        %v1743 = vcombine.low %v1687, %v1703
        %v1744 = vcombine.high %v1687, %v1703
        %v1746 = vunpack.c.l.s4 1934713408
        %v1747 = vunpack.c.0.s8 %v1746
        %v1748 = vlaneseq
        %v1749 = vshrl.u32 %v1748, 7
        %v1750 = vsub.s32 %v1747, %v1749
        %v1751 = vrot.slane %v1743, %v1750
        %v1753 = vunpack.c.l.s4 1934713408
        %v1754 = vunpack.c.0.s8 %v1753
        %v1755 = vlaneseq
        %v1756 = vshrl.u32 %v1755, 7
        %v1757 = vsub.s32 %v1754, %v1756
        %v1758 = vrot.slane %v1744, %v1757
        %v1759 = vcombine.low %v1694, %v1710
        %v1760 = vcombine.high %v1694, %v1710
        %v1762 = vunpack.c.l.s4 1934713408
        %v1763 = vunpack.c.0.s8 %v1762
        %v1764 = vlaneseq
        %v1765 = vshrl.u32 %v1764, 7
        %v1766 = vsub.s32 %v1763, %v1765
        %v1767 = vrot.slane %v1759, %v1766
        %v1769 = vunpack.c.l.s4 1934713408
        %v1770 = vunpack.c.0.s8 %v1769
        %v1771 = vlaneseq
        %v1772 = vshrl.u32 %v1771, 7
        %v1773 = vsub.s32 %v1770, %v1772
        %v1774 = vrot.slane %v1760, %v1773
        %v1775 = vcombine.low %v1719, %v1751
        %v1776 = vcombine.high %v1719, %v1751
        %v1777 = vcombine.low %v1726, %v1758
        %v1778 = vcombine.high %v1726, %v1758
        %v1779 = vcombine.low %v1735, %v1767
        %v1780 = vcombine.high %v1735, %v1767
        %v1781 = vcombine.low %v1742, %v1774
        %v1782 = vcombine.high %v1742, %v1774
        %v1783 = vcombine.low %v1419, %v1434
        %v1784 = vcombine.high %v1419, %v1434
        %v1786 = vunpack.c.l.s4 1983009808
        %v1787 = vunpack.c.0.s8 %v1786
        %v1788 = vlaneseq
        %v1789 = vshrl.u32 %v1788, 7
        %v1790 = vsub.s32 %v1787, %v1789
        %v1791 = vrot.slane %v1783, %v1790
        %v1793 = vunpack.c.l.s4 1983009808
        %v1794 = vunpack.c.0.s8 %v1793
        %v1795 = vlaneseq
        %v1796 = vshrl.u32 %v1795, 7
        %v1797 = vsub.s32 %v1794, %v1796
        %v1798 = vrot.slane %v1784, %v1797
        %v1799 = vcombine.low %v1428, %v1440
        %v1800 = vcombine.high %v1428, %v1440
        %v1802 = vunpack.c.l.s4 1983009808
        %v1803 = vunpack.c.0.s8 %v1802
        %v1804 = vlaneseq
        %v1805 = vshrl.u32 %v1804, 7
        %v1806 = vsub.s32 %v1803, %v1805
        %v1807 = vrot.slane %v1799, %v1806
        %v1809 = vunpack.c.l.s4 1983009808
        %v1810 = vunpack.c.0.s8 %v1809
        %v1811 = vlaneseq
        %v1812 = vshrl.u32 %v1811, 7
        %v1813 = vsub.s32 %v1810, %v1812
        %v1814 = vrot.slane %v1800, %v1813
        %v1815 = vcombine.low %v1446, %v1458
        %v1816 = vcombine.high %v1446, %v1458
        %v1818 = vunpack.c.l.s4 1983009808
        %v1819 = vunpack.c.0.s8 %v1818
        %v1820 = vlaneseq
        %v1821 = vshrl.u32 %v1820, 7
        %v1822 = vsub.s32 %v1819, %v1821
        %v1823 = vrot.slane %v1815, %v1822
        %v1825 = vunpack.c.l.s4 1983009808
        %v1826 = vunpack.c.0.s8 %v1825
        %v1827 = vlaneseq
        %v1828 = vshrl.u32 %v1827, 7
        %v1829 = vsub.s32 %v1826, %v1828
        %v1830 = vrot.slane %v1816, %v1829
        %v1831 = vcombine.low %v1452, %v1464
        %v1832 = vcombine.high %v1452, %v1464
        %v1834 = vunpack.c.l.s4 1983009808
        %v1835 = vunpack.c.0.s8 %v1834
        %v1836 = vlaneseq
        %v1837 = vshrl.u32 %v1836, 7
        %v1838 = vsub.s32 %v1835, %v1837
        %v1839 = vrot.slane %v1831, %v1838
        %v1841 = vunpack.c.l.s4 1983009808
        %v1842 = vunpack.c.0.s8 %v1841
        %v1843 = vlaneseq
        %v1844 = vshrl.u32 %v1843, 7
        %v1845 = vsub.s32 %v1842, %v1844
        %v1846 = vrot.slane %v1832, %v1845
        %v1847 = vcombine.low %v1791, %v1807
        %v1848 = vcombine.high %v1791, %v1807
        %v1850 = vunpack.c.l.s4 1934713408
        %v1851 = vunpack.c.0.s8 %v1850
        %v1852 = vlaneseq
        %v1853 = vshrl.u32 %v1852, 7
        %v1854 = vsub.s32 %v1851, %v1853
        %v1855 = vrot.slane %v1847, %v1854
        %v1857 = vunpack.c.l.s4 1934713408
        %v1858 = vunpack.c.0.s8 %v1857
        %v1859 = vlaneseq
        %v1860 = vshrl.u32 %v1859, 7
        %v1861 = vsub.s32 %v1858, %v1860
        %v1862 = vrot.slane %v1848, %v1861
        %v1863 = vcombine.low %v1798, %v1814
        %v1864 = vcombine.high %v1798, %v1814
        %v1866 = vunpack.c.l.s4 1934713408
        %v1867 = vunpack.c.0.s8 %v1866
        %v1868 = vlaneseq
        %v1869 = vshrl.u32 %v1868, 7
        %v1870 = vsub.s32 %v1867, %v1869
        %v1871 = vrot.slane %v1863, %v1870
        %v1873 = vunpack.c.l.s4 1934713408
        %v1874 = vunpack.c.0.s8 %v1873
        %v1875 = vlaneseq
        %v1876 = vshrl.u32 %v1875, 7
        %v1877 = vsub.s32 %v1874, %v1876
        %v1878 = vrot.slane %v1864, %v1877
        %v1879 = vcombine.low %v1823, %v1839
        %v1880 = vcombine.high %v1823, %v1839
        %v1882 = vunpack.c.l.s4 1934713408
        %v1883 = vunpack.c.0.s8 %v1882
        %v1884 = vlaneseq
        %v1885 = vshrl.u32 %v1884, 7
        %v1886 = vsub.s32 %v1883, %v1885
        %v1887 = vrot.slane %v1879, %v1886
        %v1889 = vunpack.c.l.s4 1934713408
        %v1890 = vunpack.c.0.s8 %v1889
        %v1891 = vlaneseq
        %v1892 = vshrl.u32 %v1891, 7
        %v1893 = vsub.s32 %v1890, %v1892
        %v1894 = vrot.slane %v1880, %v1893
        %v1895 = vcombine.low %v1830, %v1846
        %v1896 = vcombine.high %v1830, %v1846
        %v1898 = vunpack.c.l.s4 1934713408
        %v1899 = vunpack.c.0.s8 %v1898
        %v1900 = vlaneseq
        %v1901 = vshrl.u32 %v1900, 7
        %v1902 = vsub.s32 %v1899, %v1901
        %v1903 = vrot.slane %v1895, %v1902
        %v1905 = vunpack.c.l.s4 1934713408
        %v1906 = vunpack.c.0.s8 %v1905
        %v1907 = vlaneseq
        %v1908 = vshrl.u32 %v1907, 7
        %v1909 = vsub.s32 %v1906, %v1908
        %v1910 = vrot.slane %v1896, %v1909
        %v1911 = vcombine.low %v1855, %v1887
        %v1912 = vcombine.high %v1855, %v1887
        %v1913 = vcombine.low %v1862, %v1894
        %v1914 = vcombine.high %v1862, %v1894
        %v1915 = vcombine.low %v1871, %v1903
        %v1916 = vcombine.high %v1871, %v1903
        %v1917 = vcombine.low %v1878, %v1910
        %v1918 = vcombine.high %v1878, %v1910
        %v1919 = vcombine.low %v1421, %v1478
        %v1920 = vcombine.high %v1421, %v1478
        %v1922 = vunpack.c.l.s4 1983009808
        %v1923 = vunpack.c.0.s8 %v1922
        %v1924 = vlaneseq
        %v1925 = vshrl.u32 %v1924, 7
        %v1926 = vsub.s32 %v1923, %v1925
        %v1927 = vrot.slane %v1919, %v1926
        %v1929 = vunpack.c.l.s4 1983009808
        %v1930 = vunpack.c.0.s8 %v1929
        %v1931 = vlaneseq
        %v1932 = vshrl.u32 %v1931, 7
        %v1933 = vsub.s32 %v1930, %v1932
        %v1934 = vrot.slane %v1920, %v1933
        %v1935 = vcombine.low %v1472, %v1484
        %v1936 = vcombine.high %v1472, %v1484
        %v1938 = vunpack.c.l.s4 1983009808
        %v1939 = vunpack.c.0.s8 %v1938
        %v1940 = vlaneseq
        %v1941 = vshrl.u32 %v1940, 7
        %v1942 = vsub.s32 %v1939, %v1941
        %v1943 = vrot.slane %v1935, %v1942
        %v1945 = vunpack.c.l.s4 1983009808
        %v1946 = vunpack.c.0.s8 %v1945
        %v1947 = vlaneseq
        %v1948 = vshrl.u32 %v1947, 7
        %v1949 = vsub.s32 %v1946, %v1948
        %v1950 = vrot.slane %v1936, %v1949
        %v1951 = vcombine.low %v1490, %v1502
        %v1952 = vcombine.high %v1490, %v1502
        %v1954 = vunpack.c.l.s4 1983009808
        %v1955 = vunpack.c.0.s8 %v1954
        %v1956 = vlaneseq
        %v1957 = vshrl.u32 %v1956, 7
        %v1958 = vsub.s32 %v1955, %v1957
        %v1959 = vrot.slane %v1951, %v1958
        %v1961 = vunpack.c.l.s4 1983009808
        %v1962 = vunpack.c.0.s8 %v1961
        %v1963 = vlaneseq
        %v1964 = vshrl.u32 %v1963, 7
        %v1965 = vsub.s32 %v1962, %v1964
        %v1966 = vrot.slane %v1952, %v1965
        %v1967 = vcombine.low %v1496, %v1508
        %v1968 = vcombine.high %v1496, %v1508
        %v1970 = vunpack.c.l.s4 1983009808
        %v1971 = vunpack.c.0.s8 %v1970
        %v1972 = vlaneseq
        %v1973 = vshrl.u32 %v1972, 7
        %v1974 = vsub.s32 %v1971, %v1973
        %v1975 = vrot.slane %v1967, %v1974
        %v1977 = vunpack.c.l.s4 1983009808
        %v1978 = vunpack.c.0.s8 %v1977
        %v1979 = vlaneseq
        %v1980 = vshrl.u32 %v1979, 7
        %v1981 = vsub.s32 %v1978, %v1980
        %v1982 = vrot.slane %v1968, %v1981
        %v1983 = vcombine.low %v1927, %v1943
        %v1984 = vcombine.high %v1927, %v1943
        %v1986 = vunpack.c.l.s4 1934713408
        %v1987 = vunpack.c.0.s8 %v1986
        %v1988 = vlaneseq
        %v1989 = vshrl.u32 %v1988, 7
        %v1990 = vsub.s32 %v1987, %v1989
        %v1991 = vrot.slane %v1983, %v1990
        %v1993 = vunpack.c.l.s4 1934713408
        %v1994 = vunpack.c.0.s8 %v1993
        %v1995 = vlaneseq
        %v1996 = vshrl.u32 %v1995, 7
        %v1997 = vsub.s32 %v1994, %v1996
        %v1998 = vrot.slane %v1984, %v1997
        %v1999 = vcombine.low %v1934, %v1950
        %v2000 = vcombine.high %v1934, %v1950
        %v2002 = vunpack.c.l.s4 1934713408
        %v2003 = vunpack.c.0.s8 %v2002
        %v2004 = vlaneseq
        %v2005 = vshrl.u32 %v2004, 7
        %v2006 = vsub.s32 %v2003, %v2005
        %v2007 = vrot.slane %v1999, %v2006
        %v2009 = vunpack.c.l.s4 1934713408
        %v2010 = vunpack.c.0.s8 %v2009
        %v2011 = vlaneseq
        %v2012 = vshrl.u32 %v2011, 7
        %v2013 = vsub.s32 %v2010, %v2012
        %v2014 = vrot.slane %v2000, %v2013
        %v2015 = vcombine.low %v1959, %v1975
        %v2016 = vcombine.high %v1959, %v1975
        %v2018 = vunpack.c.l.s4 1934713408
        %v2019 = vunpack.c.0.s8 %v2018
        %v2020 = vlaneseq
        %v2021 = vshrl.u32 %v2020, 7
        %v2022 = vsub.s32 %v2019, %v2021
        %v2023 = vrot.slane %v2015, %v2022
        %v2025 = vunpack.c.l.s4 1934713408
        %v2026 = vunpack.c.0.s8 %v2025
        %v2027 = vlaneseq
        %v2028 = vshrl.u32 %v2027, 7
        %v2029 = vsub.s32 %v2026, %v2028
        %v2030 = vrot.slane %v2016, %v2029
        %v2031 = vcombine.low %v1966, %v1982
        %v2032 = vcombine.high %v1966, %v1982
        %v2034 = vunpack.c.l.s4 1934713408
        %v2035 = vunpack.c.0.s8 %v2034
        %v2036 = vlaneseq
        %v2037 = vshrl.u32 %v2036, 7
        %v2038 = vsub.s32 %v2035, %v2037
        %v2039 = vrot.slane %v2031, %v2038
        %v2041 = vunpack.c.l.s4 1934713408
        %v2042 = vunpack.c.0.s8 %v2041
        %v2043 = vlaneseq
        %v2044 = vshrl.u32 %v2043, 7
        %v2045 = vsub.s32 %v2042, %v2044
        %v2046 = vrot.slane %v2032, %v2045
        %v2047 = vcombine.low %v1991, %v2023
        %v2048 = vcombine.high %v1991, %v2023
        %v2049 = vcombine.low %v1998, %v2030
        %v2050 = vcombine.high %v1998, %v2030
        %v2051 = vcombine.low %v2007, %v2039
        %v2052 = vcombine.high %v2007, %v2039
        %v2053 = vcombine.low %v2014, %v2046
        %v2054 = vcombine.high %v2014, %v2046
        %v2055 = vcombine.low %v1639, %v1641
        %v2056 = vcombine.high %v1639, %v1641
        %v2058 = vunpack.c.l.s4 1983009808
        %v2059 = vunpack.c.0.s8 %v2058
        %v2060 = vlaneseq
        %v2061 = vshrl.u32 %v2060, 7
        %v2062 = vsub.s32 %v2059, %v2061
        %v2063 = vrot.slane %v2055, %v2062
        %v2065 = vunpack.c.l.s4 1983009808
        %v2066 = vunpack.c.0.s8 %v2065
        %v2067 = vlaneseq
        %v2068 = vshrl.u32 %v2067, 7
        %v2069 = vsub.s32 %v2066, %v2068
        %v2070 = vrot.slane %v2056, %v2069
        %v2071 = vcombine.low %v1640, %v1642
        %v2072 = vcombine.high %v1640, %v1642
        %v2074 = vunpack.c.l.s4 1983009808
        %v2075 = vunpack.c.0.s8 %v2074
        %v2076 = vlaneseq
        %v2077 = vshrl.u32 %v2076, 7
        %v2078 = vsub.s32 %v2075, %v2077
        %v2079 = vrot.slane %v2071, %v2078
        %v2081 = vunpack.c.l.s4 1983009808
        %v2082 = vunpack.c.0.s8 %v2081
        %v2083 = vlaneseq
        %v2084 = vshrl.u32 %v2083, 7
        %v2085 = vsub.s32 %v2082, %v2084
        %v2086 = vrot.slane %v2072, %v2085
        %v2087 = vcombine.low %v1643, %v1645
        %v2088 = vcombine.high %v1643, %v1645
        %v2090 = vunpack.c.l.s4 1983009808
        %v2091 = vunpack.c.0.s8 %v2090
        %v2092 = vlaneseq
        %v2093 = vshrl.u32 %v2092, 7
        %v2094 = vsub.s32 %v2091, %v2093
        %v2095 = vrot.slane %v2087, %v2094
        %v2097 = vunpack.c.l.s4 1983009808
        %v2098 = vunpack.c.0.s8 %v2097
        %v2099 = vlaneseq
        %v2100 = vshrl.u32 %v2099, 7
        %v2101 = vsub.s32 %v2098, %v2100
        %v2102 = vrot.slane %v2088, %v2101
        %v2103 = vcombine.low %v1644, %v1646
        %v2104 = vcombine.high %v1644, %v1646
        %v2106 = vunpack.c.l.s4 1983009808
        %v2107 = vunpack.c.0.s8 %v2106
        %v2108 = vlaneseq
        %v2109 = vshrl.u32 %v2108, 7
        %v2110 = vsub.s32 %v2107, %v2109
        %v2111 = vrot.slane %v2103, %v2110
        %v2113 = vunpack.c.l.s4 1983009808
        %v2114 = vunpack.c.0.s8 %v2113
        %v2115 = vlaneseq
        %v2116 = vshrl.u32 %v2115, 7
        %v2117 = vsub.s32 %v2114, %v2116
        %v2118 = vrot.slane %v2104, %v2117
        %v2119 = vcombine.low %v2063, %v2079
        %v2120 = vcombine.high %v2063, %v2079
        %v2122 = vunpack.c.l.s4 1934713408
        %v2123 = vunpack.c.0.s8 %v2122
        %v2124 = vlaneseq
        %v2125 = vshrl.u32 %v2124, 7
        %v2126 = vsub.s32 %v2123, %v2125
        %v2127 = vrot.slane %v2119, %v2126
        %v2129 = vunpack.c.l.s4 1934713408
        %v2130 = vunpack.c.0.s8 %v2129
        %v2131 = vlaneseq
        %v2132 = vshrl.u32 %v2131, 7
        %v2133 = vsub.s32 %v2130, %v2132
        %v2134 = vrot.slane %v2120, %v2133
        %v2135 = vcombine.low %v2070, %v2086
        %v2136 = vcombine.high %v2070, %v2086
        %v2138 = vunpack.c.l.s4 1934713408
        %v2139 = vunpack.c.0.s8 %v2138
        %v2140 = vlaneseq
        %v2141 = vshrl.u32 %v2140, 7
        %v2142 = vsub.s32 %v2139, %v2141
        %v2143 = vrot.slane %v2135, %v2142
        %v2145 = vunpack.c.l.s4 1934713408
        %v2146 = vunpack.c.0.s8 %v2145
        %v2147 = vlaneseq
        %v2148 = vshrl.u32 %v2147, 7
        %v2149 = vsub.s32 %v2146, %v2148
        %v2150 = vrot.slane %v2136, %v2149
        %v2151 = vcombine.low %v2095, %v2111
        %v2152 = vcombine.high %v2095, %v2111
        %v2154 = vunpack.c.l.s4 1934713408
        %v2155 = vunpack.c.0.s8 %v2154
        %v2156 = vlaneseq
        %v2157 = vshrl.u32 %v2156, 7
        %v2158 = vsub.s32 %v2155, %v2157
        %v2159 = vrot.slane %v2151, %v2158
        %v2161 = vunpack.c.l.s4 1934713408
        %v2162 = vunpack.c.0.s8 %v2161
        %v2163 = vlaneseq
        %v2164 = vshrl.u32 %v2163, 7
        %v2165 = vsub.s32 %v2162, %v2164
        %v2166 = vrot.slane %v2152, %v2165
        %v2167 = vcombine.low %v2102, %v2118
        %v2168 = vcombine.high %v2102, %v2118
        %v2170 = vunpack.c.l.s4 1934713408
        %v2171 = vunpack.c.0.s8 %v2170
        %v2172 = vlaneseq
        %v2173 = vshrl.u32 %v2172, 7
        %v2174 = vsub.s32 %v2171, %v2173
        %v2175 = vrot.slane %v2167, %v2174
        %v2177 = vunpack.c.l.s4 1934713408
        %v2178 = vunpack.c.0.s8 %v2177
        %v2179 = vlaneseq
        %v2180 = vshrl.u32 %v2179, 7
        %v2181 = vsub.s32 %v2178, %v2180
        %v2182 = vrot.slane %v2168, %v2181
        %v2183 = vcombine.low %v2127, %v2159
        %v2184 = vcombine.high %v2127, %v2159
        %v2185 = vcombine.low %v2134, %v2166
        %v2186 = vcombine.high %v2134, %v2166
        %v2187 = vcombine.low %v2143, %v2175
        %v2188 = vcombine.high %v2143, %v2175
        %v2189 = vcombine.low %v2150, %v2182
        %v2190 = vcombine.high %v2150, %v2182
        %v2191 = vcombine.low %v1911, %v1913
        %v2192 = vcombine.high %v1911, %v1913
        %v2194 = vunpack.c.l.s4 1983009808
        %v2195 = vunpack.c.0.s8 %v2194
        %v2196 = vlaneseq
        %v2197 = vshrl.u32 %v2196, 7
        %v2198 = vsub.s32 %v2195, %v2197
        %v2199 = vrot.slane %v2191, %v2198
        %v2201 = vunpack.c.l.s4 1983009808
        %v2202 = vunpack.c.0.s8 %v2201
        %v2203 = vlaneseq
        %v2204 = vshrl.u32 %v2203, 7
        %v2205 = vsub.s32 %v2202, %v2204
        %v2206 = vrot.slane %v2192, %v2205
        %v2207 = vcombine.low %v1912, %v1914
        %v2208 = vcombine.high %v1912, %v1914
        %v2210 = vunpack.c.l.s4 1983009808
        %v2211 = vunpack.c.0.s8 %v2210
        %v2212 = vlaneseq
        %v2213 = vshrl.u32 %v2212, 7
        %v2214 = vsub.s32 %v2211, %v2213
        %v2215 = vrot.slane %v2207, %v2214
        %v2217 = vunpack.c.l.s4 1983009808
        %v2218 = vunpack.c.0.s8 %v2217
        %v2219 = vlaneseq
        %v2220 = vshrl.u32 %v2219, 7
        %v2221 = vsub.s32 %v2218, %v2220
        %v2222 = vrot.slane %v2208, %v2221
        %v2223 = vcombine.low %v1915, %v1917
        %v2224 = vcombine.high %v1915, %v1917
        %v2226 = vunpack.c.l.s4 1983009808
        %v2227 = vunpack.c.0.s8 %v2226
        %v2228 = vlaneseq
        %v2229 = vshrl.u32 %v2228, 7
        %v2230 = vsub.s32 %v2227, %v2229
        %v2231 = vrot.slane %v2223, %v2230
        %v2233 = vunpack.c.l.s4 1983009808
        %v2234 = vunpack.c.0.s8 %v2233
        %v2235 = vlaneseq
        %v2236 = vshrl.u32 %v2235, 7
        %v2237 = vsub.s32 %v2234, %v2236
        %v2238 = vrot.slane %v2224, %v2237
        %v2239 = vcombine.low %v1916, %v1918
        %v2240 = vcombine.high %v1916, %v1918
        %v2242 = vunpack.c.l.s4 1983009808
        %v2243 = vunpack.c.0.s8 %v2242
        %v2244 = vlaneseq
        %v2245 = vshrl.u32 %v2244, 7
        %v2246 = vsub.s32 %v2243, %v2245
        %v2247 = vrot.slane %v2239, %v2246
        %v2249 = vunpack.c.l.s4 1983009808
        %v2250 = vunpack.c.0.s8 %v2249
        %v2251 = vlaneseq
        %v2252 = vshrl.u32 %v2251, 7
        %v2253 = vsub.s32 %v2250, %v2252
        %v2254 = vrot.slane %v2240, %v2253
        %v2255 = vcombine.low %v2199, %v2215
        %v2256 = vcombine.high %v2199, %v2215
        %v2258 = vunpack.c.l.s4 1934713408
        %v2259 = vunpack.c.0.s8 %v2258
        %v2260 = vlaneseq
        %v2261 = vshrl.u32 %v2260, 7
        %v2262 = vsub.s32 %v2259, %v2261
        %v2263 = vrot.slane %v2255, %v2262
        %v2265 = vunpack.c.l.s4 1934713408
        %v2266 = vunpack.c.0.s8 %v2265
        %v2267 = vlaneseq
        %v2268 = vshrl.u32 %v2267, 7
        %v2269 = vsub.s32 %v2266, %v2268
        %v2270 = vrot.slane %v2256, %v2269
        %v2271 = vcombine.low %v2206, %v2222
        %v2272 = vcombine.high %v2206, %v2222
        %v2274 = vunpack.c.l.s4 1934713408
        %v2275 = vunpack.c.0.s8 %v2274
        %v2276 = vlaneseq
        %v2277 = vshrl.u32 %v2276, 7
        %v2278 = vsub.s32 %v2275, %v2277
        %v2279 = vrot.slane %v2271, %v2278
        %v2281 = vunpack.c.l.s4 1934713408
        %v2282 = vunpack.c.0.s8 %v2281
        %v2283 = vlaneseq
        %v2284 = vshrl.u32 %v2283, 7
        %v2285 = vsub.s32 %v2282, %v2284
        %v2286 = vrot.slane %v2272, %v2285
        %v2287 = vcombine.low %v2231, %v2247
        %v2288 = vcombine.high %v2231, %v2247
        %v2290 = vunpack.c.l.s4 1934713408
        %v2291 = vunpack.c.0.s8 %v2290
        %v2292 = vlaneseq
        %v2293 = vshrl.u32 %v2292, 7
        %v2294 = vsub.s32 %v2291, %v2293
        %v2295 = vrot.slane %v2287, %v2294
        %v2297 = vunpack.c.l.s4 1934713408
        %v2298 = vunpack.c.0.s8 %v2297
        %v2299 = vlaneseq
        %v2300 = vshrl.u32 %v2299, 7
        %v2301 = vsub.s32 %v2298, %v2300
        %v2302 = vrot.slane %v2288, %v2301
        %v2303 = vcombine.low %v2238, %v2254
        %v2304 = vcombine.high %v2238, %v2254
        %v2306 = vunpack.c.l.s4 1934713408
        %v2307 = vunpack.c.0.s8 %v2306
        %v2308 = vlaneseq
        %v2309 = vshrl.u32 %v2308, 7
        %v2310 = vsub.s32 %v2307, %v2309
        %v2311 = vrot.slane %v2303, %v2310
        %v2313 = vunpack.c.l.s4 1934713408
        %v2314 = vunpack.c.0.s8 %v2313
        %v2315 = vlaneseq
        %v2316 = vshrl.u32 %v2315, 7
        %v2317 = vsub.s32 %v2314, %v2316
        %v2318 = vrot.slane %v2304, %v2317
        %v2319 = vcombine.low %v2263, %v2295
        %v2320 = vcombine.high %v2263, %v2295
        %v2321 = vcombine.low %v2270, %v2302
        %v2322 = vcombine.high %v2270, %v2302
        %v2323 = vcombine.low %v2279, %v2311
        %v2324 = vcombine.high %v2279, %v2311
        %v2325 = vcombine.low %v2286, %v2318
        %v2326 = vcombine.high %v2286, %v2318
        %v2327 = vcombine.low %v1775, %v1777
        %v2328 = vcombine.high %v1775, %v1777
        %v2330 = vunpack.c.l.s4 1983009808
        %v2331 = vunpack.c.0.s8 %v2330
        %v2332 = vlaneseq
        %v2333 = vshrl.u32 %v2332, 7
        %v2334 = vsub.s32 %v2331, %v2333
        %v2335 = vrot.slane %v2327, %v2334
        %v2337 = vunpack.c.l.s4 1983009808
        %v2338 = vunpack.c.0.s8 %v2337
        %v2339 = vlaneseq
        %v2340 = vshrl.u32 %v2339, 7
        %v2341 = vsub.s32 %v2338, %v2340
        %v2342 = vrot.slane %v2328, %v2341
        %v2343 = vcombine.low %v1776, %v1778
        %v2344 = vcombine.high %v1776, %v1778
        %v2346 = vunpack.c.l.s4 1983009808
        %v2347 = vunpack.c.0.s8 %v2346
        %v2348 = vlaneseq
        %v2349 = vshrl.u32 %v2348, 7
        %v2350 = vsub.s32 %v2347, %v2349
        %v2351 = vrot.slane %v2343, %v2350
        %v2353 = vunpack.c.l.s4 1983009808
        %v2354 = vunpack.c.0.s8 %v2353
        %v2355 = vlaneseq
        %v2356 = vshrl.u32 %v2355, 7
        %v2357 = vsub.s32 %v2354, %v2356
        %v2358 = vrot.slane %v2344, %v2357
        %v2359 = vcombine.low %v1779, %v1781
        %v2360 = vcombine.high %v1779, %v1781
        %v2362 = vunpack.c.l.s4 1983009808
        %v2363 = vunpack.c.0.s8 %v2362
        %v2364 = vlaneseq
        %v2365 = vshrl.u32 %v2364, 7
        %v2366 = vsub.s32 %v2363, %v2365
        %v2367 = vrot.slane %v2359, %v2366
        %v2369 = vunpack.c.l.s4 1983009808
        %v2370 = vunpack.c.0.s8 %v2369
        %v2371 = vlaneseq
        %v2372 = vshrl.u32 %v2371, 7
        %v2373 = vsub.s32 %v2370, %v2372
        %v2374 = vrot.slane %v2360, %v2373
        %v2375 = vcombine.low %v1780, %v1782
        %v2376 = vcombine.high %v1780, %v1782
        %v2378 = vunpack.c.l.s4 1983009808
        %v2379 = vunpack.c.0.s8 %v2378
        %v2380 = vlaneseq
        %v2381 = vshrl.u32 %v2380, 7
        %v2382 = vsub.s32 %v2379, %v2381
        %v2383 = vrot.slane %v2375, %v2382
        %v2385 = vunpack.c.l.s4 1983009808
        %v2386 = vunpack.c.0.s8 %v2385
        %v2387 = vlaneseq
        %v2388 = vshrl.u32 %v2387, 7
        %v2389 = vsub.s32 %v2386, %v2388
        %v2390 = vrot.slane %v2376, %v2389
        %v2391 = vcombine.low %v2335, %v2351
        %v2392 = vcombine.high %v2335, %v2351
        %v2394 = vunpack.c.l.s4 1934713408
        %v2395 = vunpack.c.0.s8 %v2394
        %v2396 = vlaneseq
        %v2397 = vshrl.u32 %v2396, 7
        %v2398 = vsub.s32 %v2395, %v2397
        %v2399 = vrot.slane %v2391, %v2398
        %v2401 = vunpack.c.l.s4 1934713408
        %v2402 = vunpack.c.0.s8 %v2401
        %v2403 = vlaneseq
        %v2404 = vshrl.u32 %v2403, 7
        %v2405 = vsub.s32 %v2402, %v2404
        %v2406 = vrot.slane %v2392, %v2405
        %v2407 = vcombine.low %v2342, %v2358
        %v2408 = vcombine.high %v2342, %v2358
        %v2410 = vunpack.c.l.s4 1934713408
        %v2411 = vunpack.c.0.s8 %v2410
        %v2412 = vlaneseq
        %v2413 = vshrl.u32 %v2412, 7
        %v2414 = vsub.s32 %v2411, %v2413
        %v2415 = vrot.slane %v2407, %v2414
        %v2417 = vunpack.c.l.s4 1934713408
        %v2418 = vunpack.c.0.s8 %v2417
        %v2419 = vlaneseq
        %v2420 = vshrl.u32 %v2419, 7
        %v2421 = vsub.s32 %v2418, %v2420
        %v2422 = vrot.slane %v2408, %v2421
        %v2423 = vcombine.low %v2367, %v2383
        %v2424 = vcombine.high %v2367, %v2383
        %v2426 = vunpack.c.l.s4 1934713408
        %v2427 = vunpack.c.0.s8 %v2426
        %v2428 = vlaneseq
        %v2429 = vshrl.u32 %v2428, 7
        %v2430 = vsub.s32 %v2427, %v2429
        %v2431 = vrot.slane %v2423, %v2430
        %v2433 = vunpack.c.l.s4 1934713408
        %v2434 = vunpack.c.0.s8 %v2433
        %v2435 = vlaneseq
        %v2436 = vshrl.u32 %v2435, 7
        %v2437 = vsub.s32 %v2434, %v2436
        %v2438 = vrot.slane %v2424, %v2437
        %v2439 = vcombine.low %v2374, %v2390
        %v2440 = vcombine.high %v2374, %v2390
        %v2442 = vunpack.c.l.s4 1934713408
        %v2443 = vunpack.c.0.s8 %v2442
        %v2444 = vlaneseq
        %v2445 = vshrl.u32 %v2444, 7
        %v2446 = vsub.s32 %v2443, %v2445
        %v2447 = vrot.slane %v2439, %v2446
        %v2449 = vunpack.c.l.s4 1934713408
        %v2450 = vunpack.c.0.s8 %v2449
        %v2451 = vlaneseq
        %v2452 = vshrl.u32 %v2451, 7
        %v2453 = vsub.s32 %v2450, %v2452
        %v2454 = vrot.slane %v2440, %v2453
        %v2455 = vcombine.low %v2399, %v2431
        %v2456 = vcombine.high %v2399, %v2431
        %v2457 = vcombine.low %v2406, %v2438
        %v2458 = vcombine.high %v2406, %v2438
        %v2459 = vcombine.low %v2415, %v2447
        %v2460 = vcombine.high %v2415, %v2447
        %v2461 = vcombine.low %v2422, %v2454
        %v2462 = vcombine.high %v2422, %v2454
        %v2463 = vcombine.low %v2047, %v2049
        %v2464 = vcombine.high %v2047, %v2049
        %v2466 = vunpack.c.l.s4 1983009808
        %v2467 = vunpack.c.0.s8 %v2466
        %v2468 = vlaneseq
        %v2469 = vshrl.u32 %v2468, 7
        %v2470 = vsub.s32 %v2467, %v2469
        %v2471 = vrot.slane %v2463, %v2470
        %v2473 = vunpack.c.l.s4 1983009808
        %v2474 = vunpack.c.0.s8 %v2473
        %v2475 = vlaneseq
        %v2476 = vshrl.u32 %v2475, 7
        %v2477 = vsub.s32 %v2474, %v2476
        %v2478 = vrot.slane %v2464, %v2477
        %v2479 = vcombine.low %v2048, %v2050
        %v2480 = vcombine.high %v2048, %v2050
        %v2482 = vunpack.c.l.s4 1983009808
        %v2483 = vunpack.c.0.s8 %v2482
        %v2484 = vlaneseq
        %v2485 = vshrl.u32 %v2484, 7
        %v2486 = vsub.s32 %v2483, %v2485
        %v2487 = vrot.slane %v2479, %v2486
        %v2489 = vunpack.c.l.s4 1983009808
        %v2490 = vunpack.c.0.s8 %v2489
        %v2491 = vlaneseq
        %v2492 = vshrl.u32 %v2491, 7
        %v2493 = vsub.s32 %v2490, %v2492
        %v2494 = vrot.slane %v2480, %v2493
        %v2495 = vcombine.low %v2051, %v2053
        %v2496 = vcombine.high %v2051, %v2053
        %v2498 = vunpack.c.l.s4 1983009808
        %v2499 = vunpack.c.0.s8 %v2498
        %v2500 = vlaneseq
        %v2501 = vshrl.u32 %v2500, 7
        %v2502 = vsub.s32 %v2499, %v2501
        %v2503 = vrot.slane %v2495, %v2502
        %v2505 = vunpack.c.l.s4 1983009808
        %v2506 = vunpack.c.0.s8 %v2505
        %v2507 = vlaneseq
        %v2508 = vshrl.u32 %v2507, 7
        %v2509 = vsub.s32 %v2506, %v2508
        %v2510 = vrot.slane %v2496, %v2509
        %v2511 = vcombine.low %v2052, %v2054
        %v2512 = vcombine.high %v2052, %v2054
        %v2514 = vunpack.c.l.s4 1983009808
        %v2515 = vunpack.c.0.s8 %v2514
        %v2516 = vlaneseq
        %v2517 = vshrl.u32 %v2516, 7
        %v2518 = vsub.s32 %v2515, %v2517
        %v2519 = vrot.slane %v2511, %v2518
        %v2521 = vunpack.c.l.s4 1983009808
        %v2522 = vunpack.c.0.s8 %v2521
        %v2523 = vlaneseq
        %v2524 = vshrl.u32 %v2523, 7
        %v2525 = vsub.s32 %v2522, %v2524
        %v2526 = vrot.slane %v2512, %v2525
        %v2527 = vcombine.low %v2471, %v2487
        %v2528 = vcombine.high %v2471, %v2487
        %v2530 = vunpack.c.l.s4 1934713408
        %v2531 = vunpack.c.0.s8 %v2530
        %v2532 = vlaneseq
        %v2533 = vshrl.u32 %v2532, 7
        %v2534 = vsub.s32 %v2531, %v2533
        %v2535 = vrot.slane %v2527, %v2534
        %v2537 = vunpack.c.l.s4 1934713408
        %v2538 = vunpack.c.0.s8 %v2537
        %v2539 = vlaneseq
        %v2540 = vshrl.u32 %v2539, 7
        %v2541 = vsub.s32 %v2538, %v2540
        %v2542 = vrot.slane %v2528, %v2541
        %v2543 = vcombine.low %v2478, %v2494
        %v2544 = vcombine.high %v2478, %v2494
        %v2546 = vunpack.c.l.s4 1934713408
        %v2547 = vunpack.c.0.s8 %v2546
        %v2548 = vlaneseq
        %v2549 = vshrl.u32 %v2548, 7
        %v2550 = vsub.s32 %v2547, %v2549
        %v2551 = vrot.slane %v2543, %v2550
        %v2553 = vunpack.c.l.s4 1934713408
        %v2554 = vunpack.c.0.s8 %v2553
        %v2555 = vlaneseq
        %v2556 = vshrl.u32 %v2555, 7
        %v2557 = vsub.s32 %v2554, %v2556
        %v2558 = vrot.slane %v2544, %v2557
        %v2559 = vcombine.low %v2503, %v2519
        %v2560 = vcombine.high %v2503, %v2519
        %v2562 = vunpack.c.l.s4 1934713408
        %v2563 = vunpack.c.0.s8 %v2562
        %v2564 = vlaneseq
        %v2565 = vshrl.u32 %v2564, 7
        %v2566 = vsub.s32 %v2563, %v2565
        %v2567 = vrot.slane %v2559, %v2566
        %v2569 = vunpack.c.l.s4 1934713408
        %v2570 = vunpack.c.0.s8 %v2569
        %v2571 = vlaneseq
        %v2572 = vshrl.u32 %v2571, 7
        %v2573 = vsub.s32 %v2570, %v2572
        %v2574 = vrot.slane %v2560, %v2573
        %v2575 = vcombine.low %v2510, %v2526
        %v2576 = vcombine.high %v2510, %v2526
        %v2578 = vunpack.c.l.s4 1934713408
        %v2579 = vunpack.c.0.s8 %v2578
        %v2580 = vlaneseq
        %v2581 = vshrl.u32 %v2580, 7
        %v2582 = vsub.s32 %v2579, %v2581
        %v2583 = vrot.slane %v2575, %v2582
        %v2585 = vunpack.c.l.s4 1934713408
        %v2586 = vunpack.c.0.s8 %v2585
        %v2587 = vlaneseq
        %v2588 = vshrl.u32 %v2587, 7
        %v2589 = vsub.s32 %v2586, %v2588
        %v2590 = vrot.slane %v2576, %v2589
        %v2591 = vcombine.low %v2535, %v2567
        %v2592 = vcombine.high %v2535, %v2567
        %v2593 = vcombine.low %v2542, %v2574
        %v2594 = vcombine.high %v2542, %v2574
        %v2595 = vcombine.low %v2551, %v2583
        %v2596 = vcombine.high %v2551, %v2583
        %v2597 = vcombine.low %v2558, %v2590
        %v2598 = vcombine.high %v2558, %v2590
        %2599 = vxpose.xlu0.b32.start [1/16] %v2183, 128
        %2600 = vxpose.xlu0.b32.cont [2/16] %v2319, 128
        %2601 = vxpose.xlu0.b32.cont [3/16] 0.0, 128
        %2602 = vxpose.xlu0.b32.cont [4/16] 0.0, 128
        %2603 = vxpose.xlu0.b32.cont [5/16] 0.0, 128
        %2604 = vxpose.xlu0.b32.cont [6/16] 0.0, 128
        %2605 = vxpose.xlu0.b32.cont [7/16] 0.0, 128
        %2606 = vxpose.xlu0.b32.cont [8/16] 0.0, 128
        %2607 = vxpose.xlu0.b32.cont [9/16] 0.0, 128
        %2608 = vxpose.xlu0.b32.cont [10/16] 0.0, 128
        %2609 = vxpose.xlu0.b32.cont [11/16] 0.0, 128
        %2610 = vxpose.xlu0.b32.cont [12/16] 0.0, 128
        %2611 = vxpose.xlu0.b32.cont [13/16] 0.0, 128
        %2612 = vxpose.xlu0.b32.cont [14/16] 0.0, 128
        %2613 = vxpose.xlu0.b32.cont [15/16] 0.0, 128
        %2614 = vxpose.xlu0.b32.end [16/16] 0.0, 128
        %v2615 = vpop.trf.xlu0
        %v2616 = vpop.trf.xlu0
        %v2617 = vpop.trf.xlu0
        %v2618 = vpop.trf.xlu0
        %v2619 = vpop.trf.xlu0
        %v2620 = vpop.trf.xlu0
        %v2621 = vpop.trf.xlu0
        %v2622 = vpop.trf.xlu0
        %v2623 = vpop.trf.xlu0
        %v2624 = vpop.trf.xlu0
        %v2625 = vpop.trf.xlu0
        %v2626 = vpop.trf.xlu0
        %v2627 = vpop.trf.xlu0
        %v2628 = vpop.trf.xlu0
        %v2629 = vpop.trf.xlu0
        %v2630 = vpop.trf.xlu0
        %2631 = vxpose.xlu0.b32.start [1/16] %v2184, 128
        %2632 = vxpose.xlu0.b32.cont [2/16] %v2320, 128
        %2633 = vxpose.xlu0.b32.cont [3/16] 0.0, 128
        %2634 = vxpose.xlu0.b32.cont [4/16] 0.0, 128
        %2635 = vxpose.xlu0.b32.cont [5/16] 0.0, 128
        %2636 = vxpose.xlu0.b32.cont [6/16] 0.0, 128
        %2637 = vxpose.xlu0.b32.cont [7/16] 0.0, 128
        %2638 = vxpose.xlu0.b32.cont [8/16] 0.0, 128
        %2639 = vxpose.xlu0.b32.cont [9/16] 0.0, 128
        %2640 = vxpose.xlu0.b32.cont [10/16] 0.0, 128
        %2641 = vxpose.xlu0.b32.cont [11/16] 0.0, 128
        %2642 = vxpose.xlu0.b32.cont [12/16] 0.0, 128
        %2643 = vxpose.xlu0.b32.cont [13/16] 0.0, 128
        %2644 = vxpose.xlu0.b32.cont [14/16] 0.0, 128
        %2645 = vxpose.xlu0.b32.cont [15/16] 0.0, 128
        %2646 = vxpose.xlu0.b32.end [16/16] 0.0, 128
        %v2647 = vpop.trf.xlu0
        %v2648 = vpop.trf.xlu0
        %v2649 = vpop.trf.xlu0
        %v2650 = vpop.trf.xlu0
        %v2651 = vpop.trf.xlu0
        %v2652 = vpop.trf.xlu0
        %v2653 = vpop.trf.xlu0
        %v2654 = vpop.trf.xlu0
        %v2655 = vpop.trf.xlu0
        %v2656 = vpop.trf.xlu0
        %v2657 = vpop.trf.xlu0
        %v2658 = vpop.trf.xlu0
        %v2659 = vpop.trf.xlu0
        %v2660 = vpop.trf.xlu0
        %v2661 = vpop.trf.xlu0
        %v2662 = vpop.trf.xlu0
        %2663 = vxpose.xlu0.b32.start [1/16] %v2185, 128
        %2664 = vxpose.xlu0.b32.cont [2/16] %v2321, 128
        %2665 = vxpose.xlu0.b32.cont [3/16] 0.0, 128
        %2666 = vxpose.xlu0.b32.cont [4/16] 0.0, 128
        %2667 = vxpose.xlu0.b32.cont [5/16] 0.0, 128
        %2668 = vxpose.xlu0.b32.cont [6/16] 0.0, 128
        %2669 = vxpose.xlu0.b32.cont [7/16] 0.0, 128
        %2670 = vxpose.xlu0.b32.cont [8/16] 0.0, 128
        %2671 = vxpose.xlu0.b32.cont [9/16] 0.0, 128
        %2672 = vxpose.xlu0.b32.cont [10/16] 0.0, 128
        %2673 = vxpose.xlu0.b32.cont [11/16] 0.0, 128
        %2674 = vxpose.xlu0.b32.cont [12/16] 0.0, 128
        %2675 = vxpose.xlu0.b32.cont [13/16] 0.0, 128
        %2676 = vxpose.xlu0.b32.cont [14/16] 0.0, 128
        %2677 = vxpose.xlu0.b32.cont [15/16] 0.0, 128
        %2678 = vxpose.xlu0.b32.end [16/16] 0.0, 128
        %v2679 = vpop.trf.xlu0
        %v2680 = vpop.trf.xlu0
        %v2681 = vpop.trf.xlu0
        %v2682 = vpop.trf.xlu0
        %v2683 = vpop.trf.xlu0
        %v2684 = vpop.trf.xlu0
        %v2685 = vpop.trf.xlu0
        %v2686 = vpop.trf.xlu0
        %v2687 = vpop.trf.xlu0
        %v2688 = vpop.trf.xlu0
        %v2689 = vpop.trf.xlu0
        %v2690 = vpop.trf.xlu0
        %v2691 = vpop.trf.xlu0
        %v2692 = vpop.trf.xlu0
        %v2693 = vpop.trf.xlu0
        %v2694 = vpop.trf.xlu0
        %2695 = vxpose.xlu0.b32.start [1/16] %v2186, 128
        %2696 = vxpose.xlu0.b32.cont [2/16] %v2322, 128
        %2697 = vxpose.xlu0.b32.cont [3/16] 0.0, 128
        %2698 = vxpose.xlu0.b32.cont [4/16] 0.0, 128
        %2699 = vxpose.xlu0.b32.cont [5/16] 0.0, 128
        %2700 = vxpose.xlu0.b32.cont [6/16] 0.0, 128
        %2701 = vxpose.xlu0.b32.cont [7/16] 0.0, 128
        %2702 = vxpose.xlu0.b32.cont [8/16] 0.0, 128
        %2703 = vxpose.xlu0.b32.cont [9/16] 0.0, 128
        %2704 = vxpose.xlu0.b32.cont [10/16] 0.0, 128
        %2705 = vxpose.xlu0.b32.cont [11/16] 0.0, 128
        %2706 = vxpose.xlu0.b32.cont [12/16] 0.0, 128
        %2707 = vxpose.xlu0.b32.cont [13/16] 0.0, 128
        %2708 = vxpose.xlu0.b32.cont [14/16] 0.0, 128
        %2709 = vxpose.xlu0.b32.cont [15/16] 0.0, 128
        %2710 = vxpose.xlu0.b32.end [16/16] 0.0, 128
        %v2711 = vpop.trf.xlu0
        %v2712 = vpop.trf.xlu0
        %v2713 = vpop.trf.xlu0
        %v2714 = vpop.trf.xlu0
        %v2715 = vpop.trf.xlu0
        %v2716 = vpop.trf.xlu0
        %v2717 = vpop.trf.xlu0
        %v2718 = vpop.trf.xlu0
        %v2719 = vpop.trf.xlu0
        %v2720 = vpop.trf.xlu0
        %v2721 = vpop.trf.xlu0
        %v2722 = vpop.trf.xlu0
        %v2723 = vpop.trf.xlu0
        %v2724 = vpop.trf.xlu0
        %v2725 = vpop.trf.xlu0
        %v2726 = vpop.trf.xlu0
        %2727 = vxpose.xlu0.b32.start [1/16] %v2187, 128
        %2728 = vxpose.xlu0.b32.cont [2/16] %v2323, 128
        %2729 = vxpose.xlu0.b32.cont [3/16] 0.0, 128
        %2730 = vxpose.xlu0.b32.cont [4/16] 0.0, 128
        %2731 = vxpose.xlu0.b32.cont [5/16] 0.0, 128
        %2732 = vxpose.xlu0.b32.cont [6/16] 0.0, 128
        %2733 = vxpose.xlu0.b32.cont [7/16] 0.0, 128
        %2734 = vxpose.xlu0.b32.cont [8/16] 0.0, 128
        %2735 = vxpose.xlu0.b32.cont [9/16] 0.0, 128
        %2736 = vxpose.xlu0.b32.cont [10/16] 0.0, 128
        %2737 = vxpose.xlu0.b32.cont [11/16] 0.0, 128
        %2738 = vxpose.xlu0.b32.cont [12/16] 0.0, 128
        %2739 = vxpose.xlu0.b32.cont [13/16] 0.0, 128
        %2740 = vxpose.xlu0.b32.cont [14/16] 0.0, 128
        %2741 = vxpose.xlu0.b32.cont [15/16] 0.0, 128
        %2742 = vxpose.xlu0.b32.end [16/16] 0.0, 128
        %v2743 = vpop.trf.xlu0
        %v2744 = vpop.trf.xlu0
        %v2745 = vpop.trf.xlu0
        %v2746 = vpop.trf.xlu0
        %v2747 = vpop.trf.xlu0
        %v2748 = vpop.trf.xlu0
        %v2749 = vpop.trf.xlu0
        %v2750 = vpop.trf.xlu0
        %v2751 = vpop.trf.xlu0
        %v2752 = vpop.trf.xlu0
        %v2753 = vpop.trf.xlu0
        %v2754 = vpop.trf.xlu0
        %v2755 = vpop.trf.xlu0
        %v2756 = vpop.trf.xlu0
        %v2757 = vpop.trf.xlu0
        %v2758 = vpop.trf.xlu0
        %2759 = vxpose.xlu0.b32.start [1/16] %v2188, 128
        %2760 = vxpose.xlu0.b32.cont [2/16] %v2324, 128
        %2761 = vxpose.xlu0.b32.cont [3/16] 0.0, 128
        %2762 = vxpose.xlu0.b32.cont [4/16] 0.0, 128
        %2763 = vxpose.xlu0.b32.cont [5/16] 0.0, 128
        %2764 = vxpose.xlu0.b32.cont [6/16] 0.0, 128
        %2765 = vxpose.xlu0.b32.cont [7/16] 0.0, 128
        %2766 = vxpose.xlu0.b32.cont [8/16] 0.0, 128
        %2767 = vxpose.xlu0.b32.cont [9/16] 0.0, 128
        %2768 = vxpose.xlu0.b32.cont [10/16] 0.0, 128
        %2769 = vxpose.xlu0.b32.cont [11/16] 0.0, 128
        %2770 = vxpose.xlu0.b32.cont [12/16] 0.0, 128
        %2771 = vxpose.xlu0.b32.cont [13/16] 0.0, 128
        %2772 = vxpose.xlu0.b32.cont [14/16] 0.0, 128
        %2773 = vxpose.xlu0.b32.cont [15/16] 0.0, 128
        %2774 = vxpose.xlu0.b32.end [16/16] 0.0, 128
        %v2775 = vpop.trf.xlu0
        %v2776 = vpop.trf.xlu0
        %v2777 = vpop.trf.xlu0
        %v2778 = vpop.trf.xlu0
        %v2779 = vpop.trf.xlu0
        %v2780 = vpop.trf.xlu0
        %v2781 = vpop.trf.xlu0
        %v2782 = vpop.trf.xlu0
        %v2783 = vpop.trf.xlu0
        %v2784 = vpop.trf.xlu0
        %v2785 = vpop.trf.xlu0
        %v2786 = vpop.trf.xlu0
        %v2787 = vpop.trf.xlu0
        %v2788 = vpop.trf.xlu0
        %v2789 = vpop.trf.xlu0
        %v2790 = vpop.trf.xlu0
        %2791 = vxpose.xlu0.b32.start [1/16] %v2189, 128
        %2792 = vxpose.xlu0.b32.cont [2/16] %v2325, 128
        %2793 = vxpose.xlu0.b32.cont [3/16] 0.0, 128
        %2794 = vxpose.xlu0.b32.cont [4/16] 0.0, 128
        %2795 = vxpose.xlu0.b32.cont [5/16] 0.0, 128
        %2796 = vxpose.xlu0.b32.cont [6/16] 0.0, 128
        %2797 = vxpose.xlu0.b32.cont [7/16] 0.0, 128
        %2798 = vxpose.xlu0.b32.cont [8/16] 0.0, 128
        %2799 = vxpose.xlu0.b32.cont [9/16] 0.0, 128
        %2800 = vxpose.xlu0.b32.cont [10/16] 0.0, 128
        %2801 = vxpose.xlu0.b32.cont [11/16] 0.0, 128
        %2802 = vxpose.xlu0.b32.cont [12/16] 0.0, 128
        %2803 = vxpose.xlu0.b32.cont [13/16] 0.0, 128
        %2804 = vxpose.xlu0.b32.cont [14/16] 0.0, 128
        %2805 = vxpose.xlu0.b32.cont [15/16] 0.0, 128
        %2806 = vxpose.xlu0.b32.end [16/16] 0.0, 128
        %v2807 = vpop.trf.xlu0
        %v2808 = vpop.trf.xlu0
        %v2809 = vpop.trf.xlu0
        %v2810 = vpop.trf.xlu0
        %v2811 = vpop.trf.xlu0
        %v2812 = vpop.trf.xlu0
        %v2813 = vpop.trf.xlu0
        %v2814 = vpop.trf.xlu0
        %v2815 = vpop.trf.xlu0
        %v2816 = vpop.trf.xlu0
        %v2817 = vpop.trf.xlu0
        %v2818 = vpop.trf.xlu0
        %v2819 = vpop.trf.xlu0
        %v2820 = vpop.trf.xlu0
        %v2821 = vpop.trf.xlu0
        %v2822 = vpop.trf.xlu0
        %2823 = vxpose.xlu0.b32.start [1/16] %v2190, 128
        %2824 = vxpose.xlu0.b32.cont [2/16] %v2326, 128
        %2825 = vxpose.xlu0.b32.cont [3/16] 0.0, 128
        %2826 = vxpose.xlu0.b32.cont [4/16] 0.0, 128
        %2827 = vxpose.xlu0.b32.cont [5/16] 0.0, 128
        %2828 = vxpose.xlu0.b32.cont [6/16] 0.0, 128
        %2829 = vxpose.xlu0.b32.cont [7/16] 0.0, 128
        %2830 = vxpose.xlu0.b32.cont [8/16] 0.0, 128
        %2831 = vxpose.xlu0.b32.cont [9/16] 0.0, 128
        %2832 = vxpose.xlu0.b32.cont [10/16] 0.0, 128
        %2833 = vxpose.xlu0.b32.cont [11/16] 0.0, 128
        %2834 = vxpose.xlu0.b32.cont [12/16] 0.0, 128
        %2835 = vxpose.xlu0.b32.cont [13/16] 0.0, 128
        %2836 = vxpose.xlu0.b32.cont [14/16] 0.0, 128
        %2837 = vxpose.xlu0.b32.cont [15/16] 0.0, 128
        %2838 = vxpose.xlu0.b32.end [16/16] 0.0, 128
        %v2839 = vpop.trf.xlu0
        %v2840 = vpop.trf.xlu0
        %v2841 = vpop.trf.xlu0
        %v2842 = vpop.trf.xlu0
        %v2843 = vpop.trf.xlu0
        %v2844 = vpop.trf.xlu0
        %v2845 = vpop.trf.xlu0
        %v2846 = vpop.trf.xlu0
        %v2847 = vpop.trf.xlu0
        %v2848 = vpop.trf.xlu0
        %v2849 = vpop.trf.xlu0
        %v2850 = vpop.trf.xlu0
        %v2851 = vpop.trf.xlu0
        %v2852 = vpop.trf.xlu0
        %v2853 = vpop.trf.xlu0
        %v2854 = vpop.trf.xlu0
        %2855 = vxpose.xlu0.b32.start [1/16] %v2455, 128
        %2856 = vxpose.xlu0.b32.cont [2/16] %v2591, 128
        %2857 = vxpose.xlu0.b32.cont [3/16] 0.0, 128
        %2858 = vxpose.xlu0.b32.cont [4/16] 0.0, 128
        %2859 = vxpose.xlu0.b32.cont [5/16] 0.0, 128
        %2860 = vxpose.xlu0.b32.cont [6/16] 0.0, 128
        %2861 = vxpose.xlu0.b32.cont [7/16] 0.0, 128
        %2862 = vxpose.xlu0.b32.cont [8/16] 0.0, 128
        %2863 = vxpose.xlu0.b32.cont [9/16] 0.0, 128
        %2864 = vxpose.xlu0.b32.cont [10/16] 0.0, 128
        %2865 = vxpose.xlu0.b32.cont [11/16] 0.0, 128
        %2866 = vxpose.xlu0.b32.cont [12/16] 0.0, 128
        %2867 = vxpose.xlu0.b32.cont [13/16] 0.0, 128
        %2868 = vxpose.xlu0.b32.cont [14/16] 0.0, 128
        %2869 = vxpose.xlu0.b32.cont [15/16] 0.0, 128
        %2870 = vxpose.xlu0.b32.end [16/16] 0.0, 128
        %v2871 = vpop.trf.xlu0
        %v2872 = vpop.trf.xlu0
        %v2873 = vpop.trf.xlu0
        %v2874 = vpop.trf.xlu0
        %v2875 = vpop.trf.xlu0
        %v2876 = vpop.trf.xlu0
        %v2877 = vpop.trf.xlu0
        %v2878 = vpop.trf.xlu0
        %v2879 = vpop.trf.xlu0
        %v2880 = vpop.trf.xlu0
        %v2881 = vpop.trf.xlu0
        %v2882 = vpop.trf.xlu0
        %v2883 = vpop.trf.xlu0
        %v2884 = vpop.trf.xlu0
        %v2885 = vpop.trf.xlu0
        %v2886 = vpop.trf.xlu0
        %2887 = vxpose.xlu0.b32.start [1/16] %v2456, 128
        %2888 = vxpose.xlu0.b32.cont [2/16] %v2592, 128
        %2889 = vxpose.xlu0.b32.cont [3/16] 0.0, 128
        %2890 = vxpose.xlu0.b32.cont [4/16] 0.0, 128
        %2891 = vxpose.xlu0.b32.cont [5/16] 0.0, 128
        %2892 = vxpose.xlu0.b32.cont [6/16] 0.0, 128
        %2893 = vxpose.xlu0.b32.cont [7/16] 0.0, 128
        %2894 = vxpose.xlu0.b32.cont [8/16] 0.0, 128
        %2895 = vxpose.xlu0.b32.cont [9/16] 0.0, 128
        %2896 = vxpose.xlu0.b32.cont [10/16] 0.0, 128
        %2897 = vxpose.xlu0.b32.cont [11/16] 0.0, 128
        %2898 = vxpose.xlu0.b32.cont [12/16] 0.0, 128
        %2899 = vxpose.xlu0.b32.cont [13/16] 0.0, 128
        %2900 = vxpose.xlu0.b32.cont [14/16] 0.0, 128
        %2901 = vxpose.xlu0.b32.cont [15/16] 0.0, 128
        %2902 = vxpose.xlu0.b32.end [16/16] 0.0, 128
        %v2903 = vpop.trf.xlu0
        %v2904 = vpop.trf.xlu0
        %v2905 = vpop.trf.xlu0
        %v2906 = vpop.trf.xlu0
        %v2907 = vpop.trf.xlu0
        %v2908 = vpop.trf.xlu0
        %v2909 = vpop.trf.xlu0
        %v2910 = vpop.trf.xlu0
        %v2911 = vpop.trf.xlu0
        %v2912 = vpop.trf.xlu0
        %v2913 = vpop.trf.xlu0
        %v2914 = vpop.trf.xlu0
        %v2915 = vpop.trf.xlu0
        %v2916 = vpop.trf.xlu0
        %v2917 = vpop.trf.xlu0
        %v2918 = vpop.trf.xlu0
        %2919 = vxpose.xlu0.b32.start [1/16] %v2457, 128
        %2920 = vxpose.xlu0.b32.cont [2/16] %v2593, 128
        %2921 = vxpose.xlu0.b32.cont [3/16] 0.0, 128
        %2922 = vxpose.xlu0.b32.cont [4/16] 0.0, 128
        %2923 = vxpose.xlu0.b32.cont [5/16] 0.0, 128
        %2924 = vxpose.xlu0.b32.cont [6/16] 0.0, 128
        %2925 = vxpose.xlu0.b32.cont [7/16] 0.0, 128
        %2926 = vxpose.xlu0.b32.cont [8/16] 0.0, 128
        %2927 = vxpose.xlu0.b32.cont [9/16] 0.0, 128
        %2928 = vxpose.xlu0.b32.cont [10/16] 0.0, 128
        %2929 = vxpose.xlu0.b32.cont [11/16] 0.0, 128
        %2930 = vxpose.xlu0.b32.cont [12/16] 0.0, 128
        %2931 = vxpose.xlu0.b32.cont [13/16] 0.0, 128
        %2932 = vxpose.xlu0.b32.cont [14/16] 0.0, 128
        %2933 = vxpose.xlu0.b32.cont [15/16] 0.0, 128
        %2934 = vxpose.xlu0.b32.end [16/16] 0.0, 128
        %v2935 = vpop.trf.xlu0
        %v2936 = vpop.trf.xlu0
        %v2937 = vpop.trf.xlu0
        %v2938 = vpop.trf.xlu0
        %v2939 = vpop.trf.xlu0
        %v2940 = vpop.trf.xlu0
        %v2941 = vpop.trf.xlu0
        %v2942 = vpop.trf.xlu0
        %v2943 = vpop.trf.xlu0
        %v2944 = vpop.trf.xlu0
        %v2945 = vpop.trf.xlu0
        %v2946 = vpop.trf.xlu0
        %v2947 = vpop.trf.xlu0
        %v2948 = vpop.trf.xlu0
        %v2949 = vpop.trf.xlu0
        %v2950 = vpop.trf.xlu0
        %2951 = vxpose.xlu0.b32.start [1/16] %v2458, 128
        %2952 = vxpose.xlu0.b32.cont [2/16] %v2594, 128
        %2953 = vxpose.xlu0.b32.cont [3/16] 0.0, 128
        %2954 = vxpose.xlu0.b32.cont [4/16] 0.0, 128
        %2955 = vxpose.xlu0.b32.cont [5/16] 0.0, 128
        %2956 = vxpose.xlu0.b32.cont [6/16] 0.0, 128
        %2957 = vxpose.xlu0.b32.cont [7/16] 0.0, 128
        %2958 = vxpose.xlu0.b32.cont [8/16] 0.0, 128
        %2959 = vxpose.xlu0.b32.cont [9/16] 0.0, 128
        %2960 = vxpose.xlu0.b32.cont [10/16] 0.0, 128
        %2961 = vxpose.xlu0.b32.cont [11/16] 0.0, 128
        %2962 = vxpose.xlu0.b32.cont [12/16] 0.0, 128
        %2963 = vxpose.xlu0.b32.cont [13/16] 0.0, 128
        %2964 = vxpose.xlu0.b32.cont [14/16] 0.0, 128
        %2965 = vxpose.xlu0.b32.cont [15/16] 0.0, 128
        %2966 = vxpose.xlu0.b32.end [16/16] 0.0, 128
        %v2967 = vpop.trf.xlu0
        %v2968 = vpop.trf.xlu0
        %v2969 = vpop.trf.xlu0
        %v2970 = vpop.trf.xlu0
        %v2971 = vpop.trf.xlu0
        %v2972 = vpop.trf.xlu0
        %v2973 = vpop.trf.xlu0
        %v2974 = vpop.trf.xlu0
        %v2975 = vpop.trf.xlu0
        %v2976 = vpop.trf.xlu0
        %v2977 = vpop.trf.xlu0
        %v2978 = vpop.trf.xlu0
        %v2979 = vpop.trf.xlu0
        %v2980 = vpop.trf.xlu0
        %v2981 = vpop.trf.xlu0
        %v2982 = vpop.trf.xlu0
        %2983 = vxpose.xlu0.b32.start [1/16] %v2459, 128
        %2984 = vxpose.xlu0.b32.cont [2/16] %v2595, 128
        %2985 = vxpose.xlu0.b32.cont [3/16] 0.0, 128
        %2986 = vxpose.xlu0.b32.cont [4/16] 0.0, 128
        %2987 = vxpose.xlu0.b32.cont [5/16] 0.0, 128
        %2988 = vxpose.xlu0.b32.cont [6/16] 0.0, 128
        %2989 = vxpose.xlu0.b32.cont [7/16] 0.0, 128
        %2990 = vxpose.xlu0.b32.cont [8/16] 0.0, 128
        %2991 = vxpose.xlu0.b32.cont [9/16] 0.0, 128
        %2992 = vxpose.xlu0.b32.cont [10/16] 0.0, 128
        %2993 = vxpose.xlu0.b32.cont [11/16] 0.0, 128
        %2994 = vxpose.xlu0.b32.cont [12/16] 0.0, 128
        %2995 = vxpose.xlu0.b32.cont [13/16] 0.0, 128
        %2996 = vxpose.xlu0.b32.cont [14/16] 0.0, 128
        %2997 = vxpose.xlu0.b32.cont [15/16] 0.0, 128
        %2998 = vxpose.xlu0.b32.end [16/16] 0.0, 128
        %v2999 = vpop.trf.xlu0
        %v3000 = vpop.trf.xlu0
        %v3001 = vpop.trf.xlu0
        %v3002 = vpop.trf.xlu0
        %v3003 = vpop.trf.xlu0
        %v3004 = vpop.trf.xlu0
        %v3005 = vpop.trf.xlu0
        %v3006 = vpop.trf.xlu0
        %v3007 = vpop.trf.xlu0
        %v3008 = vpop.trf.xlu0
        %v3009 = vpop.trf.xlu0
        %v3010 = vpop.trf.xlu0
        %v3011 = vpop.trf.xlu0
        %v3012 = vpop.trf.xlu0
        %v3013 = vpop.trf.xlu0
        %v3014 = vpop.trf.xlu0
        %3015 = vxpose.xlu0.b32.start [1/16] %v2460, 128
        %3016 = vxpose.xlu0.b32.cont [2/16] %v2596, 128
        %3017 = vxpose.xlu0.b32.cont [3/16] 0.0, 128
        %3018 = vxpose.xlu0.b32.cont [4/16] 0.0, 128
        %3019 = vxpose.xlu0.b32.cont [5/16] 0.0, 128
        %3020 = vxpose.xlu0.b32.cont [6/16] 0.0, 128
        %3021 = vxpose.xlu0.b32.cont [7/16] 0.0, 128
        %3022 = vxpose.xlu0.b32.cont [8/16] 0.0, 128
        %3023 = vxpose.xlu0.b32.cont [9/16] 0.0, 128
        %3024 = vxpose.xlu0.b32.cont [10/16] 0.0, 128
        %3025 = vxpose.xlu0.b32.cont [11/16] 0.0, 128
        %3026 = vxpose.xlu0.b32.cont [12/16] 0.0, 128
        %3027 = vxpose.xlu0.b32.cont [13/16] 0.0, 128
        %3028 = vxpose.xlu0.b32.cont [14/16] 0.0, 128
        %3029 = vxpose.xlu0.b32.cont [15/16] 0.0, 128
        %3030 = vxpose.xlu0.b32.end [16/16] 0.0, 128
        %v3031 = vpop.trf.xlu0
        %v3032 = vpop.trf.xlu0
        %v3033 = vpop.trf.xlu0
        %v3034 = vpop.trf.xlu0
        %v3035 = vpop.trf.xlu0
        %v3036 = vpop.trf.xlu0
        %v3037 = vpop.trf.xlu0
        %v3038 = vpop.trf.xlu0
        %v3039 = vpop.trf.xlu0
        %v3040 = vpop.trf.xlu0
        %v3041 = vpop.trf.xlu0
        %v3042 = vpop.trf.xlu0
        %v3043 = vpop.trf.xlu0
        %v3044 = vpop.trf.xlu0
        %v3045 = vpop.trf.xlu0
        %v3046 = vpop.trf.xlu0
        %3047 = vxpose.xlu0.b32.start [1/16] %v2461, 128
        %3048 = vxpose.xlu0.b32.cont [2/16] %v2597, 128
        %3049 = vxpose.xlu0.b32.cont [3/16] 0.0, 128
        %3050 = vxpose.xlu0.b32.cont [4/16] 0.0, 128
        %3051 = vxpose.xlu0.b32.cont [5/16] 0.0, 128
        %3052 = vxpose.xlu0.b32.cont [6/16] 0.0, 128
        %3053 = vxpose.xlu0.b32.cont [7/16] 0.0, 128
        %3054 = vxpose.xlu0.b32.cont [8/16] 0.0, 128
        %3055 = vxpose.xlu0.b32.cont [9/16] 0.0, 128
        %3056 = vxpose.xlu0.b32.cont [10/16] 0.0, 128
        %3057 = vxpose.xlu0.b32.cont [11/16] 0.0, 128
        %3058 = vxpose.xlu0.b32.cont [12/16] 0.0, 128
        %3059 = vxpose.xlu0.b32.cont [13/16] 0.0, 128
        %3060 = vxpose.xlu0.b32.cont [14/16] 0.0, 128
        %3061 = vxpose.xlu0.b32.cont [15/16] 0.0, 128
        %3062 = vxpose.xlu0.b32.end [16/16] 0.0, 128
        %v3063 = vpop.trf.xlu0
        %v3064 = vpop.trf.xlu0
        %v3065 = vpop.trf.xlu0
        %v3066 = vpop.trf.xlu0
        %v3067 = vpop.trf.xlu0
        %v3068 = vpop.trf.xlu0
        %v3069 = vpop.trf.xlu0
        %v3070 = vpop.trf.xlu0
        %v3071 = vpop.trf.xlu0
        %v3072 = vpop.trf.xlu0
        %v3073 = vpop.trf.xlu0
        %v3074 = vpop.trf.xlu0
        %v3075 = vpop.trf.xlu0
        %v3076 = vpop.trf.xlu0
        %v3077 = vpop.trf.xlu0
        %v3078 = vpop.trf.xlu0
        %3079 = vxpose.xlu0.b32.start [1/16] %v2462, 128
        %3080 = vxpose.xlu0.b32.cont [2/16] %v2598, 128
        %3081 = vxpose.xlu0.b32.cont [3/16] 0.0, 128
        %3082 = vxpose.xlu0.b32.cont [4/16] 0.0, 128
        %3083 = vxpose.xlu0.b32.cont [5/16] 0.0, 128
        %3084 = vxpose.xlu0.b32.cont [6/16] 0.0, 128
        %3085 = vxpose.xlu0.b32.cont [7/16] 0.0, 128
        %3086 = vxpose.xlu0.b32.cont [8/16] 0.0, 128
        %3087 = vxpose.xlu0.b32.cont [9/16] 0.0, 128
        %3088 = vxpose.xlu0.b32.cont [10/16] 0.0, 128
        %3089 = vxpose.xlu0.b32.cont [11/16] 0.0, 128
        %3090 = vxpose.xlu0.b32.cont [12/16] 0.0, 128
        %3091 = vxpose.xlu0.b32.cont [13/16] 0.0, 128
        %3092 = vxpose.xlu0.b32.cont [14/16] 0.0, 128
        %3093 = vxpose.xlu0.b32.cont [15/16] 0.0, 128
        %3094 = vxpose.xlu0.b32.end [16/16] 0.0, 128
        %v3095 = vpop.trf.xlu0
        %v3096 = vpop.trf.xlu0
        %v3097 = vpop.trf.xlu0
        %v3098 = vpop.trf.xlu0
        %v3099 = vpop.trf.xlu0
        %v3100 = vpop.trf.xlu0
        %v3101 = vpop.trf.xlu0
        %v3102 = vpop.trf.xlu0
        %v3103 = vpop.trf.xlu0
        %v3104 = vpop.trf.xlu0
        %v3105 = vpop.trf.xlu0
        %v3106 = vpop.trf.xlu0
        %v3107 = vpop.trf.xlu0
        %v3108 = vpop.trf.xlu0
        %v3109 = vpop.trf.xlu0
        %v3110 = vpop.trf.xlu0
        %v3111 = vcombine.low %v2615, %v2679
        %v3112 = vcombine.high %v2615, %v2679
        %v3114 = vunpack.c.l.s4 1983009808
        %v3115 = vunpack.c.0.s8 %v3114
        %v3116 = vlaneseq
        %v3117 = vshrl.u32 %v3116, 7
        %v3118 = vsub.s32 %v3115, %v3117
        %v3119 = vrot.slane %v3111, %v3118
        %v3121 = vunpack.c.l.s4 1983009808
        %v3122 = vunpack.c.0.s8 %v3121
        %v3123 = vlaneseq
        %v3124 = vshrl.u32 %v3123, 7
        %v3125 = vsub.s32 %v3122, %v3124
        %v3126 = vrot.slane %v3112, %v3125
        %v3127 = vcombine.low %v2647, %v2711
        %v3128 = vcombine.high %v2647, %v2711
        %v3130 = vunpack.c.l.s4 1983009808
        %v3131 = vunpack.c.0.s8 %v3130
        %v3132 = vlaneseq
        %v3133 = vshrl.u32 %v3132, 7
        %v3134 = vsub.s32 %v3131, %v3133
        %v3135 = vrot.slane %v3127, %v3134
        %v3137 = vunpack.c.l.s4 1983009808
        %v3138 = vunpack.c.0.s8 %v3137
        %v3139 = vlaneseq
        %v3140 = vshrl.u32 %v3139, 7
        %v3141 = vsub.s32 %v3138, %v3140
        %v3142 = vrot.slane %v3128, %v3141
        %v3143 = vcombine.low %v2743, %v2807
        %v3144 = vcombine.high %v2743, %v2807
        %v3146 = vunpack.c.l.s4 1983009808
        %v3147 = vunpack.c.0.s8 %v3146
        %v3148 = vlaneseq
        %v3149 = vshrl.u32 %v3148, 7
        %v3150 = vsub.s32 %v3147, %v3149
        %v3151 = vrot.slane %v3143, %v3150
        %v3153 = vunpack.c.l.s4 1983009808
        %v3154 = vunpack.c.0.s8 %v3153
        %v3155 = vlaneseq
        %v3156 = vshrl.u32 %v3155, 7
        %v3157 = vsub.s32 %v3154, %v3156
        %v3158 = vrot.slane %v3144, %v3157
        %v3159 = vcombine.low %v2775, %v2839
        %v3160 = vcombine.high %v2775, %v2839
        %v3162 = vunpack.c.l.s4 1983009808
        %v3163 = vunpack.c.0.s8 %v3162
        %v3164 = vlaneseq
        %v3165 = vshrl.u32 %v3164, 7
        %v3166 = vsub.s32 %v3163, %v3165
        %v3167 = vrot.slane %v3159, %v3166
        %v3169 = vunpack.c.l.s4 1983009808
        %v3170 = vunpack.c.0.s8 %v3169
        %v3171 = vlaneseq
        %v3172 = vshrl.u32 %v3171, 7
        %v3173 = vsub.s32 %v3170, %v3172
        %v3174 = vrot.slane %v3160, %v3173
        %v3175 = vcombine.low %v3119, %v3135
        %v3176 = vcombine.high %v3119, %v3135
        %v3178 = vunpack.c.l.s4 1934713408
        %v3179 = vunpack.c.0.s8 %v3178
        %v3180 = vlaneseq
        %v3181 = vshrl.u32 %v3180, 7
        %v3182 = vsub.s32 %v3179, %v3181
        %v3183 = vrot.slane %v3175, %v3182
        %v3185 = vunpack.c.l.s4 1934713408
        %v3186 = vunpack.c.0.s8 %v3185
        %v3187 = vlaneseq
        %v3188 = vshrl.u32 %v3187, 7
        %v3189 = vsub.s32 %v3186, %v3188
        %v3190 = vrot.slane %v3176, %v3189
        %v3191 = vcombine.low %v3126, %v3142
        %v3192 = vcombine.high %v3126, %v3142
        %v3194 = vunpack.c.l.s4 1934713408
        %v3195 = vunpack.c.0.s8 %v3194
        %v3196 = vlaneseq
        %v3197 = vshrl.u32 %v3196, 7
        %v3198 = vsub.s32 %v3195, %v3197
        %v3199 = vrot.slane %v3191, %v3198
        %v3201 = vunpack.c.l.s4 1934713408
        %v3202 = vunpack.c.0.s8 %v3201
        %v3203 = vlaneseq
        %v3204 = vshrl.u32 %v3203, 7
        %v3205 = vsub.s32 %v3202, %v3204
        %v3206 = vrot.slane %v3192, %v3205
        %v3207 = vcombine.low %v3151, %v3167
        %v3208 = vcombine.high %v3151, %v3167
        %v3210 = vunpack.c.l.s4 1934713408
        %v3211 = vunpack.c.0.s8 %v3210
        %v3212 = vlaneseq
        %v3213 = vshrl.u32 %v3212, 7
        %v3214 = vsub.s32 %v3211, %v3213
        %v3215 = vrot.slane %v3207, %v3214
        %v3217 = vunpack.c.l.s4 1934713408
        %v3218 = vunpack.c.0.s8 %v3217
        %v3219 = vlaneseq
        %v3220 = vshrl.u32 %v3219, 7
        %v3221 = vsub.s32 %v3218, %v3220
        %v3222 = vrot.slane %v3208, %v3221
        %v3223 = vcombine.low %v3158, %v3174
        %v3224 = vcombine.high %v3158, %v3174
        %v3226 = vunpack.c.l.s4 1934713408
        %v3227 = vunpack.c.0.s8 %v3226
        %v3228 = vlaneseq
        %v3229 = vshrl.u32 %v3228, 7
        %v3230 = vsub.s32 %v3227, %v3229
        %v3231 = vrot.slane %v3223, %v3230
        %v3233 = vunpack.c.l.s4 1934713408
        %v3234 = vunpack.c.0.s8 %v3233
        %v3235 = vlaneseq
        %v3236 = vshrl.u32 %v3235, 7
        %v3237 = vsub.s32 %v3234, %v3236
        %v3238 = vrot.slane %v3224, %v3237
        %v3239 = vcombine.low %v3183, %v3215
        %v3240 = vcombine.high %v3183, %v3215
        %v3241 = vcombine.low %v3190, %v3222
        %v3242 = vcombine.high %v3190, %v3222
        %v3243 = vcombine.low %v3199, %v3231
        %v3244 = vcombine.high %v3199, %v3231
        %v3245 = vcombine.low %v3206, %v3238
        %v3246 = vcombine.high %v3206, %v3238
        %v3247 = vcombine.low %v2871, %v2935
        %v3248 = vcombine.high %v2871, %v2935
        %v3250 = vunpack.c.l.s4 1983009808
        %v3251 = vunpack.c.0.s8 %v3250
        %v3252 = vlaneseq
        %v3253 = vshrl.u32 %v3252, 7
        %v3254 = vsub.s32 %v3251, %v3253
        %v3255 = vrot.slane %v3247, %v3254
        %v3257 = vunpack.c.l.s4 1983009808
        %v3258 = vunpack.c.0.s8 %v3257
        %v3259 = vlaneseq
        %v3260 = vshrl.u32 %v3259, 7
        %v3261 = vsub.s32 %v3258, %v3260
        %v3262 = vrot.slane %v3248, %v3261
        %v3263 = vcombine.low %v2903, %v2967
        %v3264 = vcombine.high %v2903, %v2967
        %v3266 = vunpack.c.l.s4 1983009808
        %v3267 = vunpack.c.0.s8 %v3266
        %v3268 = vlaneseq
        %v3269 = vshrl.u32 %v3268, 7
        %v3270 = vsub.s32 %v3267, %v3269
        %v3271 = vrot.slane %v3263, %v3270
        %v3273 = vunpack.c.l.s4 1983009808
        %v3274 = vunpack.c.0.s8 %v3273
        %v3275 = vlaneseq
        %v3276 = vshrl.u32 %v3275, 7
        %v3277 = vsub.s32 %v3274, %v3276
        %v3278 = vrot.slane %v3264, %v3277
        %v3279 = vcombine.low %v2999, %v3063
        %v3280 = vcombine.high %v2999, %v3063
        %v3282 = vunpack.c.l.s4 1983009808
        %v3283 = vunpack.c.0.s8 %v3282
        %v3284 = vlaneseq
        %v3285 = vshrl.u32 %v3284, 7
        %v3286 = vsub.s32 %v3283, %v3285
        %v3287 = vrot.slane %v3279, %v3286
        %v3289 = vunpack.c.l.s4 1983009808
        %v3290 = vunpack.c.0.s8 %v3289
        %v3291 = vlaneseq
        %v3292 = vshrl.u32 %v3291, 7
        %v3293 = vsub.s32 %v3290, %v3292
        %v3294 = vrot.slane %v3280, %v3293
        %v3295 = vcombine.low %v3031, %v3095
        %v3296 = vcombine.high %v3031, %v3095
        %v3298 = vunpack.c.l.s4 1983009808
        %v3299 = vunpack.c.0.s8 %v3298
        %v3300 = vlaneseq
        %v3301 = vshrl.u32 %v3300, 7
        %v3302 = vsub.s32 %v3299, %v3301
        %v3303 = vrot.slane %v3295, %v3302
        %v3305 = vunpack.c.l.s4 1983009808
        %v3306 = vunpack.c.0.s8 %v3305
        %v3307 = vlaneseq
        %v3308 = vshrl.u32 %v3307, 7
        %v3309 = vsub.s32 %v3306, %v3308
        %v3310 = vrot.slane %v3296, %v3309
        %v3311 = vcombine.low %v3255, %v3271
        %v3312 = vcombine.high %v3255, %v3271
        %v3314 = vunpack.c.l.s4 1934713408
        %v3315 = vunpack.c.0.s8 %v3314
        %v3316 = vlaneseq
        %v3317 = vshrl.u32 %v3316, 7
        %v3318 = vsub.s32 %v3315, %v3317
        %v3319 = vrot.slane %v3311, %v3318
        %v3321 = vunpack.c.l.s4 1934713408
        %v3322 = vunpack.c.0.s8 %v3321
        %v3323 = vlaneseq
        %v3324 = vshrl.u32 %v3323, 7
        %v3325 = vsub.s32 %v3322, %v3324
        %v3326 = vrot.slane %v3312, %v3325
        %v3327 = vcombine.low %v3262, %v3278
        %v3328 = vcombine.high %v3262, %v3278
        %v3330 = vunpack.c.l.s4 1934713408
        %v3331 = vunpack.c.0.s8 %v3330
        %v3332 = vlaneseq
        %v3333 = vshrl.u32 %v3332, 7
        %v3334 = vsub.s32 %v3331, %v3333
        %v3335 = vrot.slane %v3327, %v3334
        %v3337 = vunpack.c.l.s4 1934713408
        %v3338 = vunpack.c.0.s8 %v3337
        %v3339 = vlaneseq
        %v3340 = vshrl.u32 %v3339, 7
        %v3341 = vsub.s32 %v3338, %v3340
        %v3342 = vrot.slane %v3328, %v3341
        %v3343 = vcombine.low %v3287, %v3303
        %v3344 = vcombine.high %v3287, %v3303
        %v3346 = vunpack.c.l.s4 1934713408
        %v3347 = vunpack.c.0.s8 %v3346
        %v3348 = vlaneseq
        %v3349 = vshrl.u32 %v3348, 7
        %v3350 = vsub.s32 %v3347, %v3349
        %v3351 = vrot.slane %v3343, %v3350
        %v3353 = vunpack.c.l.s4 1934713408
        %v3354 = vunpack.c.0.s8 %v3353
        %v3355 = vlaneseq
        %v3356 = vshrl.u32 %v3355, 7
        %v3357 = vsub.s32 %v3354, %v3356
        %v3358 = vrot.slane %v3344, %v3357
        %v3359 = vcombine.low %v3294, %v3310
        %v3360 = vcombine.high %v3294, %v3310
        %v3362 = vunpack.c.l.s4 1934713408
        %v3363 = vunpack.c.0.s8 %v3362
        %v3364 = vlaneseq
        %v3365 = vshrl.u32 %v3364, 7
        %v3366 = vsub.s32 %v3363, %v3365
        %v3367 = vrot.slane %v3359, %v3366
        %v3369 = vunpack.c.l.s4 1934713408
        %v3370 = vunpack.c.0.s8 %v3369
        %v3371 = vlaneseq
        %v3372 = vshrl.u32 %v3371, 7
        %v3373 = vsub.s32 %v3370, %v3372
        %v3374 = vrot.slane %v3360, %v3373
        %v3375 = vcombine.low %v3319, %v3351
        %v3376 = vcombine.high %v3319, %v3351
        %v3377 = vcombine.low %v3326, %v3358
        %v3378 = vcombine.high %v3326, %v3358
        %v3379 = vcombine.low %v3335, %v3367
        %v3380 = vcombine.high %v3335, %v3367
        %v3381 = vcombine.low %v3342, %v3374
        %v3382 = vcombine.high %v3342, %v3374
        %v3383 = vcombine.low %v2616, %v2680
        %v3384 = vcombine.high %v2616, %v2680
        %v3386 = vunpack.c.l.s4 1983009808
        %v3387 = vunpack.c.0.s8 %v3386
        %v3388 = vlaneseq
        %v3389 = vshrl.u32 %v3388, 7
        %v3390 = vsub.s32 %v3387, %v3389
        %v3391 = vrot.slane %v3383, %v3390
        %v3393 = vunpack.c.l.s4 1983009808
        %v3394 = vunpack.c.0.s8 %v3393
        %v3395 = vlaneseq
        %v3396 = vshrl.u32 %v3395, 7
        %v3397 = vsub.s32 %v3394, %v3396
        %v3398 = vrot.slane %v3384, %v3397
        %v3399 = vcombine.low %v2648, %v2712
        %v3400 = vcombine.high %v2648, %v2712
        %v3402 = vunpack.c.l.s4 1983009808
        %v3403 = vunpack.c.0.s8 %v3402
        %v3404 = vlaneseq
        %v3405 = vshrl.u32 %v3404, 7
        %v3406 = vsub.s32 %v3403, %v3405
        %v3407 = vrot.slane %v3399, %v3406
        %v3409 = vunpack.c.l.s4 1983009808
        %v3410 = vunpack.c.0.s8 %v3409
        %v3411 = vlaneseq
        %v3412 = vshrl.u32 %v3411, 7
        %v3413 = vsub.s32 %v3410, %v3412
        %v3414 = vrot.slane %v3400, %v3413
        %v3415 = vcombine.low %v2744, %v2808
        %v3416 = vcombine.high %v2744, %v2808
        %v3418 = vunpack.c.l.s4 1983009808
        %v3419 = vunpack.c.0.s8 %v3418
        %v3420 = vlaneseq
        %v3421 = vshrl.u32 %v3420, 7
        %v3422 = vsub.s32 %v3419, %v3421
        %v3423 = vrot.slane %v3415, %v3422
        %v3425 = vunpack.c.l.s4 1983009808
        %v3426 = vunpack.c.0.s8 %v3425
        %v3427 = vlaneseq
        %v3428 = vshrl.u32 %v3427, 7
        %v3429 = vsub.s32 %v3426, %v3428
        %v3430 = vrot.slane %v3416, %v3429
        %v3431 = vcombine.low %v2776, %v2840
        %v3432 = vcombine.high %v2776, %v2840
        %v3434 = vunpack.c.l.s4 1983009808
        %v3435 = vunpack.c.0.s8 %v3434
        %v3436 = vlaneseq
        %v3437 = vshrl.u32 %v3436, 7
        %v3438 = vsub.s32 %v3435, %v3437
        %v3439 = vrot.slane %v3431, %v3438
        %v3441 = vunpack.c.l.s4 1983009808
        %v3442 = vunpack.c.0.s8 %v3441
        %v3443 = vlaneseq
        %v3444 = vshrl.u32 %v3443, 7
        %v3445 = vsub.s32 %v3442, %v3444
        %v3446 = vrot.slane %v3432, %v3445
        %v3447 = vcombine.low %v3391, %v3407
        %v3448 = vcombine.high %v3391, %v3407
        %v3450 = vunpack.c.l.s4 1934713408
        %v3451 = vunpack.c.0.s8 %v3450
        %v3452 = vlaneseq
        %v3453 = vshrl.u32 %v3452, 7
        %v3454 = vsub.s32 %v3451, %v3453
        %v3455 = vrot.slane %v3447, %v3454
        %v3457 = vunpack.c.l.s4 1934713408
        %v3458 = vunpack.c.0.s8 %v3457
        %v3459 = vlaneseq
        %v3460 = vshrl.u32 %v3459, 7
        %v3461 = vsub.s32 %v3458, %v3460
        %v3462 = vrot.slane %v3448, %v3461
        %v3463 = vcombine.low %v3398, %v3414
        %v3464 = vcombine.high %v3398, %v3414
        %v3466 = vunpack.c.l.s4 1934713408
        %v3467 = vunpack.c.0.s8 %v3466
        %v3468 = vlaneseq
        %v3469 = vshrl.u32 %v3468, 7
        %v3470 = vsub.s32 %v3467, %v3469
        %v3471 = vrot.slane %v3463, %v3470
        %v3473 = vunpack.c.l.s4 1934713408
        %v3474 = vunpack.c.0.s8 %v3473
        %v3475 = vlaneseq
        %v3476 = vshrl.u32 %v3475, 7
        %v3477 = vsub.s32 %v3474, %v3476
        %v3478 = vrot.slane %v3464, %v3477
        %v3479 = vcombine.low %v3423, %v3439
        %v3480 = vcombine.high %v3423, %v3439
        %v3482 = vunpack.c.l.s4 1934713408
        %v3483 = vunpack.c.0.s8 %v3482
        %v3484 = vlaneseq
        %v3485 = vshrl.u32 %v3484, 7
        %v3486 = vsub.s32 %v3483, %v3485
        %v3487 = vrot.slane %v3479, %v3486
        %v3489 = vunpack.c.l.s4 1934713408
        %v3490 = vunpack.c.0.s8 %v3489
        %v3491 = vlaneseq
        %v3492 = vshrl.u32 %v3491, 7
        %v3493 = vsub.s32 %v3490, %v3492
        %v3494 = vrot.slane %v3480, %v3493
        %v3495 = vcombine.low %v3430, %v3446
        %v3496 = vcombine.high %v3430, %v3446
        %v3498 = vunpack.c.l.s4 1934713408
        %v3499 = vunpack.c.0.s8 %v3498
        %v3500 = vlaneseq
        %v3501 = vshrl.u32 %v3500, 7
        %v3502 = vsub.s32 %v3499, %v3501
        %v3503 = vrot.slane %v3495, %v3502
        %v3505 = vunpack.c.l.s4 1934713408
        %v3506 = vunpack.c.0.s8 %v3505
        %v3507 = vlaneseq
        %v3508 = vshrl.u32 %v3507, 7
        %v3509 = vsub.s32 %v3506, %v3508
        %v3510 = vrot.slane %v3496, %v3509
        %v3511 = vcombine.low %v3455, %v3487
        %v3512 = vcombine.high %v3455, %v3487
        %v3513 = vcombine.low %v3462, %v3494
        %v3514 = vcombine.high %v3462, %v3494
        %v3515 = vcombine.low %v3471, %v3503
        %v3516 = vcombine.high %v3471, %v3503
        %v3517 = vcombine.low %v3478, %v3510
        %v3518 = vcombine.high %v3478, %v3510
        %v3519 = vcombine.low %v2872, %v2936
        %v3520 = vcombine.high %v2872, %v2936
        %v3522 = vunpack.c.l.s4 1983009808
        %v3523 = vunpack.c.0.s8 %v3522
        %v3524 = vlaneseq
        %v3525 = vshrl.u32 %v3524, 7
        %v3526 = vsub.s32 %v3523, %v3525
        %v3527 = vrot.slane %v3519, %v3526
        %v3529 = vunpack.c.l.s4 1983009808
        %v3530 = vunpack.c.0.s8 %v3529
        %v3531 = vlaneseq
        %v3532 = vshrl.u32 %v3531, 7
        %v3533 = vsub.s32 %v3530, %v3532
        %v3534 = vrot.slane %v3520, %v3533
        %v3535 = vcombine.low %v2904, %v2968
        %v3536 = vcombine.high %v2904, %v2968
        %v3538 = vunpack.c.l.s4 1983009808
        %v3539 = vunpack.c.0.s8 %v3538
        %v3540 = vlaneseq
        %v3541 = vshrl.u32 %v3540, 7
        %v3542 = vsub.s32 %v3539, %v3541
        %v3543 = vrot.slane %v3535, %v3542
        %v3545 = vunpack.c.l.s4 1983009808
        %v3546 = vunpack.c.0.s8 %v3545
        %v3547 = vlaneseq
        %v3548 = vshrl.u32 %v3547, 7
        %v3549 = vsub.s32 %v3546, %v3548
        %v3550 = vrot.slane %v3536, %v3549
        %v3551 = vcombine.low %v3000, %v3064
        %v3552 = vcombine.high %v3000, %v3064
        %v3554 = vunpack.c.l.s4 1983009808
        %v3555 = vunpack.c.0.s8 %v3554
        %v3556 = vlaneseq
        %v3557 = vshrl.u32 %v3556, 7
        %v3558 = vsub.s32 %v3555, %v3557
        %v3559 = vrot.slane %v3551, %v3558
        %v3561 = vunpack.c.l.s4 1983009808
        %v3562 = vunpack.c.0.s8 %v3561
        %v3563 = vlaneseq
        %v3564 = vshrl.u32 %v3563, 7
        %v3565 = vsub.s32 %v3562, %v3564
        %v3566 = vrot.slane %v3552, %v3565
        %v3567 = vcombine.low %v3032, %v3096
        %v3568 = vcombine.high %v3032, %v3096
        %v3570 = vunpack.c.l.s4 1983009808
        %v3571 = vunpack.c.0.s8 %v3570
        %v3572 = vlaneseq
        %v3573 = vshrl.u32 %v3572, 7
        %v3574 = vsub.s32 %v3571, %v3573
        %v3575 = vrot.slane %v3567, %v3574
        %v3577 = vunpack.c.l.s4 1983009808
        %v3578 = vunpack.c.0.s8 %v3577
        %v3579 = vlaneseq
        %v3580 = vshrl.u32 %v3579, 7
        %v3581 = vsub.s32 %v3578, %v3580
        %v3582 = vrot.slane %v3568, %v3581
        %v3583 = vcombine.low %v3527, %v3543
        %v3584 = vcombine.high %v3527, %v3543
        %v3586 = vunpack.c.l.s4 1934713408
        %v3587 = vunpack.c.0.s8 %v3586
        %v3588 = vlaneseq
        %v3589 = vshrl.u32 %v3588, 7
        %v3590 = vsub.s32 %v3587, %v3589
        %v3591 = vrot.slane %v3583, %v3590
        %v3593 = vunpack.c.l.s4 1934713408
        %v3594 = vunpack.c.0.s8 %v3593
        %v3595 = vlaneseq
        %v3596 = vshrl.u32 %v3595, 7
        %v3597 = vsub.s32 %v3594, %v3596
        %v3598 = vrot.slane %v3584, %v3597
        %v3599 = vcombine.low %v3534, %v3550
        %v3600 = vcombine.high %v3534, %v3550
        %v3602 = vunpack.c.l.s4 1934713408
        %v3603 = vunpack.c.0.s8 %v3602
        %v3604 = vlaneseq
        %v3605 = vshrl.u32 %v3604, 7
        %v3606 = vsub.s32 %v3603, %v3605
        %v3607 = vrot.slane %v3599, %v3606
        %v3609 = vunpack.c.l.s4 1934713408
        %v3610 = vunpack.c.0.s8 %v3609
        %v3611 = vlaneseq
        %v3612 = vshrl.u32 %v3611, 7
        %v3613 = vsub.s32 %v3610, %v3612
        %v3614 = vrot.slane %v3600, %v3613
        %v3615 = vcombine.low %v3559, %v3575
        %v3616 = vcombine.high %v3559, %v3575
        %v3618 = vunpack.c.l.s4 1934713408
        %v3619 = vunpack.c.0.s8 %v3618
        %v3620 = vlaneseq
        %v3621 = vshrl.u32 %v3620, 7
        %v3622 = vsub.s32 %v3619, %v3621
        %v3623 = vrot.slane %v3615, %v3622
        %v3625 = vunpack.c.l.s4 1934713408
        %v3626 = vunpack.c.0.s8 %v3625
        %v3627 = vlaneseq
        %v3628 = vshrl.u32 %v3627, 7
        %v3629 = vsub.s32 %v3626, %v3628
        %v3630 = vrot.slane %v3616, %v3629
        %v3631 = vcombine.low %v3566, %v3582
        %v3632 = vcombine.high %v3566, %v3582
        %v3634 = vunpack.c.l.s4 1934713408
        %v3635 = vunpack.c.0.s8 %v3634
        %v3636 = vlaneseq
        %v3637 = vshrl.u32 %v3636, 7
        %v3638 = vsub.s32 %v3635, %v3637
        %v3639 = vrot.slane %v3631, %v3638
        %v3641 = vunpack.c.l.s4 1934713408
        %v3642 = vunpack.c.0.s8 %v3641
        %v3643 = vlaneseq
        %v3644 = vshrl.u32 %v3643, 7
        %v3645 = vsub.s32 %v3642, %v3644
        %v3646 = vrot.slane %v3632, %v3645
        %v3647 = vcombine.low %v3591, %v3623
        %v3648 = vcombine.high %v3591, %v3623
        %v3649 = vcombine.low %v3598, %v3630
        %v3650 = vcombine.high %v3598, %v3630
        %v3651 = vcombine.low %v3607, %v3639
        %v3652 = vcombine.high %v3607, %v3639
        %v3653 = vcombine.low %v3614, %v3646
        %v3654 = vcombine.high %v3614, %v3646
        %v3655 = vcombine.low %v3239, %v3241
        %v3656 = vcombine.high %v3239, %v3241
        %v3658 = vunpack.c.l.s4 1983009808
        %v3659 = vunpack.c.0.s8 %v3658
        %v3660 = vlaneseq
        %v3661 = vshrl.u32 %v3660, 7
        %v3662 = vsub.s32 %v3659, %v3661
        %v3663 = vrot.slane %v3655, %v3662
        %v3665 = vunpack.c.l.s4 1983009808
        %v3666 = vunpack.c.0.s8 %v3665
        %v3667 = vlaneseq
        %v3668 = vshrl.u32 %v3667, 7
        %v3669 = vsub.s32 %v3666, %v3668
        %v3670 = vrot.slane %v3656, %v3669
        %v3671 = vcombine.low %v3240, %v3242
        %v3672 = vcombine.high %v3240, %v3242
        %v3674 = vunpack.c.l.s4 1983009808
        %v3675 = vunpack.c.0.s8 %v3674
        %v3676 = vlaneseq
        %v3677 = vshrl.u32 %v3676, 7
        %v3678 = vsub.s32 %v3675, %v3677
        %v3679 = vrot.slane %v3671, %v3678
        %v3681 = vunpack.c.l.s4 1983009808
        %v3682 = vunpack.c.0.s8 %v3681
        %v3683 = vlaneseq
        %v3684 = vshrl.u32 %v3683, 7
        %v3685 = vsub.s32 %v3682, %v3684
        %v3686 = vrot.slane %v3672, %v3685
        %v3687 = vcombine.low %v3243, %v3245
        %v3688 = vcombine.high %v3243, %v3245
        %v3690 = vunpack.c.l.s4 1983009808
        %v3691 = vunpack.c.0.s8 %v3690
        %v3692 = vlaneseq
        %v3693 = vshrl.u32 %v3692, 7
        %v3694 = vsub.s32 %v3691, %v3693
        %v3695 = vrot.slane %v3687, %v3694
        %v3697 = vunpack.c.l.s4 1983009808
        %v3698 = vunpack.c.0.s8 %v3697
        %v3699 = vlaneseq
        %v3700 = vshrl.u32 %v3699, 7
        %v3701 = vsub.s32 %v3698, %v3700
        %v3702 = vrot.slane %v3688, %v3701
        %v3703 = vcombine.low %v3244, %v3246
        %v3704 = vcombine.high %v3244, %v3246
        %v3706 = vunpack.c.l.s4 1983009808
        %v3707 = vunpack.c.0.s8 %v3706
        %v3708 = vlaneseq
        %v3709 = vshrl.u32 %v3708, 7
        %v3710 = vsub.s32 %v3707, %v3709
        %v3711 = vrot.slane %v3703, %v3710
        %v3713 = vunpack.c.l.s4 1983009808
        %v3714 = vunpack.c.0.s8 %v3713
        %v3715 = vlaneseq
        %v3716 = vshrl.u32 %v3715, 7
        %v3717 = vsub.s32 %v3714, %v3716
        %v3718 = vrot.slane %v3704, %v3717
        %v3719 = vcombine.low %v3663, %v3679
        %v3720 = vcombine.high %v3663, %v3679
        %v3722 = vunpack.c.l.s4 1934713408
        %v3723 = vunpack.c.0.s8 %v3722
        %v3724 = vlaneseq
        %v3725 = vshrl.u32 %v3724, 7
        %v3726 = vsub.s32 %v3723, %v3725
        %v3727 = vrot.slane %v3719, %v3726
        %v3729 = vunpack.c.l.s4 1934713408
        %v3730 = vunpack.c.0.s8 %v3729
        %v3731 = vlaneseq
        %v3732 = vshrl.u32 %v3731, 7
        %v3733 = vsub.s32 %v3730, %v3732
        %v3734 = vrot.slane %v3720, %v3733
        %v3735 = vcombine.low %v3670, %v3686
        %v3736 = vcombine.high %v3670, %v3686
        %v3738 = vunpack.c.l.s4 1934713408
        %v3739 = vunpack.c.0.s8 %v3738
        %v3740 = vlaneseq
        %v3741 = vshrl.u32 %v3740, 7
        %v3742 = vsub.s32 %v3739, %v3741
        %v3743 = vrot.slane %v3735, %v3742
        %v3745 = vunpack.c.l.s4 1934713408
        %v3746 = vunpack.c.0.s8 %v3745
        %v3747 = vlaneseq
        %v3748 = vshrl.u32 %v3747, 7
        %v3749 = vsub.s32 %v3746, %v3748
        %v3750 = vrot.slane %v3736, %v3749
        %v3751 = vcombine.low %v3695, %v3711
        %v3752 = vcombine.high %v3695, %v3711
        %v3754 = vunpack.c.l.s4 1934713408
        %v3755 = vunpack.c.0.s8 %v3754
        %v3756 = vlaneseq
        %v3757 = vshrl.u32 %v3756, 7
        %v3758 = vsub.s32 %v3755, %v3757
        %v3759 = vrot.slane %v3751, %v3758
        %v3761 = vunpack.c.l.s4 1934713408
        %v3762 = vunpack.c.0.s8 %v3761
        %v3763 = vlaneseq
        %v3764 = vshrl.u32 %v3763, 7
        %v3765 = vsub.s32 %v3762, %v3764
        %v3766 = vrot.slane %v3752, %v3765
        %v3767 = vcombine.low %v3702, %v3718
        %v3768 = vcombine.high %v3702, %v3718
        %v3770 = vunpack.c.l.s4 1934713408
        %v3771 = vunpack.c.0.s8 %v3770
        %v3772 = vlaneseq
        %v3773 = vshrl.u32 %v3772, 7
        %v3774 = vsub.s32 %v3771, %v3773
        %v3775 = vrot.slane %v3767, %v3774
        %v3777 = vunpack.c.l.s4 1934713408
        %v3778 = vunpack.c.0.s8 %v3777
        %v3779 = vlaneseq
        %v3780 = vshrl.u32 %v3779, 7
        %v3781 = vsub.s32 %v3778, %v3780
        %v3782 = vrot.slane %v3768, %v3781
        %v3783 = vcombine.low %v3727, %v3759
        %v3784 = vcombine.high %v3727, %v3759
        %v3785 = vcombine.low %v3734, %v3766
        %v3786 = vcombine.high %v3734, %v3766
        %v3787 = vcombine.low %v3743, %v3775
        %v3788 = vcombine.high %v3743, %v3775
        %v3789 = vcombine.low %v3750, %v3782
        %v3790 = vcombine.high %v3750, %v3782
        %v3791 = vcombine.low %v3511, %v3513
        %v3792 = vcombine.high %v3511, %v3513
        %v3794 = vunpack.c.l.s4 1983009808
        %v3795 = vunpack.c.0.s8 %v3794
        %v3796 = vlaneseq
        %v3797 = vshrl.u32 %v3796, 7
        %v3798 = vsub.s32 %v3795, %v3797
        %v3799 = vrot.slane %v3791, %v3798
        %v3801 = vunpack.c.l.s4 1983009808
        %v3802 = vunpack.c.0.s8 %v3801
        %v3803 = vlaneseq
        %v3804 = vshrl.u32 %v3803, 7
        %v3805 = vsub.s32 %v3802, %v3804
        %v3806 = vrot.slane %v3792, %v3805
        %v3807 = vcombine.low %v3512, %v3514
        %v3808 = vcombine.high %v3512, %v3514
        %v3810 = vunpack.c.l.s4 1983009808
        %v3811 = vunpack.c.0.s8 %v3810
        %v3812 = vlaneseq
        %v3813 = vshrl.u32 %v3812, 7
        %v3814 = vsub.s32 %v3811, %v3813
        %v3815 = vrot.slane %v3807, %v3814
        %v3817 = vunpack.c.l.s4 1983009808
        %v3818 = vunpack.c.0.s8 %v3817
        %v3819 = vlaneseq
        %v3820 = vshrl.u32 %v3819, 7
        %v3821 = vsub.s32 %v3818, %v3820
        %v3822 = vrot.slane %v3808, %v3821
        %v3823 = vcombine.low %v3515, %v3517
        %v3824 = vcombine.high %v3515, %v3517
        %v3826 = vunpack.c.l.s4 1983009808
        %v3827 = vunpack.c.0.s8 %v3826
        %v3828 = vlaneseq
        %v3829 = vshrl.u32 %v3828, 7
        %v3830 = vsub.s32 %v3827, %v3829
        %v3831 = vrot.slane %v3823, %v3830
        %v3833 = vunpack.c.l.s4 1983009808
        %v3834 = vunpack.c.0.s8 %v3833
        %v3835 = vlaneseq
        %v3836 = vshrl.u32 %v3835, 7
        %v3837 = vsub.s32 %v3834, %v3836
        %v3838 = vrot.slane %v3824, %v3837
        %v3839 = vcombine.low %v3516, %v3518
        %v3840 = vcombine.high %v3516, %v3518
        %v3842 = vunpack.c.l.s4 1983009808
        %v3843 = vunpack.c.0.s8 %v3842
        %v3844 = vlaneseq
        %v3845 = vshrl.u32 %v3844, 7
        %v3846 = vsub.s32 %v3843, %v3845
        %v3847 = vrot.slane %v3839, %v3846
        %v3849 = vunpack.c.l.s4 1983009808
        %v3850 = vunpack.c.0.s8 %v3849
        %v3851 = vlaneseq
        %v3852 = vshrl.u32 %v3851, 7
        %v3853 = vsub.s32 %v3850, %v3852
        %v3854 = vrot.slane %v3840, %v3853
        %v3855 = vcombine.low %v3799, %v3815
        %v3856 = vcombine.high %v3799, %v3815
        %v3858 = vunpack.c.l.s4 1934713408
        %v3859 = vunpack.c.0.s8 %v3858
        %v3860 = vlaneseq
        %v3861 = vshrl.u32 %v3860, 7
        %v3862 = vsub.s32 %v3859, %v3861
        %v3863 = vrot.slane %v3855, %v3862
        %v3865 = vunpack.c.l.s4 1934713408
        %v3866 = vunpack.c.0.s8 %v3865
        %v3867 = vlaneseq
        %v3868 = vshrl.u32 %v3867, 7
        %v3869 = vsub.s32 %v3866, %v3868
        %v3870 = vrot.slane %v3856, %v3869
        %v3871 = vcombine.low %v3806, %v3822
        %v3872 = vcombine.high %v3806, %v3822
        %v3874 = vunpack.c.l.s4 1934713408
        %v3875 = vunpack.c.0.s8 %v3874
        %v3876 = vlaneseq
        %v3877 = vshrl.u32 %v3876, 7
        %v3878 = vsub.s32 %v3875, %v3877
        %v3879 = vrot.slane %v3871, %v3878
        %v3881 = vunpack.c.l.s4 1934713408
        %v3882 = vunpack.c.0.s8 %v3881
        %v3883 = vlaneseq
        %v3884 = vshrl.u32 %v3883, 7
        %v3885 = vsub.s32 %v3882, %v3884
        %v3886 = vrot.slane %v3872, %v3885
        %v3887 = vcombine.low %v3831, %v3847
        %v3888 = vcombine.high %v3831, %v3847
        %v3890 = vunpack.c.l.s4 1934713408
        %v3891 = vunpack.c.0.s8 %v3890
        %v3892 = vlaneseq
        %v3893 = vshrl.u32 %v3892, 7
        %v3894 = vsub.s32 %v3891, %v3893
        %v3895 = vrot.slane %v3887, %v3894
        %v3897 = vunpack.c.l.s4 1934713408
        %v3898 = vunpack.c.0.s8 %v3897
        %v3899 = vlaneseq
        %v3900 = vshrl.u32 %v3899, 7
        %v3901 = vsub.s32 %v3898, %v3900
        %v3902 = vrot.slane %v3888, %v3901
        %v3903 = vcombine.low %v3838, %v3854
        %v3904 = vcombine.high %v3838, %v3854
        %v3906 = vunpack.c.l.s4 1934713408
        %v3907 = vunpack.c.0.s8 %v3906
        %v3908 = vlaneseq
        %v3909 = vshrl.u32 %v3908, 7
        %v3910 = vsub.s32 %v3907, %v3909
        %v3911 = vrot.slane %v3903, %v3910
        %v3913 = vunpack.c.l.s4 1934713408
        %v3914 = vunpack.c.0.s8 %v3913
        %v3915 = vlaneseq
        %v3916 = vshrl.u32 %v3915, 7
        %v3917 = vsub.s32 %v3914, %v3916
        %v3918 = vrot.slane %v3904, %v3917
        %v3919 = vcombine.low %v3863, %v3895
        %v3920 = vcombine.high %v3863, %v3895
        %v3921 = vcombine.low %v3870, %v3902
        %v3922 = vcombine.high %v3870, %v3902
        %v3923 = vcombine.low %v3879, %v3911
        %v3924 = vcombine.high %v3879, %v3911
        %v3925 = vcombine.low %v3886, %v3918
        %v3926 = vcombine.high %v3886, %v3918
        %v3927 = vcombine.low %v3375, %v3377
        %v3928 = vcombine.high %v3375, %v3377
        %v3930 = vunpack.c.l.s4 1983009808
        %v3931 = vunpack.c.0.s8 %v3930
        %v3932 = vlaneseq
        %v3933 = vshrl.u32 %v3932, 7
        %v3934 = vsub.s32 %v3931, %v3933
        %v3935 = vrot.slane %v3927, %v3934
        %v3937 = vunpack.c.l.s4 1983009808
        %v3938 = vunpack.c.0.s8 %v3937
        %v3939 = vlaneseq
        %v3940 = vshrl.u32 %v3939, 7
        %v3941 = vsub.s32 %v3938, %v3940
        %v3942 = vrot.slane %v3928, %v3941
        %v3943 = vcombine.low %v3376, %v3378
        %v3944 = vcombine.high %v3376, %v3378
        %v3946 = vunpack.c.l.s4 1983009808
        %v3947 = vunpack.c.0.s8 %v3946
        %v3948 = vlaneseq
        %v3949 = vshrl.u32 %v3948, 7
        %v3950 = vsub.s32 %v3947, %v3949
        %v3951 = vrot.slane %v3943, %v3950
        %v3953 = vunpack.c.l.s4 1983009808
        %v3954 = vunpack.c.0.s8 %v3953
        %v3955 = vlaneseq
        %v3956 = vshrl.u32 %v3955, 7
        %v3957 = vsub.s32 %v3954, %v3956
        %v3958 = vrot.slane %v3944, %v3957
        %v3959 = vcombine.low %v3379, %v3381
        %v3960 = vcombine.high %v3379, %v3381
        %v3962 = vunpack.c.l.s4 1983009808
        %v3963 = vunpack.c.0.s8 %v3962
        %v3964 = vlaneseq
        %v3965 = vshrl.u32 %v3964, 7
        %v3966 = vsub.s32 %v3963, %v3965
        %v3967 = vrot.slane %v3959, %v3966
        %v3969 = vunpack.c.l.s4 1983009808
        %v3970 = vunpack.c.0.s8 %v3969
        %v3971 = vlaneseq
        %v3972 = vshrl.u32 %v3971, 7
        %v3973 = vsub.s32 %v3970, %v3972
        %v3974 = vrot.slane %v3960, %v3973
        %v3975 = vcombine.low %v3380, %v3382
        %v3976 = vcombine.high %v3380, %v3382
        %v3978 = vunpack.c.l.s4 1983009808
        %v3979 = vunpack.c.0.s8 %v3978
        %v3980 = vlaneseq
        %v3981 = vshrl.u32 %v3980, 7
        %v3982 = vsub.s32 %v3979, %v3981
        %v3983 = vrot.slane %v3975, %v3982
        %v3985 = vunpack.c.l.s4 1983009808
        %v3986 = vunpack.c.0.s8 %v3985
        %v3987 = vlaneseq
        %v3988 = vshrl.u32 %v3987, 7
        %v3989 = vsub.s32 %v3986, %v3988
        %v3990 = vrot.slane %v3976, %v3989
        %v3991 = vcombine.low %v3935, %v3951
        %v3992 = vcombine.high %v3935, %v3951
        %v3994 = vunpack.c.l.s4 1934713408
        %v3995 = vunpack.c.0.s8 %v3994
        %v3996 = vlaneseq
        %v3997 = vshrl.u32 %v3996, 7
        %v3998 = vsub.s32 %v3995, %v3997
        %v3999 = vrot.slane %v3991, %v3998
        %v4001 = vunpack.c.l.s4 1934713408
        %v4002 = vunpack.c.0.s8 %v4001
        %v4003 = vlaneseq
        %v4004 = vshrl.u32 %v4003, 7
        %v4005 = vsub.s32 %v4002, %v4004
        %v4006 = vrot.slane %v3992, %v4005
        %v4007 = vcombine.low %v3942, %v3958
        %v4008 = vcombine.high %v3942, %v3958
        %v4010 = vunpack.c.l.s4 1934713408
        %v4011 = vunpack.c.0.s8 %v4010
        %v4012 = vlaneseq
        %v4013 = vshrl.u32 %v4012, 7
        %v4014 = vsub.s32 %v4011, %v4013
        %v4015 = vrot.slane %v4007, %v4014
        %v4017 = vunpack.c.l.s4 1934713408
        %v4018 = vunpack.c.0.s8 %v4017
        %v4019 = vlaneseq
        %v4020 = vshrl.u32 %v4019, 7
        %v4021 = vsub.s32 %v4018, %v4020
        %v4022 = vrot.slane %v4008, %v4021
        %v4023 = vcombine.low %v3967, %v3983
        %v4024 = vcombine.high %v3967, %v3983
        %v4026 = vunpack.c.l.s4 1934713408
        %v4027 = vunpack.c.0.s8 %v4026
        %v4028 = vlaneseq
        %v4029 = vshrl.u32 %v4028, 7
        %v4030 = vsub.s32 %v4027, %v4029
        %v4031 = vrot.slane %v4023, %v4030
        %v4033 = vunpack.c.l.s4 1934713408
        %v4034 = vunpack.c.0.s8 %v4033
        %v4035 = vlaneseq
        %v4036 = vshrl.u32 %v4035, 7
        %v4037 = vsub.s32 %v4034, %v4036
        %v4038 = vrot.slane %v4024, %v4037
        %v4039 = vcombine.low %v3974, %v3990
        %v4040 = vcombine.high %v3974, %v3990
        %v4042 = vunpack.c.l.s4 1934713408
        %v4043 = vunpack.c.0.s8 %v4042
        %v4044 = vlaneseq
        %v4045 = vshrl.u32 %v4044, 7
        %v4046 = vsub.s32 %v4043, %v4045
        %v4047 = vrot.slane %v4039, %v4046
        %v4049 = vunpack.c.l.s4 1934713408
        %v4050 = vunpack.c.0.s8 %v4049
        %v4051 = vlaneseq
        %v4052 = vshrl.u32 %v4051, 7
        %v4053 = vsub.s32 %v4050, %v4052
        %v4054 = vrot.slane %v4040, %v4053
        %v4055 = vcombine.low %v3999, %v4031
        %v4056 = vcombine.high %v3999, %v4031
        %v4057 = vcombine.low %v4006, %v4038
        %v4058 = vcombine.high %v4006, %v4038
        %v4059 = vcombine.low %v4015, %v4047
        %v4060 = vcombine.high %v4015, %v4047
        %v4061 = vcombine.low %v4022, %v4054
        %v4062 = vcombine.high %v4022, %v4054
        %v4063 = vcombine.low %v3647, %v3649
        %v4064 = vcombine.high %v3647, %v3649
        %v4066 = vunpack.c.l.s4 1983009808
        %v4067 = vunpack.c.0.s8 %v4066
        %v4068 = vlaneseq
        %v4069 = vshrl.u32 %v4068, 7
        %v4070 = vsub.s32 %v4067, %v4069
        %v4071 = vrot.slane %v4063, %v4070
        %v4073 = vunpack.c.l.s4 1983009808
        %v4074 = vunpack.c.0.s8 %v4073
        %v4075 = vlaneseq
        %v4076 = vshrl.u32 %v4075, 7
        %v4077 = vsub.s32 %v4074, %v4076
        %v4078 = vrot.slane %v4064, %v4077
        %v4079 = vcombine.low %v3648, %v3650
        %v4080 = vcombine.high %v3648, %v3650
        %v4082 = vunpack.c.l.s4 1983009808
        %v4083 = vunpack.c.0.s8 %v4082
        %v4084 = vlaneseq
        %v4085 = vshrl.u32 %v4084, 7
        %v4086 = vsub.s32 %v4083, %v4085
        %v4087 = vrot.slane %v4079, %v4086
        %v4089 = vunpack.c.l.s4 1983009808
        %v4090 = vunpack.c.0.s8 %v4089
        %v4091 = vlaneseq
        %v4092 = vshrl.u32 %v4091, 7
        %v4093 = vsub.s32 %v4090, %v4092
        %v4094 = vrot.slane %v4080, %v4093
        %v4095 = vcombine.low %v3651, %v3653
        %v4096 = vcombine.high %v3651, %v3653
        %v4098 = vunpack.c.l.s4 1983009808
        %v4099 = vunpack.c.0.s8 %v4098
        %v4100 = vlaneseq
        %v4101 = vshrl.u32 %v4100, 7
        %v4102 = vsub.s32 %v4099, %v4101
        %v4103 = vrot.slane %v4095, %v4102
        %v4105 = vunpack.c.l.s4 1983009808
        %v4106 = vunpack.c.0.s8 %v4105
        %v4107 = vlaneseq
        %v4108 = vshrl.u32 %v4107, 7
        %v4109 = vsub.s32 %v4106, %v4108
        %v4110 = vrot.slane %v4096, %v4109
        %v4111 = vcombine.low %v3652, %v3654
        %v4112 = vcombine.high %v3652, %v3654
        %v4114 = vunpack.c.l.s4 1983009808
        %v4115 = vunpack.c.0.s8 %v4114
        %v4116 = vlaneseq
        %v4117 = vshrl.u32 %v4116, 7
        %v4118 = vsub.s32 %v4115, %v4117
        %v4119 = vrot.slane %v4111, %v4118
        %v4121 = vunpack.c.l.s4 1983009808
        %v4122 = vunpack.c.0.s8 %v4121
        %v4123 = vlaneseq
        %v4124 = vshrl.u32 %v4123, 7
        %v4125 = vsub.s32 %v4122, %v4124
        %v4126 = vrot.slane %v4112, %v4125
        %v4127 = vcombine.low %v4071, %v4087
        %v4128 = vcombine.high %v4071, %v4087
        %v4130 = vunpack.c.l.s4 1934713408
        %v4131 = vunpack.c.0.s8 %v4130
        %v4132 = vlaneseq
        %v4133 = vshrl.u32 %v4132, 7
        %v4134 = vsub.s32 %v4131, %v4133
        %v4135 = vrot.slane %v4127, %v4134
        %v4137 = vunpack.c.l.s4 1934713408
        %v4138 = vunpack.c.0.s8 %v4137
        %v4139 = vlaneseq
        %v4140 = vshrl.u32 %v4139, 7
        %v4141 = vsub.s32 %v4138, %v4140
        %v4142 = vrot.slane %v4128, %v4141
        %v4143 = vcombine.low %v4078, %v4094
        %v4144 = vcombine.high %v4078, %v4094
        %v4146 = vunpack.c.l.s4 1934713408
        %v4147 = vunpack.c.0.s8 %v4146
        %v4148 = vlaneseq
        %v4149 = vshrl.u32 %v4148, 7
        %v4150 = vsub.s32 %v4147, %v4149
        %v4151 = vrot.slane %v4143, %v4150
        %v4153 = vunpack.c.l.s4 1934713408
        %v4154 = vunpack.c.0.s8 %v4153
        %v4155 = vlaneseq
        %v4156 = vshrl.u32 %v4155, 7
        %v4157 = vsub.s32 %v4154, %v4156
        %v4158 = vrot.slane %v4144, %v4157
        %v4159 = vcombine.low %v4103, %v4119
        %v4160 = vcombine.high %v4103, %v4119
        %v4162 = vunpack.c.l.s4 1934713408
        %v4163 = vunpack.c.0.s8 %v4162
        %v4164 = vlaneseq
        %v4165 = vshrl.u32 %v4164, 7
        %v4166 = vsub.s32 %v4163, %v4165
        %v4167 = vrot.slane %v4159, %v4166
        %v4169 = vunpack.c.l.s4 1934713408
        %v4170 = vunpack.c.0.s8 %v4169
        %v4171 = vlaneseq
        %v4172 = vshrl.u32 %v4171, 7
        %v4173 = vsub.s32 %v4170, %v4172
        %v4174 = vrot.slane %v4160, %v4173
        %v4175 = vcombine.low %v4110, %v4126
        %v4176 = vcombine.high %v4110, %v4126
        %v4178 = vunpack.c.l.s4 1934713408
        %v4179 = vunpack.c.0.s8 %v4178
        %v4180 = vlaneseq
        %v4181 = vshrl.u32 %v4180, 7
        %v4182 = vsub.s32 %v4179, %v4181
        %v4183 = vrot.slane %v4175, %v4182
        %v4185 = vunpack.c.l.s4 1934713408
        %v4186 = vunpack.c.0.s8 %v4185
        %v4187 = vlaneseq
        %v4188 = vshrl.u32 %v4187, 7
        %v4189 = vsub.s32 %v4186, %v4188
        %v4190 = vrot.slane %v4176, %v4189
        %v4191 = vcombine.low %v4135, %v4167
        %v4192 = vcombine.high %v4135, %v4167
        %v4193 = vcombine.low %v4142, %v4174
        %v4194 = vcombine.high %v4142, %v4174
        %v4195 = vcombine.low %v4151, %v4183
        %v4196 = vcombine.high %v4151, %v4183
        %v4197 = vcombine.low %v4158, %v4190
        %v4198 = vcombine.high %v4158, %v4190
        %4201 = vrot.lane.b32.xlu0 %v3784, 16
        %v4202 = vpop.permute.xlu0 %4201
        %4203 = vrot.lane.b32.xlu0 %v3920, 16
        %v4204 = vpop.permute.xlu0 %4203
        %4209 = vrot.lane.b32.xlu0 %v3785, 32
        %v4210 = vpop.permute.xlu0 %4209
        %4211 = vrot.lane.b32.xlu0 %v3921, 32
        %v4212 = vpop.permute.xlu0 %4211
        %4217 = vrot.lane.b32.xlu0 %v3786, 48
        %v4218 = vpop.permute.xlu0 %4217
        %4219 = vrot.lane.b32.xlu0 %v3922, 48
        %v4220 = vpop.permute.xlu0 %4219
        %4225 = vrot.lane.b32.xlu0 %v3787, 64
        %v4226 = vpop.permute.xlu0 %4225
        %4227 = vrot.lane.b32.xlu0 %v3923, 64
        %v4228 = vpop.permute.xlu0 %4227
        %4233 = vrot.lane.b32.xlu0 %v3788, 80
        %v4234 = vpop.permute.xlu0 %4233
        %4235 = vrot.lane.b32.xlu0 %v3924, 80
        %v4236 = vpop.permute.xlu0 %4235
        %4241 = vrot.lane.b32.xlu0 %v3789, 96
        %v4242 = vpop.permute.xlu0 %4241
        %4243 = vrot.lane.b32.xlu0 %v3925, 96
        %v4244 = vpop.permute.xlu0 %4243
        %4249 = vrot.lane.b32.xlu0 %v3790, 112
        %v4250 = vpop.permute.xlu0 %4249
        %4251 = vrot.lane.b32.xlu0 %v3926, 112
        %v4252 = vpop.permute.xlu0 %4251
        %4257 = vrot.lane.b32.xlu0 %v4056, 16
        %v4258 = vpop.permute.xlu0 %4257
        %4259 = vrot.lane.b32.xlu0 %v4192, 16
        %v4260 = vpop.permute.xlu0 %4259
        %4265 = vrot.lane.b32.xlu0 %v4057, 32
        %v4266 = vpop.permute.xlu0 %4265
        %4267 = vrot.lane.b32.xlu0 %v4193, 32
        %v4268 = vpop.permute.xlu0 %4267
        %4273 = vrot.lane.b32.xlu0 %v4058, 48
        %v4274 = vpop.permute.xlu0 %4273
        %4275 = vrot.lane.b32.xlu0 %v4194, 48
        %v4276 = vpop.permute.xlu0 %4275
        %4281 = vrot.lane.b32.xlu0 %v4059, 64
        %v4282 = vpop.permute.xlu0 %4281
        %4283 = vrot.lane.b32.xlu0 %v4195, 64
        %v4284 = vpop.permute.xlu0 %4283
        %4289 = vrot.lane.b32.xlu0 %v4060, 80
        %v4290 = vpop.permute.xlu0 %4289
        %4291 = vrot.lane.b32.xlu0 %v4196, 80
        %v4292 = vpop.permute.xlu0 %4291
        %4297 = vrot.lane.b32.xlu0 %v4061, 96
        %v4298 = vpop.permute.xlu0 %4297
        %4299 = vrot.lane.b32.xlu0 %v4197, 96
        %v4300 = vpop.permute.xlu0 %4299
        %4305 = vrot.lane.b32.xlu0 %v4062, 112
        %v4306 = vpop.permute.xlu0 %4305
        %4307 = vrot.lane.b32.xlu0 %v4198, 112
        %v4308 = vpop.permute.xlu0 %4307
        %vm4311 = vcmask 130048
        %v4312 = vsel %vm4311, %v3783, %v4202
        %v4313 = vsel %vm4311, %v3919, %v4204
        %vm4314 = vcmask 261120
        %v4315 = vsel %vm4314, %v4312, %v4210
        %v4316 = vsel %vm4314, %v4313, %v4212
        %vm4317 = vcmask 392192
        %v4318 = vsel %vm4317, %v4315, %v4218
        %v4319 = vsel %vm4317, %v4316, %v4220
        %vm4320 = vcmask 523264
        %v4321 = vsel %vm4320, %v4318, %v4226
        %v4322 = vsel %vm4320, %v4319, %v4228
        %vm4323 = vcmask 654336
        %v4324 = vsel %vm4323, %v4321, %v4234
        %v4325 = vsel %vm4323, %v4322, %v4236
        %vm4326 = vcmask 785408
        %v4327 = vsel %vm4326, %v4324, %v4242
        %v4328 = vsel %vm4326, %v4325, %v4244
        %vm4329 = vcmask 916480
        %v4330 = vsel %vm4329, %v4327, %v4250
        %v4331 = vsel %vm4329, %v4328, %v4252
        %v4332 = vsel %vm4311, %v4055, %v4258
        %v4333 = vsel %vm4311, %v4191, %v4260
        %v4334 = vsel %vm4314, %v4332, %v4266
        %v4335 = vsel %vm4314, %v4333, %v4268
        %v4336 = vsel %vm4317, %v4334, %v4274
        %v4337 = vsel %vm4317, %v4335, %v4276
        %v4338 = vsel %vm4320, %v4336, %v4282
        %v4339 = vsel %vm4320, %v4337, %v4284
        %v4340 = vsel %vm4323, %v4338, %v4290
        %v4341 = vsel %vm4323, %v4339, %v4292
        %v4342 = vsel %vm4326, %v4340, %v4298
        %v4343 = vsel %vm4326, %v4341, %v4300
        %v4344 = vsel %vm4329, %v4342, %v4306
        %v4345 = vsel %vm4329, %v4343, %v4308
        %4348 = vrot.lane.b32.xlu0 %v1166, 112
        %v4349 = vpop.permute.xlu0 %4348
        %4350 = vrot.lane.b32.xlu0 %v1170, 112
        %v4351 = vpop.permute.xlu0 %4350
        %4354 = vrot.lane.b32.xlu0 %v1166, 96
        %v4355 = vpop.permute.xlu0 %4354
        %4356 = vrot.lane.b32.xlu0 %v1170, 96
        %v4357 = vpop.permute.xlu0 %4356
        %4360 = vrot.lane.b32.xlu0 %v1166, 80
        %v4361 = vpop.permute.xlu0 %4360
        %4362 = vrot.lane.b32.xlu0 %v1170, 80
        %v4363 = vpop.permute.xlu0 %4362
        %4366 = vrot.lane.b32.xlu0 %v1166, 64
        %v4367 = vpop.permute.xlu0 %4366
        %4368 = vrot.lane.b32.xlu0 %v1170, 64
        %v4369 = vpop.permute.xlu0 %4368
        %4372 = vrot.lane.b32.xlu0 %v1166, 48
        %v4373 = vpop.permute.xlu0 %4372
        %4374 = vrot.lane.b32.xlu0 %v1170, 48
        %v4375 = vpop.permute.xlu0 %4374
        %4378 = vrot.lane.b32.xlu0 %v1166, 32
        %v4379 = vpop.permute.xlu0 %4378
        %4380 = vrot.lane.b32.xlu0 %v1170, 32
        %v4381 = vpop.permute.xlu0 %4380
        %4384 = vrot.lane.b32.xlu0 %v1166, 16
        %v4385 = vpop.permute.xlu0 %4384
        %4386 = vrot.lane.b32.xlu0 %v1170, 16
        %v4387 = vpop.permute.xlu0 %4386
        %4392 = vrot.lane.b32.xlu0 %v1168, 112
        %v4393 = vpop.permute.xlu0 %4392
        %4394 = vrot.lane.b32.xlu0 %v1172, 112
        %v4395 = vpop.permute.xlu0 %4394
        %4398 = vrot.lane.b32.xlu0 %v1168, 96
        %v4399 = vpop.permute.xlu0 %4398
        %4400 = vrot.lane.b32.xlu0 %v1172, 96
        %v4401 = vpop.permute.xlu0 %4400
        %4404 = vrot.lane.b32.xlu0 %v1168, 80
        %v4405 = vpop.permute.xlu0 %4404
        %4406 = vrot.lane.b32.xlu0 %v1172, 80
        %v4407 = vpop.permute.xlu0 %4406
        %4410 = vrot.lane.b32.xlu0 %v1168, 64
        %v4411 = vpop.permute.xlu0 %4410
        %4412 = vrot.lane.b32.xlu0 %v1172, 64
        %v4413 = vpop.permute.xlu0 %4412
        %4416 = vrot.lane.b32.xlu0 %v1168, 48
        %v4417 = vpop.permute.xlu0 %4416
        %4418 = vrot.lane.b32.xlu0 %v1172, 48
        %v4419 = vpop.permute.xlu0 %4418
        %4422 = vrot.lane.b32.xlu0 %v1168, 32
        %v4423 = vpop.permute.xlu0 %4422
        %4424 = vrot.lane.b32.xlu0 %v1172, 32
        %v4425 = vpop.permute.xlu0 %4424
        %4428 = vrot.lane.b32.xlu0 %v1168, 16
        %v4429 = vpop.permute.xlu0 %4428
        %4430 = vrot.lane.b32.xlu0 %v1172, 16
        %v4431 = vpop.permute.xlu0 %4430
        %v4434 = vcombine.low %v1166, %v4355
        %v4435 = vcombine.high %v1166, %v4355
        %v4437 = vunpack.c.l.s4 1983009808
        %v4438 = vunpack.c.0.s8 %v4437
        %v4439 = vlaneseq
        %v4440 = vshrl.u32 %v4439, 7
        %v4441 = vsub.s32 %v4438, %v4440
        %v4442 = vrot.slane %v4434, %v4441
        %v4444 = vunpack.c.l.s4 1983009808
        %v4445 = vunpack.c.0.s8 %v4444
        %v4446 = vlaneseq
        %v4447 = vshrl.u32 %v4446, 7
        %v4448 = vsub.s32 %v4445, %v4447
        %v4449 = vrot.slane %v4435, %v4448
        %v4450 = vcombine.low %v4349, %v4361
        %v4451 = vcombine.high %v4349, %v4361
        %v4453 = vunpack.c.l.s4 1983009808
        %v4454 = vunpack.c.0.s8 %v4453
        %v4455 = vlaneseq
        %v4456 = vshrl.u32 %v4455, 7
        %v4457 = vsub.s32 %v4454, %v4456
        %v4458 = vrot.slane %v4450, %v4457
        %v4460 = vunpack.c.l.s4 1983009808
        %v4461 = vunpack.c.0.s8 %v4460
        %v4462 = vlaneseq
        %v4463 = vshrl.u32 %v4462, 7
        %v4464 = vsub.s32 %v4461, %v4463
        %v4465 = vrot.slane %v4451, %v4464
        %v4466 = vcombine.low %v4367, %v4379
        %v4467 = vcombine.high %v4367, %v4379
        %v4469 = vunpack.c.l.s4 1983009808
        %v4470 = vunpack.c.0.s8 %v4469
        %v4471 = vlaneseq
        %v4472 = vshrl.u32 %v4471, 7
        %v4473 = vsub.s32 %v4470, %v4472
        %v4474 = vrot.slane %v4466, %v4473
        %v4476 = vunpack.c.l.s4 1983009808
        %v4477 = vunpack.c.0.s8 %v4476
        %v4478 = vlaneseq
        %v4479 = vshrl.u32 %v4478, 7
        %v4480 = vsub.s32 %v4477, %v4479
        %v4481 = vrot.slane %v4467, %v4480
        %v4482 = vcombine.low %v4373, %v4385
        %v4483 = vcombine.high %v4373, %v4385
        %v4485 = vunpack.c.l.s4 1983009808
        %v4486 = vunpack.c.0.s8 %v4485
        %v4487 = vlaneseq
        %v4488 = vshrl.u32 %v4487, 7
        %v4489 = vsub.s32 %v4486, %v4488
        %v4490 = vrot.slane %v4482, %v4489
        %v4492 = vunpack.c.l.s4 1983009808
        %v4493 = vunpack.c.0.s8 %v4492
        %v4494 = vlaneseq
        %v4495 = vshrl.u32 %v4494, 7
        %v4496 = vsub.s32 %v4493, %v4495
        %v4497 = vrot.slane %v4483, %v4496
        %v4498 = vcombine.low %v4442, %v4458
        %v4499 = vcombine.high %v4442, %v4458
        %v4501 = vunpack.c.l.s4 1934713408
        %v4502 = vunpack.c.0.s8 %v4501
        %v4503 = vlaneseq
        %v4504 = vshrl.u32 %v4503, 7
        %v4505 = vsub.s32 %v4502, %v4504
        %v4506 = vrot.slane %v4498, %v4505
        %v4508 = vunpack.c.l.s4 1934713408
        %v4509 = vunpack.c.0.s8 %v4508
        %v4510 = vlaneseq
        %v4511 = vshrl.u32 %v4510, 7
        %v4512 = vsub.s32 %v4509, %v4511
        %v4513 = vrot.slane %v4499, %v4512
        %v4514 = vcombine.low %v4449, %v4465
        %v4515 = vcombine.high %v4449, %v4465
        %v4517 = vunpack.c.l.s4 1934713408
        %v4518 = vunpack.c.0.s8 %v4517
        %v4519 = vlaneseq
        %v4520 = vshrl.u32 %v4519, 7
        %v4521 = vsub.s32 %v4518, %v4520
        %v4522 = vrot.slane %v4514, %v4521
        %v4524 = vunpack.c.l.s4 1934713408
        %v4525 = vunpack.c.0.s8 %v4524
        %v4526 = vlaneseq
        %v4527 = vshrl.u32 %v4526, 7
        %v4528 = vsub.s32 %v4525, %v4527
        %v4529 = vrot.slane %v4515, %v4528
        %v4530 = vcombine.low %v4474, %v4490
        %v4531 = vcombine.high %v4474, %v4490
        %v4533 = vunpack.c.l.s4 1934713408
        %v4534 = vunpack.c.0.s8 %v4533
        %v4535 = vlaneseq
        %v4536 = vshrl.u32 %v4535, 7
        %v4537 = vsub.s32 %v4534, %v4536
        %v4538 = vrot.slane %v4530, %v4537
        %v4540 = vunpack.c.l.s4 1934713408
        %v4541 = vunpack.c.0.s8 %v4540
        %v4542 = vlaneseq
        %v4543 = vshrl.u32 %v4542, 7
        %v4544 = vsub.s32 %v4541, %v4543
        %v4545 = vrot.slane %v4531, %v4544
        %v4546 = vcombine.low %v4481, %v4497
        %v4547 = vcombine.high %v4481, %v4497
        %v4549 = vunpack.c.l.s4 1934713408
        %v4550 = vunpack.c.0.s8 %v4549
        %v4551 = vlaneseq
        %v4552 = vshrl.u32 %v4551, 7
        %v4553 = vsub.s32 %v4550, %v4552
        %v4554 = vrot.slane %v4546, %v4553
        %v4556 = vunpack.c.l.s4 1934713408
        %v4557 = vunpack.c.0.s8 %v4556
        %v4558 = vlaneseq
        %v4559 = vshrl.u32 %v4558, 7
        %v4560 = vsub.s32 %v4557, %v4559
        %v4561 = vrot.slane %v4547, %v4560
        %v4562 = vcombine.low %v4506, %v4538
        %v4563 = vcombine.high %v4506, %v4538
        %v4564 = vcombine.low %v4513, %v4545
        %v4565 = vcombine.high %v4513, %v4545
        %v4566 = vcombine.low %v4522, %v4554
        %v4567 = vcombine.high %v4522, %v4554
        %v4568 = vcombine.low %v4529, %v4561
        %v4569 = vcombine.high %v4529, %v4561
        %v4570 = vcombine.low %v1168, %v4399
        %v4571 = vcombine.high %v1168, %v4399
        %v4573 = vunpack.c.l.s4 1983009808
        %v4574 = vunpack.c.0.s8 %v4573
        %v4575 = vlaneseq
        %v4576 = vshrl.u32 %v4575, 7
        %v4577 = vsub.s32 %v4574, %v4576
        %v4578 = vrot.slane %v4570, %v4577
        %v4580 = vunpack.c.l.s4 1983009808
        %v4581 = vunpack.c.0.s8 %v4580
        %v4582 = vlaneseq
        %v4583 = vshrl.u32 %v4582, 7
        %v4584 = vsub.s32 %v4581, %v4583
        %v4585 = vrot.slane %v4571, %v4584
        %v4586 = vcombine.low %v4393, %v4405
        %v4587 = vcombine.high %v4393, %v4405
        %v4589 = vunpack.c.l.s4 1983009808
        %v4590 = vunpack.c.0.s8 %v4589
        %v4591 = vlaneseq
        %v4592 = vshrl.u32 %v4591, 7
        %v4593 = vsub.s32 %v4590, %v4592
        %v4594 = vrot.slane %v4586, %v4593
        %v4596 = vunpack.c.l.s4 1983009808
        %v4597 = vunpack.c.0.s8 %v4596
        %v4598 = vlaneseq
        %v4599 = vshrl.u32 %v4598, 7
        %v4600 = vsub.s32 %v4597, %v4599
        %v4601 = vrot.slane %v4587, %v4600
        %v4602 = vcombine.low %v4411, %v4423
        %v4603 = vcombine.high %v4411, %v4423
        %v4605 = vunpack.c.l.s4 1983009808
        %v4606 = vunpack.c.0.s8 %v4605
        %v4607 = vlaneseq
        %v4608 = vshrl.u32 %v4607, 7
        %v4609 = vsub.s32 %v4606, %v4608
        %v4610 = vrot.slane %v4602, %v4609
        %v4612 = vunpack.c.l.s4 1983009808
        %v4613 = vunpack.c.0.s8 %v4612
        %v4614 = vlaneseq
        %v4615 = vshrl.u32 %v4614, 7
        %v4616 = vsub.s32 %v4613, %v4615
        %v4617 = vrot.slane %v4603, %v4616
        %v4618 = vcombine.low %v4417, %v4429
        %v4619 = vcombine.high %v4417, %v4429
        %v4621 = vunpack.c.l.s4 1983009808
        %v4622 = vunpack.c.0.s8 %v4621
        %v4623 = vlaneseq
        %v4624 = vshrl.u32 %v4623, 7
        %v4625 = vsub.s32 %v4622, %v4624
        %v4626 = vrot.slane %v4618, %v4625
        %v4628 = vunpack.c.l.s4 1983009808
        %v4629 = vunpack.c.0.s8 %v4628
        %v4630 = vlaneseq
        %v4631 = vshrl.u32 %v4630, 7
        %v4632 = vsub.s32 %v4629, %v4631
        %v4633 = vrot.slane %v4619, %v4632
        %v4634 = vcombine.low %v4578, %v4594
        %v4635 = vcombine.high %v4578, %v4594
        %v4637 = vunpack.c.l.s4 1934713408
        %v4638 = vunpack.c.0.s8 %v4637
        %v4639 = vlaneseq
        %v4640 = vshrl.u32 %v4639, 7
        %v4641 = vsub.s32 %v4638, %v4640
        %v4642 = vrot.slane %v4634, %v4641
        %v4644 = vunpack.c.l.s4 1934713408
        %v4645 = vunpack.c.0.s8 %v4644
        %v4646 = vlaneseq
        %v4647 = vshrl.u32 %v4646, 7
        %v4648 = vsub.s32 %v4645, %v4647
        %v4649 = vrot.slane %v4635, %v4648
        %v4650 = vcombine.low %v4585, %v4601
        %v4651 = vcombine.high %v4585, %v4601
        %v4653 = vunpack.c.l.s4 1934713408
        %v4654 = vunpack.c.0.s8 %v4653
        %v4655 = vlaneseq
        %v4656 = vshrl.u32 %v4655, 7
        %v4657 = vsub.s32 %v4654, %v4656
        %v4658 = vrot.slane %v4650, %v4657
        %v4660 = vunpack.c.l.s4 1934713408
        %v4661 = vunpack.c.0.s8 %v4660
        %v4662 = vlaneseq
        %v4663 = vshrl.u32 %v4662, 7
        %v4664 = vsub.s32 %v4661, %v4663
        %v4665 = vrot.slane %v4651, %v4664
        %v4666 = vcombine.low %v4610, %v4626
        %v4667 = vcombine.high %v4610, %v4626
        %v4669 = vunpack.c.l.s4 1934713408
        %v4670 = vunpack.c.0.s8 %v4669
        %v4671 = vlaneseq
        %v4672 = vshrl.u32 %v4671, 7
        %v4673 = vsub.s32 %v4670, %v4672
        %v4674 = vrot.slane %v4666, %v4673
        %v4676 = vunpack.c.l.s4 1934713408
        %v4677 = vunpack.c.0.s8 %v4676
        %v4678 = vlaneseq
        %v4679 = vshrl.u32 %v4678, 7
        %v4680 = vsub.s32 %v4677, %v4679
        %v4681 = vrot.slane %v4667, %v4680
        %v4682 = vcombine.low %v4617, %v4633
        %v4683 = vcombine.high %v4617, %v4633
        %v4685 = vunpack.c.l.s4 1934713408
        %v4686 = vunpack.c.0.s8 %v4685
        %v4687 = vlaneseq
        %v4688 = vshrl.u32 %v4687, 7
        %v4689 = vsub.s32 %v4686, %v4688
        %v4690 = vrot.slane %v4682, %v4689
        %v4692 = vunpack.c.l.s4 1934713408
        %v4693 = vunpack.c.0.s8 %v4692
        %v4694 = vlaneseq
        %v4695 = vshrl.u32 %v4694, 7
        %v4696 = vsub.s32 %v4693, %v4695
        %v4697 = vrot.slane %v4683, %v4696
        %v4698 = vcombine.low %v4642, %v4674
        %v4699 = vcombine.high %v4642, %v4674
        %v4700 = vcombine.low %v4649, %v4681
        %v4701 = vcombine.high %v4649, %v4681
        %v4702 = vcombine.low %v4658, %v4690
        %v4703 = vcombine.high %v4658, %v4690
        %v4704 = vcombine.low %v4665, %v4697
        %v4705 = vcombine.high %v4665, %v4697
        %v4706 = vcombine.low %v1170, %v4357
        %v4707 = vcombine.high %v1170, %v4357
        %v4709 = vunpack.c.l.s4 1983009808
        %v4710 = vunpack.c.0.s8 %v4709
        %v4711 = vlaneseq
        %v4712 = vshrl.u32 %v4711, 7
        %v4713 = vsub.s32 %v4710, %v4712
        %v4714 = vrot.slane %v4706, %v4713
        %v4716 = vunpack.c.l.s4 1983009808
        %v4717 = vunpack.c.0.s8 %v4716
        %v4718 = vlaneseq
        %v4719 = vshrl.u32 %v4718, 7
        %v4720 = vsub.s32 %v4717, %v4719
        %v4721 = vrot.slane %v4707, %v4720
        %v4722 = vcombine.low %v4351, %v4363
        %v4723 = vcombine.high %v4351, %v4363
        %v4725 = vunpack.c.l.s4 1983009808
        %v4726 = vunpack.c.0.s8 %v4725
        %v4727 = vlaneseq
        %v4728 = vshrl.u32 %v4727, 7
        %v4729 = vsub.s32 %v4726, %v4728
        %v4730 = vrot.slane %v4722, %v4729
        %v4732 = vunpack.c.l.s4 1983009808
        %v4733 = vunpack.c.0.s8 %v4732
        %v4734 = vlaneseq
        %v4735 = vshrl.u32 %v4734, 7
        %v4736 = vsub.s32 %v4733, %v4735
        %v4737 = vrot.slane %v4723, %v4736
        %v4738 = vcombine.low %v4369, %v4381
        %v4739 = vcombine.high %v4369, %v4381
        %v4741 = vunpack.c.l.s4 1983009808
        %v4742 = vunpack.c.0.s8 %v4741
        %v4743 = vlaneseq
        %v4744 = vshrl.u32 %v4743, 7
        %v4745 = vsub.s32 %v4742, %v4744
        %v4746 = vrot.slane %v4738, %v4745
        %v4748 = vunpack.c.l.s4 1983009808
        %v4749 = vunpack.c.0.s8 %v4748
        %v4750 = vlaneseq
        %v4751 = vshrl.u32 %v4750, 7
        %v4752 = vsub.s32 %v4749, %v4751
        %v4753 = vrot.slane %v4739, %v4752
        %v4754 = vcombine.low %v4375, %v4387
        %v4755 = vcombine.high %v4375, %v4387
        %v4757 = vunpack.c.l.s4 1983009808
        %v4758 = vunpack.c.0.s8 %v4757
        %v4759 = vlaneseq
        %v4760 = vshrl.u32 %v4759, 7
        %v4761 = vsub.s32 %v4758, %v4760
        %v4762 = vrot.slane %v4754, %v4761
        %v4764 = vunpack.c.l.s4 1983009808
        %v4765 = vunpack.c.0.s8 %v4764
        %v4766 = vlaneseq
        %v4767 = vshrl.u32 %v4766, 7
        %v4768 = vsub.s32 %v4765, %v4767
        %v4769 = vrot.slane %v4755, %v4768
        %v4770 = vcombine.low %v4714, %v4730
        %v4771 = vcombine.high %v4714, %v4730
        %v4773 = vunpack.c.l.s4 1934713408
        %v4774 = vunpack.c.0.s8 %v4773
        %v4775 = vlaneseq
        %v4776 = vshrl.u32 %v4775, 7
        %v4777 = vsub.s32 %v4774, %v4776
        %v4778 = vrot.slane %v4770, %v4777
        %v4780 = vunpack.c.l.s4 1934713408
        %v4781 = vunpack.c.0.s8 %v4780
        %v4782 = vlaneseq
        %v4783 = vshrl.u32 %v4782, 7
        %v4784 = vsub.s32 %v4781, %v4783
        %v4785 = vrot.slane %v4771, %v4784
        %v4786 = vcombine.low %v4721, %v4737
        %v4787 = vcombine.high %v4721, %v4737
        %v4789 = vunpack.c.l.s4 1934713408
        %v4790 = vunpack.c.0.s8 %v4789
        %v4791 = vlaneseq
        %v4792 = vshrl.u32 %v4791, 7
        %v4793 = vsub.s32 %v4790, %v4792
        %v4794 = vrot.slane %v4786, %v4793
        %v4796 = vunpack.c.l.s4 1934713408
        %v4797 = vunpack.c.0.s8 %v4796
        %v4798 = vlaneseq
        %v4799 = vshrl.u32 %v4798, 7
        %v4800 = vsub.s32 %v4797, %v4799
        %v4801 = vrot.slane %v4787, %v4800
        %v4802 = vcombine.low %v4746, %v4762
        %v4803 = vcombine.high %v4746, %v4762
        %v4805 = vunpack.c.l.s4 1934713408
        %v4806 = vunpack.c.0.s8 %v4805
        %v4807 = vlaneseq
        %v4808 = vshrl.u32 %v4807, 7
        %v4809 = vsub.s32 %v4806, %v4808
        %v4810 = vrot.slane %v4802, %v4809
        %v4812 = vunpack.c.l.s4 1934713408
        %v4813 = vunpack.c.0.s8 %v4812
        %v4814 = vlaneseq
        %v4815 = vshrl.u32 %v4814, 7
        %v4816 = vsub.s32 %v4813, %v4815
        %v4817 = vrot.slane %v4803, %v4816
        %v4818 = vcombine.low %v4753, %v4769
        %v4819 = vcombine.high %v4753, %v4769
        %v4821 = vunpack.c.l.s4 1934713408
        %v4822 = vunpack.c.0.s8 %v4821
        %v4823 = vlaneseq
        %v4824 = vshrl.u32 %v4823, 7
        %v4825 = vsub.s32 %v4822, %v4824
        %v4826 = vrot.slane %v4818, %v4825
        %v4828 = vunpack.c.l.s4 1934713408
        %v4829 = vunpack.c.0.s8 %v4828
        %v4830 = vlaneseq
        %v4831 = vshrl.u32 %v4830, 7
        %v4832 = vsub.s32 %v4829, %v4831
        %v4833 = vrot.slane %v4819, %v4832
        %v4834 = vcombine.low %v4778, %v4810
        %v4835 = vcombine.high %v4778, %v4810
        %v4836 = vcombine.low %v4785, %v4817
        %v4837 = vcombine.high %v4785, %v4817
        %v4838 = vcombine.low %v4794, %v4826
        %v4839 = vcombine.high %v4794, %v4826
        %v4840 = vcombine.low %v4801, %v4833
        %v4841 = vcombine.high %v4801, %v4833
        %v4842 = vcombine.low %v1172, %v4401
        %v4843 = vcombine.high %v1172, %v4401
        %v4845 = vunpack.c.l.s4 1983009808
        %v4846 = vunpack.c.0.s8 %v4845
        %v4847 = vlaneseq
        %v4848 = vshrl.u32 %v4847, 7
        %v4849 = vsub.s32 %v4846, %v4848
        %v4850 = vrot.slane %v4842, %v4849
        %v4852 = vunpack.c.l.s4 1983009808
        %v4853 = vunpack.c.0.s8 %v4852
        %v4854 = vlaneseq
        %v4855 = vshrl.u32 %v4854, 7
        %v4856 = vsub.s32 %v4853, %v4855
        %v4857 = vrot.slane %v4843, %v4856
        %v4858 = vcombine.low %v4395, %v4407
        %v4859 = vcombine.high %v4395, %v4407
        %v4861 = vunpack.c.l.s4 1983009808
        %v4862 = vunpack.c.0.s8 %v4861
        %v4863 = vlaneseq
        %v4864 = vshrl.u32 %v4863, 7
        %v4865 = vsub.s32 %v4862, %v4864
        %v4866 = vrot.slane %v4858, %v4865
        %v4868 = vunpack.c.l.s4 1983009808
        %v4869 = vunpack.c.0.s8 %v4868
        %v4870 = vlaneseq
        %v4871 = vshrl.u32 %v4870, 7
        %v4872 = vsub.s32 %v4869, %v4871
        %v4873 = vrot.slane %v4859, %v4872
        %v4874 = vcombine.low %v4413, %v4425
        %v4875 = vcombine.high %v4413, %v4425
        %v4877 = vunpack.c.l.s4 1983009808
        %v4878 = vunpack.c.0.s8 %v4877
        %v4879 = vlaneseq
        %v4880 = vshrl.u32 %v4879, 7
        %v4881 = vsub.s32 %v4878, %v4880
        %v4882 = vrot.slane %v4874, %v4881
        %v4884 = vunpack.c.l.s4 1983009808
        %v4885 = vunpack.c.0.s8 %v4884
        %v4886 = vlaneseq
        %v4887 = vshrl.u32 %v4886, 7
        %v4888 = vsub.s32 %v4885, %v4887
        %v4889 = vrot.slane %v4875, %v4888
        %v4890 = vcombine.low %v4419, %v4431
        %v4891 = vcombine.high %v4419, %v4431
        %v4893 = vunpack.c.l.s4 1983009808
        %v4894 = vunpack.c.0.s8 %v4893
        %v4895 = vlaneseq
        %v4896 = vshrl.u32 %v4895, 7
        %v4897 = vsub.s32 %v4894, %v4896
        %v4898 = vrot.slane %v4890, %v4897
        %v4900 = vunpack.c.l.s4 1983009808
        %v4901 = vunpack.c.0.s8 %v4900
        %v4902 = vlaneseq
        %v4903 = vshrl.u32 %v4902, 7
        %v4904 = vsub.s32 %v4901, %v4903
        %v4905 = vrot.slane %v4891, %v4904
        %v4906 = vcombine.low %v4850, %v4866
        %v4907 = vcombine.high %v4850, %v4866
        %v4909 = vunpack.c.l.s4 1934713408
        %v4910 = vunpack.c.0.s8 %v4909
        %v4911 = vlaneseq
        %v4912 = vshrl.u32 %v4911, 7
        %v4913 = vsub.s32 %v4910, %v4912
        %v4914 = vrot.slane %v4906, %v4913
        %v4916 = vunpack.c.l.s4 1934713408
        %v4917 = vunpack.c.0.s8 %v4916
        %v4918 = vlaneseq
        %v4919 = vshrl.u32 %v4918, 7
        %v4920 = vsub.s32 %v4917, %v4919
        %v4921 = vrot.slane %v4907, %v4920
        %v4922 = vcombine.low %v4857, %v4873
        %v4923 = vcombine.high %v4857, %v4873
        %v4925 = vunpack.c.l.s4 1934713408
        %v4926 = vunpack.c.0.s8 %v4925
        %v4927 = vlaneseq
        %v4928 = vshrl.u32 %v4927, 7
        %v4929 = vsub.s32 %v4926, %v4928
        %v4930 = vrot.slane %v4922, %v4929
        %v4932 = vunpack.c.l.s4 1934713408
        %v4933 = vunpack.c.0.s8 %v4932
        %v4934 = vlaneseq
        %v4935 = vshrl.u32 %v4934, 7
        %v4936 = vsub.s32 %v4933, %v4935
        %v4937 = vrot.slane %v4923, %v4936
        %v4938 = vcombine.low %v4882, %v4898
        %v4939 = vcombine.high %v4882, %v4898
        %v4941 = vunpack.c.l.s4 1934713408
        %v4942 = vunpack.c.0.s8 %v4941
        %v4943 = vlaneseq
        %v4944 = vshrl.u32 %v4943, 7
        %v4945 = vsub.s32 %v4942, %v4944
        %v4946 = vrot.slane %v4938, %v4945
        %v4948 = vunpack.c.l.s4 1934713408
        %v4949 = vunpack.c.0.s8 %v4948
        %v4950 = vlaneseq
        %v4951 = vshrl.u32 %v4950, 7
        %v4952 = vsub.s32 %v4949, %v4951
        %v4953 = vrot.slane %v4939, %v4952
        %v4954 = vcombine.low %v4889, %v4905
        %v4955 = vcombine.high %v4889, %v4905
        %v4957 = vunpack.c.l.s4 1934713408
        %v4958 = vunpack.c.0.s8 %v4957
        %v4959 = vlaneseq
        %v4960 = vshrl.u32 %v4959, 7
        %v4961 = vsub.s32 %v4958, %v4960
        %v4962 = vrot.slane %v4954, %v4961
        %v4964 = vunpack.c.l.s4 1934713408
        %v4965 = vunpack.c.0.s8 %v4964
        %v4966 = vlaneseq
        %v4967 = vshrl.u32 %v4966, 7
        %v4968 = vsub.s32 %v4965, %v4967
        %v4969 = vrot.slane %v4955, %v4968
        %v4970 = vcombine.low %v4914, %v4946
        %v4971 = vcombine.high %v4914, %v4946
        %v4972 = vcombine.low %v4921, %v4953
        %v4973 = vcombine.high %v4921, %v4953
        %v4974 = vcombine.low %v4930, %v4962
        %v4975 = vcombine.high %v4930, %v4962
        %v4976 = vcombine.low %v4937, %v4969
        %v4977 = vcombine.high %v4937, %v4969
        %v4978 = vcombine.low %v4562, %v4564
        %v4979 = vcombine.high %v4562, %v4564
        %v4981 = vunpack.c.l.s4 1983009808
        %v4982 = vunpack.c.0.s8 %v4981
        %v4983 = vlaneseq
        %v4984 = vshrl.u32 %v4983, 7
        %v4985 = vsub.s32 %v4982, %v4984
        %v4986 = vrot.slane %v4978, %v4985
        %v4988 = vunpack.c.l.s4 1983009808
        %v4989 = vunpack.c.0.s8 %v4988
        %v4990 = vlaneseq
        %v4991 = vshrl.u32 %v4990, 7
        %v4992 = vsub.s32 %v4989, %v4991
        %v4993 = vrot.slane %v4979, %v4992
        %v4994 = vcombine.low %v4563, %v4565
        %v4995 = vcombine.high %v4563, %v4565
        %v4997 = vunpack.c.l.s4 1983009808
        %v4998 = vunpack.c.0.s8 %v4997
        %v4999 = vlaneseq
        %v5000 = vshrl.u32 %v4999, 7
        %v5001 = vsub.s32 %v4998, %v5000
        %v5002 = vrot.slane %v4994, %v5001
        %v5004 = vunpack.c.l.s4 1983009808
        %v5005 = vunpack.c.0.s8 %v5004
        %v5006 = vlaneseq
        %v5007 = vshrl.u32 %v5006, 7
        %v5008 = vsub.s32 %v5005, %v5007
        %v5009 = vrot.slane %v4995, %v5008
        %v5010 = vcombine.low %v4566, %v4568
        %v5011 = vcombine.high %v4566, %v4568
        %v5013 = vunpack.c.l.s4 1983009808
        %v5014 = vunpack.c.0.s8 %v5013
        %v5015 = vlaneseq
        %v5016 = vshrl.u32 %v5015, 7
        %v5017 = vsub.s32 %v5014, %v5016
        %v5018 = vrot.slane %v5010, %v5017
        %v5020 = vunpack.c.l.s4 1983009808
        %v5021 = vunpack.c.0.s8 %v5020
        %v5022 = vlaneseq
        %v5023 = vshrl.u32 %v5022, 7
        %v5024 = vsub.s32 %v5021, %v5023
        %v5025 = vrot.slane %v5011, %v5024
        %v5026 = vcombine.low %v4567, %v4569
        %v5027 = vcombine.high %v4567, %v4569
        %v5029 = vunpack.c.l.s4 1983009808
        %v5030 = vunpack.c.0.s8 %v5029
        %v5031 = vlaneseq
        %v5032 = vshrl.u32 %v5031, 7
        %v5033 = vsub.s32 %v5030, %v5032
        %v5034 = vrot.slane %v5026, %v5033
        %v5036 = vunpack.c.l.s4 1983009808
        %v5037 = vunpack.c.0.s8 %v5036
        %v5038 = vlaneseq
        %v5039 = vshrl.u32 %v5038, 7
        %v5040 = vsub.s32 %v5037, %v5039
        %v5041 = vrot.slane %v5027, %v5040
        %v5042 = vcombine.low %v4986, %v5002
        %v5043 = vcombine.high %v4986, %v5002
        %v5045 = vunpack.c.l.s4 1934713408
        %v5046 = vunpack.c.0.s8 %v5045
        %v5047 = vlaneseq
        %v5048 = vshrl.u32 %v5047, 7
        %v5049 = vsub.s32 %v5046, %v5048
        %v5050 = vrot.slane %v5042, %v5049
        %v5052 = vunpack.c.l.s4 1934713408
        %v5053 = vunpack.c.0.s8 %v5052
        %v5054 = vlaneseq
        %v5055 = vshrl.u32 %v5054, 7
        %v5056 = vsub.s32 %v5053, %v5055
        %v5057 = vrot.slane %v5043, %v5056
        %v5058 = vcombine.low %v4993, %v5009
        %v5059 = vcombine.high %v4993, %v5009
        %v5061 = vunpack.c.l.s4 1934713408
        %v5062 = vunpack.c.0.s8 %v5061
        %v5063 = vlaneseq
        %v5064 = vshrl.u32 %v5063, 7
        %v5065 = vsub.s32 %v5062, %v5064
        %v5066 = vrot.slane %v5058, %v5065
        %v5068 = vunpack.c.l.s4 1934713408
        %v5069 = vunpack.c.0.s8 %v5068
        %v5070 = vlaneseq
        %v5071 = vshrl.u32 %v5070, 7
        %v5072 = vsub.s32 %v5069, %v5071
        %v5073 = vrot.slane %v5059, %v5072
        %v5074 = vcombine.low %v5018, %v5034
        %v5075 = vcombine.high %v5018, %v5034
        %v5077 = vunpack.c.l.s4 1934713408
        %v5078 = vunpack.c.0.s8 %v5077
        %v5079 = vlaneseq
        %v5080 = vshrl.u32 %v5079, 7
        %v5081 = vsub.s32 %v5078, %v5080
        %v5082 = vrot.slane %v5074, %v5081
        %v5084 = vunpack.c.l.s4 1934713408
        %v5085 = vunpack.c.0.s8 %v5084
        %v5086 = vlaneseq
        %v5087 = vshrl.u32 %v5086, 7
        %v5088 = vsub.s32 %v5085, %v5087
        %v5089 = vrot.slane %v5075, %v5088
        %v5090 = vcombine.low %v5025, %v5041
        %v5091 = vcombine.high %v5025, %v5041
        %v5093 = vunpack.c.l.s4 1934713408
        %v5094 = vunpack.c.0.s8 %v5093
        %v5095 = vlaneseq
        %v5096 = vshrl.u32 %v5095, 7
        %v5097 = vsub.s32 %v5094, %v5096
        %v5098 = vrot.slane %v5090, %v5097
        %v5100 = vunpack.c.l.s4 1934713408
        %v5101 = vunpack.c.0.s8 %v5100
        %v5102 = vlaneseq
        %v5103 = vshrl.u32 %v5102, 7
        %v5104 = vsub.s32 %v5101, %v5103
        %v5105 = vrot.slane %v5091, %v5104
        %v5106 = vcombine.low %v5050, %v5082
        %v5107 = vcombine.high %v5050, %v5082
        %v5108 = vcombine.low %v5057, %v5089
        %v5109 = vcombine.high %v5057, %v5089
        %v5110 = vcombine.low %v5066, %v5098
        %v5111 = vcombine.high %v5066, %v5098
        %v5112 = vcombine.low %v5073, %v5105
        %v5113 = vcombine.high %v5073, %v5105
        %v5114 = vcombine.low %v4834, %v4836
        %v5115 = vcombine.high %v4834, %v4836
        %v5117 = vunpack.c.l.s4 1983009808
        %v5118 = vunpack.c.0.s8 %v5117
        %v5119 = vlaneseq
        %v5120 = vshrl.u32 %v5119, 7
        %v5121 = vsub.s32 %v5118, %v5120
        %v5122 = vrot.slane %v5114, %v5121
        %v5124 = vunpack.c.l.s4 1983009808
        %v5125 = vunpack.c.0.s8 %v5124
        %v5126 = vlaneseq
        %v5127 = vshrl.u32 %v5126, 7
        %v5128 = vsub.s32 %v5125, %v5127
        %v5129 = vrot.slane %v5115, %v5128
        %v5130 = vcombine.low %v4835, %v4837
        %v5131 = vcombine.high %v4835, %v4837
        %v5133 = vunpack.c.l.s4 1983009808
        %v5134 = vunpack.c.0.s8 %v5133
        %v5135 = vlaneseq
        %v5136 = vshrl.u32 %v5135, 7
        %v5137 = vsub.s32 %v5134, %v5136
        %v5138 = vrot.slane %v5130, %v5137
        %v5140 = vunpack.c.l.s4 1983009808
        %v5141 = vunpack.c.0.s8 %v5140
        %v5142 = vlaneseq
        %v5143 = vshrl.u32 %v5142, 7
        %v5144 = vsub.s32 %v5141, %v5143
        %v5145 = vrot.slane %v5131, %v5144
        %v5146 = vcombine.low %v4838, %v4840
        %v5147 = vcombine.high %v4838, %v4840
        %v5149 = vunpack.c.l.s4 1983009808
        %v5150 = vunpack.c.0.s8 %v5149
        %v5151 = vlaneseq
        %v5152 = vshrl.u32 %v5151, 7
        %v5153 = vsub.s32 %v5150, %v5152
        %v5154 = vrot.slane %v5146, %v5153
        %v5156 = vunpack.c.l.s4 1983009808
        %v5157 = vunpack.c.0.s8 %v5156
        %v5158 = vlaneseq
        %v5159 = vshrl.u32 %v5158, 7
        %v5160 = vsub.s32 %v5157, %v5159
        %v5161 = vrot.slane %v5147, %v5160
        %v5162 = vcombine.low %v4839, %v4841
        %v5163 = vcombine.high %v4839, %v4841
        %v5165 = vunpack.c.l.s4 1983009808
        %v5166 = vunpack.c.0.s8 %v5165
        %v5167 = vlaneseq
        %v5168 = vshrl.u32 %v5167, 7
        %v5169 = vsub.s32 %v5166, %v5168
        %v5170 = vrot.slane %v5162, %v5169
        %v5172 = vunpack.c.l.s4 1983009808
        %v5173 = vunpack.c.0.s8 %v5172
        %v5174 = vlaneseq
        %v5175 = vshrl.u32 %v5174, 7
        %v5176 = vsub.s32 %v5173, %v5175
        %v5177 = vrot.slane %v5163, %v5176
        %v5178 = vcombine.low %v5122, %v5138
        %v5179 = vcombine.high %v5122, %v5138
        %v5181 = vunpack.c.l.s4 1934713408
        %v5182 = vunpack.c.0.s8 %v5181
        %v5183 = vlaneseq
        %v5184 = vshrl.u32 %v5183, 7
        %v5185 = vsub.s32 %v5182, %v5184
        %v5186 = vrot.slane %v5178, %v5185
        %v5188 = vunpack.c.l.s4 1934713408
        %v5189 = vunpack.c.0.s8 %v5188
        %v5190 = vlaneseq
        %v5191 = vshrl.u32 %v5190, 7
        %v5192 = vsub.s32 %v5189, %v5191
        %v5193 = vrot.slane %v5179, %v5192
        %v5194 = vcombine.low %v5129, %v5145
        %v5195 = vcombine.high %v5129, %v5145
        %v5197 = vunpack.c.l.s4 1934713408
        %v5198 = vunpack.c.0.s8 %v5197
        %v5199 = vlaneseq
        %v5200 = vshrl.u32 %v5199, 7
        %v5201 = vsub.s32 %v5198, %v5200
        %v5202 = vrot.slane %v5194, %v5201
        %v5204 = vunpack.c.l.s4 1934713408
        %v5205 = vunpack.c.0.s8 %v5204
        %v5206 = vlaneseq
        %v5207 = vshrl.u32 %v5206, 7
        %v5208 = vsub.s32 %v5205, %v5207
        %v5209 = vrot.slane %v5195, %v5208
        %v5210 = vcombine.low %v5154, %v5170
        %v5211 = vcombine.high %v5154, %v5170
        %v5213 = vunpack.c.l.s4 1934713408
        %v5214 = vunpack.c.0.s8 %v5213
        %v5215 = vlaneseq
        %v5216 = vshrl.u32 %v5215, 7
        %v5217 = vsub.s32 %v5214, %v5216
        %v5218 = vrot.slane %v5210, %v5217
        %v5220 = vunpack.c.l.s4 1934713408
        %v5221 = vunpack.c.0.s8 %v5220
        %v5222 = vlaneseq
        %v5223 = vshrl.u32 %v5222, 7
        %v5224 = vsub.s32 %v5221, %v5223
        %v5225 = vrot.slane %v5211, %v5224
        %v5226 = vcombine.low %v5161, %v5177
        %v5227 = vcombine.high %v5161, %v5177
        %v5229 = vunpack.c.l.s4 1934713408
        %v5230 = vunpack.c.0.s8 %v5229
        %v5231 = vlaneseq
        %v5232 = vshrl.u32 %v5231, 7
        %v5233 = vsub.s32 %v5230, %v5232
        %v5234 = vrot.slane %v5226, %v5233
        %v5236 = vunpack.c.l.s4 1934713408
        %v5237 = vunpack.c.0.s8 %v5236
        %v5238 = vlaneseq
        %v5239 = vshrl.u32 %v5238, 7
        %v5240 = vsub.s32 %v5237, %v5239
        %v5241 = vrot.slane %v5227, %v5240
        %v5242 = vcombine.low %v5186, %v5218
        %v5243 = vcombine.high %v5186, %v5218
        %v5244 = vcombine.low %v5193, %v5225
        %v5245 = vcombine.high %v5193, %v5225
        %v5246 = vcombine.low %v5202, %v5234
        %v5247 = vcombine.high %v5202, %v5234
        %v5248 = vcombine.low %v5209, %v5241
        %v5249 = vcombine.high %v5209, %v5241
        %v5250 = vcombine.low %v4698, %v4700
        %v5251 = vcombine.high %v4698, %v4700
        %v5253 = vunpack.c.l.s4 1983009808
        %v5254 = vunpack.c.0.s8 %v5253
        %v5255 = vlaneseq
        %v5256 = vshrl.u32 %v5255, 7
        %v5257 = vsub.s32 %v5254, %v5256
        %v5258 = vrot.slane %v5250, %v5257
        %v5260 = vunpack.c.l.s4 1983009808
        %v5261 = vunpack.c.0.s8 %v5260
        %v5262 = vlaneseq
        %v5263 = vshrl.u32 %v5262, 7
        %v5264 = vsub.s32 %v5261, %v5263
        %v5265 = vrot.slane %v5251, %v5264
        %v5266 = vcombine.low %v4699, %v4701
        %v5267 = vcombine.high %v4699, %v4701
        %v5269 = vunpack.c.l.s4 1983009808
        %v5270 = vunpack.c.0.s8 %v5269
        %v5271 = vlaneseq
        %v5272 = vshrl.u32 %v5271, 7
        %v5273 = vsub.s32 %v5270, %v5272
        %v5274 = vrot.slane %v5266, %v5273
        %v5276 = vunpack.c.l.s4 1983009808
        %v5277 = vunpack.c.0.s8 %v5276
        %v5278 = vlaneseq
        %v5279 = vshrl.u32 %v5278, 7
        %v5280 = vsub.s32 %v5277, %v5279
        %v5281 = vrot.slane %v5267, %v5280
        %v5282 = vcombine.low %v4702, %v4704
        %v5283 = vcombine.high %v4702, %v4704
        %v5285 = vunpack.c.l.s4 1983009808
        %v5286 = vunpack.c.0.s8 %v5285
        %v5287 = vlaneseq
        %v5288 = vshrl.u32 %v5287, 7
        %v5289 = vsub.s32 %v5286, %v5288
        %v5290 = vrot.slane %v5282, %v5289
        %v5292 = vunpack.c.l.s4 1983009808
        %v5293 = vunpack.c.0.s8 %v5292
        %v5294 = vlaneseq
        %v5295 = vshrl.u32 %v5294, 7
        %v5296 = vsub.s32 %v5293, %v5295
        %v5297 = vrot.slane %v5283, %v5296
        %v5298 = vcombine.low %v4703, %v4705
        %v5299 = vcombine.high %v4703, %v4705
        %v5301 = vunpack.c.l.s4 1983009808
        %v5302 = vunpack.c.0.s8 %v5301
        %v5303 = vlaneseq
        %v5304 = vshrl.u32 %v5303, 7
        %v5305 = vsub.s32 %v5302, %v5304
        %v5306 = vrot.slane %v5298, %v5305
        %v5308 = vunpack.c.l.s4 1983009808
        %v5309 = vunpack.c.0.s8 %v5308
        %v5310 = vlaneseq
        %v5311 = vshrl.u32 %v5310, 7
        %v5312 = vsub.s32 %v5309, %v5311
        %v5313 = vrot.slane %v5299, %v5312
        %v5314 = vcombine.low %v5258, %v5274
        %v5315 = vcombine.high %v5258, %v5274
        %v5317 = vunpack.c.l.s4 1934713408
        %v5318 = vunpack.c.0.s8 %v5317
        %v5319 = vlaneseq
        %v5320 = vshrl.u32 %v5319, 7
        %v5321 = vsub.s32 %v5318, %v5320
        %v5322 = vrot.slane %v5314, %v5321
        %v5324 = vunpack.c.l.s4 1934713408
        %v5325 = vunpack.c.0.s8 %v5324
        %v5326 = vlaneseq
        %v5327 = vshrl.u32 %v5326, 7
        %v5328 = vsub.s32 %v5325, %v5327
        %v5329 = vrot.slane %v5315, %v5328
        %v5330 = vcombine.low %v5265, %v5281
        %v5331 = vcombine.high %v5265, %v5281
        %v5333 = vunpack.c.l.s4 1934713408
        %v5334 = vunpack.c.0.s8 %v5333
        %v5335 = vlaneseq
        %v5336 = vshrl.u32 %v5335, 7
        %v5337 = vsub.s32 %v5334, %v5336
        %v5338 = vrot.slane %v5330, %v5337
        %v5340 = vunpack.c.l.s4 1934713408
        %v5341 = vunpack.c.0.s8 %v5340
        %v5342 = vlaneseq
        %v5343 = vshrl.u32 %v5342, 7
        %v5344 = vsub.s32 %v5341, %v5343
        %v5345 = vrot.slane %v5331, %v5344
        %v5346 = vcombine.low %v5290, %v5306
        %v5347 = vcombine.high %v5290, %v5306
        %v5349 = vunpack.c.l.s4 1934713408
        %v5350 = vunpack.c.0.s8 %v5349
        %v5351 = vlaneseq
        %v5352 = vshrl.u32 %v5351, 7
        %v5353 = vsub.s32 %v5350, %v5352
        %v5354 = vrot.slane %v5346, %v5353
        %v5356 = vunpack.c.l.s4 1934713408
        %v5357 = vunpack.c.0.s8 %v5356
        %v5358 = vlaneseq
        %v5359 = vshrl.u32 %v5358, 7
        %v5360 = vsub.s32 %v5357, %v5359
        %v5361 = vrot.slane %v5347, %v5360
        %v5362 = vcombine.low %v5297, %v5313
        %v5363 = vcombine.high %v5297, %v5313
        %v5365 = vunpack.c.l.s4 1934713408
        %v5366 = vunpack.c.0.s8 %v5365
        %v5367 = vlaneseq
        %v5368 = vshrl.u32 %v5367, 7
        %v5369 = vsub.s32 %v5366, %v5368
        %v5370 = vrot.slane %v5362, %v5369
        %v5372 = vunpack.c.l.s4 1934713408
        %v5373 = vunpack.c.0.s8 %v5372
        %v5374 = vlaneseq
        %v5375 = vshrl.u32 %v5374, 7
        %v5376 = vsub.s32 %v5373, %v5375
        %v5377 = vrot.slane %v5363, %v5376
        %v5378 = vcombine.low %v5322, %v5354
        %v5379 = vcombine.high %v5322, %v5354
        %v5380 = vcombine.low %v5329, %v5361
        %v5381 = vcombine.high %v5329, %v5361
        %v5382 = vcombine.low %v5338, %v5370
        %v5383 = vcombine.high %v5338, %v5370
        %v5384 = vcombine.low %v5345, %v5377
        %v5385 = vcombine.high %v5345, %v5377
        %v5386 = vcombine.low %v4970, %v4972
        %v5387 = vcombine.high %v4970, %v4972
        %v5389 = vunpack.c.l.s4 1983009808
        %v5390 = vunpack.c.0.s8 %v5389
        %v5391 = vlaneseq
        %v5392 = vshrl.u32 %v5391, 7
        %v5393 = vsub.s32 %v5390, %v5392
        %v5394 = vrot.slane %v5386, %v5393
        %v5396 = vunpack.c.l.s4 1983009808
        %v5397 = vunpack.c.0.s8 %v5396
        %v5398 = vlaneseq
        %v5399 = vshrl.u32 %v5398, 7
        %v5400 = vsub.s32 %v5397, %v5399
        %v5401 = vrot.slane %v5387, %v5400
        %v5402 = vcombine.low %v4971, %v4973
        %v5403 = vcombine.high %v4971, %v4973
        %v5405 = vunpack.c.l.s4 1983009808
        %v5406 = vunpack.c.0.s8 %v5405
        %v5407 = vlaneseq
        %v5408 = vshrl.u32 %v5407, 7
        %v5409 = vsub.s32 %v5406, %v5408
        %v5410 = vrot.slane %v5402, %v5409
        %v5412 = vunpack.c.l.s4 1983009808
        %v5413 = vunpack.c.0.s8 %v5412
        %v5414 = vlaneseq
        %v5415 = vshrl.u32 %v5414, 7
        %v5416 = vsub.s32 %v5413, %v5415
        %v5417 = vrot.slane %v5403, %v5416
        %v5418 = vcombine.low %v4974, %v4976
        %v5419 = vcombine.high %v4974, %v4976
        %v5421 = vunpack.c.l.s4 1983009808
        %v5422 = vunpack.c.0.s8 %v5421
        %v5423 = vlaneseq
        %v5424 = vshrl.u32 %v5423, 7
        %v5425 = vsub.s32 %v5422, %v5424
        %v5426 = vrot.slane %v5418, %v5425
        %v5428 = vunpack.c.l.s4 1983009808
        %v5429 = vunpack.c.0.s8 %v5428
        %v5430 = vlaneseq
        %v5431 = vshrl.u32 %v5430, 7
        %v5432 = vsub.s32 %v5429, %v5431
        %v5433 = vrot.slane %v5419, %v5432
        %v5434 = vcombine.low %v4975, %v4977
        %v5435 = vcombine.high %v4975, %v4977
        %v5437 = vunpack.c.l.s4 1983009808
        %v5438 = vunpack.c.0.s8 %v5437
        %v5439 = vlaneseq
        %v5440 = vshrl.u32 %v5439, 7
        %v5441 = vsub.s32 %v5438, %v5440
        %v5442 = vrot.slane %v5434, %v5441
        %v5444 = vunpack.c.l.s4 1983009808
        %v5445 = vunpack.c.0.s8 %v5444
        %v5446 = vlaneseq
        %v5447 = vshrl.u32 %v5446, 7
        %v5448 = vsub.s32 %v5445, %v5447
        %v5449 = vrot.slane %v5435, %v5448
        %v5450 = vcombine.low %v5394, %v5410
        %v5451 = vcombine.high %v5394, %v5410
        %v5453 = vunpack.c.l.s4 1934713408
        %v5454 = vunpack.c.0.s8 %v5453
        %v5455 = vlaneseq
        %v5456 = vshrl.u32 %v5455, 7
        %v5457 = vsub.s32 %v5454, %v5456
        %v5458 = vrot.slane %v5450, %v5457
        %v5460 = vunpack.c.l.s4 1934713408
        %v5461 = vunpack.c.0.s8 %v5460
        %v5462 = vlaneseq
        %v5463 = vshrl.u32 %v5462, 7
        %v5464 = vsub.s32 %v5461, %v5463
        %v5465 = vrot.slane %v5451, %v5464
        %v5466 = vcombine.low %v5401, %v5417
        %v5467 = vcombine.high %v5401, %v5417
        %v5469 = vunpack.c.l.s4 1934713408
        %v5470 = vunpack.c.0.s8 %v5469
        %v5471 = vlaneseq
        %v5472 = vshrl.u32 %v5471, 7
        %v5473 = vsub.s32 %v5470, %v5472
        %v5474 = vrot.slane %v5466, %v5473
        %v5476 = vunpack.c.l.s4 1934713408
        %v5477 = vunpack.c.0.s8 %v5476
        %v5478 = vlaneseq
        %v5479 = vshrl.u32 %v5478, 7
        %v5480 = vsub.s32 %v5477, %v5479
        %v5481 = vrot.slane %v5467, %v5480
        %v5482 = vcombine.low %v5426, %v5442
        %v5483 = vcombine.high %v5426, %v5442
        %v5485 = vunpack.c.l.s4 1934713408
        %v5486 = vunpack.c.0.s8 %v5485
        %v5487 = vlaneseq
        %v5488 = vshrl.u32 %v5487, 7
        %v5489 = vsub.s32 %v5486, %v5488
        %v5490 = vrot.slane %v5482, %v5489
        %v5492 = vunpack.c.l.s4 1934713408
        %v5493 = vunpack.c.0.s8 %v5492
        %v5494 = vlaneseq
        %v5495 = vshrl.u32 %v5494, 7
        %v5496 = vsub.s32 %v5493, %v5495
        %v5497 = vrot.slane %v5483, %v5496
        %v5498 = vcombine.low %v5433, %v5449
        %v5499 = vcombine.high %v5433, %v5449
        %v5501 = vunpack.c.l.s4 1934713408
        %v5502 = vunpack.c.0.s8 %v5501
        %v5503 = vlaneseq
        %v5504 = vshrl.u32 %v5503, 7
        %v5505 = vsub.s32 %v5502, %v5504
        %v5506 = vrot.slane %v5498, %v5505
        %v5508 = vunpack.c.l.s4 1934713408
        %v5509 = vunpack.c.0.s8 %v5508
        %v5510 = vlaneseq
        %v5511 = vshrl.u32 %v5510, 7
        %v5512 = vsub.s32 %v5509, %v5511
        %v5513 = vrot.slane %v5499, %v5512
        %v5514 = vcombine.low %v5458, %v5490
        %v5515 = vcombine.high %v5458, %v5490
        %v5516 = vcombine.low %v5465, %v5497
        %v5517 = vcombine.high %v5465, %v5497
        %v5518 = vcombine.low %v5474, %v5506
        %v5519 = vcombine.high %v5474, %v5506
        %v5520 = vcombine.low %v5481, %v5513
        %v5521 = vcombine.high %v5481, %v5513
        %5522 = vxpose.xlu0.b32.start [1/16] %v5106, 128
        %5523 = vxpose.xlu0.b32.cont [2/16] %v5242, 128
        %5524 = vxpose.xlu0.b32.cont [3/16] 0.0, 128
        %5525 = vxpose.xlu0.b32.cont [4/16] 0.0, 128
        %5526 = vxpose.xlu0.b32.cont [5/16] 0.0, 128
        %5527 = vxpose.xlu0.b32.cont [6/16] 0.0, 128
        %5528 = vxpose.xlu0.b32.cont [7/16] 0.0, 128
        %5529 = vxpose.xlu0.b32.cont [8/16] 0.0, 128
        %5530 = vxpose.xlu0.b32.cont [9/16] 0.0, 128
        %5531 = vxpose.xlu0.b32.cont [10/16] 0.0, 128
        %5532 = vxpose.xlu0.b32.cont [11/16] 0.0, 128
        %5533 = vxpose.xlu0.b32.cont [12/16] 0.0, 128
        %5534 = vxpose.xlu0.b32.cont [13/16] 0.0, 128
        %5535 = vxpose.xlu0.b32.cont [14/16] 0.0, 128
        %5536 = vxpose.xlu0.b32.cont [15/16] 0.0, 128
        %5537 = vxpose.xlu0.b32.end [16/16] 0.0, 128
        %v5538 = vpop.trf.xlu0
        %v5539 = vpop.trf.xlu0
        %v5540 = vpop.trf.xlu0
        %v5541 = vpop.trf.xlu0
        %v5542 = vpop.trf.xlu0
        %v5543 = vpop.trf.xlu0
        %v5544 = vpop.trf.xlu0
        %v5545 = vpop.trf.xlu0
        %v5546 = vpop.trf.xlu0
        %v5547 = vpop.trf.xlu0
        %v5548 = vpop.trf.xlu0
        %v5549 = vpop.trf.xlu0
        %v5550 = vpop.trf.xlu0
        %v5551 = vpop.trf.xlu0
        %v5552 = vpop.trf.xlu0
        %v5553 = vpop.trf.xlu0
        %5554 = vxpose.xlu0.b32.start [1/16] %v5107, 128
        %5555 = vxpose.xlu0.b32.cont [2/16] %v5243, 128
        %5556 = vxpose.xlu0.b32.cont [3/16] 0.0, 128
        %5557 = vxpose.xlu0.b32.cont [4/16] 0.0, 128
        %5558 = vxpose.xlu0.b32.cont [5/16] 0.0, 128
        %5559 = vxpose.xlu0.b32.cont [6/16] 0.0, 128
        %5560 = vxpose.xlu0.b32.cont [7/16] 0.0, 128
        %5561 = vxpose.xlu0.b32.cont [8/16] 0.0, 128
        %5562 = vxpose.xlu0.b32.cont [9/16] 0.0, 128
        %5563 = vxpose.xlu0.b32.cont [10/16] 0.0, 128
        %5564 = vxpose.xlu0.b32.cont [11/16] 0.0, 128
        %5565 = vxpose.xlu0.b32.cont [12/16] 0.0, 128
        %5566 = vxpose.xlu0.b32.cont [13/16] 0.0, 128
        %5567 = vxpose.xlu0.b32.cont [14/16] 0.0, 128
        %5568 = vxpose.xlu0.b32.cont [15/16] 0.0, 128
        %5569 = vxpose.xlu0.b32.end [16/16] 0.0, 128
        %v5570 = vpop.trf.xlu0
        %v5571 = vpop.trf.xlu0
        %v5572 = vpop.trf.xlu0
        %v5573 = vpop.trf.xlu0
        %v5574 = vpop.trf.xlu0
        %v5575 = vpop.trf.xlu0
        %v5576 = vpop.trf.xlu0
        %v5577 = vpop.trf.xlu0
        %v5578 = vpop.trf.xlu0
        %v5579 = vpop.trf.xlu0
        %v5580 = vpop.trf.xlu0
        %v5581 = vpop.trf.xlu0
        %v5582 = vpop.trf.xlu0
        %v5583 = vpop.trf.xlu0
        %v5584 = vpop.trf.xlu0
        %v5585 = vpop.trf.xlu0
        %5586 = vxpose.xlu0.b32.start [1/16] %v5108, 128
        %5587 = vxpose.xlu0.b32.cont [2/16] %v5244, 128
        %5588 = vxpose.xlu0.b32.cont [3/16] 0.0, 128
        %5589 = vxpose.xlu0.b32.cont [4/16] 0.0, 128
        %5590 = vxpose.xlu0.b32.cont [5/16] 0.0, 128
        %5591 = vxpose.xlu0.b32.cont [6/16] 0.0, 128
        %5592 = vxpose.xlu0.b32.cont [7/16] 0.0, 128
        %5593 = vxpose.xlu0.b32.cont [8/16] 0.0, 128
        %5594 = vxpose.xlu0.b32.cont [9/16] 0.0, 128
        %5595 = vxpose.xlu0.b32.cont [10/16] 0.0, 128
        %5596 = vxpose.xlu0.b32.cont [11/16] 0.0, 128
        %5597 = vxpose.xlu0.b32.cont [12/16] 0.0, 128
        %5598 = vxpose.xlu0.b32.cont [13/16] 0.0, 128
        %5599 = vxpose.xlu0.b32.cont [14/16] 0.0, 128
        %5600 = vxpose.xlu0.b32.cont [15/16] 0.0, 128
        %5601 = vxpose.xlu0.b32.end [16/16] 0.0, 128
        %v5602 = vpop.trf.xlu0
        %v5603 = vpop.trf.xlu0
        %v5604 = vpop.trf.xlu0
        %v5605 = vpop.trf.xlu0
        %v5606 = vpop.trf.xlu0
        %v5607 = vpop.trf.xlu0
        %v5608 = vpop.trf.xlu0
        %v5609 = vpop.trf.xlu0
        %v5610 = vpop.trf.xlu0
        %v5611 = vpop.trf.xlu0
        %v5612 = vpop.trf.xlu0
        %v5613 = vpop.trf.xlu0
        %v5614 = vpop.trf.xlu0
        %v5615 = vpop.trf.xlu0
        %v5616 = vpop.trf.xlu0
        %v5617 = vpop.trf.xlu0
        %5618 = vxpose.xlu0.b32.start [1/16] %v5109, 128
        %5619 = vxpose.xlu0.b32.cont [2/16] %v5245, 128
        %5620 = vxpose.xlu0.b32.cont [3/16] 0.0, 128
        %5621 = vxpose.xlu0.b32.cont [4/16] 0.0, 128
        %5622 = vxpose.xlu0.b32.cont [5/16] 0.0, 128
        %5623 = vxpose.xlu0.b32.cont [6/16] 0.0, 128
        %5624 = vxpose.xlu0.b32.cont [7/16] 0.0, 128
        %5625 = vxpose.xlu0.b32.cont [8/16] 0.0, 128
        %5626 = vxpose.xlu0.b32.cont [9/16] 0.0, 128
        %5627 = vxpose.xlu0.b32.cont [10/16] 0.0, 128
        %5628 = vxpose.xlu0.b32.cont [11/16] 0.0, 128
        %5629 = vxpose.xlu0.b32.cont [12/16] 0.0, 128
        %5630 = vxpose.xlu0.b32.cont [13/16] 0.0, 128
        %5631 = vxpose.xlu0.b32.cont [14/16] 0.0, 128
        %5632 = vxpose.xlu0.b32.cont [15/16] 0.0, 128
        %5633 = vxpose.xlu0.b32.end [16/16] 0.0, 128
        %v5634 = vpop.trf.xlu0
        %v5635 = vpop.trf.xlu0
        %v5636 = vpop.trf.xlu0
        %v5637 = vpop.trf.xlu0
        %v5638 = vpop.trf.xlu0
        %v5639 = vpop.trf.xlu0
        %v5640 = vpop.trf.xlu0
        %v5641 = vpop.trf.xlu0
        %v5642 = vpop.trf.xlu0
        %v5643 = vpop.trf.xlu0
        %v5644 = vpop.trf.xlu0
        %v5645 = vpop.trf.xlu0
        %v5646 = vpop.trf.xlu0
        %v5647 = vpop.trf.xlu0
        %v5648 = vpop.trf.xlu0
        %v5649 = vpop.trf.xlu0
        %5650 = vxpose.xlu0.b32.start [1/16] %v5110, 128
        %5651 = vxpose.xlu0.b32.cont [2/16] %v5246, 128
        %5652 = vxpose.xlu0.b32.cont [3/16] 0.0, 128
        %5653 = vxpose.xlu0.b32.cont [4/16] 0.0, 128
        %5654 = vxpose.xlu0.b32.cont [5/16] 0.0, 128
        %5655 = vxpose.xlu0.b32.cont [6/16] 0.0, 128
        %5656 = vxpose.xlu0.b32.cont [7/16] 0.0, 128
        %5657 = vxpose.xlu0.b32.cont [8/16] 0.0, 128
        %5658 = vxpose.xlu0.b32.cont [9/16] 0.0, 128
        %5659 = vxpose.xlu0.b32.cont [10/16] 0.0, 128
        %5660 = vxpose.xlu0.b32.cont [11/16] 0.0, 128
        %5661 = vxpose.xlu0.b32.cont [12/16] 0.0, 128
        %5662 = vxpose.xlu0.b32.cont [13/16] 0.0, 128
        %5663 = vxpose.xlu0.b32.cont [14/16] 0.0, 128
        %5664 = vxpose.xlu0.b32.cont [15/16] 0.0, 128
        %5665 = vxpose.xlu0.b32.end [16/16] 0.0, 128
        %v5666 = vpop.trf.xlu0
        %v5667 = vpop.trf.xlu0
        %v5668 = vpop.trf.xlu0
        %v5669 = vpop.trf.xlu0
        %v5670 = vpop.trf.xlu0
        %v5671 = vpop.trf.xlu0
        %v5672 = vpop.trf.xlu0
        %v5673 = vpop.trf.xlu0
        %v5674 = vpop.trf.xlu0
        %v5675 = vpop.trf.xlu0
        %v5676 = vpop.trf.xlu0
        %v5677 = vpop.trf.xlu0
        %v5678 = vpop.trf.xlu0
        %v5679 = vpop.trf.xlu0
        %v5680 = vpop.trf.xlu0
        %v5681 = vpop.trf.xlu0
        %5682 = vxpose.xlu0.b32.start [1/16] %v5111, 128
        %5683 = vxpose.xlu0.b32.cont [2/16] %v5247, 128
        %5684 = vxpose.xlu0.b32.cont [3/16] 0.0, 128
        %5685 = vxpose.xlu0.b32.cont [4/16] 0.0, 128
        %5686 = vxpose.xlu0.b32.cont [5/16] 0.0, 128
        %5687 = vxpose.xlu0.b32.cont [6/16] 0.0, 128
        %5688 = vxpose.xlu0.b32.cont [7/16] 0.0, 128
        %5689 = vxpose.xlu0.b32.cont [8/16] 0.0, 128
        %5690 = vxpose.xlu0.b32.cont [9/16] 0.0, 128
        %5691 = vxpose.xlu0.b32.cont [10/16] 0.0, 128
        %5692 = vxpose.xlu0.b32.cont [11/16] 0.0, 128
        %5693 = vxpose.xlu0.b32.cont [12/16] 0.0, 128
        %5694 = vxpose.xlu0.b32.cont [13/16] 0.0, 128
        %5695 = vxpose.xlu0.b32.cont [14/16] 0.0, 128
        %5696 = vxpose.xlu0.b32.cont [15/16] 0.0, 128
        %5697 = vxpose.xlu0.b32.end [16/16] 0.0, 128
        %v5698 = vpop.trf.xlu0
        %v5699 = vpop.trf.xlu0
        %v5700 = vpop.trf.xlu0
        %v5701 = vpop.trf.xlu0
        %v5702 = vpop.trf.xlu0
        %v5703 = vpop.trf.xlu0
        %v5704 = vpop.trf.xlu0
        %v5705 = vpop.trf.xlu0
        %v5706 = vpop.trf.xlu0
        %v5707 = vpop.trf.xlu0
        %v5708 = vpop.trf.xlu0
        %v5709 = vpop.trf.xlu0
        %v5710 = vpop.trf.xlu0
        %v5711 = vpop.trf.xlu0
        %v5712 = vpop.trf.xlu0
        %v5713 = vpop.trf.xlu0
        %5714 = vxpose.xlu0.b32.start [1/16] %v5112, 128
        %5715 = vxpose.xlu0.b32.cont [2/16] %v5248, 128
        %5716 = vxpose.xlu0.b32.cont [3/16] 0.0, 128
        %5717 = vxpose.xlu0.b32.cont [4/16] 0.0, 128
        %5718 = vxpose.xlu0.b32.cont [5/16] 0.0, 128
        %5719 = vxpose.xlu0.b32.cont [6/16] 0.0, 128
        %5720 = vxpose.xlu0.b32.cont [7/16] 0.0, 128
        %5721 = vxpose.xlu0.b32.cont [8/16] 0.0, 128
        %5722 = vxpose.xlu0.b32.cont [9/16] 0.0, 128
        %5723 = vxpose.xlu0.b32.cont [10/16] 0.0, 128
        %5724 = vxpose.xlu0.b32.cont [11/16] 0.0, 128
        %5725 = vxpose.xlu0.b32.cont [12/16] 0.0, 128
        %5726 = vxpose.xlu0.b32.cont [13/16] 0.0, 128
        %5727 = vxpose.xlu0.b32.cont [14/16] 0.0, 128
        %5728 = vxpose.xlu0.b32.cont [15/16] 0.0, 128
        %5729 = vxpose.xlu0.b32.end [16/16] 0.0, 128
        %v5730 = vpop.trf.xlu0
        %v5731 = vpop.trf.xlu0
        %v5732 = vpop.trf.xlu0
        %v5733 = vpop.trf.xlu0
        %v5734 = vpop.trf.xlu0
        %v5735 = vpop.trf.xlu0
        %v5736 = vpop.trf.xlu0
        %v5737 = vpop.trf.xlu0
        %v5738 = vpop.trf.xlu0
        %v5739 = vpop.trf.xlu0
        %v5740 = vpop.trf.xlu0
        %v5741 = vpop.trf.xlu0
        %v5742 = vpop.trf.xlu0
        %v5743 = vpop.trf.xlu0
        %v5744 = vpop.trf.xlu0
        %v5745 = vpop.trf.xlu0
        %5746 = vxpose.xlu0.b32.start [1/16] %v5113, 128
        %5747 = vxpose.xlu0.b32.cont [2/16] %v5249, 128
        %5748 = vxpose.xlu0.b32.cont [3/16] 0.0, 128
        %5749 = vxpose.xlu0.b32.cont [4/16] 0.0, 128
        %5750 = vxpose.xlu0.b32.cont [5/16] 0.0, 128
        %5751 = vxpose.xlu0.b32.cont [6/16] 0.0, 128
        %5752 = vxpose.xlu0.b32.cont [7/16] 0.0, 128
        %5753 = vxpose.xlu0.b32.cont [8/16] 0.0, 128
        %5754 = vxpose.xlu0.b32.cont [9/16] 0.0, 128
        %5755 = vxpose.xlu0.b32.cont [10/16] 0.0, 128
        %5756 = vxpose.xlu0.b32.cont [11/16] 0.0, 128
        %5757 = vxpose.xlu0.b32.cont [12/16] 0.0, 128
        %5758 = vxpose.xlu0.b32.cont [13/16] 0.0, 128
        %5759 = vxpose.xlu0.b32.cont [14/16] 0.0, 128
        %5760 = vxpose.xlu0.b32.cont [15/16] 0.0, 128
        %5761 = vxpose.xlu0.b32.end [16/16] 0.0, 128
        %v5762 = vpop.trf.xlu0
        %v5763 = vpop.trf.xlu0
        %v5764 = vpop.trf.xlu0
        %v5765 = vpop.trf.xlu0
        %v5766 = vpop.trf.xlu0
        %v5767 = vpop.trf.xlu0
        %v5768 = vpop.trf.xlu0
        %v5769 = vpop.trf.xlu0
        %v5770 = vpop.trf.xlu0
        %v5771 = vpop.trf.xlu0
        %v5772 = vpop.trf.xlu0
        %v5773 = vpop.trf.xlu0
        %v5774 = vpop.trf.xlu0
        %v5775 = vpop.trf.xlu0
        %v5776 = vpop.trf.xlu0
        %v5777 = vpop.trf.xlu0
        %5778 = vxpose.xlu0.b32.start [1/16] %v5378, 128
        %5779 = vxpose.xlu0.b32.cont [2/16] %v5514, 128
        %5780 = vxpose.xlu0.b32.cont [3/16] 0.0, 128
        %5781 = vxpose.xlu0.b32.cont [4/16] 0.0, 128
        %5782 = vxpose.xlu0.b32.cont [5/16] 0.0, 128
        %5783 = vxpose.xlu0.b32.cont [6/16] 0.0, 128
        %5784 = vxpose.xlu0.b32.cont [7/16] 0.0, 128
        %5785 = vxpose.xlu0.b32.cont [8/16] 0.0, 128
        %5786 = vxpose.xlu0.b32.cont [9/16] 0.0, 128
        %5787 = vxpose.xlu0.b32.cont [10/16] 0.0, 128
        %5788 = vxpose.xlu0.b32.cont [11/16] 0.0, 128
        %5789 = vxpose.xlu0.b32.cont [12/16] 0.0, 128
        %5790 = vxpose.xlu0.b32.cont [13/16] 0.0, 128
        %5791 = vxpose.xlu0.b32.cont [14/16] 0.0, 128
        %5792 = vxpose.xlu0.b32.cont [15/16] 0.0, 128
        %5793 = vxpose.xlu0.b32.end [16/16] 0.0, 128
        %v5794 = vpop.trf.xlu0
        %v5795 = vpop.trf.xlu0
        %v5796 = vpop.trf.xlu0
        %v5797 = vpop.trf.xlu0
        %v5798 = vpop.trf.xlu0
        %v5799 = vpop.trf.xlu0
        %v5800 = vpop.trf.xlu0
        %v5801 = vpop.trf.xlu0
        %v5802 = vpop.trf.xlu0
        %v5803 = vpop.trf.xlu0
        %v5804 = vpop.trf.xlu0
        %v5805 = vpop.trf.xlu0
        %v5806 = vpop.trf.xlu0
        %v5807 = vpop.trf.xlu0
        %v5808 = vpop.trf.xlu0
        %v5809 = vpop.trf.xlu0
        %5810 = vxpose.xlu0.b32.start [1/16] %v5379, 128
        %5811 = vxpose.xlu0.b32.cont [2/16] %v5515, 128
        %5812 = vxpose.xlu0.b32.cont [3/16] 0.0, 128
        %5813 = vxpose.xlu0.b32.cont [4/16] 0.0, 128
        %5814 = vxpose.xlu0.b32.cont [5/16] 0.0, 128
        %5815 = vxpose.xlu0.b32.cont [6/16] 0.0, 128
        %5816 = vxpose.xlu0.b32.cont [7/16] 0.0, 128
        %5817 = vxpose.xlu0.b32.cont [8/16] 0.0, 128
        %5818 = vxpose.xlu0.b32.cont [9/16] 0.0, 128
        %5819 = vxpose.xlu0.b32.cont [10/16] 0.0, 128
        %5820 = vxpose.xlu0.b32.cont [11/16] 0.0, 128
        %5821 = vxpose.xlu0.b32.cont [12/16] 0.0, 128
        %5822 = vxpose.xlu0.b32.cont [13/16] 0.0, 128
        %5823 = vxpose.xlu0.b32.cont [14/16] 0.0, 128
        %5824 = vxpose.xlu0.b32.cont [15/16] 0.0, 128
        %5825 = vxpose.xlu0.b32.end [16/16] 0.0, 128
        %v5826 = vpop.trf.xlu0
        %v5827 = vpop.trf.xlu0
        %v5828 = vpop.trf.xlu0
        %v5829 = vpop.trf.xlu0
        %v5830 = vpop.trf.xlu0
        %v5831 = vpop.trf.xlu0
        %v5832 = vpop.trf.xlu0
        %v5833 = vpop.trf.xlu0
        %v5834 = vpop.trf.xlu0
        %v5835 = vpop.trf.xlu0
        %v5836 = vpop.trf.xlu0
        %v5837 = vpop.trf.xlu0
        %v5838 = vpop.trf.xlu0
        %v5839 = vpop.trf.xlu0
        %v5840 = vpop.trf.xlu0
        %v5841 = vpop.trf.xlu0
        %5842 = vxpose.xlu0.b32.start [1/16] %v5380, 128
        %5843 = vxpose.xlu0.b32.cont [2/16] %v5516, 128
        %5844 = vxpose.xlu0.b32.cont [3/16] 0.0, 128
        %5845 = vxpose.xlu0.b32.cont [4/16] 0.0, 128
        %5846 = vxpose.xlu0.b32.cont [5/16] 0.0, 128
        %5847 = vxpose.xlu0.b32.cont [6/16] 0.0, 128
        %5848 = vxpose.xlu0.b32.cont [7/16] 0.0, 128
        %5849 = vxpose.xlu0.b32.cont [8/16] 0.0, 128
        %5850 = vxpose.xlu0.b32.cont [9/16] 0.0, 128
        %5851 = vxpose.xlu0.b32.cont [10/16] 0.0, 128
        %5852 = vxpose.xlu0.b32.cont [11/16] 0.0, 128
        %5853 = vxpose.xlu0.b32.cont [12/16] 0.0, 128
        %5854 = vxpose.xlu0.b32.cont [13/16] 0.0, 128
        %5855 = vxpose.xlu0.b32.cont [14/16] 0.0, 128
        %5856 = vxpose.xlu0.b32.cont [15/16] 0.0, 128
        %5857 = vxpose.xlu0.b32.end [16/16] 0.0, 128
        %v5858 = vpop.trf.xlu0
        %v5859 = vpop.trf.xlu0
        %v5860 = vpop.trf.xlu0
        %v5861 = vpop.trf.xlu0
        %v5862 = vpop.trf.xlu0
        %v5863 = vpop.trf.xlu0
        %v5864 = vpop.trf.xlu0
        %v5865 = vpop.trf.xlu0
        %v5866 = vpop.trf.xlu0
        %v5867 = vpop.trf.xlu0
        %v5868 = vpop.trf.xlu0
        %v5869 = vpop.trf.xlu0
        %v5870 = vpop.trf.xlu0
        %v5871 = vpop.trf.xlu0
        %v5872 = vpop.trf.xlu0
        %v5873 = vpop.trf.xlu0
        %5874 = vxpose.xlu0.b32.start [1/16] %v5381, 128
        %5875 = vxpose.xlu0.b32.cont [2/16] %v5517, 128
        %5876 = vxpose.xlu0.b32.cont [3/16] 0.0, 128
        %5877 = vxpose.xlu0.b32.cont [4/16] 0.0, 128
        %5878 = vxpose.xlu0.b32.cont [5/16] 0.0, 128
        %5879 = vxpose.xlu0.b32.cont [6/16] 0.0, 128
        %5880 = vxpose.xlu0.b32.cont [7/16] 0.0, 128
        %5881 = vxpose.xlu0.b32.cont [8/16] 0.0, 128
        %5882 = vxpose.xlu0.b32.cont [9/16] 0.0, 128
        %5883 = vxpose.xlu0.b32.cont [10/16] 0.0, 128
        %5884 = vxpose.xlu0.b32.cont [11/16] 0.0, 128
        %5885 = vxpose.xlu0.b32.cont [12/16] 0.0, 128
        %5886 = vxpose.xlu0.b32.cont [13/16] 0.0, 128
        %5887 = vxpose.xlu0.b32.cont [14/16] 0.0, 128
        %5888 = vxpose.xlu0.b32.cont [15/16] 0.0, 128
        %5889 = vxpose.xlu0.b32.end [16/16] 0.0, 128
        %v5890 = vpop.trf.xlu0
        %v5891 = vpop.trf.xlu0
        %v5892 = vpop.trf.xlu0
        %v5893 = vpop.trf.xlu0
        %v5894 = vpop.trf.xlu0
        %v5895 = vpop.trf.xlu0
        %v5896 = vpop.trf.xlu0
        %v5897 = vpop.trf.xlu0
        %v5898 = vpop.trf.xlu0
        %v5899 = vpop.trf.xlu0
        %v5900 = vpop.trf.xlu0
        %v5901 = vpop.trf.xlu0
        %v5902 = vpop.trf.xlu0
        %v5903 = vpop.trf.xlu0
        %v5904 = vpop.trf.xlu0
        %v5905 = vpop.trf.xlu0
        %5906 = vxpose.xlu0.b32.start [1/16] %v5382, 128
        %5907 = vxpose.xlu0.b32.cont [2/16] %v5518, 128
        %5908 = vxpose.xlu0.b32.cont [3/16] 0.0, 128
        %5909 = vxpose.xlu0.b32.cont [4/16] 0.0, 128
        %5910 = vxpose.xlu0.b32.cont [5/16] 0.0, 128
        %5911 = vxpose.xlu0.b32.cont [6/16] 0.0, 128
        %5912 = vxpose.xlu0.b32.cont [7/16] 0.0, 128
        %5913 = vxpose.xlu0.b32.cont [8/16] 0.0, 128
        %5914 = vxpose.xlu0.b32.cont [9/16] 0.0, 128
        %5915 = vxpose.xlu0.b32.cont [10/16] 0.0, 128
        %5916 = vxpose.xlu0.b32.cont [11/16] 0.0, 128
        %5917 = vxpose.xlu0.b32.cont [12/16] 0.0, 128
        %5918 = vxpose.xlu0.b32.cont [13/16] 0.0, 128
        %5919 = vxpose.xlu0.b32.cont [14/16] 0.0, 128
        %5920 = vxpose.xlu0.b32.cont [15/16] 0.0, 128
        %5921 = vxpose.xlu0.b32.end [16/16] 0.0, 128
        %v5922 = vpop.trf.xlu0
        %v5923 = vpop.trf.xlu0
        %v5924 = vpop.trf.xlu0
        %v5925 = vpop.trf.xlu0
        %v5926 = vpop.trf.xlu0
        %v5927 = vpop.trf.xlu0
        %v5928 = vpop.trf.xlu0
        %v5929 = vpop.trf.xlu0
        %v5930 = vpop.trf.xlu0
        %v5931 = vpop.trf.xlu0
        %v5932 = vpop.trf.xlu0
        %v5933 = vpop.trf.xlu0
        %v5934 = vpop.trf.xlu0
        %v5935 = vpop.trf.xlu0
        %v5936 = vpop.trf.xlu0
        %v5937 = vpop.trf.xlu0
        %5938 = vxpose.xlu0.b32.start [1/16] %v5383, 128
        %5939 = vxpose.xlu0.b32.cont [2/16] %v5519, 128
        %5940 = vxpose.xlu0.b32.cont [3/16] 0.0, 128
        %5941 = vxpose.xlu0.b32.cont [4/16] 0.0, 128
        %5942 = vxpose.xlu0.b32.cont [5/16] 0.0, 128
        %5943 = vxpose.xlu0.b32.cont [6/16] 0.0, 128
        %5944 = vxpose.xlu0.b32.cont [7/16] 0.0, 128
        %5945 = vxpose.xlu0.b32.cont [8/16] 0.0, 128
        %5946 = vxpose.xlu0.b32.cont [9/16] 0.0, 128
        %5947 = vxpose.xlu0.b32.cont [10/16] 0.0, 128
        %5948 = vxpose.xlu0.b32.cont [11/16] 0.0, 128
        %5949 = vxpose.xlu0.b32.cont [12/16] 0.0, 128
        %5950 = vxpose.xlu0.b32.cont [13/16] 0.0, 128
        %5951 = vxpose.xlu0.b32.cont [14/16] 0.0, 128
        %5952 = vxpose.xlu0.b32.cont [15/16] 0.0, 128
        %5953 = vxpose.xlu0.b32.end [16/16] 0.0, 128
        %v5954 = vpop.trf.xlu0
        %v5955 = vpop.trf.xlu0
        %v5956 = vpop.trf.xlu0
        %v5957 = vpop.trf.xlu0
        %v5958 = vpop.trf.xlu0
        %v5959 = vpop.trf.xlu0
        %v5960 = vpop.trf.xlu0
        %v5961 = vpop.trf.xlu0
        %v5962 = vpop.trf.xlu0
        %v5963 = vpop.trf.xlu0
        %v5964 = vpop.trf.xlu0
        %v5965 = vpop.trf.xlu0
        %v5966 = vpop.trf.xlu0
        %v5967 = vpop.trf.xlu0
        %v5968 = vpop.trf.xlu0
        %v5969 = vpop.trf.xlu0
        %5970 = vxpose.xlu0.b32.start [1/16] %v5384, 128
        %5971 = vxpose.xlu0.b32.cont [2/16] %v5520, 128
        %5972 = vxpose.xlu0.b32.cont [3/16] 0.0, 128
        %5973 = vxpose.xlu0.b32.cont [4/16] 0.0, 128
        %5974 = vxpose.xlu0.b32.cont [5/16] 0.0, 128
        %5975 = vxpose.xlu0.b32.cont [6/16] 0.0, 128
        %5976 = vxpose.xlu0.b32.cont [7/16] 0.0, 128
        %5977 = vxpose.xlu0.b32.cont [8/16] 0.0, 128
        %5978 = vxpose.xlu0.b32.cont [9/16] 0.0, 128
        %5979 = vxpose.xlu0.b32.cont [10/16] 0.0, 128
        %5980 = vxpose.xlu0.b32.cont [11/16] 0.0, 128
        %5981 = vxpose.xlu0.b32.cont [12/16] 0.0, 128
        %5982 = vxpose.xlu0.b32.cont [13/16] 0.0, 128
        %5983 = vxpose.xlu0.b32.cont [14/16] 0.0, 128
        %5984 = vxpose.xlu0.b32.cont [15/16] 0.0, 128
        %5985 = vxpose.xlu0.b32.end [16/16] 0.0, 128
        %v5986 = vpop.trf.xlu0
        %v5987 = vpop.trf.xlu0
        %v5988 = vpop.trf.xlu0
        %v5989 = vpop.trf.xlu0
        %v5990 = vpop.trf.xlu0
        %v5991 = vpop.trf.xlu0
        %v5992 = vpop.trf.xlu0
        %v5993 = vpop.trf.xlu0
        %v5994 = vpop.trf.xlu0
        %v5995 = vpop.trf.xlu0
        %v5996 = vpop.trf.xlu0
        %v5997 = vpop.trf.xlu0
        %v5998 = vpop.trf.xlu0
        %v5999 = vpop.trf.xlu0
        %v6000 = vpop.trf.xlu0
        %v6001 = vpop.trf.xlu0
        %6002 = vxpose.xlu0.b32.start [1/16] %v5385, 128
        %6003 = vxpose.xlu0.b32.cont [2/16] %v5521, 128
        %6004 = vxpose.xlu0.b32.cont [3/16] 0.0, 128
        %6005 = vxpose.xlu0.b32.cont [4/16] 0.0, 128
        %6006 = vxpose.xlu0.b32.cont [5/16] 0.0, 128
        %6007 = vxpose.xlu0.b32.cont [6/16] 0.0, 128
        %6008 = vxpose.xlu0.b32.cont [7/16] 0.0, 128
        %6009 = vxpose.xlu0.b32.cont [8/16] 0.0, 128
        %6010 = vxpose.xlu0.b32.cont [9/16] 0.0, 128
        %6011 = vxpose.xlu0.b32.cont [10/16] 0.0, 128
        %6012 = vxpose.xlu0.b32.cont [11/16] 0.0, 128
        %6013 = vxpose.xlu0.b32.cont [12/16] 0.0, 128
        %6014 = vxpose.xlu0.b32.cont [13/16] 0.0, 128
        %6015 = vxpose.xlu0.b32.cont [14/16] 0.0, 128
        %6016 = vxpose.xlu0.b32.cont [15/16] 0.0, 128
        %6017 = vxpose.xlu0.b32.end [16/16] 0.0, 128
        %v6018 = vpop.trf.xlu0
        %v6019 = vpop.trf.xlu0
        %v6020 = vpop.trf.xlu0
        %v6021 = vpop.trf.xlu0
        %v6022 = vpop.trf.xlu0
        %v6023 = vpop.trf.xlu0
        %v6024 = vpop.trf.xlu0
        %v6025 = vpop.trf.xlu0
        %v6026 = vpop.trf.xlu0
        %v6027 = vpop.trf.xlu0
        %v6028 = vpop.trf.xlu0
        %v6029 = vpop.trf.xlu0
        %v6030 = vpop.trf.xlu0
        %v6031 = vpop.trf.xlu0
        %v6032 = vpop.trf.xlu0
        %v6033 = vpop.trf.xlu0
        %v6034 = vcombine.low %v5538, %v5602
        %v6035 = vcombine.high %v5538, %v5602
        %v6037 = vunpack.c.l.s4 1983009808
        %v6038 = vunpack.c.0.s8 %v6037
        %v6039 = vlaneseq
        %v6040 = vshrl.u32 %v6039, 7
        %v6041 = vsub.s32 %v6038, %v6040
        %v6042 = vrot.slane %v6034, %v6041
        %v6044 = vunpack.c.l.s4 1983009808
        %v6045 = vunpack.c.0.s8 %v6044
        %v6046 = vlaneseq
        %v6047 = vshrl.u32 %v6046, 7
        %v6048 = vsub.s32 %v6045, %v6047
        %v6049 = vrot.slane %v6035, %v6048
        %v6050 = vcombine.low %v5570, %v5634
        %v6051 = vcombine.high %v5570, %v5634
        %v6053 = vunpack.c.l.s4 1983009808
        %v6054 = vunpack.c.0.s8 %v6053
        %v6055 = vlaneseq
        %v6056 = vshrl.u32 %v6055, 7
        %v6057 = vsub.s32 %v6054, %v6056
        %v6058 = vrot.slane %v6050, %v6057
        %v6060 = vunpack.c.l.s4 1983009808
        %v6061 = vunpack.c.0.s8 %v6060
        %v6062 = vlaneseq
        %v6063 = vshrl.u32 %v6062, 7
        %v6064 = vsub.s32 %v6061, %v6063
        %v6065 = vrot.slane %v6051, %v6064
        %v6066 = vcombine.low %v5666, %v5730
        %v6067 = vcombine.high %v5666, %v5730
        %v6069 = vunpack.c.l.s4 1983009808
        %v6070 = vunpack.c.0.s8 %v6069
        %v6071 = vlaneseq
        %v6072 = vshrl.u32 %v6071, 7
        %v6073 = vsub.s32 %v6070, %v6072
        %v6074 = vrot.slane %v6066, %v6073
        %v6076 = vunpack.c.l.s4 1983009808
        %v6077 = vunpack.c.0.s8 %v6076
        %v6078 = vlaneseq
        %v6079 = vshrl.u32 %v6078, 7
        %v6080 = vsub.s32 %v6077, %v6079
        %v6081 = vrot.slane %v6067, %v6080
        %v6082 = vcombine.low %v5698, %v5762
        %v6083 = vcombine.high %v5698, %v5762
        %v6085 = vunpack.c.l.s4 1983009808
        %v6086 = vunpack.c.0.s8 %v6085
        %v6087 = vlaneseq
        %v6088 = vshrl.u32 %v6087, 7
        %v6089 = vsub.s32 %v6086, %v6088
        %v6090 = vrot.slane %v6082, %v6089
        %v6092 = vunpack.c.l.s4 1983009808
        %v6093 = vunpack.c.0.s8 %v6092
        %v6094 = vlaneseq
        %v6095 = vshrl.u32 %v6094, 7
        %v6096 = vsub.s32 %v6093, %v6095
        %v6097 = vrot.slane %v6083, %v6096
        %v6098 = vcombine.low %v6042, %v6058
        %v6099 = vcombine.high %v6042, %v6058
        %v6101 = vunpack.c.l.s4 1934713408
        %v6102 = vunpack.c.0.s8 %v6101
        %v6103 = vlaneseq
        %v6104 = vshrl.u32 %v6103, 7
        %v6105 = vsub.s32 %v6102, %v6104
        %v6106 = vrot.slane %v6098, %v6105
        %v6108 = vunpack.c.l.s4 1934713408
        %v6109 = vunpack.c.0.s8 %v6108
        %v6110 = vlaneseq
        %v6111 = vshrl.u32 %v6110, 7
        %v6112 = vsub.s32 %v6109, %v6111
        %v6113 = vrot.slane %v6099, %v6112
        %v6114 = vcombine.low %v6049, %v6065
        %v6115 = vcombine.high %v6049, %v6065
        %v6117 = vunpack.c.l.s4 1934713408
        %v6118 = vunpack.c.0.s8 %v6117
        %v6119 = vlaneseq
        %v6120 = vshrl.u32 %v6119, 7
        %v6121 = vsub.s32 %v6118, %v6120
        %v6122 = vrot.slane %v6114, %v6121
        %v6124 = vunpack.c.l.s4 1934713408
        %v6125 = vunpack.c.0.s8 %v6124
        %v6126 = vlaneseq
        %v6127 = vshrl.u32 %v6126, 7
        %v6128 = vsub.s32 %v6125, %v6127
        %v6129 = vrot.slane %v6115, %v6128
        %v6130 = vcombine.low %v6074, %v6090
        %v6131 = vcombine.high %v6074, %v6090
        %v6133 = vunpack.c.l.s4 1934713408
        %v6134 = vunpack.c.0.s8 %v6133
        %v6135 = vlaneseq
        %v6136 = vshrl.u32 %v6135, 7
        %v6137 = vsub.s32 %v6134, %v6136
        %v6138 = vrot.slane %v6130, %v6137
        %v6140 = vunpack.c.l.s4 1934713408
        %v6141 = vunpack.c.0.s8 %v6140
        %v6142 = vlaneseq
        %v6143 = vshrl.u32 %v6142, 7
        %v6144 = vsub.s32 %v6141, %v6143
        %v6145 = vrot.slane %v6131, %v6144
        %v6146 = vcombine.low %v6081, %v6097
        %v6147 = vcombine.high %v6081, %v6097
        %v6149 = vunpack.c.l.s4 1934713408
        %v6150 = vunpack.c.0.s8 %v6149
        %v6151 = vlaneseq
        %v6152 = vshrl.u32 %v6151, 7
        %v6153 = vsub.s32 %v6150, %v6152
        %v6154 = vrot.slane %v6146, %v6153
        %v6156 = vunpack.c.l.s4 1934713408
        %v6157 = vunpack.c.0.s8 %v6156
        %v6158 = vlaneseq
        %v6159 = vshrl.u32 %v6158, 7
        %v6160 = vsub.s32 %v6157, %v6159
        %v6161 = vrot.slane %v6147, %v6160
        %v6162 = vcombine.low %v6106, %v6138
        %v6163 = vcombine.high %v6106, %v6138
        %v6164 = vcombine.low %v6113, %v6145
        %v6165 = vcombine.high %v6113, %v6145
        %v6166 = vcombine.low %v6122, %v6154
        %v6167 = vcombine.high %v6122, %v6154
        %v6168 = vcombine.low %v6129, %v6161
        %v6169 = vcombine.high %v6129, %v6161
        %v6170 = vcombine.low %v5794, %v5858
        %v6171 = vcombine.high %v5794, %v5858
        %v6173 = vunpack.c.l.s4 1983009808
        %v6174 = vunpack.c.0.s8 %v6173
        %v6175 = vlaneseq
        %v6176 = vshrl.u32 %v6175, 7
        %v6177 = vsub.s32 %v6174, %v6176
        %v6178 = vrot.slane %v6170, %v6177
        %v6180 = vunpack.c.l.s4 1983009808
        %v6181 = vunpack.c.0.s8 %v6180
        %v6182 = vlaneseq
        %v6183 = vshrl.u32 %v6182, 7
        %v6184 = vsub.s32 %v6181, %v6183
        %v6185 = vrot.slane %v6171, %v6184
        %v6186 = vcombine.low %v5826, %v5890
        %v6187 = vcombine.high %v5826, %v5890
        %v6189 = vunpack.c.l.s4 1983009808
        %v6190 = vunpack.c.0.s8 %v6189
        %v6191 = vlaneseq
        %v6192 = vshrl.u32 %v6191, 7
        %v6193 = vsub.s32 %v6190, %v6192
        %v6194 = vrot.slane %v6186, %v6193
        %v6196 = vunpack.c.l.s4 1983009808
        %v6197 = vunpack.c.0.s8 %v6196
        %v6198 = vlaneseq
        %v6199 = vshrl.u32 %v6198, 7
        %v6200 = vsub.s32 %v6197, %v6199
        %v6201 = vrot.slane %v6187, %v6200
        %v6202 = vcombine.low %v5922, %v5986
        %v6203 = vcombine.high %v5922, %v5986
        %v6205 = vunpack.c.l.s4 1983009808
        %v6206 = vunpack.c.0.s8 %v6205
        %v6207 = vlaneseq
        %v6208 = vshrl.u32 %v6207, 7
        %v6209 = vsub.s32 %v6206, %v6208
        %v6210 = vrot.slane %v6202, %v6209
        %v6212 = vunpack.c.l.s4 1983009808
        %v6213 = vunpack.c.0.s8 %v6212
        %v6214 = vlaneseq
        %v6215 = vshrl.u32 %v6214, 7
        %v6216 = vsub.s32 %v6213, %v6215
        %v6217 = vrot.slane %v6203, %v6216
        %v6218 = vcombine.low %v5954, %v6018
        %v6219 = vcombine.high %v5954, %v6018
        %v6221 = vunpack.c.l.s4 1983009808
        %v6222 = vunpack.c.0.s8 %v6221
        %v6223 = vlaneseq
        %v6224 = vshrl.u32 %v6223, 7
        %v6225 = vsub.s32 %v6222, %v6224
        %v6226 = vrot.slane %v6218, %v6225
        %v6228 = vunpack.c.l.s4 1983009808
        %v6229 = vunpack.c.0.s8 %v6228
        %v6230 = vlaneseq
        %v6231 = vshrl.u32 %v6230, 7
        %v6232 = vsub.s32 %v6229, %v6231
        %v6233 = vrot.slane %v6219, %v6232
        %v6234 = vcombine.low %v6178, %v6194
        %v6235 = vcombine.high %v6178, %v6194
        %v6237 = vunpack.c.l.s4 1934713408
        %v6238 = vunpack.c.0.s8 %v6237
        %v6239 = vlaneseq
        %v6240 = vshrl.u32 %v6239, 7
        %v6241 = vsub.s32 %v6238, %v6240
        %v6242 = vrot.slane %v6234, %v6241
        %v6244 = vunpack.c.l.s4 1934713408
        %v6245 = vunpack.c.0.s8 %v6244
        %v6246 = vlaneseq
        %v6247 = vshrl.u32 %v6246, 7
        %v6248 = vsub.s32 %v6245, %v6247
        %v6249 = vrot.slane %v6235, %v6248
        %v6250 = vcombine.low %v6185, %v6201
        %v6251 = vcombine.high %v6185, %v6201
        %v6253 = vunpack.c.l.s4 1934713408
        %v6254 = vunpack.c.0.s8 %v6253
        %v6255 = vlaneseq
        %v6256 = vshrl.u32 %v6255, 7
        %v6257 = vsub.s32 %v6254, %v6256
        %v6258 = vrot.slane %v6250, %v6257
        %v6260 = vunpack.c.l.s4 1934713408
        %v6261 = vunpack.c.0.s8 %v6260
        %v6262 = vlaneseq
        %v6263 = vshrl.u32 %v6262, 7
        %v6264 = vsub.s32 %v6261, %v6263
        %v6265 = vrot.slane %v6251, %v6264
        %v6266 = vcombine.low %v6210, %v6226
        %v6267 = vcombine.high %v6210, %v6226
        %v6269 = vunpack.c.l.s4 1934713408
        %v6270 = vunpack.c.0.s8 %v6269
        %v6271 = vlaneseq
        %v6272 = vshrl.u32 %v6271, 7
        %v6273 = vsub.s32 %v6270, %v6272
        %v6274 = vrot.slane %v6266, %v6273
        %v6276 = vunpack.c.l.s4 1934713408
        %v6277 = vunpack.c.0.s8 %v6276
        %v6278 = vlaneseq
        %v6279 = vshrl.u32 %v6278, 7
        %v6280 = vsub.s32 %v6277, %v6279
        %v6281 = vrot.slane %v6267, %v6280
        %v6282 = vcombine.low %v6217, %v6233
        %v6283 = vcombine.high %v6217, %v6233
        %v6285 = vunpack.c.l.s4 1934713408
        %v6286 = vunpack.c.0.s8 %v6285
        %v6287 = vlaneseq
        %v6288 = vshrl.u32 %v6287, 7
        %v6289 = vsub.s32 %v6286, %v6288
        %v6290 = vrot.slane %v6282, %v6289
        %v6292 = vunpack.c.l.s4 1934713408
        %v6293 = vunpack.c.0.s8 %v6292
        %v6294 = vlaneseq
        %v6295 = vshrl.u32 %v6294, 7
        %v6296 = vsub.s32 %v6293, %v6295
        %v6297 = vrot.slane %v6283, %v6296
        %v6298 = vcombine.low %v6242, %v6274
        %v6299 = vcombine.high %v6242, %v6274
        %v6300 = vcombine.low %v6249, %v6281
        %v6301 = vcombine.high %v6249, %v6281
        %v6302 = vcombine.low %v6258, %v6290
        %v6303 = vcombine.high %v6258, %v6290
        %v6304 = vcombine.low %v6265, %v6297
        %v6305 = vcombine.high %v6265, %v6297
        %v6306 = vcombine.low %v5539, %v5603
        %v6307 = vcombine.high %v5539, %v5603
        %v6309 = vunpack.c.l.s4 1983009808
        %v6310 = vunpack.c.0.s8 %v6309
        %v6311 = vlaneseq
        %v6312 = vshrl.u32 %v6311, 7
        %v6313 = vsub.s32 %v6310, %v6312
        %v6314 = vrot.slane %v6306, %v6313
        %v6316 = vunpack.c.l.s4 1983009808
        %v6317 = vunpack.c.0.s8 %v6316
        %v6318 = vlaneseq
        %v6319 = vshrl.u32 %v6318, 7
        %v6320 = vsub.s32 %v6317, %v6319
        %v6321 = vrot.slane %v6307, %v6320
        %v6322 = vcombine.low %v5571, %v5635
        %v6323 = vcombine.high %v5571, %v5635
        %v6325 = vunpack.c.l.s4 1983009808
        %v6326 = vunpack.c.0.s8 %v6325
        %v6327 = vlaneseq
        %v6328 = vshrl.u32 %v6327, 7
        %v6329 = vsub.s32 %v6326, %v6328
        %v6330 = vrot.slane %v6322, %v6329
        %v6332 = vunpack.c.l.s4 1983009808
        %v6333 = vunpack.c.0.s8 %v6332
        %v6334 = vlaneseq
        %v6335 = vshrl.u32 %v6334, 7
        %v6336 = vsub.s32 %v6333, %v6335
        %v6337 = vrot.slane %v6323, %v6336
        %v6338 = vcombine.low %v5667, %v5731
        %v6339 = vcombine.high %v5667, %v5731
        %v6341 = vunpack.c.l.s4 1983009808
        %v6342 = vunpack.c.0.s8 %v6341
        %v6343 = vlaneseq
        %v6344 = vshrl.u32 %v6343, 7
        %v6345 = vsub.s32 %v6342, %v6344
        %v6346 = vrot.slane %v6338, %v6345
        %v6348 = vunpack.c.l.s4 1983009808
        %v6349 = vunpack.c.0.s8 %v6348
        %v6350 = vlaneseq
        %v6351 = vshrl.u32 %v6350, 7
        %v6352 = vsub.s32 %v6349, %v6351
        %v6353 = vrot.slane %v6339, %v6352
        %v6354 = vcombine.low %v5699, %v5763
        %v6355 = vcombine.high %v5699, %v5763
        %v6357 = vunpack.c.l.s4 1983009808
        %v6358 = vunpack.c.0.s8 %v6357
        %v6359 = vlaneseq
        %v6360 = vshrl.u32 %v6359, 7
        %v6361 = vsub.s32 %v6358, %v6360
        %v6362 = vrot.slane %v6354, %v6361
        %v6364 = vunpack.c.l.s4 1983009808
        %v6365 = vunpack.c.0.s8 %v6364
        %v6366 = vlaneseq
        %v6367 = vshrl.u32 %v6366, 7
        %v6368 = vsub.s32 %v6365, %v6367
        %v6369 = vrot.slane %v6355, %v6368
        %v6370 = vcombine.low %v6314, %v6330
        %v6371 = vcombine.high %v6314, %v6330
        %v6373 = vunpack.c.l.s4 1934713408
        %v6374 = vunpack.c.0.s8 %v6373
        %v6375 = vlaneseq
        %v6376 = vshrl.u32 %v6375, 7
        %v6377 = vsub.s32 %v6374, %v6376
        %v6378 = vrot.slane %v6370, %v6377
        %v6380 = vunpack.c.l.s4 1934713408
        %v6381 = vunpack.c.0.s8 %v6380
        %v6382 = vlaneseq
        %v6383 = vshrl.u32 %v6382, 7
        %v6384 = vsub.s32 %v6381, %v6383
        %v6385 = vrot.slane %v6371, %v6384
        %v6386 = vcombine.low %v6321, %v6337
        %v6387 = vcombine.high %v6321, %v6337
        %v6389 = vunpack.c.l.s4 1934713408
        %v6390 = vunpack.c.0.s8 %v6389
        %v6391 = vlaneseq
        %v6392 = vshrl.u32 %v6391, 7
        %v6393 = vsub.s32 %v6390, %v6392
        %v6394 = vrot.slane %v6386, %v6393
        %v6396 = vunpack.c.l.s4 1934713408
        %v6397 = vunpack.c.0.s8 %v6396
        %v6398 = vlaneseq
        %v6399 = vshrl.u32 %v6398, 7
        %v6400 = vsub.s32 %v6397, %v6399
        %v6401 = vrot.slane %v6387, %v6400
        %v6402 = vcombine.low %v6346, %v6362
        %v6403 = vcombine.high %v6346, %v6362
        %v6405 = vunpack.c.l.s4 1934713408
        %v6406 = vunpack.c.0.s8 %v6405
        %v6407 = vlaneseq
        %v6408 = vshrl.u32 %v6407, 7
        %v6409 = vsub.s32 %v6406, %v6408
        %v6410 = vrot.slane %v6402, %v6409
        %v6412 = vunpack.c.l.s4 1934713408
        %v6413 = vunpack.c.0.s8 %v6412
        %v6414 = vlaneseq
        %v6415 = vshrl.u32 %v6414, 7
        %v6416 = vsub.s32 %v6413, %v6415
        %v6417 = vrot.slane %v6403, %v6416
        %v6418 = vcombine.low %v6353, %v6369
        %v6419 = vcombine.high %v6353, %v6369
        %v6421 = vunpack.c.l.s4 1934713408
        %v6422 = vunpack.c.0.s8 %v6421
        %v6423 = vlaneseq
        %v6424 = vshrl.u32 %v6423, 7
        %v6425 = vsub.s32 %v6422, %v6424
        %v6426 = vrot.slane %v6418, %v6425
        %v6428 = vunpack.c.l.s4 1934713408
        %v6429 = vunpack.c.0.s8 %v6428
        %v6430 = vlaneseq
        %v6431 = vshrl.u32 %v6430, 7
        %v6432 = vsub.s32 %v6429, %v6431
        %v6433 = vrot.slane %v6419, %v6432
        %v6434 = vcombine.low %v6378, %v6410
        %v6435 = vcombine.high %v6378, %v6410
        %v6436 = vcombine.low %v6385, %v6417
        %v6437 = vcombine.high %v6385, %v6417
        %v6438 = vcombine.low %v6394, %v6426
        %v6439 = vcombine.high %v6394, %v6426
        %v6440 = vcombine.low %v6401, %v6433
        %v6441 = vcombine.high %v6401, %v6433
        %v6442 = vcombine.low %v5795, %v5859
        %v6443 = vcombine.high %v5795, %v5859
        %v6445 = vunpack.c.l.s4 1983009808
        %v6446 = vunpack.c.0.s8 %v6445
        %v6447 = vlaneseq
        %v6448 = vshrl.u32 %v6447, 7
        %v6449 = vsub.s32 %v6446, %v6448
        %v6450 = vrot.slane %v6442, %v6449
        %v6452 = vunpack.c.l.s4 1983009808
        %v6453 = vunpack.c.0.s8 %v6452
        %v6454 = vlaneseq
        %v6455 = vshrl.u32 %v6454, 7
        %v6456 = vsub.s32 %v6453, %v6455
        %v6457 = vrot.slane %v6443, %v6456
        %v6458 = vcombine.low %v5827, %v5891
        %v6459 = vcombine.high %v5827, %v5891
        %v6461 = vunpack.c.l.s4 1983009808
        %v6462 = vunpack.c.0.s8 %v6461
        %v6463 = vlaneseq
        %v6464 = vshrl.u32 %v6463, 7
        %v6465 = vsub.s32 %v6462, %v6464
        %v6466 = vrot.slane %v6458, %v6465
        %v6468 = vunpack.c.l.s4 1983009808
        %v6469 = vunpack.c.0.s8 %v6468
        %v6470 = vlaneseq
        %v6471 = vshrl.u32 %v6470, 7
        %v6472 = vsub.s32 %v6469, %v6471
        %v6473 = vrot.slane %v6459, %v6472
        %v6474 = vcombine.low %v5923, %v5987
        %v6475 = vcombine.high %v5923, %v5987
        %v6477 = vunpack.c.l.s4 1983009808
        %v6478 = vunpack.c.0.s8 %v6477
        %v6479 = vlaneseq
        %v6480 = vshrl.u32 %v6479, 7
        %v6481 = vsub.s32 %v6478, %v6480
        %v6482 = vrot.slane %v6474, %v6481
        %v6484 = vunpack.c.l.s4 1983009808
        %v6485 = vunpack.c.0.s8 %v6484
        %v6486 = vlaneseq
        %v6487 = vshrl.u32 %v6486, 7
        %v6488 = vsub.s32 %v6485, %v6487
        %v6489 = vrot.slane %v6475, %v6488
        %v6490 = vcombine.low %v5955, %v6019
        %v6491 = vcombine.high %v5955, %v6019
        %v6493 = vunpack.c.l.s4 1983009808
        %v6494 = vunpack.c.0.s8 %v6493
        %v6495 = vlaneseq
        %v6496 = vshrl.u32 %v6495, 7
        %v6497 = vsub.s32 %v6494, %v6496
        %v6498 = vrot.slane %v6490, %v6497
        %v6500 = vunpack.c.l.s4 1983009808
        %v6501 = vunpack.c.0.s8 %v6500
        %v6502 = vlaneseq
        %v6503 = vshrl.u32 %v6502, 7
        %v6504 = vsub.s32 %v6501, %v6503
        %v6505 = vrot.slane %v6491, %v6504
        %v6506 = vcombine.low %v6450, %v6466
        %v6507 = vcombine.high %v6450, %v6466
        %v6509 = vunpack.c.l.s4 1934713408
        %v6510 = vunpack.c.0.s8 %v6509
        %v6511 = vlaneseq
        %v6512 = vshrl.u32 %v6511, 7
        %v6513 = vsub.s32 %v6510, %v6512
        %v6514 = vrot.slane %v6506, %v6513
        %v6516 = vunpack.c.l.s4 1934713408
        %v6517 = vunpack.c.0.s8 %v6516
        %v6518 = vlaneseq
        %v6519 = vshrl.u32 %v6518, 7
        %v6520 = vsub.s32 %v6517, %v6519
        %v6521 = vrot.slane %v6507, %v6520
        %v6522 = vcombine.low %v6457, %v6473
        %v6523 = vcombine.high %v6457, %v6473
        %v6525 = vunpack.c.l.s4 1934713408
        %v6526 = vunpack.c.0.s8 %v6525
        %v6527 = vlaneseq
        %v6528 = vshrl.u32 %v6527, 7
        %v6529 = vsub.s32 %v6526, %v6528
        %v6530 = vrot.slane %v6522, %v6529
        %v6532 = vunpack.c.l.s4 1934713408
        %v6533 = vunpack.c.0.s8 %v6532
        %v6534 = vlaneseq
        %v6535 = vshrl.u32 %v6534, 7
        %v6536 = vsub.s32 %v6533, %v6535
        %v6537 = vrot.slane %v6523, %v6536
        %v6538 = vcombine.low %v6482, %v6498
        %v6539 = vcombine.high %v6482, %v6498
        %v6541 = vunpack.c.l.s4 1934713408
        %v6542 = vunpack.c.0.s8 %v6541
        %v6543 = vlaneseq
        %v6544 = vshrl.u32 %v6543, 7
        %v6545 = vsub.s32 %v6542, %v6544
        %v6546 = vrot.slane %v6538, %v6545
        %v6548 = vunpack.c.l.s4 1934713408
        %v6549 = vunpack.c.0.s8 %v6548
        %v6550 = vlaneseq
        %v6551 = vshrl.u32 %v6550, 7
        %v6552 = vsub.s32 %v6549, %v6551
        %v6553 = vrot.slane %v6539, %v6552
        %v6554 = vcombine.low %v6489, %v6505
        %v6555 = vcombine.high %v6489, %v6505
        %v6557 = vunpack.c.l.s4 1934713408
        %v6558 = vunpack.c.0.s8 %v6557
        %v6559 = vlaneseq
        %v6560 = vshrl.u32 %v6559, 7
        %v6561 = vsub.s32 %v6558, %v6560
        %v6562 = vrot.slane %v6554, %v6561
        %v6564 = vunpack.c.l.s4 1934713408
        %v6565 = vunpack.c.0.s8 %v6564
        %v6566 = vlaneseq
        %v6567 = vshrl.u32 %v6566, 7
        %v6568 = vsub.s32 %v6565, %v6567
        %v6569 = vrot.slane %v6555, %v6568
        %v6570 = vcombine.low %v6514, %v6546
        %v6571 = vcombine.high %v6514, %v6546
        %v6572 = vcombine.low %v6521, %v6553
        %v6573 = vcombine.high %v6521, %v6553
        %v6574 = vcombine.low %v6530, %v6562
        %v6575 = vcombine.high %v6530, %v6562
        %v6576 = vcombine.low %v6537, %v6569
        %v6577 = vcombine.high %v6537, %v6569
        %v6578 = vcombine.low %v6162, %v6164
        %v6579 = vcombine.high %v6162, %v6164
        %v6581 = vunpack.c.l.s4 1983009808
        %v6582 = vunpack.c.0.s8 %v6581
        %v6583 = vlaneseq
        %v6584 = vshrl.u32 %v6583, 7
        %v6585 = vsub.s32 %v6582, %v6584
        %v6586 = vrot.slane %v6578, %v6585
        %v6588 = vunpack.c.l.s4 1983009808
        %v6589 = vunpack.c.0.s8 %v6588
        %v6590 = vlaneseq
        %v6591 = vshrl.u32 %v6590, 7
        %v6592 = vsub.s32 %v6589, %v6591
        %v6593 = vrot.slane %v6579, %v6592
        %v6594 = vcombine.low %v6163, %v6165
        %v6595 = vcombine.high %v6163, %v6165
        %v6597 = vunpack.c.l.s4 1983009808
        %v6598 = vunpack.c.0.s8 %v6597
        %v6599 = vlaneseq
        %v6600 = vshrl.u32 %v6599, 7
        %v6601 = vsub.s32 %v6598, %v6600
        %v6602 = vrot.slane %v6594, %v6601
        %v6604 = vunpack.c.l.s4 1983009808
        %v6605 = vunpack.c.0.s8 %v6604
        %v6606 = vlaneseq
        %v6607 = vshrl.u32 %v6606, 7
        %v6608 = vsub.s32 %v6605, %v6607
        %v6609 = vrot.slane %v6595, %v6608
        %v6610 = vcombine.low %v6166, %v6168
        %v6611 = vcombine.high %v6166, %v6168
        %v6613 = vunpack.c.l.s4 1983009808
        %v6614 = vunpack.c.0.s8 %v6613
        %v6615 = vlaneseq
        %v6616 = vshrl.u32 %v6615, 7
        %v6617 = vsub.s32 %v6614, %v6616
        %v6618 = vrot.slane %v6610, %v6617
        %v6620 = vunpack.c.l.s4 1983009808
        %v6621 = vunpack.c.0.s8 %v6620
        %v6622 = vlaneseq
        %v6623 = vshrl.u32 %v6622, 7
        %v6624 = vsub.s32 %v6621, %v6623
        %v6625 = vrot.slane %v6611, %v6624
        %v6626 = vcombine.low %v6167, %v6169
        %v6627 = vcombine.high %v6167, %v6169
        %v6629 = vunpack.c.l.s4 1983009808
        %v6630 = vunpack.c.0.s8 %v6629
        %v6631 = vlaneseq
        %v6632 = vshrl.u32 %v6631, 7
        %v6633 = vsub.s32 %v6630, %v6632
        %v6634 = vrot.slane %v6626, %v6633
        %v6636 = vunpack.c.l.s4 1983009808
        %v6637 = vunpack.c.0.s8 %v6636
        %v6638 = vlaneseq
        %v6639 = vshrl.u32 %v6638, 7
        %v6640 = vsub.s32 %v6637, %v6639
        %v6641 = vrot.slane %v6627, %v6640
        %v6642 = vcombine.low %v6586, %v6602
        %v6643 = vcombine.high %v6586, %v6602
        %v6645 = vunpack.c.l.s4 1934713408
        %v6646 = vunpack.c.0.s8 %v6645
        %v6647 = vlaneseq
        %v6648 = vshrl.u32 %v6647, 7
        %v6649 = vsub.s32 %v6646, %v6648
        %v6650 = vrot.slane %v6642, %v6649
        %v6652 = vunpack.c.l.s4 1934713408
        %v6653 = vunpack.c.0.s8 %v6652
        %v6654 = vlaneseq
        %v6655 = vshrl.u32 %v6654, 7
        %v6656 = vsub.s32 %v6653, %v6655
        %v6657 = vrot.slane %v6643, %v6656
        %v6658 = vcombine.low %v6593, %v6609
        %v6659 = vcombine.high %v6593, %v6609
        %v6661 = vunpack.c.l.s4 1934713408
        %v6662 = vunpack.c.0.s8 %v6661
        %v6663 = vlaneseq
        %v6664 = vshrl.u32 %v6663, 7
        %v6665 = vsub.s32 %v6662, %v6664
        %v6666 = vrot.slane %v6658, %v6665
        %v6668 = vunpack.c.l.s4 1934713408
        %v6669 = vunpack.c.0.s8 %v6668
        %v6670 = vlaneseq
        %v6671 = vshrl.u32 %v6670, 7
        %v6672 = vsub.s32 %v6669, %v6671
        %v6673 = vrot.slane %v6659, %v6672
        %v6674 = vcombine.low %v6618, %v6634
        %v6675 = vcombine.high %v6618, %v6634
        %v6677 = vunpack.c.l.s4 1934713408
        %v6678 = vunpack.c.0.s8 %v6677
        %v6679 = vlaneseq
        %v6680 = vshrl.u32 %v6679, 7
        %v6681 = vsub.s32 %v6678, %v6680
        %v6682 = vrot.slane %v6674, %v6681
        %v6684 = vunpack.c.l.s4 1934713408
        %v6685 = vunpack.c.0.s8 %v6684
        %v6686 = vlaneseq
        %v6687 = vshrl.u32 %v6686, 7
        %v6688 = vsub.s32 %v6685, %v6687
        %v6689 = vrot.slane %v6675, %v6688
        %v6690 = vcombine.low %v6625, %v6641
        %v6691 = vcombine.high %v6625, %v6641
        %v6693 = vunpack.c.l.s4 1934713408
        %v6694 = vunpack.c.0.s8 %v6693
        %v6695 = vlaneseq
        %v6696 = vshrl.u32 %v6695, 7
        %v6697 = vsub.s32 %v6694, %v6696
        %v6698 = vrot.slane %v6690, %v6697
        %v6700 = vunpack.c.l.s4 1934713408
        %v6701 = vunpack.c.0.s8 %v6700
        %v6702 = vlaneseq
        %v6703 = vshrl.u32 %v6702, 7
        %v6704 = vsub.s32 %v6701, %v6703
        %v6705 = vrot.slane %v6691, %v6704
        %v6706 = vcombine.low %v6650, %v6682
        %v6707 = vcombine.high %v6650, %v6682
        %v6708 = vcombine.low %v6657, %v6689
        %v6709 = vcombine.high %v6657, %v6689
        %v6710 = vcombine.low %v6666, %v6698
        %v6711 = vcombine.high %v6666, %v6698
        %v6712 = vcombine.low %v6673, %v6705
        %v6713 = vcombine.high %v6673, %v6705
        %v6714 = vcombine.low %v6434, %v6436
        %v6715 = vcombine.high %v6434, %v6436
        %v6717 = vunpack.c.l.s4 1983009808
        %v6718 = vunpack.c.0.s8 %v6717
        %v6719 = vlaneseq
        %v6720 = vshrl.u32 %v6719, 7
        %v6721 = vsub.s32 %v6718, %v6720
        %v6722 = vrot.slane %v6714, %v6721
        %v6724 = vunpack.c.l.s4 1983009808
        %v6725 = vunpack.c.0.s8 %v6724
        %v6726 = vlaneseq
        %v6727 = vshrl.u32 %v6726, 7
        %v6728 = vsub.s32 %v6725, %v6727
        %v6729 = vrot.slane %v6715, %v6728
        %v6730 = vcombine.low %v6435, %v6437
        %v6731 = vcombine.high %v6435, %v6437
        %v6733 = vunpack.c.l.s4 1983009808
        %v6734 = vunpack.c.0.s8 %v6733
        %v6735 = vlaneseq
        %v6736 = vshrl.u32 %v6735, 7
        %v6737 = vsub.s32 %v6734, %v6736
        %v6738 = vrot.slane %v6730, %v6737
        %v6740 = vunpack.c.l.s4 1983009808
        %v6741 = vunpack.c.0.s8 %v6740
        %v6742 = vlaneseq
        %v6743 = vshrl.u32 %v6742, 7
        %v6744 = vsub.s32 %v6741, %v6743
        %v6745 = vrot.slane %v6731, %v6744
        %v6746 = vcombine.low %v6438, %v6440
        %v6747 = vcombine.high %v6438, %v6440
        %v6749 = vunpack.c.l.s4 1983009808
        %v6750 = vunpack.c.0.s8 %v6749
        %v6751 = vlaneseq
        %v6752 = vshrl.u32 %v6751, 7
        %v6753 = vsub.s32 %v6750, %v6752
        %v6754 = vrot.slane %v6746, %v6753
        %v6756 = vunpack.c.l.s4 1983009808
        %v6757 = vunpack.c.0.s8 %v6756
        %v6758 = vlaneseq
        %v6759 = vshrl.u32 %v6758, 7
        %v6760 = vsub.s32 %v6757, %v6759
        %v6761 = vrot.slane %v6747, %v6760
        %v6762 = vcombine.low %v6439, %v6441
        %v6763 = vcombine.high %v6439, %v6441
        %v6765 = vunpack.c.l.s4 1983009808
        %v6766 = vunpack.c.0.s8 %v6765
        %v6767 = vlaneseq
        %v6768 = vshrl.u32 %v6767, 7
        %v6769 = vsub.s32 %v6766, %v6768
        %v6770 = vrot.slane %v6762, %v6769
        %v6772 = vunpack.c.l.s4 1983009808
        %v6773 = vunpack.c.0.s8 %v6772
        %v6774 = vlaneseq
        %v6775 = vshrl.u32 %v6774, 7
        %v6776 = vsub.s32 %v6773, %v6775
        %v6777 = vrot.slane %v6763, %v6776
        %v6778 = vcombine.low %v6722, %v6738
        %v6779 = vcombine.high %v6722, %v6738
        %v6781 = vunpack.c.l.s4 1934713408
        %v6782 = vunpack.c.0.s8 %v6781
        %v6783 = vlaneseq
        %v6784 = vshrl.u32 %v6783, 7
        %v6785 = vsub.s32 %v6782, %v6784
        %v6786 = vrot.slane %v6778, %v6785
        %v6788 = vunpack.c.l.s4 1934713408
        %v6789 = vunpack.c.0.s8 %v6788
        %v6790 = vlaneseq
        %v6791 = vshrl.u32 %v6790, 7
        %v6792 = vsub.s32 %v6789, %v6791
        %v6793 = vrot.slane %v6779, %v6792
        %v6794 = vcombine.low %v6729, %v6745
        %v6795 = vcombine.high %v6729, %v6745
        %v6797 = vunpack.c.l.s4 1934713408
        %v6798 = vunpack.c.0.s8 %v6797
        %v6799 = vlaneseq
        %v6800 = vshrl.u32 %v6799, 7
        %v6801 = vsub.s32 %v6798, %v6800
        %v6802 = vrot.slane %v6794, %v6801
        %v6804 = vunpack.c.l.s4 1934713408
        %v6805 = vunpack.c.0.s8 %v6804
        %v6806 = vlaneseq
        %v6807 = vshrl.u32 %v6806, 7
        %v6808 = vsub.s32 %v6805, %v6807
        %v6809 = vrot.slane %v6795, %v6808
        %v6810 = vcombine.low %v6754, %v6770
        %v6811 = vcombine.high %v6754, %v6770
        %v6813 = vunpack.c.l.s4 1934713408
        %v6814 = vunpack.c.0.s8 %v6813
        %v6815 = vlaneseq
        %v6816 = vshrl.u32 %v6815, 7
        %v6817 = vsub.s32 %v6814, %v6816
        %v6818 = vrot.slane %v6810, %v6817
        %v6820 = vunpack.c.l.s4 1934713408
        %v6821 = vunpack.c.0.s8 %v6820
        %v6822 = vlaneseq
        %v6823 = vshrl.u32 %v6822, 7
        %v6824 = vsub.s32 %v6821, %v6823
        %v6825 = vrot.slane %v6811, %v6824
        %v6826 = vcombine.low %v6761, %v6777
        %v6827 = vcombine.high %v6761, %v6777
        %v6829 = vunpack.c.l.s4 1934713408
        %v6830 = vunpack.c.0.s8 %v6829
        %v6831 = vlaneseq
        %v6832 = vshrl.u32 %v6831, 7
        %v6833 = vsub.s32 %v6830, %v6832
        %v6834 = vrot.slane %v6826, %v6833
        %v6836 = vunpack.c.l.s4 1934713408
        %v6837 = vunpack.c.0.s8 %v6836
        %v6838 = vlaneseq
        %v6839 = vshrl.u32 %v6838, 7
        %v6840 = vsub.s32 %v6837, %v6839
        %v6841 = vrot.slane %v6827, %v6840
        %v6842 = vcombine.low %v6786, %v6818
        %v6843 = vcombine.high %v6786, %v6818
        %v6844 = vcombine.low %v6793, %v6825
        %v6845 = vcombine.high %v6793, %v6825
        %v6846 = vcombine.low %v6802, %v6834
        %v6847 = vcombine.high %v6802, %v6834
        %v6848 = vcombine.low %v6809, %v6841
        %v6849 = vcombine.high %v6809, %v6841
        %v6850 = vcombine.low %v6298, %v6300
        %v6851 = vcombine.high %v6298, %v6300
        %v6853 = vunpack.c.l.s4 1983009808
        %v6854 = vunpack.c.0.s8 %v6853
        %v6855 = vlaneseq
        %v6856 = vshrl.u32 %v6855, 7
        %v6857 = vsub.s32 %v6854, %v6856
        %v6858 = vrot.slane %v6850, %v6857
        %v6860 = vunpack.c.l.s4 1983009808
        %v6861 = vunpack.c.0.s8 %v6860
        %v6862 = vlaneseq
        %v6863 = vshrl.u32 %v6862, 7
        %v6864 = vsub.s32 %v6861, %v6863
        %v6865 = vrot.slane %v6851, %v6864
        %v6866 = vcombine.low %v6299, %v6301
        %v6867 = vcombine.high %v6299, %v6301
        %v6869 = vunpack.c.l.s4 1983009808
        %v6870 = vunpack.c.0.s8 %v6869
        %v6871 = vlaneseq
        %v6872 = vshrl.u32 %v6871, 7
        %v6873 = vsub.s32 %v6870, %v6872
        %v6874 = vrot.slane %v6866, %v6873
        %v6876 = vunpack.c.l.s4 1983009808
        %v6877 = vunpack.c.0.s8 %v6876
        %v6878 = vlaneseq
        %v6879 = vshrl.u32 %v6878, 7
        %v6880 = vsub.s32 %v6877, %v6879
        %v6881 = vrot.slane %v6867, %v6880
        %v6882 = vcombine.low %v6302, %v6304
        %v6883 = vcombine.high %v6302, %v6304
        %v6885 = vunpack.c.l.s4 1983009808
        %v6886 = vunpack.c.0.s8 %v6885
        %v6887 = vlaneseq
        %v6888 = vshrl.u32 %v6887, 7
        %v6889 = vsub.s32 %v6886, %v6888
        %v6890 = vrot.slane %v6882, %v6889
        %v6892 = vunpack.c.l.s4 1983009808
        %v6893 = vunpack.c.0.s8 %v6892
        %v6894 = vlaneseq
        %v6895 = vshrl.u32 %v6894, 7
        %v6896 = vsub.s32 %v6893, %v6895
        %v6897 = vrot.slane %v6883, %v6896
        %v6898 = vcombine.low %v6303, %v6305
        %v6899 = vcombine.high %v6303, %v6305
        %v6901 = vunpack.c.l.s4 1983009808
        %v6902 = vunpack.c.0.s8 %v6901
        %v6903 = vlaneseq
        %v6904 = vshrl.u32 %v6903, 7
        %v6905 = vsub.s32 %v6902, %v6904
        %v6906 = vrot.slane %v6898, %v6905
        %v6908 = vunpack.c.l.s4 1983009808
        %v6909 = vunpack.c.0.s8 %v6908
        %v6910 = vlaneseq
        %v6911 = vshrl.u32 %v6910, 7
        %v6912 = vsub.s32 %v6909, %v6911
        %v6913 = vrot.slane %v6899, %v6912
        %v6914 = vcombine.low %v6858, %v6874
        %v6915 = vcombine.high %v6858, %v6874
        %v6917 = vunpack.c.l.s4 1934713408
        %v6918 = vunpack.c.0.s8 %v6917
        %v6919 = vlaneseq
        %v6920 = vshrl.u32 %v6919, 7
        %v6921 = vsub.s32 %v6918, %v6920
        %v6922 = vrot.slane %v6914, %v6921
        %v6924 = vunpack.c.l.s4 1934713408
        %v6925 = vunpack.c.0.s8 %v6924
        %v6926 = vlaneseq
        %v6927 = vshrl.u32 %v6926, 7
        %v6928 = vsub.s32 %v6925, %v6927
        %v6929 = vrot.slane %v6915, %v6928
        %v6930 = vcombine.low %v6865, %v6881
        %v6931 = vcombine.high %v6865, %v6881
        %v6933 = vunpack.c.l.s4 1934713408
        %v6934 = vunpack.c.0.s8 %v6933
        %v6935 = vlaneseq
        %v6936 = vshrl.u32 %v6935, 7
        %v6937 = vsub.s32 %v6934, %v6936
        %v6938 = vrot.slane %v6930, %v6937
        %v6940 = vunpack.c.l.s4 1934713408
        %v6941 = vunpack.c.0.s8 %v6940
        %v6942 = vlaneseq
        %v6943 = vshrl.u32 %v6942, 7
        %v6944 = vsub.s32 %v6941, %v6943
        %v6945 = vrot.slane %v6931, %v6944
        %v6946 = vcombine.low %v6890, %v6906
        %v6947 = vcombine.high %v6890, %v6906
        %v6949 = vunpack.c.l.s4 1934713408
        %v6950 = vunpack.c.0.s8 %v6949
        %v6951 = vlaneseq
        %v6952 = vshrl.u32 %v6951, 7
        %v6953 = vsub.s32 %v6950, %v6952
        %v6954 = vrot.slane %v6946, %v6953
        %v6956 = vunpack.c.l.s4 1934713408
        %v6957 = vunpack.c.0.s8 %v6956
        %v6958 = vlaneseq
        %v6959 = vshrl.u32 %v6958, 7
        %v6960 = vsub.s32 %v6957, %v6959
        %v6961 = vrot.slane %v6947, %v6960
        %v6962 = vcombine.low %v6897, %v6913
        %v6963 = vcombine.high %v6897, %v6913
        %v6965 = vunpack.c.l.s4 1934713408
        %v6966 = vunpack.c.0.s8 %v6965
        %v6967 = vlaneseq
        %v6968 = vshrl.u32 %v6967, 7
        %v6969 = vsub.s32 %v6966, %v6968
        %v6970 = vrot.slane %v6962, %v6969
        %v6972 = vunpack.c.l.s4 1934713408
        %v6973 = vunpack.c.0.s8 %v6972
        %v6974 = vlaneseq
        %v6975 = vshrl.u32 %v6974, 7
        %v6976 = vsub.s32 %v6973, %v6975
        %v6977 = vrot.slane %v6963, %v6976
        %v6978 = vcombine.low %v6922, %v6954
        %v6979 = vcombine.high %v6922, %v6954
        %v6980 = vcombine.low %v6929, %v6961
        %v6981 = vcombine.high %v6929, %v6961
        %v6982 = vcombine.low %v6938, %v6970
        %v6983 = vcombine.high %v6938, %v6970
        %v6984 = vcombine.low %v6945, %v6977
        %v6985 = vcombine.high %v6945, %v6977
        %v6986 = vcombine.low %v6570, %v6572
        %v6987 = vcombine.high %v6570, %v6572
        %v6989 = vunpack.c.l.s4 1983009808
        %v6990 = vunpack.c.0.s8 %v6989
        %v6991 = vlaneseq
        %v6992 = vshrl.u32 %v6991, 7
        %v6993 = vsub.s32 %v6990, %v6992
        %v6994 = vrot.slane %v6986, %v6993
        %v6996 = vunpack.c.l.s4 1983009808
        %v6997 = vunpack.c.0.s8 %v6996
        %v6998 = vlaneseq
        %v6999 = vshrl.u32 %v6998, 7
        %v7000 = vsub.s32 %v6997, %v6999
        %v7001 = vrot.slane %v6987, %v7000
        %v7002 = vcombine.low %v6571, %v6573
        %v7003 = vcombine.high %v6571, %v6573
        %v7005 = vunpack.c.l.s4 1983009808
        %v7006 = vunpack.c.0.s8 %v7005
        %v7007 = vlaneseq
        %v7008 = vshrl.u32 %v7007, 7
        %v7009 = vsub.s32 %v7006, %v7008
        %v7010 = vrot.slane %v7002, %v7009
        %v7012 = vunpack.c.l.s4 1983009808
        %v7013 = vunpack.c.0.s8 %v7012
        %v7014 = vlaneseq
        %v7015 = vshrl.u32 %v7014, 7
        %v7016 = vsub.s32 %v7013, %v7015
        %v7017 = vrot.slane %v7003, %v7016
        %v7018 = vcombine.low %v6574, %v6576
        %v7019 = vcombine.high %v6574, %v6576
        %v7021 = vunpack.c.l.s4 1983009808
        %v7022 = vunpack.c.0.s8 %v7021
        %v7023 = vlaneseq
        %v7024 = vshrl.u32 %v7023, 7
        %v7025 = vsub.s32 %v7022, %v7024
        %v7026 = vrot.slane %v7018, %v7025
        %v7028 = vunpack.c.l.s4 1983009808
        %v7029 = vunpack.c.0.s8 %v7028
        %v7030 = vlaneseq
        %v7031 = vshrl.u32 %v7030, 7
        %v7032 = vsub.s32 %v7029, %v7031
        %v7033 = vrot.slane %v7019, %v7032
        %v7034 = vcombine.low %v6575, %v6577
        %v7035 = vcombine.high %v6575, %v6577
        %v7037 = vunpack.c.l.s4 1983009808
        %v7038 = vunpack.c.0.s8 %v7037
        %v7039 = vlaneseq
        %v7040 = vshrl.u32 %v7039, 7
        %v7041 = vsub.s32 %v7038, %v7040
        %v7042 = vrot.slane %v7034, %v7041
        %v7044 = vunpack.c.l.s4 1983009808
        %v7045 = vunpack.c.0.s8 %v7044
        %v7046 = vlaneseq
        %v7047 = vshrl.u32 %v7046, 7
        %v7048 = vsub.s32 %v7045, %v7047
        %v7049 = vrot.slane %v7035, %v7048
        %v7050 = vcombine.low %v6994, %v7010
        %v7051 = vcombine.high %v6994, %v7010
        %v7053 = vunpack.c.l.s4 1934713408
        %v7054 = vunpack.c.0.s8 %v7053
        %v7055 = vlaneseq
        %v7056 = vshrl.u32 %v7055, 7
        %v7057 = vsub.s32 %v7054, %v7056
        %v7058 = vrot.slane %v7050, %v7057
        %v7060 = vunpack.c.l.s4 1934713408
        %v7061 = vunpack.c.0.s8 %v7060
        %v7062 = vlaneseq
        %v7063 = vshrl.u32 %v7062, 7
        %v7064 = vsub.s32 %v7061, %v7063
        %v7065 = vrot.slane %v7051, %v7064
        %v7066 = vcombine.low %v7001, %v7017
        %v7067 = vcombine.high %v7001, %v7017
        %v7069 = vunpack.c.l.s4 1934713408
        %v7070 = vunpack.c.0.s8 %v7069
        %v7071 = vlaneseq
        %v7072 = vshrl.u32 %v7071, 7
        %v7073 = vsub.s32 %v7070, %v7072
        %v7074 = vrot.slane %v7066, %v7073
        %v7076 = vunpack.c.l.s4 1934713408
        %v7077 = vunpack.c.0.s8 %v7076
        %v7078 = vlaneseq
        %v7079 = vshrl.u32 %v7078, 7
        %v7080 = vsub.s32 %v7077, %v7079
        %v7081 = vrot.slane %v7067, %v7080
        %v7082 = vcombine.low %v7026, %v7042
        %v7083 = vcombine.high %v7026, %v7042
        %v7085 = vunpack.c.l.s4 1934713408
        %v7086 = vunpack.c.0.s8 %v7085
        %v7087 = vlaneseq
        %v7088 = vshrl.u32 %v7087, 7
        %v7089 = vsub.s32 %v7086, %v7088
        %v7090 = vrot.slane %v7082, %v7089
        %v7092 = vunpack.c.l.s4 1934713408
        %v7093 = vunpack.c.0.s8 %v7092
        %v7094 = vlaneseq
        %v7095 = vshrl.u32 %v7094, 7
        %v7096 = vsub.s32 %v7093, %v7095
        %v7097 = vrot.slane %v7083, %v7096
        %v7098 = vcombine.low %v7033, %v7049
        %v7099 = vcombine.high %v7033, %v7049
        %v7101 = vunpack.c.l.s4 1934713408
        %v7102 = vunpack.c.0.s8 %v7101
        %v7103 = vlaneseq
        %v7104 = vshrl.u32 %v7103, 7
        %v7105 = vsub.s32 %v7102, %v7104
        %v7106 = vrot.slane %v7098, %v7105
        %v7108 = vunpack.c.l.s4 1934713408
        %v7109 = vunpack.c.0.s8 %v7108
        %v7110 = vlaneseq
        %v7111 = vshrl.u32 %v7110, 7
        %v7112 = vsub.s32 %v7109, %v7111
        %v7113 = vrot.slane %v7099, %v7112
        %v7114 = vcombine.low %v7058, %v7090
        %v7115 = vcombine.high %v7058, %v7090
        %v7116 = vcombine.low %v7065, %v7097
        %v7117 = vcombine.high %v7065, %v7097
        %v7118 = vcombine.low %v7074, %v7106
        %v7119 = vcombine.high %v7074, %v7106
        %v7120 = vcombine.low %v7081, %v7113
        %v7121 = vcombine.high %v7081, %v7113
        %7124 = vrot.lane.b32.xlu0 %v6707, 16
        %v7125 = vpop.permute.xlu0 %7124
        %7126 = vrot.lane.b32.xlu0 %v6843, 16
        %v7127 = vpop.permute.xlu0 %7126
        %7132 = vrot.lane.b32.xlu0 %v6708, 32
        %v7133 = vpop.permute.xlu0 %7132
        %7134 = vrot.lane.b32.xlu0 %v6844, 32
        %v7135 = vpop.permute.xlu0 %7134
        %7140 = vrot.lane.b32.xlu0 %v6709, 48
        %v7141 = vpop.permute.xlu0 %7140
        %7142 = vrot.lane.b32.xlu0 %v6845, 48
        %v7143 = vpop.permute.xlu0 %7142
        %7148 = vrot.lane.b32.xlu0 %v6710, 64
        %v7149 = vpop.permute.xlu0 %7148
        %7150 = vrot.lane.b32.xlu0 %v6846, 64
        %v7151 = vpop.permute.xlu0 %7150
        %7156 = vrot.lane.b32.xlu0 %v6711, 80
        %v7157 = vpop.permute.xlu0 %7156
        %7158 = vrot.lane.b32.xlu0 %v6847, 80
        %v7159 = vpop.permute.xlu0 %7158
        %7164 = vrot.lane.b32.xlu0 %v6712, 96
        %v7165 = vpop.permute.xlu0 %7164
        %7166 = vrot.lane.b32.xlu0 %v6848, 96
        %v7167 = vpop.permute.xlu0 %7166
        %7172 = vrot.lane.b32.xlu0 %v6713, 112
        %v7173 = vpop.permute.xlu0 %7172
        %7174 = vrot.lane.b32.xlu0 %v6849, 112
        %v7175 = vpop.permute.xlu0 %7174
        %7180 = vrot.lane.b32.xlu0 %v6979, 16
        %v7181 = vpop.permute.xlu0 %7180
        %7182 = vrot.lane.b32.xlu0 %v7115, 16
        %v7183 = vpop.permute.xlu0 %7182
        %7188 = vrot.lane.b32.xlu0 %v6980, 32
        %v7189 = vpop.permute.xlu0 %7188
        %7190 = vrot.lane.b32.xlu0 %v7116, 32
        %v7191 = vpop.permute.xlu0 %7190
        %7196 = vrot.lane.b32.xlu0 %v6981, 48
        %v7197 = vpop.permute.xlu0 %7196
        %7198 = vrot.lane.b32.xlu0 %v7117, 48
        %v7199 = vpop.permute.xlu0 %7198
        %7204 = vrot.lane.b32.xlu0 %v6982, 64
        %v7205 = vpop.permute.xlu0 %7204
        %7206 = vrot.lane.b32.xlu0 %v7118, 64
        %v7207 = vpop.permute.xlu0 %7206
        %7212 = vrot.lane.b32.xlu0 %v6983, 80
        %v7213 = vpop.permute.xlu0 %7212
        %7214 = vrot.lane.b32.xlu0 %v7119, 80
        %v7215 = vpop.permute.xlu0 %7214
        %7220 = vrot.lane.b32.xlu0 %v6984, 96
        %v7221 = vpop.permute.xlu0 %7220
        %7222 = vrot.lane.b32.xlu0 %v7120, 96
        %v7223 = vpop.permute.xlu0 %7222
        %7228 = vrot.lane.b32.xlu0 %v6985, 112
        %v7229 = vpop.permute.xlu0 %7228
        %7230 = vrot.lane.b32.xlu0 %v7121, 112
        %v7231 = vpop.permute.xlu0 %7230
        %v7234 = vsel %vm4311, %v6706, %v7125
        %v7235 = vsel %vm4311, %v6842, %v7127
        %v7236 = vsel %vm4314, %v7234, %v7133
        %v7237 = vsel %vm4314, %v7235, %v7135
        %v7238 = vsel %vm4317, %v7236, %v7141
        %v7239 = vsel %vm4317, %v7237, %v7143
        %v7240 = vsel %vm4320, %v7238, %v7149
        %v7241 = vsel %vm4320, %v7239, %v7151
        %v7242 = vsel %vm4323, %v7240, %v7157
        %v7243 = vsel %vm4323, %v7241, %v7159
        %v7244 = vsel %vm4326, %v7242, %v7165
        %v7245 = vsel %vm4326, %v7243, %v7167
        %v7246 = vsel %vm4329, %v7244, %v7173
        %v7247 = vsel %vm4329, %v7245, %v7175
        %v7248 = vsel %vm4311, %v6978, %v7181
        %v7249 = vsel %vm4311, %v7114, %v7183
        %v7250 = vsel %vm4314, %v7248, %v7189
        %v7251 = vsel %vm4314, %v7249, %v7191
        %v7252 = vsel %vm4317, %v7250, %v7197
        %v7253 = vsel %vm4317, %v7251, %v7199
        %v7254 = vsel %vm4320, %v7252, %v7205
        %v7255 = vsel %vm4320, %v7253, %v7207
        %v7256 = vsel %vm4323, %v7254, %v7213
        %v7257 = vsel %vm4323, %v7255, %v7215
        %v7258 = vsel %vm4326, %v7256, %v7221
        %v7259 = vsel %vm4326, %v7257, %v7223
        %v7260 = vsel %vm4329, %v7258, %v7229
        %v7261 = vsel %vm4329, %v7259, %v7231
        %v7262 = vmul.f32 %v4330, %v4330
        %v7263 = vmul.f32 %v4344, %v4344
        %v7264 = vmul.f32 %v4331, %v4331
        %v7265 = vmul.f32 %v4345, %v4345
        %v7266 = vmul.f32 %v7246, %v7246
        %v7267 = vmul.f32 %v7260, %v7260
        %v7268 = vmul.f32 %v7247, %v7247
        %v7269 = vmul.f32 %v7261, %v7261
        %v7270 = vmul.f32 %v1166, %v1166
        %v7271 = vmul.f32 %v1168, %v1168
        %v7272 = vmul.f32 %v1170, %v1170
        %v7273 = vmul.f32 %v1172, %v1172
        %v7274 = vmul.f32 %v1415, %v1415
        %v7275 = vmul.f32 %v1417, %v1417
        %v7276 = vmul.f32 %v1419, %v1419
        %v7277 = vmul.f32 %v1421, %v1421
        %v7278 = vld [vmem:[#allocation11] sm:$0xff]
        %v7279 = vld [vmem:[#allocation11 + $0x8] sm:$0xff]
        %v7280 = vld [vmem:[#allocation11 + $0x10] sm:$0xff]
        %v7281 = vld [vmem:[#allocation11 + $0x18] sm:$0xff]
        %v7282 = vld [vmem:[#allocation11 + $0x20] sm:$0xff]
        %v7283 = vld [vmem:[#allocation11 + $0x28] sm:$0xff]
        %v7284 = vld [vmem:[#allocation11 + $0x30] sm:$0xff]
        %v7285 = vld [vmem:[#allocation11 + $0x38] sm:$0xff]
        %v7286 = vld [vmem:[#allocation11 + $0x40] sm:$0xff]
        %v7287 = vld [vmem:[#allocation11 + $0x48] sm:$0xff]
        %v7288 = vld [vmem:[#allocation11 + $0x50] sm:$0xff]
        %v7289 = vld [vmem:[#allocation11 + $0x58] sm:$0xff]
        %v7290 = vld [vmem:[#allocation11 + $0x60] sm:$0xff]
        %v7291 = vld [vmem:[#allocation11 + $0x68] sm:$0xff]
        %v7292 = vld [vmem:[#allocation11 + $0x70] sm:$0xff]
        %v7293 = vld [vmem:[#allocation11 + $0x78] sm:$0xff]
        %v7294 = vld [vmem:[#allocation11 + $0x80] sm:$0xff]
        %v7295 = vld [vmem:[#allocation11 + $0x88] sm:$0xff]
        %v7296 = vld [vmem:[#allocation11 + $0x90] sm:$0xff]
        %v7297 = vld [vmem:[#allocation11 + $0x98] sm:$0xff]
        %v7298 = vld [vmem:[#allocation11 + $0xa0] sm:$0xff]
        %v7299 = vld [vmem:[#allocation11 + $0xa8] sm:$0xff]
        %v7300 = vld [vmem:[#allocation11 + $0xb0] sm:$0xff]
        %v7301 = vld [vmem:[#allocation11 + $0xb8] sm:$0xff]
        %v7302 = vld [vmem:[#allocation11 + $0xc0] sm:$0xff]
        %v7303 = vld [vmem:[#allocation11 + $0xc8] sm:$0xff]
        %v7304 = vld [vmem:[#allocation11 + $0xd0] sm:$0xff]
        %v7305 = vld [vmem:[#allocation11 + $0xd8] sm:$0xff]
        %v7306 = vld [vmem:[#allocation11 + $0xe0] sm:$0xff]
        %v7307 = vld [vmem:[#allocation11 + $0xe8] sm:$0xff]
        %v7308 = vld [vmem:[#allocation11 + $0xf0] sm:$0xff]
        %v7309 = vld [vmem:[#allocation11 + $0xf8] sm:$0xff]
        %v7310 = vld [vmem:[#allocation11 + $0x100] sm:$0xff]
        %v7311 = vld [vmem:[#allocation11 + $0x108] sm:$0xff]
        %v7312 = vld [vmem:[#allocation11 + $0x110] sm:$0xff]
        %v7313 = vld [vmem:[#allocation11 + $0x118] sm:$0xff]
        %v7314 = vld [vmem:[#allocation11 + $0x120] sm:$0xff]
        %v7315 = vld [vmem:[#allocation11 + $0x128] sm:$0xff]
        %v7316 = vld [vmem:[#allocation11 + $0x130] sm:$0xff]
        %v7317 = vld [vmem:[#allocation11 + $0x138] sm:$0xff]
        %v7318 = vld [vmem:[#allocation11 + $0x140] sm:$0xff]
        %v7319 = vld [vmem:[#allocation11 + $0x148] sm:$0xff]
        %v7320 = vld [vmem:[#allocation11 + $0x150] sm:$0xff]
        %v7321 = vld [vmem:[#allocation11 + $0x158] sm:$0xff]
        %v7322 = vld [vmem:[#allocation11 + $0x160] sm:$0xff]
        %v7323 = vld [vmem:[#allocation11 + $0x168] sm:$0xff]
        %v7324 = vld [vmem:[#allocation11 + $0x170] sm:$0xff]
        %v7325 = vld [vmem:[#allocation11 + $0x178] sm:$0xff]
        %v7326 = vld [vmem:[#allocation11 + $0x180] sm:$0xff]
        %v7327 = vld [vmem:[#allocation11 + $0x188] sm:$0xff]
        %v7328 = vld [vmem:[#allocation11 + $0x190] sm:$0xff]
        %v7329 = vld [vmem:[#allocation11 + $0x198] sm:$0xff]
        %v7330 = vld [vmem:[#allocation11 + $0x1a0] sm:$0xff]
        %v7331 = vld [vmem:[#allocation11 + $0x1a8] sm:$0xff]
        %v7332 = vld [vmem:[#allocation11 + $0x1b0] sm:$0xff]
        %v7333 = vld [vmem:[#allocation11 + $0x1b8] sm:$0xff]
        %v7334 = vld [vmem:[#allocation11 + $0x1c0] sm:$0xff]
        %v7335 = vld [vmem:[#allocation11 + $0x1c8] sm:$0xff]
        %v7336 = vld [vmem:[#allocation11 + $0x1d0] sm:$0xff]
        %v7337 = vld [vmem:[#allocation11 + $0x1d8] sm:$0xff]
        %v7338 = vld [vmem:[#allocation11 + $0x1e0] sm:$0xff]
        %v7339 = vld [vmem:[#allocation11 + $0x1e8] sm:$0xff]
        %v7340 = vld [vmem:[#allocation11 + $0x1f0] sm:$0xff]
        %v7341 = vld [vmem:[#allocation11 + $0x1f8] sm:$0xff]
        %7342 = vmatprep.subr.mxu0 %v7279
        %7343 = vmatpush1.msra.mxu0 %v7278
        %7344 = vmatprep.subr.mxu0 %v7281
        %7345 = vmatpush1.msra.mxu0 %v7280
        %7346 = vmatprep.subr.mxu0 %v7283
        %7347 = vmatpush1.msra.mxu0 %v7282
        %7348 = vmatprep.subr.mxu0 %v7285
        %7349 = vmatpush1.msra.mxu0 %v7284
        %7350 = vmatprep.subr.mxu0 %v7287
        %7351 = vmatpush1.msra.mxu0 %v7286
        %7352 = vmatprep.subr.mxu0 %v7289
        %7353 = vmatpush1.msra.mxu0 %v7288
        %7354 = vmatprep.subr.mxu0 %v7291
        %7355 = vmatpush1.msra.mxu0 %v7290
        %7356 = vmatprep.subr.mxu0 %v7293
        %7357 = vmatpush1.msra.mxu0 %v7292
        %7358 = vmatprep.subr.mxu0 %v7295
        %7359 = vmatpush1.msra.mxu0 %v7294
        %7360 = vmatprep.subr.mxu0 %v7297
        %7361 = vmatpush1.msra.mxu0 %v7296
        %7362 = vmatprep.subr.mxu0 %v7299
        %7363 = vmatpush1.msra.mxu0 %v7298
        %7364 = vmatprep.subr.mxu0 %v7301
        %7365 = vmatpush1.msra.mxu0 %v7300
        %7366 = vmatprep.subr.mxu0 %v7303
        %7367 = vmatpush1.msra.mxu0 %v7302
        %7368 = vmatprep.subr.mxu0 %v7305
        %7369 = vmatpush1.msra.mxu0 %v7304
        %7370 = vmatprep.subr.mxu0 %v7307
        %7371 = vmatpush1.msra.mxu0 %v7306
        %7372 = vmatprep.subr.mxu0 %v7309
        %7373 = vmatpush1.msra.mxu0 %v7308
        %7374 = vmatprep.subr.mxu0 %v7311
        %7375 = vmatpush1.msra.mxu0 %v7310
        %7376 = vmatprep.subr.mxu0 %v7313
        %7377 = vmatpush1.msra.mxu0 %v7312
        %7378 = vmatprep.subr.mxu0 %v7315
        %7379 = vmatpush1.msra.mxu0 %v7314
        %7380 = vmatprep.subr.mxu0 %v7317
        %7381 = vmatpush1.msra.mxu0 %v7316
        %7382 = vmatprep.subr.mxu0 %v7319
        %7383 = vmatpush1.msra.mxu0 %v7318
        %7384 = vmatprep.subr.mxu0 %v7321
        %7385 = vmatpush1.msra.mxu0 %v7320
        %7386 = vmatprep.subr.mxu0 %v7323
        %7387 = vmatpush1.msra.mxu0 %v7322
        %7388 = vmatprep.subr.mxu0 %v7325
        %7389 = vmatpush1.msra.mxu0 %v7324
        %7390 = vmatprep.subr.mxu0 %v7327
        %7391 = vmatpush1.msra.mxu0 %v7326
        %7392 = vmatprep.subr.mxu0 %v7329
        %7393 = vmatpush1.msra.mxu0 %v7328
        %7394 = vmatprep.subr.mxu0 %v7331
        %7395 = vmatpush1.msra.mxu0 %v7330
        %7396 = vmatprep.subr.mxu0 %v7333
        %7397 = vmatpush1.msra.mxu0 %v7332
        %7398 = vmatprep.subr.mxu0 %v7335
        %7399 = vmatpush1.msra.mxu0 %v7334
        %7400 = vmatprep.subr.mxu0 %v7337
        %7401 = vmatpush1.msra.mxu0 %v7336
        %7402 = vmatprep.subr.mxu0 %v7339
        %7403 = vmatpush1.msra.mxu0 %v7338
        %7404 = vmatprep.subr.mxu0 %v7341
        %7405 = vmatpush1.msra.mxu0 %v7340
        %7406 = vmatprep.mubr.f32.mxu0 %v7263
        %7407 = vmatmul.mubr.f32.gmra.mrb[0].mxu0 %v7262
        %v7408 = vpop.f32.mrb[0].mxu0
        %v7409 = vadd.f32 0.0, %v7408
        %v7410 = vpop.f32.mrb[0].mxu0
        %v7411 = vadd.f32 0.0, %v7410
        %7412 = vmatprep.mubr.f32.mxu0 %v7265
        %7413 = vmatmul.mubr.f32.gmra.mrb[0].mxu0 %v7264
        %v7414 = vpop.f32.mrb[0].mxu0
        %v7415 = vadd.f32 0.0, %v7414
        %v7416 = vpop.f32.mrb[0].mxu0
        %v7417 = vadd.f32 0.0, %v7416
        %7418 = vmatprep.mubr.f32.mxu0 %v7267
        %7419 = vmatmul.mubr.f32.gmra.mrb[0].mxu0 %v7266
        %v7420 = vpop.f32.mrb[0].mxu0
        %v7421 = vadd.f32 0.0, %v7420
        %v7422 = vpop.f32.mrb[0].mxu0
        %v7423 = vadd.f32 0.0, %v7422
        %7424 = vmatprep.mubr.f32.mxu0 %v7269
        %7425 = vmatmul.mubr.f32.gmra.mrb[0].mxu0 %v7268
        %v7426 = vpop.f32.mrb[0].mxu0
        %v7427 = vadd.f32 0.0, %v7426
        %v7428 = vpop.f32.mrb[0].mxu0
        %v7429 = vadd.f32 0.0, %v7428
        %7430 = vmatprep.mubr.f32.mxu0 %v7271
        %7431 = vmatmul.mubr.f32.gmra.mrb[0].mxu0 %v7270
        %v7432 = vpop.f32.mrb[0].mxu0
        %v7433 = vadd.f32 0.0, %v7432
        %v7434 = vpop.f32.mrb[0].mxu0
        %v7435 = vadd.f32 0.0, %v7434
        %7436 = vmatprep.mubr.f32.mxu0 %v7273
        %7437 = vmatmul.mubr.f32.gmra.mrb[0].mxu0 %v7272
        %v7438 = vpop.f32.mrb[0].mxu0
        %v7439 = vadd.f32 0.0, %v7438
        %v7440 = vpop.f32.mrb[0].mxu0
        %v7441 = vadd.f32 0.0, %v7440
        %7442 = vmatprep.mubr.f32.mxu0 %v7275
        %7443 = vmatmul.mubr.f32.gmra.mrb[0].mxu0 %v7274
        %v7444 = vpop.f32.mrb[0].mxu0
        %v7445 = vadd.f32 0.0, %v7444
        %v7446 = vpop.f32.mrb[0].mxu0
        %v7447 = vadd.f32 0.0, %v7446
        %7448 = vmatprep.mubr.f32.mxu0 %v7277
        %7449 = vmatmul.mubr.f32.gmra.mrb[0].mxu0 %v7276
        %v7450 = vpop.f32.mrb[0].mxu0
        %v7451 = vadd.f32 0.0, %v7450
        %v7452 = vpop.f32.mrb[0].mxu0
        %v7453 = vadd.f32 0.0, %v7452
        %7454 = vdwg.mxu0
        %v7455 = vmax.f32 %v7409, 1e-24
        %v7456 = vmax.f32 %v7411, 1e-24
        %v7457 = vmax.f32 %v7415, 1e-24
        %v7458 = vmax.f32 %v7417, 1e-24
        %v7459 = vmax.f32 %v7421, 1e-24
        %v7460 = vmax.f32 %v7423, 1e-24
        %v7461 = vmax.f32 %v7427, 1e-24
        %v7462 = vmax.f32 %v7429, 1e-24
        %v7463 = vmax.f32 %v7433, 1e-24
        %v7464 = vmax.f32 %v7435, 1e-24
        %v7465 = vmax.f32 %v7439, 1e-24
        %v7466 = vmax.f32 %v7441, 1e-24
        %v7467 = vmax.f32 %v7445, 1e-24
        %v7468 = vmax.f32 %v7447, 1e-24
        %v7469 = vmax.f32 %v7451, 1e-24
        %v7470 = vmax.f32 %v7453, 1e-24
        %v7471 = vrsqrt.pop %v7455
        %v7472 = vrsqrt.pop %v7456
        %v7473 = vrsqrt.pop %v7457
        %v7474 = vrsqrt.pop %v7458
        %v7475 = vrsqrt.pop %v7459
        %v7476 = vrsqrt.pop %v7460
        %v7477 = vrsqrt.pop %v7461
        %v7478 = vrsqrt.pop %v7462
        %v7479 = vrsqrt.pop %v7463
        %v7480 = vrsqrt.pop %v7464
        %v7481 = vrsqrt.pop %v7465
        %v7482 = vrsqrt.pop %v7466
        %v7483 = vrsqrt.pop %v7467
        %v7484 = vrsqrt.pop %v7468
        %v7485 = vrsqrt.pop %v7469
        %v7486 = vrsqrt.pop %v7470
        %v7487 = vmul.f32 %v4330, %v7471
        %v7488 = vmul.f32 %v4344, %v7472
        %v7489 = vmul.f32 %v4331, %v7473
        %v7490 = vmul.f32 %v4345, %v7474
        %v7491 = vmul.f32 %v7246, %v7475
        %v7492 = vmul.f32 %v7260, %v7476
        %v7493 = vmul.f32 %v7247, %v7477
        %v7494 = vmul.f32 %v7261, %v7478
        %v7495 = vmul.f32 %v1166, %v7479
        %v7496 = vmul.f32 %v1168, %v7480
        %v7497 = vmul.f32 %v1170, %v7481
        %v7498 = vmul.f32 %v1172, %v7482
        %v7499 = vmul.f32 %v1415, %v7483
        %v7500 = vmul.f32 %v1417, %v7484
        %v7501 = vmul.f32 %v1419, %v7485
        %v7502 = vmul.f32 %v1421, %v7486
        %v7503 = vld [vmem:[#allocation13] sm:$0xff]
        %v7504 = vld [vmem:[#allocation13 + $0x8] sm:$0xff]
        %v7505 = vld [vmem:[#allocation13 + $0x10] sm:$0xff]
        %v7506 = vld [vmem:[#allocation13 + $0x18] sm:$0xff]
        %v7507 = vld [vmem:[#allocation13 + $0x20] sm:$0xff]
        %v7508 = vld [vmem:[#allocation13 + $0x28] sm:$0xff]
        %v7509 = vld [vmem:[#allocation13 + $0x30] sm:$0xff]
        %v7510 = vld [vmem:[#allocation13 + $0x38] sm:$0xff]
        %v7511 = vld [vmem:[#allocation13 + $0x40] sm:$0xff]
        %v7512 = vld [vmem:[#allocation13 + $0x48] sm:$0xff]
        %v7513 = vld [vmem:[#allocation13 + $0x50] sm:$0xff]
        %v7514 = vld [vmem:[#allocation13 + $0x58] sm:$0xff]
        %v7515 = vld [vmem:[#allocation13 + $0x60] sm:$0xff]
        %v7516 = vld [vmem:[#allocation13 + $0x68] sm:$0xff]
        %v7517 = vld [vmem:[#allocation13 + $0x70] sm:$0xff]
        %v7518 = vld [vmem:[#allocation13 + $0x78] sm:$0xff]
        %v7519 = vld [vmem:[#allocation13 + $0x80] sm:$0xff]
        %v7520 = vld [vmem:[#allocation13 + $0x88] sm:$0xff]
        %v7521 = vld [vmem:[#allocation13 + $0x90] sm:$0xff]
        %v7522 = vld [vmem:[#allocation13 + $0x98] sm:$0xff]
        %v7523 = vld [vmem:[#allocation13 + $0xa0] sm:$0xff]
        %v7524 = vld [vmem:[#allocation13 + $0xa8] sm:$0xff]
        %v7525 = vld [vmem:[#allocation13 + $0xb0] sm:$0xff]
        %v7526 = vld [vmem:[#allocation13 + $0xb8] sm:$0xff]
        %v7527 = vld [vmem:[#allocation13 + $0xc0] sm:$0xff]
        %v7528 = vld [vmem:[#allocation13 + $0xc8] sm:$0xff]
        %v7529 = vld [vmem:[#allocation13 + $0xd0] sm:$0xff]
        %v7530 = vld [vmem:[#allocation13 + $0xd8] sm:$0xff]
        %v7531 = vld [vmem:[#allocation13 + $0xe0] sm:$0xff]
        %v7532 = vld [vmem:[#allocation13 + $0xe8] sm:$0xff]
        %v7533 = vld [vmem:[#allocation13 + $0xf0] sm:$0xff]
        %v7534 = vld [vmem:[#allocation13 + $0xf8] sm:$0xff]
        %v7535 = vmul.f32 %v7503, %v7495
        %v7536 = vmul.f32 %v7504, %v7496
        %v7537 = vmul.f32 %v7505, %v7497
        %v7538 = vmul.f32 %v7506, %v7498
        %v7539 = vmul.f32 %v7507, %v7495
        %v7540 = vmul.f32 %v7508, %v7496
        %v7541 = vmul.f32 %v7509, %v7497
        %v7542 = vmul.f32 %v7510, %v7498
        %v7543 = vmul.f32 %v7511, %v7495
        %v7544 = vmul.f32 %v7512, %v7496
        %v7545 = vmul.f32 %v7513, %v7497
        %v7546 = vmul.f32 %v7514, %v7498
        %v7547 = vmul.f32 %v7515, %v7495
        %v7548 = vmul.f32 %v7516, %v7496
        %v7549 = vmul.f32 %v7517, %v7497
        %v7550 = vmul.f32 %v7518, %v7498
        %v7551 = vmul.f32 %v7519, %v7495
        %v7552 = vmul.f32 %v7520, %v7496
        %v7553 = vmul.f32 %v7521, %v7497
        %v7554 = vmul.f32 %v7522, %v7498
        %v7555 = vmul.f32 %v7523, %v7495
        %v7556 = vmul.f32 %v7524, %v7496
        %v7557 = vmul.f32 %v7525, %v7497
        %v7558 = vmul.f32 %v7526, %v7498
        %v7559 = vmul.f32 %v7527, %v7495
        %v7560 = vmul.f32 %v7528, %v7496
        %v7561 = vmul.f32 %v7529, %v7497
        %v7562 = vmul.f32 %v7530, %v7498
        %v7563 = vmul.f32 %v7531, %v7495
        %v7564 = vmul.f32 %v7532, %v7496
        %v7565 = vmul.f32 %v7533, %v7497
        %v7566 = vmul.f32 %v7534, %v7498
        %v7567 = vmul.f32 %v7503, %v1166
        %v7568 = vmul.f32 %v7504, %v1168
        %v7569 = vmul.f32 %v7505, %v1170
        %v7570 = vmul.f32 %v7506, %v1172
        %v7571 = vmul.f32 %v7507, %v1166
        %v7572 = vmul.f32 %v7508, %v1168
        %v7573 = vmul.f32 %v7509, %v1170
        %v7574 = vmul.f32 %v7510, %v1172
        %v7575 = vmul.f32 %v7511, %v1166
        %v7576 = vmul.f32 %v7512, %v1168
        %v7577 = vmul.f32 %v7513, %v1170
        %v7578 = vmul.f32 %v7514, %v1172
        %v7579 = vmul.f32 %v7515, %v1166
        %v7580 = vmul.f32 %v7516, %v1168
        %v7581 = vmul.f32 %v7517, %v1170
        %v7582 = vmul.f32 %v7518, %v1172
        %v7583 = vmul.f32 %v7519, %v1166
        %v7584 = vmul.f32 %v7520, %v1168
        %v7585 = vmul.f32 %v7521, %v1170
        %v7586 = vmul.f32 %v7522, %v1172
        %v7587 = vmul.f32 %v7523, %v1166
        %v7588 = vmul.f32 %v7524, %v1168
        %v7589 = vmul.f32 %v7525, %v1170
        %v7590 = vmul.f32 %v7526, %v1172
        %v7591 = vmul.f32 %v7527, %v1166
        %v7592 = vmul.f32 %v7528, %v1168
        %v7593 = vmul.f32 %v7529, %v1170
        %v7594 = vmul.f32 %v7530, %v1172
        %v7595 = vmul.f32 %v7531, %v1166
        %v7596 = vmul.f32 %v7532, %v1168
        %v7597 = vmul.f32 %v7533, %v1170
        %v7598 = vmul.f32 %v7534, %v1172
        %v7599 = vmul.f32 %v7503, %v7499
        %v7600 = vmul.f32 %v7504, %v7500
        %v7601 = vmul.f32 %v7505, %v7501
        %v7602 = vmul.f32 %v7506, %v7502
        %v7603 = vmul.f32 %v7507, %v7499
        %v7604 = vmul.f32 %v7508, %v7500
        %v7605 = vmul.f32 %v7509, %v7501
        %v7606 = vmul.f32 %v7510, %v7502
        %v7607 = vmul.f32 %v7511, %v7499
        %v7608 = vmul.f32 %v7512, %v7500
        %v7609 = vmul.f32 %v7513, %v7501
        %v7610 = vmul.f32 %v7514, %v7502
        %v7611 = vmul.f32 %v7515, %v7499
        %v7612 = vmul.f32 %v7516, %v7500
        %v7613 = vmul.f32 %v7517, %v7501
        %v7614 = vmul.f32 %v7518, %v7502
        %v7615 = vmul.f32 %v7519, %v7499
        %v7616 = vmul.f32 %v7520, %v7500
        %v7617 = vmul.f32 %v7521, %v7501
        %v7618 = vmul.f32 %v7522, %v7502
        %v7619 = vmul.f32 %v7523, %v7499
        %v7620 = vmul.f32 %v7524, %v7500
        %v7621 = vmul.f32 %v7525, %v7501
        %v7622 = vmul.f32 %v7526, %v7502
        %v7623 = vmul.f32 %v7527, %v7499
        %v7624 = vmul.f32 %v7528, %v7500
        %v7625 = vmul.f32 %v7529, %v7501
        %v7626 = vmul.f32 %v7530, %v7502
        %v7627 = vmul.f32 %v7531, %v7499
        %v7628 = vmul.f32 %v7532, %v7500
        %v7629 = vmul.f32 %v7533, %v7501
        %v7630 = vmul.f32 %v7534, %v7502
        %v7631 = vmul.f32 %v7503, %v1415
        %v7632 = vmul.f32 %v7504, %v1417
        %v7633 = vmul.f32 %v7505, %v1419
        %v7634 = vmul.f32 %v7506, %v1421
        %v7635 = vmul.f32 %v7507, %v1415
        %v7636 = vmul.f32 %v7508, %v1417
        %v7637 = vmul.f32 %v7509, %v1419
        %v7638 = vmul.f32 %v7510, %v1421
        %v7639 = vmul.f32 %v7511, %v1415
        %v7640 = vmul.f32 %v7512, %v1417
        %v7641 = vmul.f32 %v7513, %v1419
        %v7642 = vmul.f32 %v7514, %v1421
        %v7643 = vmul.f32 %v7515, %v1415
        %v7644 = vmul.f32 %v7516, %v1417
        %v7645 = vmul.f32 %v7517, %v1419
        %v7646 = vmul.f32 %v7518, %v1421
        %v7647 = vmul.f32 %v7519, %v1415
        %v7648 = vmul.f32 %v7520, %v1417
        %v7649 = vmul.f32 %v7521, %v1419
        %v7650 = vmul.f32 %v7522, %v1421
        %v7651 = vmul.f32 %v7523, %v1415
        %v7652 = vmul.f32 %v7524, %v1417
        %v7653 = vmul.f32 %v7525, %v1419
        %v7654 = vmul.f32 %v7526, %v1421
        %v7655 = vmul.f32 %v7527, %v1415
        %v7656 = vmul.f32 %v7528, %v1417
        %v7657 = vmul.f32 %v7529, %v1419
        %v7658 = vmul.f32 %v7530, %v1421
        %v7659 = vmul.f32 %v7531, %v1415
        %v7660 = vmul.f32 %v7532, %v1417
        %v7661 = vmul.f32 %v7533, %v1419
        %v7662 = vmul.f32 %v7534, %v1421
        %7663 = vmatprep.subr.mxu0 %v7536
        %7664 = vmatpush1.xpose.msra.mxu0 %v7535
        %7665 = vmatprep.subr.mxu0 %v7538
        %7666 = vmatpush1.xpose.msra.mxu0 %v7537
        %7667 = vmatprep.subr.mxu0 %v7540
        %7668 = vmatpush1.xpose.msra.mxu0 %v7539
        %7669 = vmatprep.subr.mxu0 %v7542
        %7670 = vmatpush1.xpose.msra.mxu0 %v7541
        %7671 = vmatprep.subr.mxu0 %v7544
        %7672 = vmatpush1.xpose.msra.mxu0 %v7543
        %7673 = vmatprep.subr.mxu0 %v7546
        %7674 = vmatpush1.xpose.msra.mxu0 %v7545
        %7675 = vmatprep.subr.mxu0 %v7548
        %7676 = vmatpush1.xpose.msra.mxu0 %v7547
        %7677 = vmatprep.subr.mxu0 %v7550
        %7678 = vmatpush1.xpose.msra.mxu0 %v7549
        %7679 = vmatprep.subr.mxu0 %v7552
        %7680 = vmatpush1.xpose.msra.mxu0 %v7551
        %7681 = vmatprep.subr.mxu0 %v7554
        %7682 = vmatpush1.xpose.msra.mxu0 %v7553
        %7683 = vmatprep.subr.mxu0 %v7556
        %7684 = vmatpush1.xpose.msra.mxu0 %v7555
        %7685 = vmatprep.subr.mxu0 %v7558
        %7686 = vmatpush1.xpose.msra.mxu0 %v7557
        %7687 = vmatprep.subr.mxu0 %v7560
        %7688 = vmatpush1.xpose.msra.mxu0 %v7559
        %7689 = vmatprep.subr.mxu0 %v7562
        %7690 = vmatpush1.xpose.msra.mxu0 %v7561
        %7691 = vmatprep.subr.mxu0 %v7564
        %7692 = vmatpush1.xpose.msra.mxu0 %v7563
        %7693 = vmatprep.subr.mxu0 %v7566
        %7694 = vmatpush1.xpose.msra.mxu0 %v7565
        %7695 = vmatprep.subr.mxu0 0.0
        %7696 = vmatpush1.xpose.msra.mxu0 0.0
        %7697 = vmatprep.subr.mxu0 0.0
        %7698 = vmatpush1.xpose.msra.mxu0 0.0
        %7699 = vmatprep.subr.mxu0 0.0
        %7700 = vmatpush1.xpose.msra.mxu0 0.0
        %7701 = vmatprep.subr.mxu0 0.0
        %7702 = vmatpush1.xpose.msra.mxu0 0.0
        %7703 = vmatprep.subr.mxu0 0.0
        %7704 = vmatpush1.xpose.msra.mxu0 0.0
        %7705 = vmatprep.subr.mxu0 0.0
        %7706 = vmatpush1.xpose.msra.mxu0 0.0
        %7707 = vmatprep.subr.mxu0 0.0
        %7708 = vmatpush1.xpose.msra.mxu0 0.0
        %7709 = vmatprep.subr.mxu0 0.0
        %7710 = vmatpush1.xpose.msra.mxu0 0.0
        %7711 = vmatprep.subr.mxu0 0.0
        %7712 = vmatpush1.xpose.msra.mxu0 0.0
        %7713 = vmatprep.subr.mxu0 0.0
        %7714 = vmatpush1.xpose.msra.mxu0 0.0
        %7715 = vmatprep.subr.mxu0 0.0
        %7716 = vmatpush1.xpose.msra.mxu0 0.0
        %7717 = vmatprep.subr.mxu0 0.0
        %7718 = vmatpush1.xpose.msra.mxu0 0.0
        %7719 = vmatprep.subr.mxu0 0.0
        %7720 = vmatpush1.xpose.msra.mxu0 0.0
        %7721 = vmatprep.subr.mxu0 0.0
        %7722 = vmatpush1.xpose.msra.mxu0 0.0
        %7723 = vmatprep.subr.mxu0 0.0
        %7724 = vmatpush1.xpose.msra.mxu0 0.0
        %7725 = vmatprep.subr.mxu0 0.0
        %7726 = vmatpush1.xpose.msra.mxu0 0.0
        %7727 = vmatprep.mubr.f32.mxu0 %v7488
        %7728 = vmatmul.mubr.f32.gmra.mrb[0].mxu0 %v7487
        %v7729 = vpop.f32.mrb[0].mxu0
        %v7730 = vadd.f32 0.0, %v7729
        %v7731 = vpop.f32.mrb[0].mxu0
        %7732 = vmatprep.mubr.f32.mxu0 %v7490
        %7733 = vmatmul.mubr.f32.gmra.mrb[0].mxu0 %v7489
        %v7734 = vpop.f32.mrb[0].mxu0
        %v7735 = vadd.f32 0.0, %v7734
        %v7736 = vpop.f32.mrb[0].mxu0
        %7737 = vdwg.mxu0
        %7738 = vmatprep.subr.mxu0 %v7600
        %7739 = vmatpush1.xpose.msra.mxu0 %v7599
        %7740 = vmatprep.subr.mxu0 %v7602
        %7741 = vmatpush1.xpose.msra.mxu0 %v7601
        %7742 = vmatprep.subr.mxu0 %v7604
        %7743 = vmatpush1.xpose.msra.mxu0 %v7603
        %7744 = vmatprep.subr.mxu0 %v7606
        %7745 = vmatpush1.xpose.msra.mxu0 %v7605
        %7746 = vmatprep.subr.mxu0 %v7608
        %7747 = vmatpush1.xpose.msra.mxu0 %v7607
        %7748 = vmatprep.subr.mxu0 %v7610
        %7749 = vmatpush1.xpose.msra.mxu0 %v7609
        %7750 = vmatprep.subr.mxu0 %v7612
        %7751 = vmatpush1.xpose.msra.mxu0 %v7611
        %7752 = vmatprep.subr.mxu0 %v7614
        %7753 = vmatpush1.xpose.msra.mxu0 %v7613
        %7754 = vmatprep.subr.mxu0 %v7616
        %7755 = vmatpush1.xpose.msra.mxu0 %v7615
        %7756 = vmatprep.subr.mxu0 %v7618
        %7757 = vmatpush1.xpose.msra.mxu0 %v7617
        %7758 = vmatprep.subr.mxu0 %v7620
        %7759 = vmatpush1.xpose.msra.mxu0 %v7619
        %7760 = vmatprep.subr.mxu0 %v7622
        %7761 = vmatpush1.xpose.msra.mxu0 %v7621
        %7762 = vmatprep.subr.mxu0 %v7624
        %7763 = vmatpush1.xpose.msra.mxu0 %v7623
        %7764 = vmatprep.subr.mxu0 %v7626
        %7765 = vmatpush1.xpose.msra.mxu0 %v7625
        %7766 = vmatprep.subr.mxu0 %v7628
        %7767 = vmatpush1.xpose.msra.mxu0 %v7627
        %7768 = vmatprep.subr.mxu0 %v7630
        %7769 = vmatpush1.xpose.msra.mxu0 %v7629
        %7770 = vmatprep.subr.mxu0 0.0
        %7771 = vmatpush1.xpose.msra.mxu0 0.0
        %7772 = vmatprep.subr.mxu0 0.0
        %7773 = vmatpush1.xpose.msra.mxu0 0.0
        %7774 = vmatprep.subr.mxu0 0.0
        %7775 = vmatpush1.xpose.msra.mxu0 0.0
        %7776 = vmatprep.subr.mxu0 0.0
        %7777 = vmatpush1.xpose.msra.mxu0 0.0
        %7778 = vmatprep.subr.mxu0 0.0
        %7779 = vmatpush1.xpose.msra.mxu0 0.0
        %7780 = vmatprep.subr.mxu0 0.0
        %7781 = vmatpush1.xpose.msra.mxu0 0.0
        %7782 = vmatprep.subr.mxu0 0.0
        %7783 = vmatpush1.xpose.msra.mxu0 0.0
        %7784 = vmatprep.subr.mxu0 0.0
        %7785 = vmatpush1.xpose.msra.mxu0 0.0
        %7786 = vmatprep.subr.mxu0 0.0
        %7787 = vmatpush1.xpose.msra.mxu0 0.0
        %7788 = vmatprep.subr.mxu0 0.0
        %7789 = vmatpush1.xpose.msra.mxu0 0.0
        %7790 = vmatprep.subr.mxu0 0.0
        %7791 = vmatpush1.xpose.msra.mxu0 0.0
        %7792 = vmatprep.subr.mxu0 0.0
        %7793 = vmatpush1.xpose.msra.mxu0 0.0
        %7794 = vmatprep.subr.mxu0 0.0
        %7795 = vmatpush1.xpose.msra.mxu0 0.0
        %7796 = vmatprep.subr.mxu0 0.0
        %7797 = vmatpush1.xpose.msra.mxu0 0.0
        %7798 = vmatprep.subr.mxu0 0.0
        %7799 = vmatpush1.xpose.msra.mxu0 0.0
        %7800 = vmatprep.subr.mxu0 0.0
        %7801 = vmatpush1.xpose.msra.mxu0 0.0
        %7802 = vmatprep.mubr.f32.mxu0 %v7492
        %7803 = vmatmul.mubr.f32.gmra.mrb[0].mxu0 %v7491
        %v7804 = vpop.f32.mrb[0].mxu0
        %v7805 = vadd.f32 0.0, %v7804
        %v7806 = vpop.f32.mrb[0].mxu0
        %7807 = vmatprep.mubr.f32.mxu0 %v7494
        %7808 = vmatmul.mubr.f32.gmra.mrb[0].mxu0 %v7493
        %v7809 = vpop.f32.mrb[0].mxu0
        %v7810 = vadd.f32 0.0, %v7809
        %v7811 = vpop.f32.mrb[0].mxu0
        %7812 = vdwg.mxu0
        %v7813 = vmul.f32 %v7730, 1.442695
        %v7814 = vpow.pop %v7813
        %v7815 = vmul.f32 %v7735, 1.442695
        %v7816 = vpow.pop %v7815
        %v7817 = vmul.f32 %v7805, 1.442695
        %v7818 = vpow.pop %v7817
        %v7819 = vmul.f32 %v7810, 1.442695
        %v7820 = vpow.pop %v7819
        %v7821 = vld [vmem:[#allocation14] sm:$0xff]
        %v7822 = vld [vmem:[#allocation14 + $0x8] sm:$0xff]
        %v7823 = vld [vmem:[#allocation14 + $0x10] sm:$0xff]
        %v7824 = vld [vmem:[#allocation14 + $0x18] sm:$0xff]
        %v7825 = vld [vmem:[#allocation14 + $0x20] sm:$0xff]
        %v7826 = vld [vmem:[#allocation14 + $0x28] sm:$0xff]
        %v7827 = vld [vmem:[#allocation14 + $0x30] sm:$0xff]
        %v7828 = vld [vmem:[#allocation14 + $0x38] sm:$0xff]
        %v7829 = vld [vmem:[#allocation14 + $0x40] sm:$0xff]
        %v7830 = vld [vmem:[#allocation14 + $0x48] sm:$0xff]
        %v7831 = vld [vmem:[#allocation14 + $0x50] sm:$0xff]
        %v7832 = vld [vmem:[#allocation14 + $0x58] sm:$0xff]
        %v7833 = vld [vmem:[#allocation14 + $0x60] sm:$0xff]
        %v7834 = vld [vmem:[#allocation14 + $0x68] sm:$0xff]
        %v7835 = vld [vmem:[#allocation14 + $0x70] sm:$0xff]
        %v7836 = vld [vmem:[#allocation14 + $0x78] sm:$0xff]
        %7837 = vmatprep.subr.mxu0 0.0
        %7838 = vmatpush1.msra.mxu0 %v7821
        %7839 = vmatprep.subr.mxu0 0.0
        %7840 = vmatpush1.msra.mxu0 %v7822
        %7841 = vmatprep.subr.mxu0 0.0
        %7842 = vmatpush1.msra.mxu0 %v7823
        %7843 = vmatprep.subr.mxu0 0.0
        %7844 = vmatpush1.msra.mxu0 %v7824
        %7845 = vmatprep.subr.mxu0 0.0
        %7846 = vmatpush1.msra.mxu0 %v7825
        %7847 = vmatprep.subr.mxu0 0.0
        %7848 = vmatpush1.msra.mxu0 %v7826
        %7849 = vmatprep.subr.mxu0 0.0
        %7850 = vmatpush1.msra.mxu0 %v7827
        %7851 = vmatprep.subr.mxu0 0.0
        %7852 = vmatpush1.msra.mxu0 %v7828
        %7853 = vmatprep.subr.mxu0 0.0
        %7854 = vmatpush1.msra.mxu0 %v7829
        %7855 = vmatprep.subr.mxu0 0.0
        %7856 = vmatpush1.msra.mxu0 %v7830
        %7857 = vmatprep.subr.mxu0 0.0
        %7858 = vmatpush1.msra.mxu0 %v7831
        %7859 = vmatprep.subr.mxu0 0.0
        %7860 = vmatpush1.msra.mxu0 %v7832
        %7861 = vmatprep.subr.mxu0 0.0
        %7862 = vmatpush1.msra.mxu0 %v7833
        %7863 = vmatprep.subr.mxu0 0.0
        %7864 = vmatpush1.msra.mxu0 %v7834
        %7865 = vmatprep.subr.mxu0 0.0
        %7866 = vmatpush1.msra.mxu0 %v7835
        %7867 = vmatprep.subr.mxu0 0.0
        %7868 = vmatpush1.msra.mxu0 %v7836
        %7869 = vmatprep.subr.mxu0 0.0
        %7870 = vmatpush1.msra.mxu0 0.0
        %7871 = vmatprep.subr.mxu0 0.0
        %7872 = vmatpush1.msra.mxu0 0.0
        %7873 = vmatprep.subr.mxu0 0.0
        %7874 = vmatpush1.msra.mxu0 0.0
        %7875 = vmatprep.subr.mxu0 0.0
        %7876 = vmatpush1.msra.mxu0 0.0
        %7877 = vmatprep.subr.mxu0 0.0
        %7878 = vmatpush1.msra.mxu0 0.0
        %7879 = vmatprep.subr.mxu0 0.0
        %7880 = vmatpush1.msra.mxu0 0.0
        %7881 = vmatprep.subr.mxu0 0.0
        %7882 = vmatpush1.msra.mxu0 0.0
        %7883 = vmatprep.subr.mxu0 0.0
        %7884 = vmatpush1.msra.mxu0 0.0
        %7885 = vmatprep.subr.mxu0 0.0
        %7886 = vmatpush1.msra.mxu0 0.0
        %7887 = vmatprep.subr.mxu0 0.0
        %7888 = vmatpush1.msra.mxu0 0.0
        %7889 = vmatprep.subr.mxu0 0.0
        %7890 = vmatpush1.msra.mxu0 0.0
        %7891 = vmatprep.subr.mxu0 0.0
        %7892 = vmatpush1.msra.mxu0 0.0
        %7893 = vmatprep.subr.mxu0 0.0
        %7894 = vmatpush1.msra.mxu0 0.0
        %7895 = vmatprep.subr.mxu0 0.0
        %7896 = vmatpush1.msra.mxu0 0.0
        %7897 = vmatprep.subr.mxu0 0.0
        %7898 = vmatpush1.msra.mxu0 0.0
        %7899 = vmatprep.subr.mxu0 0.0
        %7900 = vmatpush1.msra.mxu0 0.0
        %7901 = vmatprep.mubr.f32.mxu0 0.0
        %7902 = vmatmul.mubr.f32.gmra.mrb[0].mxu0 %v7814
        %v7903 = vpop.f32.mrb[0].mxu0
        %v7904 = vadd.f32 0.0, %v7903
        %v7905 = vpop.f32.mrb[0].mxu0
        %7906 = vmatprep.mubr.f32.mxu0 0.0
        %7907 = vmatmul.mubr.f32.gmra.mrb[0].mxu0 %v7816
        %v7908 = vpop.f32.mrb[0].mxu0
        %v7909 = vadd.f32 0.0, %v7908
        %v7910 = vpop.f32.mrb[0].mxu0
        %7911 = vmatprep.mubr.f32.mxu0 0.0
        %7912 = vmatmul.mubr.f32.gmra.mrb[0].mxu0 %v7818
        %v7913 = vpop.f32.mrb[0].mxu0
        %v7914 = vadd.f32 0.0, %v7913
        %v7915 = vpop.f32.mrb[0].mxu0
        %7916 = vmatprep.mubr.f32.mxu0 0.0
        %7917 = vmatmul.mubr.f32.gmra.mrb[0].mxu0 %v7820
        %v7918 = vpop.f32.mrb[0].mxu0
        %v7919 = vadd.f32 0.0, %v7918
        %v7920 = vpop.f32.mrb[0].mxu0
        %7921 = vdwg.mxu0
        %v7922 = vrcp.pop %v7904
        %v7923 = vrcp.pop %v7909
        %v7924 = vrcp.pop %v7914
        %v7925 = vrcp.pop %v7919
        %v7926 = vmul.f32 %v7814, %v7922
        %v7927 = vmul.f32 %v7816, %v7923
        %v7928 = vmul.f32 %v7818, %v7924
        %v7929 = vmul.f32 %v7820, %v7925
        %7930 = vmatprep.subr.mxu0 %v7568
        %7931 = vmatpush1.msra.mxu0 %v7567
        %7932 = vmatprep.subr.mxu0 %v7570
        %7933 = vmatpush1.msra.mxu0 %v7569
        %7934 = vmatprep.subr.mxu0 %v7572
        %7935 = vmatpush1.msra.mxu0 %v7571
        %7936 = vmatprep.subr.mxu0 %v7574
        %7937 = vmatpush1.msra.mxu0 %v7573
        %7938 = vmatprep.subr.mxu0 %v7576
        %7939 = vmatpush1.msra.mxu0 %v7575
        %7940 = vmatprep.subr.mxu0 %v7578
        %7941 = vmatpush1.msra.mxu0 %v7577
        %7942 = vmatprep.subr.mxu0 %v7580
        %7943 = vmatpush1.msra.mxu0 %v7579
        %7944 = vmatprep.subr.mxu0 %v7582
        %7945 = vmatpush1.msra.mxu0 %v7581
        %7946 = vmatprep.subr.mxu0 %v7584
        %7947 = vmatpush1.msra.mxu0 %v7583
        %7948 = vmatprep.subr.mxu0 %v7586
        %7949 = vmatpush1.msra.mxu0 %v7585
        %7950 = vmatprep.subr.mxu0 %v7588
        %7951 = vmatpush1.msra.mxu0 %v7587
        %7952 = vmatprep.subr.mxu0 %v7590
        %7953 = vmatpush1.msra.mxu0 %v7589
        %7954 = vmatprep.subr.mxu0 %v7592
        %7955 = vmatpush1.msra.mxu0 %v7591
        %7956 = vmatprep.subr.mxu0 %v7594
        %7957 = vmatpush1.msra.mxu0 %v7593
        %7958 = vmatprep.subr.mxu0 %v7596
        %7959 = vmatpush1.msra.mxu0 %v7595
        %7960 = vmatprep.subr.mxu0 %v7598
        %7961 = vmatpush1.msra.mxu0 %v7597
        %7962 = vmatprep.subr.mxu0 0.0
        %7963 = vmatpush1.msra.mxu0 0.0
        %7964 = vmatprep.subr.mxu0 0.0
        %7965 = vmatpush1.msra.mxu0 0.0
        %7966 = vmatprep.subr.mxu0 0.0
        %7967 = vmatpush1.msra.mxu0 0.0
        %7968 = vmatprep.subr.mxu0 0.0
        %7969 = vmatpush1.msra.mxu0 0.0
        %7970 = vmatprep.subr.mxu0 0.0
        %7971 = vmatpush1.msra.mxu0 0.0
        %7972 = vmatprep.subr.mxu0 0.0
        %7973 = vmatpush1.msra.mxu0 0.0
        %7974 = vmatprep.subr.mxu0 0.0
        %7975 = vmatpush1.msra.mxu0 0.0
        %7976 = vmatprep.subr.mxu0 0.0
        %7977 = vmatpush1.msra.mxu0 0.0
        %7978 = vmatprep.subr.mxu0 0.0
        %7979 = vmatpush1.msra.mxu0 0.0
        %7980 = vmatprep.subr.mxu0 0.0
        %7981 = vmatpush1.msra.mxu0 0.0
        %7982 = vmatprep.subr.mxu0 0.0
        %7983 = vmatpush1.msra.mxu0 0.0
        %7984 = vmatprep.subr.mxu0 0.0
        %7985 = vmatpush1.msra.mxu0 0.0
        %7986 = vmatprep.subr.mxu0 0.0
        %7987 = vmatpush1.msra.mxu0 0.0
        %7988 = vmatprep.subr.mxu0 0.0
        %7989 = vmatpush1.msra.mxu0 0.0
        %7990 = vmatprep.subr.mxu0 0.0
        %7991 = vmatpush1.msra.mxu0 0.0
        %7992 = vmatprep.subr.mxu0 0.0
        %7993 = vmatpush1.msra.mxu0 0.0
        %7994 = vmatprep.mubr.f32.mxu0 0.0
        %7995 = vmatmul.mubr.f32.gmra.mrb[0].mxu0 %v7926
        %v7996 = vpop.f32.mrb[0].mxu0
        %v7997 = vadd.f32 %v7487, %v7996
        %v7998 = vpop.f32.mrb[0].mxu0
        %v7999 = vadd.f32 %v7488, %v7998
        %8000 = vmatprep.mubr.f32.mxu0 0.0
        %8001 = vmatmul.mubr.f32.gmra.mrb[0].mxu0 %v7927
        %v8002 = vpop.f32.mrb[0].mxu0
        %v8003 = vadd.f32 %v7489, %v8002
        %v8004 = vpop.f32.mrb[0].mxu0
        %v8005 = vadd.f32 %v7490, %v8004
        %8006 = vdwg.mxu0
        %8007 = vmatprep.subr.mxu0 %v7632
        %8008 = vmatpush1.msra.mxu0 %v7631
        %8009 = vmatprep.subr.mxu0 %v7634
        %8010 = vmatpush1.msra.mxu0 %v7633
        %8011 = vmatprep.subr.mxu0 %v7636
        %8012 = vmatpush1.msra.mxu0 %v7635
        %8013 = vmatprep.subr.mxu0 %v7638
        %8014 = vmatpush1.msra.mxu0 %v7637
        %8015 = vmatprep.subr.mxu0 %v7640
        %8016 = vmatpush1.msra.mxu0 %v7639
        %8017 = vmatprep.subr.mxu0 %v7642
        %8018 = vmatpush1.msra.mxu0 %v7641
        %8019 = vmatprep.subr.mxu0 %v7644
        %8020 = vmatpush1.msra.mxu0 %v7643
        %8021 = vmatprep.subr.mxu0 %v7646
        %8022 = vmatpush1.msra.mxu0 %v7645
        %8023 = vmatprep.subr.mxu0 %v7648
        %8024 = vmatpush1.msra.mxu0 %v7647
        %8025 = vmatprep.subr.mxu0 %v7650
        %8026 = vmatpush1.msra.mxu0 %v7649
        %8027 = vmatprep.subr.mxu0 %v7652
        %8028 = vmatpush1.msra.mxu0 %v7651
        %8029 = vmatprep.subr.mxu0 %v7654
        %8030 = vmatpush1.msra.mxu0 %v7653
        %8031 = vmatprep.subr.mxu0 %v7656
        %8032 = vmatpush1.msra.mxu0 %v7655
        %8033 = vmatprep.subr.mxu0 %v7658
        %8034 = vmatpush1.msra.mxu0 %v7657
        %8035 = vmatprep.subr.mxu0 %v7660
        %8036 = vmatpush1.msra.mxu0 %v7659
        %8037 = vmatprep.subr.mxu0 %v7662
        %8038 = vmatpush1.msra.mxu0 %v7661
        %8039 = vmatprep.subr.mxu0 0.0
        %8040 = vmatpush1.msra.mxu0 0.0
        %8041 = vmatprep.subr.mxu0 0.0
        %8042 = vmatpush1.msra.mxu0 0.0
        %8043 = vmatprep.subr.mxu0 0.0
        %8044 = vmatpush1.msra.mxu0 0.0
        %8045 = vmatprep.subr.mxu0 0.0
        %8046 = vmatpush1.msra.mxu0 0.0
        %8047 = vmatprep.subr.mxu0 0.0
        %8048 = vmatpush1.msra.mxu0 0.0
        %8049 = vmatprep.subr.mxu0 0.0
        %8050 = vmatpush1.msra.mxu0 0.0
        %8051 = vmatprep.subr.mxu0 0.0
        %8052 = vmatpush1.msra.mxu0 0.0
        %8053 = vmatprep.subr.mxu0 0.0
        %8054 = vmatpush1.msra.mxu0 0.0
        %8055 = vmatprep.subr.mxu0 0.0
        %8056 = vmatpush1.msra.mxu0 0.0
        %8057 = vmatprep.subr.mxu0 0.0
        %8058 = vmatpush1.msra.mxu0 0.0
        %8059 = vmatprep.subr.mxu0 0.0
        %8060 = vmatpush1.msra.mxu0 0.0
        %8061 = vmatprep.subr.mxu0 0.0
        %8062 = vmatpush1.msra.mxu0 0.0
        %8063 = vmatprep.subr.mxu0 0.0
        %8064 = vmatpush1.msra.mxu0 0.0
        %8065 = vmatprep.subr.mxu0 0.0
        %8066 = vmatpush1.msra.mxu0 0.0
        %8067 = vmatprep.subr.mxu0 0.0
        %8068 = vmatpush1.msra.mxu0 0.0
        %8069 = vmatprep.subr.mxu0 0.0
        %8070 = vmatpush1.msra.mxu0 0.0
        %8071 = vmatprep.mubr.f32.mxu0 0.0
        %8072 = vmatmul.mubr.f32.gmra.mrb[0].mxu0 %v7928
        %v8073 = vpop.f32.mrb[0].mxu0
        %v8074 = vadd.f32 %v7491, %v8073
        %v8075 = vpop.f32.mrb[0].mxu0
        %v8076 = vadd.f32 %v7492, %v8075
        %8077 = vmatprep.mubr.f32.mxu0 0.0
        %8078 = vmatmul.mubr.f32.gmra.mrb[0].mxu0 %v7929
        %v8079 = vpop.f32.mrb[0].mxu0
        %v8080 = vadd.f32 %v7493, %v8079
        %v8081 = vpop.f32.mrb[0].mxu0
        %v8082 = vadd.f32 %v7494, %v8081
        %8083 = vdwg.mxu0
        %v8084 = vld [vmem:[#allocation16] sm:$0xff]
        %v8085 = vld [vmem:[#allocation16 + $0x8] sm:$0xff]
        %v8086 = vld [vmem:[#allocation16 + $0x10] sm:$0xff]
        %v8087 = vld [vmem:[#allocation16 + $0x18] sm:$0xff]
        %v8088 = vld [vmem:[#allocation16 + $0x20] sm:$0xff]
        %v8089 = vld [vmem:[#allocation16 + $0x28] sm:$0xff]
        %v8090 = vld [vmem:[#allocation16 + $0x30] sm:$0xff]
        %v8091 = vld [vmem:[#allocation16 + $0x38] sm:$0xff]
        %v8092 = vld [vmem:[#allocation16 + $0x40] sm:$0xff]
        %v8093 = vld [vmem:[#allocation16 + $0x48] sm:$0xff]
        %v8094 = vld [vmem:[#allocation16 + $0x50] sm:$0xff]
        %v8095 = vld [vmem:[#allocation16 + $0x58] sm:$0xff]
        %v8096 = vld [vmem:[#allocation16 + $0x60] sm:$0xff]
        %v8097 = vld [vmem:[#allocation16 + $0x68] sm:$0xff]
        %v8098 = vld [vmem:[#allocation16 + $0x70] sm:$0xff]
        %v8099 = vld [vmem:[#allocation16 + $0x78] sm:$0xff]
        %v8100 = vld [vmem:[#allocation16 + $0x80] sm:$0xff]
        %v8101 = vld [vmem:[#allocation16 + $0x88] sm:$0xff]
        %v8102 = vld [vmem:[#allocation16 + $0x90] sm:$0xff]
        %v8103 = vld [vmem:[#allocation16 + $0x98] sm:$0xff]
        %v8104 = vld [vmem:[#allocation16 + $0xa0] sm:$0xff]
        %v8105 = vld [vmem:[#allocation16 + $0xa8] sm:$0xff]
        %v8106 = vld [vmem:[#allocation16 + $0xb0] sm:$0xff]
        %v8107 = vld [vmem:[#allocation16 + $0xb8] sm:$0xff]
        %v8108 = vld [vmem:[#allocation16 + $0xc0] sm:$0xff]
        %v8109 = vld [vmem:[#allocation16 + $0xc8] sm:$0xff]
        %v8110 = vld [vmem:[#allocation16 + $0xd0] sm:$0xff]
        %v8111 = vld [vmem:[#allocation16 + $0xd8] sm:$0xff]
        %v8112 = vld [vmem:[#allocation16 + $0xe0] sm:$0xff]
        %v8113 = vld [vmem:[#allocation16 + $0xe8] sm:$0xff]
        %v8114 = vld [vmem:[#allocation16 + $0xf0] sm:$0xff]
        %v8115 = vld [vmem:[#allocation16 + $0xf8] sm:$0xff]
        %v8116 = vld [vmem:[#allocation16 + $0x100] sm:$0xff]
        %v8117 = vld [vmem:[#allocation16 + $0x108] sm:$0xff]
        %v8118 = vld [vmem:[#allocation16 + $0x110] sm:$0xff]
        %v8119 = vld [vmem:[#allocation16 + $0x118] sm:$0xff]
        %v8120 = vld [vmem:[#allocation16 + $0x120] sm:$0xff]
        %v8121 = vld [vmem:[#allocation16 + $0x128] sm:$0xff]
        %v8122 = vld [vmem:[#allocation16 + $0x130] sm:$0xff]
        %v8123 = vld [vmem:[#allocation16 + $0x138] sm:$0xff]
        %v8124 = vld [vmem:[#allocation16 + $0x140] sm:$0xff]
        %v8125 = vld [vmem:[#allocation16 + $0x148] sm:$0xff]
        %v8126 = vld [vmem:[#allocation16 + $0x150] sm:$0xff]
        %v8127 = vld [vmem:[#allocation16 + $0x158] sm:$0xff]
        %v8128 = vld [vmem:[#allocation16 + $0x160] sm:$0xff]
        %v8129 = vld [vmem:[#allocation16 + $0x168] sm:$0xff]
        %v8130 = vld [vmem:[#allocation16 + $0x170] sm:$0xff]
        %v8131 = vld [vmem:[#allocation16 + $0x178] sm:$0xff]
        %v8132 = vld [vmem:[#allocation16 + $0x180] sm:$0xff]
        %v8133 = vld [vmem:[#allocation16 + $0x188] sm:$0xff]
        %v8134 = vld [vmem:[#allocation16 + $0x190] sm:$0xff]
        %v8135 = vld [vmem:[#allocation16 + $0x198] sm:$0xff]
        %v8136 = vld [vmem:[#allocation16 + $0x1a0] sm:$0xff]
        %v8137 = vld [vmem:[#allocation16 + $0x1a8] sm:$0xff]
        %v8138 = vld [vmem:[#allocation16 + $0x1b0] sm:$0xff]
        %v8139 = vld [vmem:[#allocation16 + $0x1b8] sm:$0xff]
        %v8140 = vld [vmem:[#allocation16 + $0x1c0] sm:$0xff]
        %v8141 = vld [vmem:[#allocation16 + $0x1c8] sm:$0xff]
        %v8142 = vld [vmem:[#allocation16 + $0x1d0] sm:$0xff]
        %v8143 = vld [vmem:[#allocation16 + $0x1d8] sm:$0xff]
        %v8144 = vld [vmem:[#allocation16 + $0x1e0] sm:$0xff]
        %v8145 = vld [vmem:[#allocation16 + $0x1e8] sm:$0xff]
        %v8146 = vld [vmem:[#allocation16 + $0x1f0] sm:$0xff]
        %v8147 = vld [vmem:[#allocation16 + $0x1f8] sm:$0xff]
        %v8148 = vld [vmem:[%s11] sm:$0x3]
        %v8150 = vlaneseq
        %v8151 = vshrl.u32 %v8150, 7
        %v8152 = vsub.s32 0, %v8151
        %v8153 = vrot.slane %v8148, %v8152
        %v8154 = vlaneseq
        %v8155 = vshrl.u32 %v8154, 7
        %v8156 = vsub.s32 1, %v8155
        %v8157 = vrot.slane %v8148, %v8156
        %8160 = vmatprep.subr.mxu0 %v8085
        %8161 = vmatpush1.msra.mxu0 %v8084
        %8162 = vmatprep.subr.mxu0 %v8087
        %8163 = vmatpush1.msra.mxu0 %v8086
        %8164 = vmatprep.subr.mxu0 %v8089
        %8165 = vmatpush1.msra.mxu0 %v8088
        %8166 = vmatprep.subr.mxu0 %v8091
        %8167 = vmatpush1.msra.mxu0 %v8090
        %8168 = vmatprep.subr.mxu0 %v8093
        %8169 = vmatpush1.msra.mxu0 %v8092
        %8170 = vmatprep.subr.mxu0 %v8095
        %8171 = vmatpush1.msra.mxu0 %v8094
        %8172 = vmatprep.subr.mxu0 %v8097
        %8173 = vmatpush1.msra.mxu0 %v8096
        %8174 = vmatprep.subr.mxu0 %v8099
        %8175 = vmatpush1.msra.mxu0 %v8098
        %8176 = vmatprep.subr.mxu0 %v8101
        %8177 = vmatpush1.msra.mxu0 %v8100
        %8178 = vmatprep.subr.mxu0 %v8103
        %8179 = vmatpush1.msra.mxu0 %v8102
        %8180 = vmatprep.subr.mxu0 %v8105
        %8181 = vmatpush1.msra.mxu0 %v8104
        %8182 = vmatprep.subr.mxu0 %v8107
        %8183 = vmatpush1.msra.mxu0 %v8106
        %8184 = vmatprep.subr.mxu0 %v8109
        %8185 = vmatpush1.msra.mxu0 %v8108
        %8186 = vmatprep.subr.mxu0 %v8111
        %8187 = vmatpush1.msra.mxu0 %v8110
        %8188 = vmatprep.subr.mxu0 %v8113
        %8189 = vmatpush1.msra.mxu0 %v8112
        %8190 = vmatprep.subr.mxu0 %v8115
        %8191 = vmatpush1.msra.mxu0 %v8114
        %8192 = vmatprep.subr.mxu0 %v8117
        %8193 = vmatpush1.msra.mxu0 %v8116
        %8194 = vmatprep.subr.mxu0 %v8119
        %8195 = vmatpush1.msra.mxu0 %v8118
        %8196 = vmatprep.subr.mxu0 %v8121
        %8197 = vmatpush1.msra.mxu0 %v8120
        %8198 = vmatprep.subr.mxu0 %v8123
        %8199 = vmatpush1.msra.mxu0 %v8122
        %8200 = vmatprep.subr.mxu0 %v8125
        %8201 = vmatpush1.msra.mxu0 %v8124
        %8202 = vmatprep.subr.mxu0 %v8127
        %8203 = vmatpush1.msra.mxu0 %v8126
        %8204 = vmatprep.subr.mxu0 %v8129
        %8205 = vmatpush1.msra.mxu0 %v8128
        %8206 = vmatprep.subr.mxu0 %v8131
        %8207 = vmatpush1.msra.mxu0 %v8130
        %8208 = vmatprep.subr.mxu0 %v8133
        %8209 = vmatpush1.msra.mxu0 %v8132
        %8210 = vmatprep.subr.mxu0 %v8135
        %8211 = vmatpush1.msra.mxu0 %v8134
        %8212 = vmatprep.subr.mxu0 %v8137
        %8213 = vmatpush1.msra.mxu0 %v8136
        %8214 = vmatprep.subr.mxu0 %v8139
        %8215 = vmatpush1.msra.mxu0 %v8138
        %8216 = vmatprep.subr.mxu0 %v8141
        %8217 = vmatpush1.msra.mxu0 %v8140
        %8218 = vmatprep.subr.mxu0 %v8143
        %8219 = vmatpush1.msra.mxu0 %v8142
        %8220 = vmatprep.subr.mxu0 %v8145
        %8221 = vmatpush1.msra.mxu0 %v8144
        %8222 = vmatprep.subr.mxu0 %v8147
        %8223 = vmatpush1.msra.mxu0 %v8146
        %8224 = vmatprep.mubr.f32.mxu0 %v7999
        %8225 = vmatmul.mubr.f32.gmra.mrb[0].mxu0 %v7997
        %v8226 = vpop.f32.mrb[0].mxu0
        %v8227 = vadd.f32 %v8153, %v8226
        %v8228 = vpop.f32.mrb[0].mxu0
        %v8229 = vadd.f32 %v8157, %v8228
        %8230 = vmatprep.mubr.f32.mxu0 %v8005
        %8231 = vmatmul.mubr.f32.gmra.mrb[0].mxu0 %v8003
        %v8232 = vpop.f32.mrb[0].mxu0
        %v8233 = vadd.f32 %v8153, %v8232
        %v8234 = vpop.f32.mrb[0].mxu0
        %v8235 = vadd.f32 %v8157, %v8234
        %8236 = vmatprep.mubr.f32.mxu0 %v8076
        %8237 = vmatmul.mubr.f32.gmra.mrb[0].mxu0 %v8074
        %v8238 = vpop.f32.mrb[0].mxu0
        %v8239 = vadd.f32 %v8153, %v8238
        %v8240 = vpop.f32.mrb[0].mxu0
        %v8241 = vadd.f32 %v8157, %v8240
        %8242 = vmatprep.mubr.f32.mxu0 %v8082
        %8243 = vmatmul.mubr.f32.gmra.mrb[0].mxu0 %v8080
        %v8244 = vpop.f32.mrb[0].mxu0
        %v8245 = vadd.f32 %v8153, %v8244
        %v8246 = vpop.f32.mrb[0].mxu0
        %v8247 = vadd.f32 %v8157, %v8246
        %8248 = vdwg.mxu0
        %8249 = vst [vmem:[%s603] sm:$0xff] %v8227
        %8250 = vst [vmem:[%s603 + $0x8] sm:$0xff] %v8229
        %8251 = vst [vmem:[%s603 + $0x10] sm:$0xff] %v8233
        %8252 = vst [vmem:[%s603 + $0x18] sm:$0xff] %v8235
        %8253 = vst [vmem:[%s610] sm:$0xff] %v8239
        %8254 = vst [vmem:[%s610 + $0x8] sm:$0xff] %v8241
        %8255 = vst [vmem:[%s610 + $0x10] sm:$0xff] %v8245
        %8256 = vst [vmem:[%s610 + $0x18] sm:$0xff] %v8247
        %s8257 = sand.u32 %s310, 1
        %s8258 = scalar_lea.sflag [#allocation4], %s8257
        %s8259 = sand.u32 %s310, 1
        %s8260 = smul.addr %s8259, 32
        %s8261 = scalar_lea.vmem [#allocation17], %s8260
        %s8262 = sand.u32 %s336, 1
        %s8263 = scalar_lea.sflag [#allocation19], %s8262
        %s8264 = sand.u32 %s336, 1
        %s8265 = smul.addr %s8264, 32
        %s8266 = scalar_lea.vmem [#allocation18], %s8265
        // Predicated region
        $region105: #{tpu_custom_call.1} parent=67 // pred_check
          %p8267 = pneg %p320
        $region106: #{tpu_custom_call.1} parent=67 // pred_check_branch
          %8269 = sbr.rel (%p8267) target = $region108
        $region107: #{tpu_custom_call.1} parent=67 // pred_region
          %s8271 = ssub.s32 512, 512
          %8272 = vsyncadd %s8258, %s8271
          %s8273 = smul.addr %s40, 4
          %s8274 = smul.addr %s8273, 128
          %s8275 = scalar_lea.hbm %s12, %s8274
          %s8276 = sshll.u32 %s8261, 4
          %s8277 = int_to_ptr.vmem [resolvable:$true] %s8276
          %8282 = dma.vmem_to_hbm [thread:$0]  %s8277, 512, %s8275, %s8258, 256, 256, 16
        $region108: #{tpu_custom_call.1} parent=67 // pred_fallthru
          _
        // Predicated region
        $region109: #{tpu_custom_call.1} parent=67 // pred_check
          %p8283 = pneg %p346
        $region110: #{tpu_custom_call.1} parent=67 // pred_check_branch
          %8285 = sbr.rel (%p8283) target = $region112
        $region111: #{tpu_custom_call.1} parent=67 // pred_region
          %s8287 = ssub.s32 512, 512
          %8288 = vsyncadd %s8263, %s8287
          %s8289 = smul.addr %s40, 4
          %s8290 = smul.addr %s8289, 128
          %s8291 = scalar_lea.hbm %s13, %s8290
          %s8292 = sshll.u32 %s8266, 4
          %s8293 = int_to_ptr.vmem [resolvable:$true] %s8292
          %8298 = dma.vmem_to_hbm [thread:$0]  %s8293, 512, %s8291, %s8263, 256, 256, 16
        $region112: #{tpu_custom_call.1} parent=67 // pred_fallthru
          _
      $region68: #{tpu_custom_call.1} parent=5 // pred_fallthru
        _
      %p8299 = scmp.le.s32.totalorder 2, %s35
      // Predicated region
      $region113: #{tpu_custom_call.1} parent=5 // pred_check
        %p8300 = pneg %p8299
      $region114: #{tpu_custom_call.1} parent=5 // pred_check_branch
        %8302 = sbr.rel (%p8300) target = $region116
      $region115: #{tpu_custom_call.1} parent=5 // pred_region
        %s8303 = ssub.s32 %s35, 2
        // Predicated region
        $region117: #{tpu_custom_call.1} parent=115 // pred_check
          %p8304 = pneg %p326
        $region118: #{tpu_custom_call.1} parent=115 // pred_check_branch
          %8306 = sbr.rel (%p8304) target = $region120
        $region119: #{tpu_custom_call.1} parent=115 // pred_region
          %s8307 = sand.u32 %s311, 1
          %s8308 = scalar_lea.sflag [#allocation4], %s8307
          %s8309 = sand.u32 %s311, 1
          %s8310 = smul.addr %s8309, 32
          %s8311 = scalar_lea.vmem [#allocation17], %s8310
          %8312 = dma.done %s8308, 512
        $region120: #{tpu_custom_call.1} parent=115 // pred_fallthru
          _
        // Predicated region
        $region121: #{tpu_custom_call.1} parent=115 // pred_check
          %p8313 = pneg %p352
        $region122: #{tpu_custom_call.1} parent=115 // pred_check_branch
          %8315 = sbr.rel (%p8313) target = $region124
        $region123: #{tpu_custom_call.1} parent=115 // pred_region
          %s8316 = sand.u32 %s337, 1
          %s8317 = scalar_lea.sflag [#allocation19], %s8316
          %s8318 = sand.u32 %s337, 1
          %s8319 = smul.addr %s8318, 32
          %s8320 = scalar_lea.vmem [#allocation18], %s8319
          %8321 = dma.done %s8317, 512
        $region124: #{tpu_custom_call.1} parent=115 // pred_fallthru
          _
      $region116: #{tpu_custom_call.1} parent=5 // pred_fallthru
        _
    $region6: #{tpu_custom_call.1} parent=1 // loop_footer
      %s39 = sadd.s32 1, %s35
    $region7: #{tpu_custom_call.1} parent=1 // loop_footer_branch
      %34 = sbr.rel target = $region3
    $region8: #{tpu_custom_call.1} parent=1 // loop_exit
      _
    %8322 = vsyncpa [#allocation3], 1
    %s8323 = scalar_lea.sflag [#allocation3], 1
    %8324 = vsyncpa %s8323, 1
    %8325 = vsyncpa [#allocation6], 1
    %s8326 = scalar_lea.sflag [#allocation6], 1
    %8327 = vsyncpa %s8326, 1
    %8328 = vsyncpa [#allocation9], 1
    %8329 = vsyncpa [#allocation12], 1
    %8330 = vsyncpa [#allocation15], 1
    %8331 = vsyncpa [#allocation4], 1
    %s8332 = scalar_lea.sflag [#allocation4], 1
    %8333 = vsyncpa %s8332, 1
    %8334 = vsyncpa [#allocation19], 1
    %s8335 = scalar_lea.sflag [#allocation19], 1
    %8336 = vsyncpa %s8335, 1

</llo_original>
